<compile_context>
chip_gen: v6e
topology: v6e:2x2x1
jax: 0.10.0
libtpu: 0.0.40
codegen_flags: <defaults>
</compile_context>

<pallas_src>
import jax
import jax.numpy as jnp
from jax import lax
from jax.experimental import pallas as pl
from jax.experimental.pallas import tpu as pltpu

EPS = 1e-5
COUT_BLOCK = 128


def relu_conv_bn_relu(x_nchw, w_oihw, gamma, beta, *, dilation=2, pad=2):
    """x_nchw: (1, Cin, H, W) f32; w_oihw: (Cout, Cin, KH, KW) f32; gamma/beta: (Cout,)."""
    n, cin, h, w = x_nchw.shape
    assert n == 1, "kernel is specialized to batch=1 (matches the module input)"
    cout, cin2, kh, kw = w_oihw.shape
    assert cin2 == cin and cin % 128 == 0 and cout % COUT_BLOCK == 0

    wp = w + 2 * pad                       # padded width (=32 for this module)
    assert wp & (wp - 1) == 0, "row-wrap mask assumes padded width is a power of two"
    rows_out = h * wp                      # outputs computed on (H, Wp) grid, extra cols masked
    max_off = (kh - 1) * dilation * wp + (kw - 1) * dilation
    hp = h + 2 * pad
    while hp * wp < rows_out + max_off:    # extra bottom pad rows keep tap slices in-bounds
        hp += 1
    offsets = [ih * dilation * wp + iw * dilation for ih in range(kh) for iw in range(kw)]
    n_valid = float(h * w)

    # ---- glue (plain JAX): layout change + zero pad + bf16 cast ----
    x_hwc = jnp.transpose(x_nchw[0], (1, 2, 0))                           # (H, W, Cin)
    xp = jnp.pad(x_hwc, ((pad, hp - h - pad), (pad, pad), (0, 0)))        # (Hp, Wp, Cin)
    xp_flat = xp.reshape(hp * wp, cin).astype(jnp.bfloat16)               # (Hp*Wp, Cin)
    wk = jnp.transpose(w_oihw, (2, 3, 1, 0)).reshape(kh * kw * cin, cout) # (9*Cin, Cout)
    wk = wk.astype(jnp.bfloat16)
    g2 = gamma.reshape(1, cout).astype(jnp.float32)
    b2 = beta.reshape(1, cout).astype(jnp.float32)

    def kernel(xp_ref, w_ref, g_ref, b_ref, o_ref):
        # xp_ref: (Hp*Wp, Cin) bf16 (full), w_ref: (9*Cin, cb) bf16,
        # g_ref/b_ref: (1, cb) f32, o_ref: (H*Wp, cb) f32
        xr = jnp.maximum(xp_ref[...], 0)                       # fused input ReLU (once)
        patches = jnp.concatenate(
            [xr[off:off + rows_out, :] for off in offsets], axis=-1)      # (H*Wp, 9*Cin) bf16
        acc = jnp.dot(patches, w_ref[...],
                      preferred_element_type=jnp.float32)                 # (H*Wp, cb) f32

        # BatchNorm2d training-mode stats over the H*W valid positions only
        # (wrapped columns x >= W contribute garbage and are masked out; divisor stays H*W).
        col = lax.broadcasted_iota(jnp.int32, (rows_out, 1), 0) & (wp - 1)
        valid = (col < w).astype(jnp.float32)                             # (H*Wp, 1)
        am = acc * valid
        inv_n = jnp.float32(1.0 / n_valid)
        mean = jnp.sum(am, axis=0, keepdims=True) * inv_n                 # (1, cb)
        var = jnp.sum(am * acc, axis=0, keepdims=True) * inv_n - mean * mean
        scale = g_ref[...] * lax.rsqrt(var + EPS)
        shift = b_ref[...] - mean * scale
        o_ref[...] = jnp.maximum(acc * scale + shift, 0.0)                # final ReLU

    nblk = cout // COUT_BLOCK
    out_flat = pl.pallas_call(
        kernel,
        out_shape=jax.ShapeDtypeStruct((rows_out, cout), jnp.float32),
        grid=(nblk,),
        in_specs=[
            pl.BlockSpec((hp * wp, cin), lambda j: (0, 0)),               # full padded input
            pl.BlockSpec((kh * kw * cin, COUT_BLOCK), lambda j: (0, j)),  # weight Cout-half
            pl.BlockSpec((1, COUT_BLOCK), lambda j: (0, j)),              # gamma half
            pl.BlockSpec((1, COUT_BLOCK), lambda j: (0, j)),              # beta half
        ],
        out_specs=pl.BlockSpec((rows_out, COUT_BLOCK), lambda j: (0, j)),
        compiler_params=pltpu.CompilerParams(
            dimension_semantics=("parallel",),
            vmem_limit_bytes=48 * 1024 * 1024,                            # safe on v5e/v6e/v7x
        ),
    )(xp_flat, wk, g2, b2)

    # drop the wrapped columns and go back to NCHW
    out = out_flat.reshape(h, wp, cout)[:, :w, :]                         # (H, W, Cout)
    return jnp.transpose(out, (2, 0, 1))[None]


def reference(x_nchw, w_oihw, gamma, beta):
    """Pure-JAX reference of the PyTorch module's forward (training-mode BN)."""
    xr = jnp.maximum(x_nchw, 0.0)
    y = lax.conv_general_dilated(
        xr, w_oihw, window_strides=(1, 1), padding=((2, 2), (2, 2)),
        rhs_dilation=(2, 2), dimension_numbers=('NCHW', 'OIHW', 'NCHW'))
    mean = jnp.mean(y, axis=(0, 2, 3), keepdims=True)
    var = jnp.var(y, axis=(0, 2, 3), keepdims=True)   # biased, as PyTorch normalizes with
    yn = (y - mean) * lax.rsqrt(var + EPS)
    yn = yn * gamma[None, :, None, None] + beta[None, :, None, None]
    return jnp.maximum(yn, 0.0)


if __name__ == "__main__":
    key = jax.random.PRNGKey(0)
    k_x, k_w = jax.random.split(key)

    N, C, H, W = 1, 256, 28, 28                      # shapes from the module
    x = jax.random.normal(k_x, (N, C, H, W), dtype=jnp.float32)

    # Conv2d(256, 256, 3x3, bias=False) weight, deterministic kaiming-like init.
    fan_in = C * 3 * 3
    wgt = jax.random.normal(k_w, (C, C, 3, 3), dtype=jnp.float32) * (2.0 / fan_in) ** 0.5
    # BatchNorm2d default affine init: weight=1, bias=0.
    gamma = jnp.ones((C,), dtype=jnp.float32)
    beta = jnp.zeros((C,), dtype=jnp.float32)
    # TODO(synk): BatchNorm running_mean/running_var buffer updates (training side effect)
    # are not modeled; they do not affect the returned tensor.

    fn = jax.jit(relu_conv_bn_relu)
    out = jax.block_until_ready(fn(x, wgt, gamma, beta))
    ref = jax.block_until_ready(reference(x, wgt, gamma, beta))

    assert out.shape == (N, C, H, W) and out.dtype == jnp.float32
    max_err = float(jnp.max(jnp.abs(out - ref)))
    if max_err > 5e-2:
        raise AssertionError(f"mismatch vs reference, max abs err = {max_err}")

    print("KERNEL_OK")
</pallas_src>

<mosaic_0001>
module attributes {stable_mosaic.version = 11 : i64} {
  func.func @kernel(%arg0: i32, %arg1: memref<1056x256xbf16, #tpu.memory_space<vmem>>, %arg2: memref<2304x128xbf16, #tpu.memory_space<vmem>>, %arg3: memref<1x128xf32, #tpu.memory_space<vmem>>, %arg4: memref<1x128xf32, #tpu.memory_space<vmem>>, %arg5: memref<896x128xf32, #tpu.memory_space<vmem>>) attributes {dimension_semantics = [#tpu.dimension_semantics<parallel>], iteration_bounds = array<i64: 2>, scalar_prefetch = 0 : i64, scratch_operands = 0 : i64, tpu.core_type = #tpu.core_type<tc>, window_params = [{pipeline_mode = #tpu.pipeline_mode<synchronous>, transform_indices = @transform_0, window_bounds = array<i64: 1056, 256>}, {transform_indices = @transform_1, window_bounds = array<i64: 2304, 128>}, {transform_indices = @transform_2, window_bounds = array<i64: 1, 128>}, {transform_indices = @transform_3, window_bounds = array<i64: 1, 128>}, {transform_indices = @transform_4, window_bounds = array<i64: 896, 128>}]} {
    %c0 = arith.constant 0 : index
    %c0_0 = arith.constant 0 : index
    %0 = vector.load %arg1[%c0, %c0_0] : memref<1056x256xbf16, #tpu.memory_space<vmem>>, vector<1056x256xbf16>
    %cst = arith.constant 0.000000e+00 : bf16
    %1 = vector.broadcast %cst : bf16 to vector<1056x256xbf16>
    %2 = arith.maximumf %0, %1 : vector<1056x256xbf16>
    %3 = vector.extract_strided_slice %2 {offsets = [0, 0], sizes = [896, 256], strides = [1, 1]} : vector<1056x256xbf16> to vector<896x256xbf16>
    %4 = vector.extract_strided_slice %2 {offsets = [2, 0], sizes = [896, 256], strides = [1, 1]} : vector<1056x256xbf16> to vector<896x256xbf16>
    %5 = vector.extract_strided_slice %2 {offsets = [4, 0], sizes = [896, 256], strides = [1, 1]} : vector<1056x256xbf16> to vector<896x256xbf16>
    %6 = vector.extract_strided_slice %2 {offsets = [64, 0], sizes = [896, 256], strides = [1, 1]} : vector<1056x256xbf16> to vector<896x256xbf16>
    %7 = vector.extract_strided_slice %2 {offsets = [66, 0], sizes = [896, 256], strides = [1, 1]} : vector<1056x256xbf16> to vector<896x256xbf16>
    %8 = vector.extract_strided_slice %2 {offsets = [68, 0], sizes = [896, 256], strides = [1, 1]} : vector<1056x256xbf16> to vector<896x256xbf16>
    %9 = vector.extract_strided_slice %2 {offsets = [128, 0], sizes = [896, 256], strides = [1, 1]} : vector<1056x256xbf16> to vector<896x256xbf16>
    %10 = vector.extract_strided_slice %2 {offsets = [130, 0], sizes = [896, 256], strides = [1, 1]} : vector<1056x256xbf16> to vector<896x256xbf16>
    %11 = vector.extract_strided_slice %2 {offsets = [132, 0], sizes = [896, 256], strides = [1, 1]} : vector<1056x256xbf16> to vector<896x256xbf16>
    %12 = tpu.concatenate %3, %4, %5, %6, %7, %8, %9, %10, %11 in 1 : vector<896x256xbf16>, vector<896x256xbf16>, vector<896x256xbf16>, vector<896x256xbf16>, vector<896x256xbf16>, vector<896x256xbf16>, vector<896x256xbf16>, vector<896x256xbf16>, vector<896x256xbf16> -> vector<896x2304xbf16>
    %c0_1 = arith.constant 0 : index
    %c0_2 = arith.constant 0 : index
    %13 = vector.load %arg2[%c0_1, %c0_2] : memref<2304x128xbf16, #tpu.memory_space<vmem>>, vector<2304x128xbf16>
    %cst_3 = arith.constant dense<0.000000e+00> : vector<896x128xf32>
    %14 = tpu.matmul %12, %13, %cst_3 {dimension_numbers = #tpu.dot_dimension_numbers<[1], [0], [0], [1], [0, 0, 1, 1], [], []>} : vector<896x2304xbf16>, vector<2304x128xbf16>, vector<896x128xf32> -> vector<896x128xf32>
    %15 = tpu.iota {dimensions = array<i32: 0>} : vector<896x1xi32>
    %c31_i32 = arith.constant 31 : i32
    %16 = vector.broadcast %c31_i32 : i32 to vector<896x1xi32>
    %17 = arith.andi %15, %16 : vector<896x1xi32>
    %c28_i32 = arith.constant 28 : i32
    %18 = vector.broadcast %c28_i32 : i32 to vector<896x1xi32>
    %19 = arith.cmpi slt, %17, %18 : vector<896x1xi32>
    %20 = arith.extui %19 : vector<896x1xi1> to vector<896x1xi32>
    %21 = arith.sitofp %20 : vector<896x1xi32> to vector<896x1xf32>
    %22 = vector.broadcast %21 : vector<896x1xf32> to vector<896x128xf32>
    %23 = arith.mulf %14, %22 : vector<896x128xf32>
    %cst_4 = arith.constant dense<0.000000e+00> : vector<128xf32>
    %24 = vector.multi_reduction <add>, %23, %cst_4 [0] : vector<896x128xf32> to vector<128xf32>
    %25 = vector.shape_cast %24 : vector<128xf32> to vector<1x128xf32>
    %cst_5 = arith.constant 0.00127551018 : f32
    %26 = vector.broadcast %cst_5 : f32 to vector<1x128xf32>
    %27 = arith.mulf %25, %26 : vector<1x128xf32>
    %28 = arith.mulf %23, %14 : vector<896x128xf32>
    %cst_6 = arith.constant dense<0.000000e+00> : vector<128xf32>
    %29 = vector.multi_reduction <add>, %28, %cst_6 [0] : vector<896x128xf32> to vector<128xf32>
    %30 = vector.shape_cast %29 : vector<128xf32> to vector<1x128xf32>
    %cst_7 = arith.constant 0.00127551018 : f32
    %31 = vector.broadcast %cst_7 : f32 to vector<1x128xf32>
    %32 = arith.mulf %30, %31 : vector<1x128xf32>
    %33 = arith.mulf %27, %27 : vector<1x128xf32>
    %34 = arith.subf %32, %33 : vector<1x128xf32>
    %c0_8 = arith.constant 0 : index
    %c0_9 = arith.constant 0 : index
    %35 = vector.load %arg3[%c0_8, %c0_9] : memref<1x128xf32, #tpu.memory_space<vmem>>, vector<1x128xf32>
    %cst_10 = arith.constant 9.99999974E-6 : f32
    %36 = vector.broadcast %cst_10 : f32 to vector<1x128xf32>
    %37 = arith.addf %34, %36 : vector<1x128xf32>
    %38 = math.rsqrt %37 : vector<1x128xf32>
    %39 = arith.mulf %35, %38 : vector<1x128xf32>
    %c0_11 = arith.constant 0 : index
    %c0_12 = arith.constant 0 : index
    %40 = vector.load %arg4[%c0_11, %c0_12] : memref<1x128xf32, #tpu.memory_space<vmem>>, vector<1x128xf32>
    %41 = arith.mulf %27, %39 : vector<1x128xf32>
    %42 = arith.subf %40, %41 : vector<1x128xf32>
    %43 = vector.broadcast %39 : vector<1x128xf32> to vector<896x128xf32>
    %44 = arith.mulf %14, %43 : vector<896x128xf32>
    %45 = vector.broadcast %42 : vector<1x128xf32> to vector<896x128xf32>
    %46 = arith.addf %44, %45 : vector<896x128xf32>
    %cst_13 = arith.constant 0.000000e+00 : f32
    %47 = vector.broadcast %cst_13 : f32 to vector<896x128xf32>
    %48 = arith.maximumf %46, %47 : vector<896x128xf32>
    %c0_14 = arith.constant 0 : index
    %c0_15 = arith.constant 0 : index
    %49 = vector.load %arg5[%c0_14, %c0_15] : memref<896x128xf32, #tpu.memory_space<vmem>>, vector<896x128xf32>
    tpu.vector_store %arg5[%c0_14, %c0_15], %48 {strides = array<i32>} : memref<896x128xf32, #tpu.memory_space<vmem>>, vector<896x128xf32>,
    return
  }
  func.func @transform_0(%arg0: i32) -> (i32, i32) {
    %c0_i32 = arith.constant 0 : i32
    %c0_i32_0 = arith.constant 0 : i32
    %c0_i32_1 = arith.constant 0 : i32
    return %c0_i32, %c0_i32_0 : i32, i32
  }
  func.func @transform_1(%arg0: i32) -> (i32, i32) {
    %c0_i32 = arith.constant 0 : i32
    %c0_i32_0 = arith.constant 0 : i32
    return %c0_i32, %arg0 : i32, i32
  }
  func.func @transform_2(%arg0: i32) -> (i32, i32) {
    %c0_i32 = arith.constant 0 : i32
    %c0_i32_0 = arith.constant 0 : i32
    return %c0_i32, %arg0 : i32, i32
  }
  func.func @transform_3(%arg0: i32) -> (i32, i32) {
    %c0_i32 = arith.constant 0 : i32
    %c0_i32_0 = arith.constant 0 : i32
    return %c0_i32, %arg0 : i32, i32
  }
  func.func @transform_4(%arg0: i32) -> (i32, i32) {
    %c0_i32 = arith.constant 0 : i32
    %c0_i32_0 = arith.constant 0 : i32
    return %c0_i32, %arg0 : i32, i32
  }
}

</mosaic_0001>

<llo_original>
// kernel: relu_conv_bn_relu.1
$region0: #{relu_conv_bn_relu.1}
  #allocation0 [shape = 'u32[]', space=smem, size = 0x4, offset = 0x4, fixed_abs, tag = 'smem constant byte address 0x4 - core index']
  #allocation1 [shape = 'u32[144,128]{1,0:T(1,128)}', space=vmem, size = 0x12000, scoped, tag = 'internal scratch']
  %s0 = inlined_call_operand.vmem [shape: bf16[1056,256], index: 0, kind: input, shape index: {}]
  %s1 = inlined_call_operand.vmem [shape: bf16[2304,256], index: 1, kind: input, shape index: {}]
  %s2 = inlined_call_operand.vmem [shape: f32[1,256], index: 2, kind: input, shape index: {}]
  %s3 = inlined_call_operand.vmem [shape: f32[1,256], index: 3, kind: input, shape index: {}]
  %s4 = inlined_call_operand.vmem [shape: f32[896,256], index: 4, kind: output, shape index: {}]
  %s5 = sld [smem:[#allocation0]]
  $region124: #{relu_conv_bn_relu.1} parent=0
    _
  %s7 = ssub.s32 1, %s5
  %s8 = scalar_select 0, %s7, %s5
  $region1: #{relu_conv_bn_relu.1} parent=0
    #allocation2 [shape = 'u8[1179648]{0}', space=vmem, size = 0x120000, scoped, tag = 'input window, operand 1']
    #allocation3 [shape = 'u8[917504]{0}', space=vmem, size = 0xe0000, scoped, tag = 'output window, operand 0']
    loop: start=0, step=1, limit=4
    $region2: #{relu_conv_bn_relu.1} parent=1 // loop_pre_header
      _
    $region3: #{relu_conv_bn_relu.1} parent=1 // loop_header
      %s10 = sphi 0, %s14
      %p11 = scmp.ge.s32.totalorder %s10, 4
      %s18 = sphi 0, %s18
      %s20 = sphi 0, %s18
      %s21 = sphi 0, %s20
      %s35 = sphi 0, %s21
      %s41 = sphi 0, %s43
      %s44 = sphi 0, %s41
      %s45 = sphi 0, %s44
      %s61 = sphi 0, %s45
      %s67 = sphi 0, %s69
      %s70 = sphi 0, %s67
      %s71 = sphi 0, %s70
      %s87 = sphi 0, %s71
      %s93 = sphi 0, %s95
      %s96 = sphi 0, %s93
      %s97 = sphi 0, %s96
      %s113 = sphi 0, %s97
      %s119 = sphi 0, %s121
      %s122 = sphi 0, %s119
      %s123 = sphi 0, %s122
      %s139 = sphi 0, %s123
    $region4: #{relu_conv_bn_relu.1} parent=1 // loop_header_branch
      %13 = sbr.rel (%p11) target = $region8
    $region5: #{relu_conv_bn_relu.1} parent=1 // loop_body
      %s15 = ssub.s32 %s10, 1
      %s16 = ssub.s32 %s10, 2
      %s17 = sadd.s32 %s10, 1
      %s19 = sadd.s32 %s18, 1
      %p22 = scmp.eq.s32.totalorder %s10, 1
      %p23 = scmp.ne.s32.totalorder %s18, %s20
      %p24 = scmp.eq.s32.totalorder %s10, 0
      %p25 = por %p23, %p24
      %p26 = scmp.ne.s32.totalorder %s18, %s20
      %p27 = scmp.eq.s32.totalorder %s15, 1
      %p28 = por %p26, %p27
      %p29 = scmp.ne.s32.totalorder %s20, %s21
      %p30 = scmp.eq.s32.totalorder %s15, 0
      %p31 = por %p29, %p30
      %p32 = scmp.ne.s32.totalorder %s20, %s21
      %p33 = scmp.eq.s32.totalorder %s16, 1
      %p34 = por %p32, %p33
      %p36 = scmp.ne.s32.totalorder %s21, %s35
      %p37 = scmp.eq.s32.totalorder %s16, 0
      %p38 = por %p36, %p37
      %s39 = ssub.s32 %s10, %s17
      %p40 = scmp.eq.s32.totalorder %s39, 0
      %s42 = sadd.s32 %s41, 1
      %s43 = scalar_select %p40, %s41, %s42
      %p46 = pneg %p40
      %p47 = scmp.eq.s32.totalorder %s10, 1
      %p48 = por %p46, %p47
      %p49 = scmp.ne.s32.totalorder %s41, %s44
      %p50 = scmp.eq.s32.totalorder %s10, 0
      %p51 = por %p49, %p50
      %p52 = scmp.ne.s32.totalorder %s41, %s44
      %p53 = scmp.eq.s32.totalorder %s15, 1
      %p54 = por %p52, %p53
      %p55 = scmp.ne.s32.totalorder %s44, %s45
      %p56 = scmp.eq.s32.totalorder %s15, 0
      %p57 = por %p55, %p56
      %p58 = scmp.ne.s32.totalorder %s44, %s45
      %p59 = scmp.eq.s32.totalorder %s16, 1
      %p60 = por %p58, %p59
      %p62 = scmp.ne.s32.totalorder %s45, %s61
      %p63 = scmp.eq.s32.totalorder %s16, 0
      %p64 = por %p62, %p63
      %s65 = ssub.s32 %s10, %s17
      %p66 = scmp.eq.s32.totalorder %s65, 0
      %s68 = sadd.s32 %s67, 1
      %s69 = scalar_select %p66, %s67, %s68
      %p72 = pneg %p66
      %p73 = scmp.eq.s32.totalorder %s10, 1
      %p74 = por %p72, %p73
      %p75 = scmp.ne.s32.totalorder %s67, %s70
      %p76 = scmp.eq.s32.totalorder %s10, 0
      %p77 = por %p75, %p76
      %p78 = scmp.ne.s32.totalorder %s67, %s70
      %p79 = scmp.eq.s32.totalorder %s15, 1
      %p80 = por %p78, %p79
      %p81 = scmp.ne.s32.totalorder %s70, %s71
      %p82 = scmp.eq.s32.totalorder %s15, 0
      %p83 = por %p81, %p82
      %p84 = scmp.ne.s32.totalorder %s70, %s71
      %p85 = scmp.eq.s32.totalorder %s16, 1
      %p86 = por %p84, %p85
      %p88 = scmp.ne.s32.totalorder %s71, %s87
      %p89 = scmp.eq.s32.totalorder %s16, 0
      %p90 = por %p88, %p89
      %s91 = ssub.s32 %s10, %s17
      %p92 = scmp.eq.s32.totalorder %s91, 0
      %s94 = sadd.s32 %s93, 1
      %s95 = scalar_select %p92, %s93, %s94
      %p98 = pneg %p92
      %p99 = scmp.eq.s32.totalorder %s10, 1
      %p100 = por %p98, %p99
      %p101 = scmp.ne.s32.totalorder %s93, %s96
      %p102 = scmp.eq.s32.totalorder %s10, 0
      %p103 = por %p101, %p102
      %p104 = scmp.ne.s32.totalorder %s93, %s96
      %p105 = scmp.eq.s32.totalorder %s15, 1
      %p106 = por %p104, %p105
      %p107 = scmp.ne.s32.totalorder %s96, %s97
      %p108 = scmp.eq.s32.totalorder %s15, 0
      %p109 = por %p107, %p108
      %p110 = scmp.ne.s32.totalorder %s96, %s97
      %p111 = scmp.eq.s32.totalorder %s16, 1
      %p112 = por %p110, %p111
      %p114 = scmp.ne.s32.totalorder %s97, %s113
      %p115 = scmp.eq.s32.totalorder %s16, 0
      %p116 = por %p114, %p115
      %s117 = ssub.s32 %s10, %s17
      %p118 = scmp.eq.s32.totalorder %s117, 0
      %s120 = sadd.s32 %s119, 1
      %s121 = scalar_select %p118, %s119, %s120
      %p124 = pneg %p118
      %p125 = scmp.eq.s32.totalorder %s10, 1
      %p126 = por %p124, %p125
      %p127 = scmp.ne.s32.totalorder %s119, %s122
      %p128 = scmp.eq.s32.totalorder %s10, 0
      %p129 = por %p127, %p128
      %p130 = scmp.ne.s32.totalorder %s119, %s122
      %p131 = scmp.eq.s32.totalorder %s15, 1
      %p132 = por %p130, %p131
      %p133 = scmp.ne.s32.totalorder %s122, %s123
      %p134 = scmp.eq.s32.totalorder %s15, 0
      %p135 = por %p133, %p134
      %p136 = scmp.ne.s32.totalorder %s122, %s123
      %p137 = scmp.eq.s32.totalorder %s16, 1
      %p138 = por %p136, %p137
      %p140 = scmp.ne.s32.totalorder %s123, %s139
      %p141 = scmp.eq.s32.totalorder %s16, 0
      %p142 = por %p140, %p141
      %p143 = scmp.le.s32.totalorder 1, %s10
      %p144 = scmp.lt.s32.totalorder %s10, 3
      %p145 = pnand %p143, %p144
      %p146 = pneg %p145
      // Predicated region
      $region9: #{relu_conv_bn_relu.1} parent=5 // pred_check
        _
      $region10: #{relu_conv_bn_relu.1} parent=5 // pred_check_branch
        %148 = sbr.rel (%p145) target = $region12
      $region11: #{relu_conv_bn_relu.1} parent=5 // pred_region
        %s149 = ssub.s32 %s10, 1
        // Predicated region
        $region13: #{relu_conv_bn_relu.1} parent=11 // pred_check
          %p150 = pneg %p31
        $region14: #{relu_conv_bn_relu.1} parent=11 // pred_check_branch
          %152 = sbr.rel (%p150) target = $region16
        $region15: #{relu_conv_bn_relu.1} parent=11 // pred_region
          _
        $region16: #{relu_conv_bn_relu.1} parent=11 // pred_fallthru
          _
      $region12: #{relu_conv_bn_relu.1} parent=5 // pred_fallthru
        _
      %p153 = scmp.lt.s32.totalorder %s10, 2
      // Predicated region
      $region17: #{relu_conv_bn_relu.1} parent=5 // pred_check
        %p154 = pneg %p153
      $region18: #{relu_conv_bn_relu.1} parent=5 // pred_check_branch
        %156 = sbr.rel (%p154) target = $region20
      $region19: #{relu_conv_bn_relu.1} parent=5 // pred_region
        // Predicated region
        $region21: #{relu_conv_bn_relu.1} parent=19 // pred_check
          %p157 = pneg %p51
        $region22: #{relu_conv_bn_relu.1} parent=19 // pred_check_branch
          %159 = sbr.rel (%p157) target = $region24
        $region23: #{relu_conv_bn_relu.1} parent=19 // pred_region
          %s160 = sand.u32 %s41, 1
          %s161 = sand.u32 %s41, 1
          %s162 = smul.addr %s161, 1152
          %s163 = scalar_lea.vmem [#allocation2], %s162
          %s164 = smul.addr %s10, 4
          %s165 = scalar_lea.vmem %s1, %s164
          // Predicated region
          $region25: #{relu_conv_bn_relu.1} parent=23 // pred_check
            _
          $region26: #{relu_conv_bn_relu.1} parent=23 // pred_check_branch
            %167 = sbr.rel (0) target = $region28
          $region27: #{relu_conv_bn_relu.1} parent=23 // pred_region
            // Predicated region
            $region29: #{relu_conv_bn_relu.1} parent=27 // pred_check
              _
            $region30: #{relu_conv_bn_relu.1} parent=27 // pred_check_branch
              %169 = sbr.rel target = $region32
            $region31: #{relu_conv_bn_relu.1} parent=27 // pred_region
              // Predicated region
              $region44: #{relu_conv_bn_relu.1} parent=31 // pred_check
                _
              $region45: #{relu_conv_bn_relu.1} parent=31 // pred_check_branch
                %759 = sbr.rel (0) target = $region47
              $region46: #{relu_conv_bn_relu.1} parent=31 // pred_region
                loop: start=0, step=1, limit=1
                $region48: #{relu_conv_bn_relu.1} parent=46 // loop_pre_header
                  _
                $region49: #{relu_conv_bn_relu.1} parent=46 // loop_header
                  %s761 = sphi 0, %s765
                  %p762 = scmp.ge.s32.totalorder %s761, 1
                  %s766 = sphi %s165, %s165
                  %s767 = sphi %s163, %s163
                $region50: #{relu_conv_bn_relu.1} parent=46 // loop_header_branch
                  %764 = sbr.rel (%p762) target = $region54
                $region51: #{relu_conv_bn_relu.1} parent=46 // loop_body
                  _
                $region52: #{relu_conv_bn_relu.1} parent=46 // loop_footer
                  %s765 = sadd.s32 1, %s761
                $region53: #{relu_conv_bn_relu.1} parent=46 // loop_footer_branch
                  %760 = sbr.rel target = $region49
                $region54: #{relu_conv_bn_relu.1} parent=46 // loop_exit
                  _
                %s769 = ssub.s32 16, 1
                loop: start=0, step=1, limit=1
                $region55: #{relu_conv_bn_relu.1} parent=46 // loop_pre_header
                  _
                $region56: #{relu_conv_bn_relu.1} parent=46 // loop_header
                  %s771 = sphi 0, %s775
                  %p772 = scmp.ge.s32.totalorder %s771, 1
                  %s776 = sphi %s165, %s165
                  %s777 = sphi %s163, %s163
                $region57: #{relu_conv_bn_relu.1} parent=46 // loop_header_branch
                  %774 = sbr.rel (%p772) target = $region61
                $region58: #{relu_conv_bn_relu.1} parent=46 // loop_body
                  %v778 = vld [vmem:[%s776] sm:%s769]
                  %779 = vst [vmem:[%s777] sm:%s769] %v778
                  %v780 = vld [vmem:[%s776 + $0x8] sm:%s769]
                  %781 = vst [vmem:[%s777 + $0x4] sm:%s769] %v780
                  %v782 = vld [vmem:[%s776 + $0x10] sm:%s769]
                  %783 = vst [vmem:[%s777 + $0x8] sm:%s769] %v782
                  %v784 = vld [vmem:[%s776 + $0x18] sm:%s769]
                  %785 = vst [vmem:[%s777 + $0xc] sm:%s769] %v784
                  %v786 = vld [vmem:[%s776 + $0x20] sm:%s769]
                  %787 = vst [vmem:[%s777 + $0x10] sm:%s769] %v786
                  %v788 = vld [vmem:[%s776 + $0x28] sm:%s769]
                  %789 = vst [vmem:[%s777 + $0x14] sm:%s769] %v788
                  %v790 = vld [vmem:[%s776 + $0x30] sm:%s769]
                  %791 = vst [vmem:[%s777 + $0x18] sm:%s769] %v790
                  %v792 = vld [vmem:[%s776 + $0x38] sm:%s769]
                  %793 = vst [vmem:[%s777 + $0x1c] sm:%s769] %v792
                  %v794 = vld [vmem:[%s776 + $0x40] sm:%s769]
                  %795 = vst [vmem:[%s777 + $0x20] sm:%s769] %v794
                  %v796 = vld [vmem:[%s776 + $0x48] sm:%s769]
                  %797 = vst [vmem:[%s777 + $0x24] sm:%s769] %v796
                  %v798 = vld [vmem:[%s776 + $0x50] sm:%s769]
                  %799 = vst [vmem:[%s777 + $0x28] sm:%s769] %v798
                  %v800 = vld [vmem:[%s776 + $0x58] sm:%s769]
                  %801 = vst [vmem:[%s777 + $0x2c] sm:%s769] %v800
                  %v802 = vld [vmem:[%s776 + $0x60] sm:%s769]
                  %803 = vst [vmem:[%s777 + $0x30] sm:%s769] %v802
                  %v804 = vld [vmem:[%s776 + $0x68] sm:%s769]
                  %805 = vst [vmem:[%s777 + $0x34] sm:%s769] %v804
                  %v806 = vld [vmem:[%s776 + $0x70] sm:%s769]
                  %807 = vst [vmem:[%s777 + $0x38] sm:%s769] %v806
                  %v808 = vld [vmem:[%s776 + $0x78] sm:%s769]
                  %809 = vst [vmem:[%s777 + $0x3c] sm:%s769] %v808
                  %v810 = vld [vmem:[%s776 + $0x80] sm:%s769]
                  %811 = vst [vmem:[%s777 + $0x40] sm:%s769] %v810
                  %v812 = vld [vmem:[%s776 + $0x88] sm:%s769]
                  %813 = vst [vmem:[%s777 + $0x44] sm:%s769] %v812
                  %v814 = vld [vmem:[%s776 + $0x90] sm:%s769]
                  %815 = vst [vmem:[%s777 + $0x48] sm:%s769] %v814
                  %v816 = vld [vmem:[%s776 + $0x98] sm:%s769]
                  %817 = vst [vmem:[%s777 + $0x4c] sm:%s769] %v816
                  %v818 = vld [vmem:[%s776 + $0xa0] sm:%s769]
                  %819 = vst [vmem:[%s777 + $0x50] sm:%s769] %v818
                  %v820 = vld [vmem:[%s776 + $0xa8] sm:%s769]
                  %821 = vst [vmem:[%s777 + $0x54] sm:%s769] %v820
                  %v822 = vld [vmem:[%s776 + $0xb0] sm:%s769]
                  %823 = vst [vmem:[%s777 + $0x58] sm:%s769] %v822
                  %v824 = vld [vmem:[%s776 + $0xb8] sm:%s769]
                  %825 = vst [vmem:[%s777 + $0x5c] sm:%s769] %v824
                  %v826 = vld [vmem:[%s776 + $0xc0] sm:%s769]
                  %827 = vst [vmem:[%s777 + $0x60] sm:%s769] %v826
                  %v828 = vld [vmem:[%s776 + $0xc8] sm:%s769]
                  %829 = vst [vmem:[%s777 + $0x64] sm:%s769] %v828
                  %v830 = vld [vmem:[%s776 + $0xd0] sm:%s769]
                  %831 = vst [vmem:[%s777 + $0x68] sm:%s769] %v830
                  %v832 = vld [vmem:[%s776 + $0xd8] sm:%s769]
                  %833 = vst [vmem:[%s777 + $0x6c] sm:%s769] %v832
                  %v834 = vld [vmem:[%s776 + $0xe0] sm:%s769]
                  %835 = vst [vmem:[%s777 + $0x70] sm:%s769] %v834
                  %v836 = vld [vmem:[%s776 + $0xe8] sm:%s769]
                  %837 = vst [vmem:[%s777 + $0x74] sm:%s769] %v836
                  %v838 = vld [vmem:[%s776 + $0xf0] sm:%s769]
                  %839 = vst [vmem:[%s777 + $0x78] sm:%s769] %v838
                  %v840 = vld [vmem:[%s776 + $0xf8] sm:%s769]
                  %841 = vst [vmem:[%s777 + $0x7c] sm:%s769] %v840
                  %v842 = vld [vmem:[%s776 + $0x100] sm:%s769]
                  %843 = vst [vmem:[%s777 + $0x80] sm:%s769] %v842
                  %v844 = vld [vmem:[%s776 + $0x108] sm:%s769]
                  %845 = vst [vmem:[%s777 + $0x84] sm:%s769] %v844
                  %v846 = vld [vmem:[%s776 + $0x110] sm:%s769]
                  %847 = vst [vmem:[%s777 + $0x88] sm:%s769] %v846
                  %v848 = vld [vmem:[%s776 + $0x118] sm:%s769]
                  %849 = vst [vmem:[%s777 + $0x8c] sm:%s769] %v848
                  %v850 = vld [vmem:[%s776 + $0x120] sm:%s769]
                  %851 = vst [vmem:[%s777 + $0x90] sm:%s769] %v850
                  %v852 = vld [vmem:[%s776 + $0x128] sm:%s769]
                  %853 = vst [vmem:[%s777 + $0x94] sm:%s769] %v852
                  %v854 = vld [vmem:[%s776 + $0x130] sm:%s769]
                  %855 = vst [vmem:[%s777 + $0x98] sm:%s769] %v854
                  %v856 = vld [vmem:[%s776 + $0x138] sm:%s769]
                  %857 = vst [vmem:[%s777 + $0x9c] sm:%s769] %v856
                  %v858 = vld [vmem:[%s776 + $0x140] sm:%s769]
                  %859 = vst [vmem:[%s777 + $0xa0] sm:%s769] %v858
                  %v860 = vld [vmem:[%s776 + $0x148] sm:%s769]
                  %861 = vst [vmem:[%s777 + $0xa4] sm:%s769] %v860
                  %v862 = vld [vmem:[%s776 + $0x150] sm:%s769]
                  %863 = vst [vmem:[%s777 + $0xa8] sm:%s769] %v862
                  %v864 = vld [vmem:[%s776 + $0x158] sm:%s769]
                  %865 = vst [vmem:[%s777 + $0xac] sm:%s769] %v864
                  %v866 = vld [vmem:[%s776 + $0x160] sm:%s769]
                  %867 = vst [vmem:[%s777 + $0xb0] sm:%s769] %v866
                  %v868 = vld [vmem:[%s776 + $0x168] sm:%s769]
                  %869 = vst [vmem:[%s777 + $0xb4] sm:%s769] %v868
                  %v870 = vld [vmem:[%s776 + $0x170] sm:%s769]
                  %871 = vst [vmem:[%s777 + $0xb8] sm:%s769] %v870
                  %v872 = vld [vmem:[%s776 + $0x178] sm:%s769]
                  %873 = vst [vmem:[%s777 + $0xbc] sm:%s769] %v872
                  %v874 = vld [vmem:[%s776 + $0x180] sm:%s769]
                  %875 = vst [vmem:[%s777 + $0xc0] sm:%s769] %v874
                  %v876 = vld [vmem:[%s776 + $0x188] sm:%s769]
                  %877 = vst [vmem:[%s777 + $0xc4] sm:%s769] %v876
                  %v878 = vld [vmem:[%s776 + $0x190] sm:%s769]
                  %879 = vst [vmem:[%s777 + $0xc8] sm:%s769] %v878
                  %v880 = vld [vmem:[%s776 + $0x198] sm:%s769]
                  %881 = vst [vmem:[%s777 + $0xcc] sm:%s769] %v880
                  %v882 = vld [vmem:[%s776 + $0x1a0] sm:%s769]
                  %883 = vst [vmem:[%s777 + $0xd0] sm:%s769] %v882
                  %v884 = vld [vmem:[%s776 + $0x1a8] sm:%s769]
                  %885 = vst [vmem:[%s777 + $0xd4] sm:%s769] %v884
                  %v886 = vld [vmem:[%s776 + $0x1b0] sm:%s769]
                  %887 = vst [vmem:[%s777 + $0xd8] sm:%s769] %v886
                  %v888 = vld [vmem:[%s776 + $0x1b8] sm:%s769]
                  %889 = vst [vmem:[%s777 + $0xdc] sm:%s769] %v888
                  %v890 = vld [vmem:[%s776 + $0x1c0] sm:%s769]
                  %891 = vst [vmem:[%s777 + $0xe0] sm:%s769] %v890
                  %v892 = vld [vmem:[%s776 + $0x1c8] sm:%s769]
                  %893 = vst [vmem:[%s777 + $0xe4] sm:%s769] %v892
                  %v894 = vld [vmem:[%s776 + $0x1d0] sm:%s769]
                  %895 = vst [vmem:[%s777 + $0xe8] sm:%s769] %v894
                  %v896 = vld [vmem:[%s776 + $0x1d8] sm:%s769]
                  %897 = vst [vmem:[%s777 + $0xec] sm:%s769] %v896
                  %v898 = vld [vmem:[%s776 + $0x1e0] sm:%s769]
                  %899 = vst [vmem:[%s777 + $0xf0] sm:%s769] %v898
                  %v900 = vld [vmem:[%s776 + $0x1e8] sm:%s769]
                  %901 = vst [vmem:[%s777 + $0xf4] sm:%s769] %v900
                  %v902 = vld [vmem:[%s776 + $0x1f0] sm:%s769]
                  %903 = vst [vmem:[%s777 + $0xf8] sm:%s769] %v902
                  %v904 = vld [vmem:[%s776 + $0x1f8] sm:%s769]
                  %905 = vst [vmem:[%s777 + $0xfc] sm:%s769] %v904
                  %v906 = vld [vmem:[%s776 + $0x200] sm:%s769]
                  %907 = vst [vmem:[%s777 + $0x100] sm:%s769] %v906
                  %v908 = vld [vmem:[%s776 + $0x208] sm:%s769]
                  %909 = vst [vmem:[%s777 + $0x104] sm:%s769] %v908
                  %v910 = vld [vmem:[%s776 + $0x210] sm:%s769]
                  %911 = vst [vmem:[%s777 + $0x108] sm:%s769] %v910
                  %v912 = vld [vmem:[%s776 + $0x218] sm:%s769]
                  %913 = vst [vmem:[%s777 + $0x10c] sm:%s769] %v912
                  %v914 = vld [vmem:[%s776 + $0x220] sm:%s769]
                  %915 = vst [vmem:[%s777 + $0x110] sm:%s769] %v914
                  %v916 = vld [vmem:[%s776 + $0x228] sm:%s769]
                  %917 = vst [vmem:[%s777 + $0x114] sm:%s769] %v916
                  %v918 = vld [vmem:[%s776 + $0x230] sm:%s769]
                  %919 = vst [vmem:[%s777 + $0x118] sm:%s769] %v918
                  %v920 = vld [vmem:[%s776 + $0x238] sm:%s769]
                  %921 = vst [vmem:[%s777 + $0x11c] sm:%s769] %v920
                  %v922 = vld [vmem:[%s776 + $0x240] sm:%s769]
                  %923 = vst [vmem:[%s777 + $0x120] sm:%s769] %v922
                  %v924 = vld [vmem:[%s776 + $0x248] sm:%s769]
                  %925 = vst [vmem:[%s777 + $0x124] sm:%s769] %v924
                  %v926 = vld [vmem:[%s776 + $0x250] sm:%s769]
                  %927 = vst [vmem:[%s777 + $0x128] sm:%s769] %v926
                  %v928 = vld [vmem:[%s776 + $0x258] sm:%s769]
                  %929 = vst [vmem:[%s777 + $0x12c] sm:%s769] %v928
                  %v930 = vld [vmem:[%s776 + $0x260] sm:%s769]
                  %931 = vst [vmem:[%s777 + $0x130] sm:%s769] %v930
                  %v932 = vld [vmem:[%s776 + $0x268] sm:%s769]
                  %933 = vst [vmem:[%s777 + $0x134] sm:%s769] %v932
                  %v934 = vld [vmem:[%s776 + $0x270] sm:%s769]
                  %935 = vst [vmem:[%s777 + $0x138] sm:%s769] %v934
                  %v936 = vld [vmem:[%s776 + $0x278] sm:%s769]
                  %937 = vst [vmem:[%s777 + $0x13c] sm:%s769] %v936
                  %v938 = vld [vmem:[%s776 + $0x280] sm:%s769]
                  %939 = vst [vmem:[%s777 + $0x140] sm:%s769] %v938
                  %v940 = vld [vmem:[%s776 + $0x288] sm:%s769]
                  %941 = vst [vmem:[%s777 + $0x144] sm:%s769] %v940
                  %v942 = vld [vmem:[%s776 + $0x290] sm:%s769]
                  %943 = vst [vmem:[%s777 + $0x148] sm:%s769] %v942
                  %v944 = vld [vmem:[%s776 + $0x298] sm:%s769]
                  %945 = vst [vmem:[%s777 + $0x14c] sm:%s769] %v944
                  %v946 = vld [vmem:[%s776 + $0x2a0] sm:%s769]
                  %947 = vst [vmem:[%s777 + $0x150] sm:%s769] %v946
                  %v948 = vld [vmem:[%s776 + $0x2a8] sm:%s769]
                  %949 = vst [vmem:[%s777 + $0x154] sm:%s769] %v948
                  %v950 = vld [vmem:[%s776 + $0x2b0] sm:%s769]
                  %951 = vst [vmem:[%s777 + $0x158] sm:%s769] %v950
                  %v952 = vld [vmem:[%s776 + $0x2b8] sm:%s769]
                  %953 = vst [vmem:[%s777 + $0x15c] sm:%s769] %v952
                  %v954 = vld [vmem:[%s776 + $0x2c0] sm:%s769]
                  %955 = vst [vmem:[%s777 + $0x160] sm:%s769] %v954
                  %v956 = vld [vmem:[%s776 + $0x2c8] sm:%s769]
                  %957 = vst [vmem:[%s777 + $0x164] sm:%s769] %v956
                  %v958 = vld [vmem:[%s776 + $0x2d0] sm:%s769]
                  %959 = vst [vmem:[%s777 + $0x168] sm:%s769] %v958
                  %v960 = vld [vmem:[%s776 + $0x2d8] sm:%s769]
                  %961 = vst [vmem:[%s777 + $0x16c] sm:%s769] %v960
                  %v962 = vld [vmem:[%s776 + $0x2e0] sm:%s769]
                  %963 = vst [vmem:[%s777 + $0x170] sm:%s769] %v962
                  %v964 = vld [vmem:[%s776 + $0x2e8] sm:%s769]
                  %965 = vst [vmem:[%s777 + $0x174] sm:%s769] %v964
                  %v966 = vld [vmem:[%s776 + $0x2f0] sm:%s769]
                  %967 = vst [vmem:[%s777 + $0x178] sm:%s769] %v966
                  %v968 = vld [vmem:[%s776 + $0x2f8] sm:%s769]
                  %969 = vst [vmem:[%s777 + $0x17c] sm:%s769] %v968
                  %v970 = vld [vmem:[%s776 + $0x300] sm:%s769]
                  %971 = vst [vmem:[%s777 + $0x180] sm:%s769] %v970
                  %v972 = vld [vmem:[%s776 + $0x308] sm:%s769]
                  %973 = vst [vmem:[%s777 + $0x184] sm:%s769] %v972
                  %v974 = vld [vmem:[%s776 + $0x310] sm:%s769]
                  %975 = vst [vmem:[%s777 + $0x188] sm:%s769] %v974
                  %v976 = vld [vmem:[%s776 + $0x318] sm:%s769]
                  %977 = vst [vmem:[%s777 + $0x18c] sm:%s769] %v976
                  %v978 = vld [vmem:[%s776 + $0x320] sm:%s769]
                  %979 = vst [vmem:[%s777 + $0x190] sm:%s769] %v978
                  %v980 = vld [vmem:[%s776 + $0x328] sm:%s769]
                  %981 = vst [vmem:[%s777 + $0x194] sm:%s769] %v980
                  %v982 = vld [vmem:[%s776 + $0x330] sm:%s769]
                  %983 = vst [vmem:[%s777 + $0x198] sm:%s769] %v982
                  %v984 = vld [vmem:[%s776 + $0x338] sm:%s769]
                  %985 = vst [vmem:[%s777 + $0x19c] sm:%s769] %v984
                  %v986 = vld [vmem:[%s776 + $0x340] sm:%s769]
                  %987 = vst [vmem:[%s777 + $0x1a0] sm:%s769] %v986
                  %v988 = vld [vmem:[%s776 + $0x348] sm:%s769]
                  %989 = vst [vmem:[%s777 + $0x1a4] sm:%s769] %v988
                  %v990 = vld [vmem:[%s776 + $0x350] sm:%s769]
                  %991 = vst [vmem:[%s777 + $0x1a8] sm:%s769] %v990
                  %v992 = vld [vmem:[%s776 + $0x358] sm:%s769]
                  %993 = vst [vmem:[%s777 + $0x1ac] sm:%s769] %v992
                  %v994 = vld [vmem:[%s776 + $0x360] sm:%s769]
                  %995 = vst [vmem:[%s777 + $0x1b0] sm:%s769] %v994
                  %v996 = vld [vmem:[%s776 + $0x368] sm:%s769]
                  %997 = vst [vmem:[%s777 + $0x1b4] sm:%s769] %v996
                  %v998 = vld [vmem:[%s776 + $0x370] sm:%s769]
                  %999 = vst [vmem:[%s777 + $0x1b8] sm:%s769] %v998
                  %v1000 = vld [vmem:[%s776 + $0x378] sm:%s769]
                  %1001 = vst [vmem:[%s777 + $0x1bc] sm:%s769] %v1000
                  %v1002 = vld [vmem:[%s776 + $0x380] sm:%s769]
                  %1003 = vst [vmem:[%s777 + $0x1c0] sm:%s769] %v1002
                  %v1004 = vld [vmem:[%s776 + $0x388] sm:%s769]
                  %1005 = vst [vmem:[%s777 + $0x1c4] sm:%s769] %v1004
                  %v1006 = vld [vmem:[%s776 + $0x390] sm:%s769]
                  %1007 = vst [vmem:[%s777 + $0x1c8] sm:%s769] %v1006
                  %v1008 = vld [vmem:[%s776 + $0x398] sm:%s769]
                  %1009 = vst [vmem:[%s777 + $0x1cc] sm:%s769] %v1008
                  %v1010 = vld [vmem:[%s776 + $0x3a0] sm:%s769]
                  %1011 = vst [vmem:[%s777 + $0x1d0] sm:%s769] %v1010
                  %v1012 = vld [vmem:[%s776 + $0x3a8] sm:%s769]
                  %1013 = vst [vmem:[%s777 + $0x1d4] sm:%s769] %v1012
                  %v1014 = vld [vmem:[%s776 + $0x3b0] sm:%s769]
                  %1015 = vst [vmem:[%s777 + $0x1d8] sm:%s769] %v1014
                  %v1016 = vld [vmem:[%s776 + $0x3b8] sm:%s769]
                  %1017 = vst [vmem:[%s777 + $0x1dc] sm:%s769] %v1016
                  %v1018 = vld [vmem:[%s776 + $0x3c0] sm:%s769]
                  %1019 = vst [vmem:[%s777 + $0x1e0] sm:%s769] %v1018
                  %v1020 = vld [vmem:[%s776 + $0x3c8] sm:%s769]
                  %1021 = vst [vmem:[%s777 + $0x1e4] sm:%s769] %v1020
                  %v1022 = vld [vmem:[%s776 + $0x3d0] sm:%s769]
                  %1023 = vst [vmem:[%s777 + $0x1e8] sm:%s769] %v1022
                  %v1024 = vld [vmem:[%s776 + $0x3d8] sm:%s769]
                  %1025 = vst [vmem:[%s777 + $0x1ec] sm:%s769] %v1024
                  %v1026 = vld [vmem:[%s776 + $0x3e0] sm:%s769]
                  %1027 = vst [vmem:[%s777 + $0x1f0] sm:%s769] %v1026
                  %v1028 = vld [vmem:[%s776 + $0x3e8] sm:%s769]
                  %1029 = vst [vmem:[%s777 + $0x1f4] sm:%s769] %v1028
                  %v1030 = vld [vmem:[%s776 + $0x3f0] sm:%s769]
                  %1031 = vst [vmem:[%s777 + $0x1f8] sm:%s769] %v1030
                  %v1032 = vld [vmem:[%s776 + $0x3f8] sm:%s769]
                  %1033 = vst [vmem:[%s777 + $0x1fc] sm:%s769] %v1032
                  %v1034 = vld [vmem:[%s776 + $0x400] sm:%s769]
                  %1035 = vst [vmem:[%s777 + $0x200] sm:%s769] %v1034
                  %v1036 = vld [vmem:[%s776 + $0x408] sm:%s769]
                  %1037 = vst [vmem:[%s777 + $0x204] sm:%s769] %v1036
                  %v1038 = vld [vmem:[%s776 + $0x410] sm:%s769]
                  %1039 = vst [vmem:[%s777 + $0x208] sm:%s769] %v1038
                  %v1040 = vld [vmem:[%s776 + $0x418] sm:%s769]
                  %1041 = vst [vmem:[%s777 + $0x20c] sm:%s769] %v1040
                  %v1042 = vld [vmem:[%s776 + $0x420] sm:%s769]
                  %1043 = vst [vmem:[%s777 + $0x210] sm:%s769] %v1042
                  %v1044 = vld [vmem:[%s776 + $0x428] sm:%s769]
                  %1045 = vst [vmem:[%s777 + $0x214] sm:%s769] %v1044
                  %v1046 = vld [vmem:[%s776 + $0x430] sm:%s769]
                  %1047 = vst [vmem:[%s777 + $0x218] sm:%s769] %v1046
                  %v1048 = vld [vmem:[%s776 + $0x438] sm:%s769]
                  %1049 = vst [vmem:[%s777 + $0x21c] sm:%s769] %v1048
                  %v1050 = vld [vmem:[%s776 + $0x440] sm:%s769]
                  %1051 = vst [vmem:[%s777 + $0x220] sm:%s769] %v1050
                  %v1052 = vld [vmem:[%s776 + $0x448] sm:%s769]
                  %1053 = vst [vmem:[%s777 + $0x224] sm:%s769] %v1052
                  %v1054 = vld [vmem:[%s776 + $0x450] sm:%s769]
                  %1055 = vst [vmem:[%s777 + $0x228] sm:%s769] %v1054
                  %v1056 = vld [vmem:[%s776 + $0x458] sm:%s769]
                  %1057 = vst [vmem:[%s777 + $0x22c] sm:%s769] %v1056
                  %v1058 = vld [vmem:[%s776 + $0x460] sm:%s769]
                  %1059 = vst [vmem:[%s777 + $0x230] sm:%s769] %v1058
                  %v1060 = vld [vmem:[%s776 + $0x468] sm:%s769]
                  %1061 = vst [vmem:[%s777 + $0x234] sm:%s769] %v1060
                  %v1062 = vld [vmem:[%s776 + $0x470] sm:%s769]
                  %1063 = vst [vmem:[%s777 + $0x238] sm:%s769] %v1062
                  %v1064 = vld [vmem:[%s776 + $0x478] sm:%s769]
                  %1065 = vst [vmem:[%s777 + $0x23c] sm:%s769] %v1064
                  %v1066 = vld [vmem:[%s776 + $0x480] sm:%s769]
                  %1067 = vst [vmem:[%s777 + $0x240] sm:%s769] %v1066
                  %v1068 = vld [vmem:[%s776 + $0x488] sm:%s769]
                  %1069 = vst [vmem:[%s777 + $0x244] sm:%s769] %v1068
                  %v1070 = vld [vmem:[%s776 + $0x490] sm:%s769]
                  %1071 = vst [vmem:[%s777 + $0x248] sm:%s769] %v1070
                  %v1072 = vld [vmem:[%s776 + $0x498] sm:%s769]
                  %1073 = vst [vmem:[%s777 + $0x24c] sm:%s769] %v1072
                  %v1074 = vld [vmem:[%s776 + $0x4a0] sm:%s769]
                  %1075 = vst [vmem:[%s777 + $0x250] sm:%s769] %v1074
                  %v1076 = vld [vmem:[%s776 + $0x4a8] sm:%s769]
                  %1077 = vst [vmem:[%s777 + $0x254] sm:%s769] %v1076
                  %v1078 = vld [vmem:[%s776 + $0x4b0] sm:%s769]
                  %1079 = vst [vmem:[%s777 + $0x258] sm:%s769] %v1078
                  %v1080 = vld [vmem:[%s776 + $0x4b8] sm:%s769]
                  %1081 = vst [vmem:[%s777 + $0x25c] sm:%s769] %v1080
                  %v1082 = vld [vmem:[%s776 + $0x4c0] sm:%s769]
                  %1083 = vst [vmem:[%s777 + $0x260] sm:%s769] %v1082
                  %v1084 = vld [vmem:[%s776 + $0x4c8] sm:%s769]
                  %1085 = vst [vmem:[%s777 + $0x264] sm:%s769] %v1084
                  %v1086 = vld [vmem:[%s776 + $0x4d0] sm:%s769]
                  %1087 = vst [vmem:[%s777 + $0x268] sm:%s769] %v1086
                  %v1088 = vld [vmem:[%s776 + $0x4d8] sm:%s769]
                  %1089 = vst [vmem:[%s777 + $0x26c] sm:%s769] %v1088
                  %v1090 = vld [vmem:[%s776 + $0x4e0] sm:%s769]
                  %1091 = vst [vmem:[%s777 + $0x270] sm:%s769] %v1090
                  %v1092 = vld [vmem:[%s776 + $0x4e8] sm:%s769]
                  %1093 = vst [vmem:[%s777 + $0x274] sm:%s769] %v1092
                  %v1094 = vld [vmem:[%s776 + $0x4f0] sm:%s769]
                  %1095 = vst [vmem:[%s777 + $0x278] sm:%s769] %v1094
                  %v1096 = vld [vmem:[%s776 + $0x4f8] sm:%s769]
                  %1097 = vst [vmem:[%s777 + $0x27c] sm:%s769] %v1096
                  %v1098 = vld [vmem:[%s776 + $0x500] sm:%s769]
                  %1099 = vst [vmem:[%s777 + $0x280] sm:%s769] %v1098
                  %v1100 = vld [vmem:[%s776 + $0x508] sm:%s769]
                  %1101 = vst [vmem:[%s777 + $0x284] sm:%s769] %v1100
                  %v1102 = vld [vmem:[%s776 + $0x510] sm:%s769]
                  %1103 = vst [vmem:[%s777 + $0x288] sm:%s769] %v1102
                  %v1104 = vld [vmem:[%s776 + $0x518] sm:%s769]
                  %1105 = vst [vmem:[%s777 + $0x28c] sm:%s769] %v1104
                  %v1106 = vld [vmem:[%s776 + $0x520] sm:%s769]
                  %1107 = vst [vmem:[%s777 + $0x290] sm:%s769] %v1106
                  %v1108 = vld [vmem:[%s776 + $0x528] sm:%s769]
                  %1109 = vst [vmem:[%s777 + $0x294] sm:%s769] %v1108
                  %v1110 = vld [vmem:[%s776 + $0x530] sm:%s769]
                  %1111 = vst [vmem:[%s777 + $0x298] sm:%s769] %v1110
                  %v1112 = vld [vmem:[%s776 + $0x538] sm:%s769]
                  %1113 = vst [vmem:[%s777 + $0x29c] sm:%s769] %v1112
                  %v1114 = vld [vmem:[%s776 + $0x540] sm:%s769]
                  %1115 = vst [vmem:[%s777 + $0x2a0] sm:%s769] %v1114
                  %v1116 = vld [vmem:[%s776 + $0x548] sm:%s769]
                  %1117 = vst [vmem:[%s777 + $0x2a4] sm:%s769] %v1116
                  %v1118 = vld [vmem:[%s776 + $0x550] sm:%s769]
                  %1119 = vst [vmem:[%s777 + $0x2a8] sm:%s769] %v1118
                  %v1120 = vld [vmem:[%s776 + $0x558] sm:%s769]
                  %1121 = vst [vmem:[%s777 + $0x2ac] sm:%s769] %v1120
                  %v1122 = vld [vmem:[%s776 + $0x560] sm:%s769]
                  %1123 = vst [vmem:[%s777 + $0x2b0] sm:%s769] %v1122
                  %v1124 = vld [vmem:[%s776 + $0x568] sm:%s769]
                  %1125 = vst [vmem:[%s777 + $0x2b4] sm:%s769] %v1124
                  %v1126 = vld [vmem:[%s776 + $0x570] sm:%s769]
                  %1127 = vst [vmem:[%s777 + $0x2b8] sm:%s769] %v1126
                  %v1128 = vld [vmem:[%s776 + $0x578] sm:%s769]
                  %1129 = vst [vmem:[%s777 + $0x2bc] sm:%s769] %v1128
                  %v1130 = vld [vmem:[%s776 + $0x580] sm:%s769]
                  %1131 = vst [vmem:[%s777 + $0x2c0] sm:%s769] %v1130
                  %v1132 = vld [vmem:[%s776 + $0x588] sm:%s769]
                  %1133 = vst [vmem:[%s777 + $0x2c4] sm:%s769] %v1132
                  %v1134 = vld [vmem:[%s776 + $0x590] sm:%s769]
                  %1135 = vst [vmem:[%s777 + $0x2c8] sm:%s769] %v1134
                  %v1136 = vld [vmem:[%s776 + $0x598] sm:%s769]
                  %1137 = vst [vmem:[%s777 + $0x2cc] sm:%s769] %v1136
                  %v1138 = vld [vmem:[%s776 + $0x5a0] sm:%s769]
                  %1139 = vst [vmem:[%s777 + $0x2d0] sm:%s769] %v1138
                  %v1140 = vld [vmem:[%s776 + $0x5a8] sm:%s769]
                  %1141 = vst [vmem:[%s777 + $0x2d4] sm:%s769] %v1140
                  %v1142 = vld [vmem:[%s776 + $0x5b0] sm:%s769]
                  %1143 = vst [vmem:[%s777 + $0x2d8] sm:%s769] %v1142
                  %v1144 = vld [vmem:[%s776 + $0x5b8] sm:%s769]
                  %1145 = vst [vmem:[%s777 + $0x2dc] sm:%s769] %v1144
                  %v1146 = vld [vmem:[%s776 + $0x5c0] sm:%s769]
                  %1147 = vst [vmem:[%s777 + $0x2e0] sm:%s769] %v1146
                  %v1148 = vld [vmem:[%s776 + $0x5c8] sm:%s769]
                  %1149 = vst [vmem:[%s777 + $0x2e4] sm:%s769] %v1148
                  %v1150 = vld [vmem:[%s776 + $0x5d0] sm:%s769]
                  %1151 = vst [vmem:[%s777 + $0x2e8] sm:%s769] %v1150
                  %v1152 = vld [vmem:[%s776 + $0x5d8] sm:%s769]
                  %1153 = vst [vmem:[%s777 + $0x2ec] sm:%s769] %v1152
                  %v1154 = vld [vmem:[%s776 + $0x5e0] sm:%s769]
                  %1155 = vst [vmem:[%s777 + $0x2f0] sm:%s769] %v1154
                  %v1156 = vld [vmem:[%s776 + $0x5e8] sm:%s769]
                  %1157 = vst [vmem:[%s777 + $0x2f4] sm:%s769] %v1156
                  %v1158 = vld [vmem:[%s776 + $0x5f0] sm:%s769]
                  %1159 = vst [vmem:[%s777 + $0x2f8] sm:%s769] %v1158
                  %v1160 = vld [vmem:[%s776 + $0x5f8] sm:%s769]
                  %1161 = vst [vmem:[%s777 + $0x2fc] sm:%s769] %v1160
                  %v1162 = vld [vmem:[%s776 + $0x600] sm:%s769]
                  %1163 = vst [vmem:[%s777 + $0x300] sm:%s769] %v1162
                  %v1164 = vld [vmem:[%s776 + $0x608] sm:%s769]
                  %1165 = vst [vmem:[%s777 + $0x304] sm:%s769] %v1164
                  %v1166 = vld [vmem:[%s776 + $0x610] sm:%s769]
                  %1167 = vst [vmem:[%s777 + $0x308] sm:%s769] %v1166
                  %v1168 = vld [vmem:[%s776 + $0x618] sm:%s769]
                  %1169 = vst [vmem:[%s777 + $0x30c] sm:%s769] %v1168
                  %v1170 = vld [vmem:[%s776 + $0x620] sm:%s769]
                  %1171 = vst [vmem:[%s777 + $0x310] sm:%s769] %v1170
                  %v1172 = vld [vmem:[%s776 + $0x628] sm:%s769]
                  %1173 = vst [vmem:[%s777 + $0x314] sm:%s769] %v1172
                  %v1174 = vld [vmem:[%s776 + $0x630] sm:%s769]
                  %1175 = vst [vmem:[%s777 + $0x318] sm:%s769] %v1174
                  %v1176 = vld [vmem:[%s776 + $0x638] sm:%s769]
                  %1177 = vst [vmem:[%s777 + $0x31c] sm:%s769] %v1176
                  %v1178 = vld [vmem:[%s776 + $0x640] sm:%s769]
                  %1179 = vst [vmem:[%s777 + $0x320] sm:%s769] %v1178
                  %v1180 = vld [vmem:[%s776 + $0x648] sm:%s769]
                  %1181 = vst [vmem:[%s777 + $0x324] sm:%s769] %v1180
                  %v1182 = vld [vmem:[%s776 + $0x650] sm:%s769]
                  %1183 = vst [vmem:[%s777 + $0x328] sm:%s769] %v1182
                  %v1184 = vld [vmem:[%s776 + $0x658] sm:%s769]
                  %1185 = vst [vmem:[%s777 + $0x32c] sm:%s769] %v1184
                  %v1186 = vld [vmem:[%s776 + $0x660] sm:%s769]
                  %1187 = vst [vmem:[%s777 + $0x330] sm:%s769] %v1186
                  %v1188 = vld [vmem:[%s776 + $0x668] sm:%s769]
                  %1189 = vst [vmem:[%s777 + $0x334] sm:%s769] %v1188
                  %v1190 = vld [vmem:[%s776 + $0x670] sm:%s769]
                  %1191 = vst [vmem:[%s777 + $0x338] sm:%s769] %v1190
                  %v1192 = vld [vmem:[%s776 + $0x678] sm:%s769]
                  %1193 = vst [vmem:[%s777 + $0x33c] sm:%s769] %v1192
                  %v1194 = vld [vmem:[%s776 + $0x680] sm:%s769]
                  %1195 = vst [vmem:[%s777 + $0x340] sm:%s769] %v1194
                  %v1196 = vld [vmem:[%s776 + $0x688] sm:%s769]
                  %1197 = vst [vmem:[%s777 + $0x344] sm:%s769] %v1196
                  %v1198 = vld [vmem:[%s776 + $0x690] sm:%s769]
                  %1199 = vst [vmem:[%s777 + $0x348] sm:%s769] %v1198
                  %v1200 = vld [vmem:[%s776 + $0x698] sm:%s769]
                  %1201 = vst [vmem:[%s777 + $0x34c] sm:%s769] %v1200
                  %v1202 = vld [vmem:[%s776 + $0x6a0] sm:%s769]
                  %1203 = vst [vmem:[%s777 + $0x350] sm:%s769] %v1202
                  %v1204 = vld [vmem:[%s776 + $0x6a8] sm:%s769]
                  %1205 = vst [vmem:[%s777 + $0x354] sm:%s769] %v1204
                  %v1206 = vld [vmem:[%s776 + $0x6b0] sm:%s769]
                  %1207 = vst [vmem:[%s777 + $0x358] sm:%s769] %v1206
                  %v1208 = vld [vmem:[%s776 + $0x6b8] sm:%s769]
                  %1209 = vst [vmem:[%s777 + $0x35c] sm:%s769] %v1208
                  %v1210 = vld [vmem:[%s776 + $0x6c0] sm:%s769]
                  %1211 = vst [vmem:[%s777 + $0x360] sm:%s769] %v1210
                  %v1212 = vld [vmem:[%s776 + $0x6c8] sm:%s769]
                  %1213 = vst [vmem:[%s777 + $0x364] sm:%s769] %v1212
                  %v1214 = vld [vmem:[%s776 + $0x6d0] sm:%s769]
                  %1215 = vst [vmem:[%s777 + $0x368] sm:%s769] %v1214
                  %v1216 = vld [vmem:[%s776 + $0x6d8] sm:%s769]
                  %1217 = vst [vmem:[%s777 + $0x36c] sm:%s769] %v1216
                  %v1218 = vld [vmem:[%s776 + $0x6e0] sm:%s769]
                  %1219 = vst [vmem:[%s777 + $0x370] sm:%s769] %v1218
                  %v1220 = vld [vmem:[%s776 + $0x6e8] sm:%s769]
                  %1221 = vst [vmem:[%s777 + $0x374] sm:%s769] %v1220
                  %v1222 = vld [vmem:[%s776 + $0x6f0] sm:%s769]
                  %1223 = vst [vmem:[%s777 + $0x378] sm:%s769] %v1222
                  %v1224 = vld [vmem:[%s776 + $0x6f8] sm:%s769]
                  %1225 = vst [vmem:[%s777 + $0x37c] sm:%s769] %v1224
                  %v1226 = vld [vmem:[%s776 + $0x700] sm:%s769]
                  %1227 = vst [vmem:[%s777 + $0x380] sm:%s769] %v1226
                  %v1228 = vld [vmem:[%s776 + $0x708] sm:%s769]
                  %1229 = vst [vmem:[%s777 + $0x384] sm:%s769] %v1228
                  %v1230 = vld [vmem:[%s776 + $0x710] sm:%s769]
                  %1231 = vst [vmem:[%s777 + $0x388] sm:%s769] %v1230
                  %v1232 = vld [vmem:[%s776 + $0x718] sm:%s769]
                  %1233 = vst [vmem:[%s777 + $0x38c] sm:%s769] %v1232
                  %v1234 = vld [vmem:[%s776 + $0x720] sm:%s769]
                  %1235 = vst [vmem:[%s777 + $0x390] sm:%s769] %v1234
                  %v1236 = vld [vmem:[%s776 + $0x728] sm:%s769]
                  %1237 = vst [vmem:[%s777 + $0x394] sm:%s769] %v1236
                  %v1238 = vld [vmem:[%s776 + $0x730] sm:%s769]
                  %1239 = vst [vmem:[%s777 + $0x398] sm:%s769] %v1238
                  %v1240 = vld [vmem:[%s776 + $0x738] sm:%s769]
                  %1241 = vst [vmem:[%s777 + $0x39c] sm:%s769] %v1240
                  %v1242 = vld [vmem:[%s776 + $0x740] sm:%s769]
                  %1243 = vst [vmem:[%s777 + $0x3a0] sm:%s769] %v1242
                  %v1244 = vld [vmem:[%s776 + $0x748] sm:%s769]
                  %1245 = vst [vmem:[%s777 + $0x3a4] sm:%s769] %v1244
                  %v1246 = vld [vmem:[%s776 + $0x750] sm:%s769]
                  %1247 = vst [vmem:[%s777 + $0x3a8] sm:%s769] %v1246
                  %v1248 = vld [vmem:[%s776 + $0x758] sm:%s769]
                  %1249 = vst [vmem:[%s777 + $0x3ac] sm:%s769] %v1248
                  %v1250 = vld [vmem:[%s776 + $0x760] sm:%s769]
                  %1251 = vst [vmem:[%s777 + $0x3b0] sm:%s769] %v1250
                  %v1252 = vld [vmem:[%s776 + $0x768] sm:%s769]
                  %1253 = vst [vmem:[%s777 + $0x3b4] sm:%s769] %v1252
                  %v1254 = vld [vmem:[%s776 + $0x770] sm:%s769]
                  %1255 = vst [vmem:[%s777 + $0x3b8] sm:%s769] %v1254
                  %v1256 = vld [vmem:[%s776 + $0x778] sm:%s769]
                  %1257 = vst [vmem:[%s777 + $0x3bc] sm:%s769] %v1256
                  %v1258 = vld [vmem:[%s776 + $0x780] sm:%s769]
                  %1259 = vst [vmem:[%s777 + $0x3c0] sm:%s769] %v1258
                  %v1260 = vld [vmem:[%s776 + $0x788] sm:%s769]
                  %1261 = vst [vmem:[%s777 + $0x3c4] sm:%s769] %v1260
                  %v1262 = vld [vmem:[%s776 + $0x790] sm:%s769]
                  %1263 = vst [vmem:[%s777 + $0x3c8] sm:%s769] %v1262
                  %v1264 = vld [vmem:[%s776 + $0x798] sm:%s769]
                  %1265 = vst [vmem:[%s777 + $0x3cc] sm:%s769] %v1264
                  %v1266 = vld [vmem:[%s776 + $0x7a0] sm:%s769]
                  %1267 = vst [vmem:[%s777 + $0x3d0] sm:%s769] %v1266
                  %v1268 = vld [vmem:[%s776 + $0x7a8] sm:%s769]
                  %1269 = vst [vmem:[%s777 + $0x3d4] sm:%s769] %v1268
                  %v1270 = vld [vmem:[%s776 + $0x7b0] sm:%s769]
                  %1271 = vst [vmem:[%s777 + $0x3d8] sm:%s769] %v1270
                  %v1272 = vld [vmem:[%s776 + $0x7b8] sm:%s769]
                  %1273 = vst [vmem:[%s777 + $0x3dc] sm:%s769] %v1272
                  %v1274 = vld [vmem:[%s776 + $0x7c0] sm:%s769]
                  %1275 = vst [vmem:[%s777 + $0x3e0] sm:%s769] %v1274
                  %v1276 = vld [vmem:[%s776 + $0x7c8] sm:%s769]
                  %1277 = vst [vmem:[%s777 + $0x3e4] sm:%s769] %v1276
                  %v1278 = vld [vmem:[%s776 + $0x7d0] sm:%s769]
                  %1279 = vst [vmem:[%s777 + $0x3e8] sm:%s769] %v1278
                  %v1280 = vld [vmem:[%s776 + $0x7d8] sm:%s769]
                  %1281 = vst [vmem:[%s777 + $0x3ec] sm:%s769] %v1280
                  %v1282 = vld [vmem:[%s776 + $0x7e0] sm:%s769]
                  %1283 = vst [vmem:[%s777 + $0x3f0] sm:%s769] %v1282
                  %v1284 = vld [vmem:[%s776 + $0x7e8] sm:%s769]
                  %1285 = vst [vmem:[%s777 + $0x3f4] sm:%s769] %v1284
                  %v1286 = vld [vmem:[%s776 + $0x7f0] sm:%s769]
                  %1287 = vst [vmem:[%s777 + $0x3f8] sm:%s769] %v1286
                  %v1288 = vld [vmem:[%s776 + $0x7f8] sm:%s769]
                  %1289 = vst [vmem:[%s777 + $0x3fc] sm:%s769] %v1288
                  %v1290 = vld [vmem:[%s776 + $0x800] sm:%s769]
                  %1291 = vst [vmem:[%s777 + $0x400] sm:%s769] %v1290
                  %v1292 = vld [vmem:[%s776 + $0x808] sm:%s769]
                  %1293 = vst [vmem:[%s777 + $0x404] sm:%s769] %v1292
                  %v1294 = vld [vmem:[%s776 + $0x810] sm:%s769]
                  %1295 = vst [vmem:[%s777 + $0x408] sm:%s769] %v1294
                  %v1296 = vld [vmem:[%s776 + $0x818] sm:%s769]
                  %1297 = vst [vmem:[%s777 + $0x40c] sm:%s769] %v1296
                  %v1298 = vld [vmem:[%s776 + $0x820] sm:%s769]
                  %1299 = vst [vmem:[%s777 + $0x410] sm:%s769] %v1298
                  %v1300 = vld [vmem:[%s776 + $0x828] sm:%s769]
                  %1301 = vst [vmem:[%s777 + $0x414] sm:%s769] %v1300
                  %v1302 = vld [vmem:[%s776 + $0x830] sm:%s769]
                  %1303 = vst [vmem:[%s777 + $0x418] sm:%s769] %v1302
                  %v1304 = vld [vmem:[%s776 + $0x838] sm:%s769]
                  %1305 = vst [vmem:[%s777 + $0x41c] sm:%s769] %v1304
                  %v1306 = vld [vmem:[%s776 + $0x840] sm:%s769]
                  %1307 = vst [vmem:[%s777 + $0x420] sm:%s769] %v1306
                  %v1308 = vld [vmem:[%s776 + $0x848] sm:%s769]
                  %1309 = vst [vmem:[%s777 + $0x424] sm:%s769] %v1308
                  %v1310 = vld [vmem:[%s776 + $0x850] sm:%s769]
                  %1311 = vst [vmem:[%s777 + $0x428] sm:%s769] %v1310
                  %v1312 = vld [vmem:[%s776 + $0x858] sm:%s769]
                  %1313 = vst [vmem:[%s777 + $0x42c] sm:%s769] %v1312
                  %v1314 = vld [vmem:[%s776 + $0x860] sm:%s769]
                  %1315 = vst [vmem:[%s777 + $0x430] sm:%s769] %v1314
                  %v1316 = vld [vmem:[%s776 + $0x868] sm:%s769]
                  %1317 = vst [vmem:[%s777 + $0x434] sm:%s769] %v1316
                  %v1318 = vld [vmem:[%s776 + $0x870] sm:%s769]
                  %1319 = vst [vmem:[%s777 + $0x438] sm:%s769] %v1318
                  %v1320 = vld [vmem:[%s776 + $0x878] sm:%s769]
                  %1321 = vst [vmem:[%s777 + $0x43c] sm:%s769] %v1320
                  %v1322 = vld [vmem:[%s776 + $0x880] sm:%s769]
                  %1323 = vst [vmem:[%s777 + $0x440] sm:%s769] %v1322
                  %v1324 = vld [vmem:[%s776 + $0x888] sm:%s769]
                  %1325 = vst [vmem:[%s777 + $0x444] sm:%s769] %v1324
                  %v1326 = vld [vmem:[%s776 + $0x890] sm:%s769]
                  %1327 = vst [vmem:[%s777 + $0x448] sm:%s769] %v1326
                  %v1328 = vld [vmem:[%s776 + $0x898] sm:%s769]
                  %1329 = vst [vmem:[%s777 + $0x44c] sm:%s769] %v1328
                  %v1330 = vld [vmem:[%s776 + $0x8a0] sm:%s769]
                  %1331 = vst [vmem:[%s777 + $0x450] sm:%s769] %v1330
                  %v1332 = vld [vmem:[%s776 + $0x8a8] sm:%s769]
                  %1333 = vst [vmem:[%s777 + $0x454] sm:%s769] %v1332
                  %v1334 = vld [vmem:[%s776 + $0x8b0] sm:%s769]
                  %1335 = vst [vmem:[%s777 + $0x458] sm:%s769] %v1334
                  %v1336 = vld [vmem:[%s776 + $0x8b8] sm:%s769]
                  %1337 = vst [vmem:[%s777 + $0x45c] sm:%s769] %v1336
                  %v1338 = vld [vmem:[%s776 + $0x8c0] sm:%s769]
                  %1339 = vst [vmem:[%s777 + $0x460] sm:%s769] %v1338
                  %v1340 = vld [vmem:[%s776 + $0x8c8] sm:%s769]
                  %1341 = vst [vmem:[%s777 + $0x464] sm:%s769] %v1340
                  %v1342 = vld [vmem:[%s776 + $0x8d0] sm:%s769]
                  %1343 = vst [vmem:[%s777 + $0x468] sm:%s769] %v1342
                  %v1344 = vld [vmem:[%s776 + $0x8d8] sm:%s769]
                  %1345 = vst [vmem:[%s777 + $0x46c] sm:%s769] %v1344
                  %v1346 = vld [vmem:[%s776 + $0x8e0] sm:%s769]
                  %1347 = vst [vmem:[%s777 + $0x470] sm:%s769] %v1346
                  %v1348 = vld [vmem:[%s776 + $0x8e8] sm:%s769]
                  %1349 = vst [vmem:[%s777 + $0x474] sm:%s769] %v1348
                  %v1350 = vld [vmem:[%s776 + $0x8f0] sm:%s769]
                  %1351 = vst [vmem:[%s777 + $0x478] sm:%s769] %v1350
                  %v1352 = vld [vmem:[%s776 + $0x8f8] sm:%s769]
                  %1353 = vst [vmem:[%s777 + $0x47c] sm:%s769] %v1352
                $region59: #{relu_conv_bn_relu.1} parent=46 // loop_footer
                  %s775 = sadd.s32 1, %s771
                $region60: #{relu_conv_bn_relu.1} parent=46 // loop_footer_branch
                  %770 = sbr.rel target = $region56
                $region61: #{relu_conv_bn_relu.1} parent=46 // loop_exit
                  _
              $region47: #{relu_conv_bn_relu.1} parent=31 // pred_fallthru
                _
            $region32: #{relu_conv_bn_relu.1} parent=27 // pred_fallthru
              _
            // Predicated region
            $region33: #{relu_conv_bn_relu.1} parent=27 // pred_check
              _
            $region34: #{relu_conv_bn_relu.1} parent=27 // pred_check_branch
              %171 = sbr.rel (0) target = $region36
            $region35: #{relu_conv_bn_relu.1} parent=27 // pred_region
              %s173 = ssub.s32 16, 1
              loop: start=0, step=1, limit=1
              $region37: #{relu_conv_bn_relu.1} parent=35 // loop_pre_header
                _
              $region38: #{relu_conv_bn_relu.1} parent=35 // loop_header
                %s175 = sphi 0, %s179
                %p176 = scmp.ge.s32.totalorder %s175, 1
                %s180 = sphi %s165, %s165
                %s181 = sphi %s163, %s163
              $region39: #{relu_conv_bn_relu.1} parent=35 // loop_header_branch
                %178 = sbr.rel (%p176) target = $region43
              $region40: #{relu_conv_bn_relu.1} parent=35 // loop_body
                %v182 = vld [vmem:[%s180] sm:%s173]
                %183 = vst [vmem:[%s181] sm:%s173] %v182
                %v184 = vld [vmem:[%s180 + $0x8] sm:%s173]
                %185 = vst [vmem:[%s181 + $0x4] sm:%s173] %v184
                %v186 = vld [vmem:[%s180 + $0x10] sm:%s173]
                %187 = vst [vmem:[%s181 + $0x8] sm:%s173] %v186
                %v188 = vld [vmem:[%s180 + $0x18] sm:%s173]
                %189 = vst [vmem:[%s181 + $0xc] sm:%s173] %v188
                %v190 = vld [vmem:[%s180 + $0x20] sm:%s173]
                %191 = vst [vmem:[%s181 + $0x10] sm:%s173] %v190
                %v192 = vld [vmem:[%s180 + $0x28] sm:%s173]
                %193 = vst [vmem:[%s181 + $0x14] sm:%s173] %v192
                %v194 = vld [vmem:[%s180 + $0x30] sm:%s173]
                %195 = vst [vmem:[%s181 + $0x18] sm:%s173] %v194
                %v196 = vld [vmem:[%s180 + $0x38] sm:%s173]
                %197 = vst [vmem:[%s181 + $0x1c] sm:%s173] %v196
                %v198 = vld [vmem:[%s180 + $0x40] sm:%s173]
                %199 = vst [vmem:[%s181 + $0x20] sm:%s173] %v198
                %v200 = vld [vmem:[%s180 + $0x48] sm:%s173]
                %201 = vst [vmem:[%s181 + $0x24] sm:%s173] %v200
                %v202 = vld [vmem:[%s180 + $0x50] sm:%s173]
                %203 = vst [vmem:[%s181 + $0x28] sm:%s173] %v202
                %v204 = vld [vmem:[%s180 + $0x58] sm:%s173]
                %205 = vst [vmem:[%s181 + $0x2c] sm:%s173] %v204
                %v206 = vld [vmem:[%s180 + $0x60] sm:%s173]
                %207 = vst [vmem:[%s181 + $0x30] sm:%s173] %v206
                %v208 = vld [vmem:[%s180 + $0x68] sm:%s173]
                %209 = vst [vmem:[%s181 + $0x34] sm:%s173] %v208
                %v210 = vld [vmem:[%s180 + $0x70] sm:%s173]
                %211 = vst [vmem:[%s181 + $0x38] sm:%s173] %v210
                %v212 = vld [vmem:[%s180 + $0x78] sm:%s173]
                %213 = vst [vmem:[%s181 + $0x3c] sm:%s173] %v212
                %v214 = vld [vmem:[%s180 + $0x80] sm:%s173]
                %215 = vst [vmem:[%s181 + $0x40] sm:%s173] %v214
                %v216 = vld [vmem:[%s180 + $0x88] sm:%s173]
                %217 = vst [vmem:[%s181 + $0x44] sm:%s173] %v216
                %v218 = vld [vmem:[%s180 + $0x90] sm:%s173]
                %219 = vst [vmem:[%s181 + $0x48] sm:%s173] %v218
                %v220 = vld [vmem:[%s180 + $0x98] sm:%s173]
                %221 = vst [vmem:[%s181 + $0x4c] sm:%s173] %v220
                %v222 = vld [vmem:[%s180 + $0xa0] sm:%s173]
                %223 = vst [vmem:[%s181 + $0x50] sm:%s173] %v222
                %v224 = vld [vmem:[%s180 + $0xa8] sm:%s173]
                %225 = vst [vmem:[%s181 + $0x54] sm:%s173] %v224
                %v226 = vld [vmem:[%s180 + $0xb0] sm:%s173]
                %227 = vst [vmem:[%s181 + $0x58] sm:%s173] %v226
                %v228 = vld [vmem:[%s180 + $0xb8] sm:%s173]
                %229 = vst [vmem:[%s181 + $0x5c] sm:%s173] %v228
                %v230 = vld [vmem:[%s180 + $0xc0] sm:%s173]
                %231 = vst [vmem:[%s181 + $0x60] sm:%s173] %v230
                %v232 = vld [vmem:[%s180 + $0xc8] sm:%s173]
                %233 = vst [vmem:[%s181 + $0x64] sm:%s173] %v232
                %v234 = vld [vmem:[%s180 + $0xd0] sm:%s173]
                %235 = vst [vmem:[%s181 + $0x68] sm:%s173] %v234
                %v236 = vld [vmem:[%s180 + $0xd8] sm:%s173]
                %237 = vst [vmem:[%s181 + $0x6c] sm:%s173] %v236
                %v238 = vld [vmem:[%s180 + $0xe0] sm:%s173]
                %239 = vst [vmem:[%s181 + $0x70] sm:%s173] %v238
                %v240 = vld [vmem:[%s180 + $0xe8] sm:%s173]
                %241 = vst [vmem:[%s181 + $0x74] sm:%s173] %v240
                %v242 = vld [vmem:[%s180 + $0xf0] sm:%s173]
                %243 = vst [vmem:[%s181 + $0x78] sm:%s173] %v242
                %v244 = vld [vmem:[%s180 + $0xf8] sm:%s173]
                %245 = vst [vmem:[%s181 + $0x7c] sm:%s173] %v244
                %v246 = vld [vmem:[%s180 + $0x100] sm:%s173]
                %247 = vst [vmem:[%s181 + $0x80] sm:%s173] %v246
                %v248 = vld [vmem:[%s180 + $0x108] sm:%s173]
                %249 = vst [vmem:[%s181 + $0x84] sm:%s173] %v248
                %v250 = vld [vmem:[%s180 + $0x110] sm:%s173]
                %251 = vst [vmem:[%s181 + $0x88] sm:%s173] %v250
                %v252 = vld [vmem:[%s180 + $0x118] sm:%s173]
                %253 = vst [vmem:[%s181 + $0x8c] sm:%s173] %v252
                %v254 = vld [vmem:[%s180 + $0x120] sm:%s173]
                %255 = vst [vmem:[%s181 + $0x90] sm:%s173] %v254
                %v256 = vld [vmem:[%s180 + $0x128] sm:%s173]
                %257 = vst [vmem:[%s181 + $0x94] sm:%s173] %v256
                %v258 = vld [vmem:[%s180 + $0x130] sm:%s173]
                %259 = vst [vmem:[%s181 + $0x98] sm:%s173] %v258
                %v260 = vld [vmem:[%s180 + $0x138] sm:%s173]
                %261 = vst [vmem:[%s181 + $0x9c] sm:%s173] %v260
                %v262 = vld [vmem:[%s180 + $0x140] sm:%s173]
                %263 = vst [vmem:[%s181 + $0xa0] sm:%s173] %v262
                %v264 = vld [vmem:[%s180 + $0x148] sm:%s173]
                %265 = vst [vmem:[%s181 + $0xa4] sm:%s173] %v264
                %v266 = vld [vmem:[%s180 + $0x150] sm:%s173]
                %267 = vst [vmem:[%s181 + $0xa8] sm:%s173] %v266
                %v268 = vld [vmem:[%s180 + $0x158] sm:%s173]
                %269 = vst [vmem:[%s181 + $0xac] sm:%s173] %v268
                %v270 = vld [vmem:[%s180 + $0x160] sm:%s173]
                %271 = vst [vmem:[%s181 + $0xb0] sm:%s173] %v270
                %v272 = vld [vmem:[%s180 + $0x168] sm:%s173]
                %273 = vst [vmem:[%s181 + $0xb4] sm:%s173] %v272
                %v274 = vld [vmem:[%s180 + $0x170] sm:%s173]
                %275 = vst [vmem:[%s181 + $0xb8] sm:%s173] %v274
                %v276 = vld [vmem:[%s180 + $0x178] sm:%s173]
                %277 = vst [vmem:[%s181 + $0xbc] sm:%s173] %v276
                %v278 = vld [vmem:[%s180 + $0x180] sm:%s173]
                %279 = vst [vmem:[%s181 + $0xc0] sm:%s173] %v278
                %v280 = vld [vmem:[%s180 + $0x188] sm:%s173]
                %281 = vst [vmem:[%s181 + $0xc4] sm:%s173] %v280
                %v282 = vld [vmem:[%s180 + $0x190] sm:%s173]
                %283 = vst [vmem:[%s181 + $0xc8] sm:%s173] %v282
                %v284 = vld [vmem:[%s180 + $0x198] sm:%s173]
                %285 = vst [vmem:[%s181 + $0xcc] sm:%s173] %v284
                %v286 = vld [vmem:[%s180 + $0x1a0] sm:%s173]
                %287 = vst [vmem:[%s181 + $0xd0] sm:%s173] %v286
                %v288 = vld [vmem:[%s180 + $0x1a8] sm:%s173]
                %289 = vst [vmem:[%s181 + $0xd4] sm:%s173] %v288
                %v290 = vld [vmem:[%s180 + $0x1b0] sm:%s173]
                %291 = vst [vmem:[%s181 + $0xd8] sm:%s173] %v290
                %v292 = vld [vmem:[%s180 + $0x1b8] sm:%s173]
                %293 = vst [vmem:[%s181 + $0xdc] sm:%s173] %v292
                %v294 = vld [vmem:[%s180 + $0x1c0] sm:%s173]
                %295 = vst [vmem:[%s181 + $0xe0] sm:%s173] %v294
                %v296 = vld [vmem:[%s180 + $0x1c8] sm:%s173]
                %297 = vst [vmem:[%s181 + $0xe4] sm:%s173] %v296
                %v298 = vld [vmem:[%s180 + $0x1d0] sm:%s173]
                %299 = vst [vmem:[%s181 + $0xe8] sm:%s173] %v298
                %v300 = vld [vmem:[%s180 + $0x1d8] sm:%s173]
                %301 = vst [vmem:[%s181 + $0xec] sm:%s173] %v300
                %v302 = vld [vmem:[%s180 + $0x1e0] sm:%s173]
                %303 = vst [vmem:[%s181 + $0xf0] sm:%s173] %v302
                %v304 = vld [vmem:[%s180 + $0x1e8] sm:%s173]
                %305 = vst [vmem:[%s181 + $0xf4] sm:%s173] %v304
                %v306 = vld [vmem:[%s180 + $0x1f0] sm:%s173]
                %307 = vst [vmem:[%s181 + $0xf8] sm:%s173] %v306
                %v308 = vld [vmem:[%s180 + $0x1f8] sm:%s173]
                %309 = vst [vmem:[%s181 + $0xfc] sm:%s173] %v308
                %v310 = vld [vmem:[%s180 + $0x200] sm:%s173]
                %311 = vst [vmem:[%s181 + $0x100] sm:%s173] %v310
                %v312 = vld [vmem:[%s180 + $0x208] sm:%s173]
                %313 = vst [vmem:[%s181 + $0x104] sm:%s173] %v312
                %v314 = vld [vmem:[%s180 + $0x210] sm:%s173]
                %315 = vst [vmem:[%s181 + $0x108] sm:%s173] %v314
                %v316 = vld [vmem:[%s180 + $0x218] sm:%s173]
                %317 = vst [vmem:[%s181 + $0x10c] sm:%s173] %v316
                %v318 = vld [vmem:[%s180 + $0x220] sm:%s173]
                %319 = vst [vmem:[%s181 + $0x110] sm:%s173] %v318
                %v320 = vld [vmem:[%s180 + $0x228] sm:%s173]
                %321 = vst [vmem:[%s181 + $0x114] sm:%s173] %v320
                %v322 = vld [vmem:[%s180 + $0x230] sm:%s173]
                %323 = vst [vmem:[%s181 + $0x118] sm:%s173] %v322
                %v324 = vld [vmem:[%s180 + $0x238] sm:%s173]
                %325 = vst [vmem:[%s181 + $0x11c] sm:%s173] %v324
                %v326 = vld [vmem:[%s180 + $0x240] sm:%s173]
                %327 = vst [vmem:[%s181 + $0x120] sm:%s173] %v326
                %v328 = vld [vmem:[%s180 + $0x248] sm:%s173]
                %329 = vst [vmem:[%s181 + $0x124] sm:%s173] %v328
                %v330 = vld [vmem:[%s180 + $0x250] sm:%s173]
                %331 = vst [vmem:[%s181 + $0x128] sm:%s173] %v330
                %v332 = vld [vmem:[%s180 + $0x258] sm:%s173]
                %333 = vst [vmem:[%s181 + $0x12c] sm:%s173] %v332
                %v334 = vld [vmem:[%s180 + $0x260] sm:%s173]
                %335 = vst [vmem:[%s181 + $0x130] sm:%s173] %v334
                %v336 = vld [vmem:[%s180 + $0x268] sm:%s173]
                %337 = vst [vmem:[%s181 + $0x134] sm:%s173] %v336
                %v338 = vld [vmem:[%s180 + $0x270] sm:%s173]
                %339 = vst [vmem:[%s181 + $0x138] sm:%s173] %v338
                %v340 = vld [vmem:[%s180 + $0x278] sm:%s173]
                %341 = vst [vmem:[%s181 + $0x13c] sm:%s173] %v340
                %v342 = vld [vmem:[%s180 + $0x280] sm:%s173]
                %343 = vst [vmem:[%s181 + $0x140] sm:%s173] %v342
                %v344 = vld [vmem:[%s180 + $0x288] sm:%s173]
                %345 = vst [vmem:[%s181 + $0x144] sm:%s173] %v344
                %v346 = vld [vmem:[%s180 + $0x290] sm:%s173]
                %347 = vst [vmem:[%s181 + $0x148] sm:%s173] %v346
                %v348 = vld [vmem:[%s180 + $0x298] sm:%s173]
                %349 = vst [vmem:[%s181 + $0x14c] sm:%s173] %v348
                %v350 = vld [vmem:[%s180 + $0x2a0] sm:%s173]
                %351 = vst [vmem:[%s181 + $0x150] sm:%s173] %v350
                %v352 = vld [vmem:[%s180 + $0x2a8] sm:%s173]
                %353 = vst [vmem:[%s181 + $0x154] sm:%s173] %v352
                %v354 = vld [vmem:[%s180 + $0x2b0] sm:%s173]
                %355 = vst [vmem:[%s181 + $0x158] sm:%s173] %v354
                %v356 = vld [vmem:[%s180 + $0x2b8] sm:%s173]
                %357 = vst [vmem:[%s181 + $0x15c] sm:%s173] %v356
                %v358 = vld [vmem:[%s180 + $0x2c0] sm:%s173]
                %359 = vst [vmem:[%s181 + $0x160] sm:%s173] %v358
                %v360 = vld [vmem:[%s180 + $0x2c8] sm:%s173]
                %361 = vst [vmem:[%s181 + $0x164] sm:%s173] %v360
                %v362 = vld [vmem:[%s180 + $0x2d0] sm:%s173]
                %363 = vst [vmem:[%s181 + $0x168] sm:%s173] %v362
                %v364 = vld [vmem:[%s180 + $0x2d8] sm:%s173]
                %365 = vst [vmem:[%s181 + $0x16c] sm:%s173] %v364
                %v366 = vld [vmem:[%s180 + $0x2e0] sm:%s173]
                %367 = vst [vmem:[%s181 + $0x170] sm:%s173] %v366
                %v368 = vld [vmem:[%s180 + $0x2e8] sm:%s173]
                %369 = vst [vmem:[%s181 + $0x174] sm:%s173] %v368
                %v370 = vld [vmem:[%s180 + $0x2f0] sm:%s173]
                %371 = vst [vmem:[%s181 + $0x178] sm:%s173] %v370
                %v372 = vld [vmem:[%s180 + $0x2f8] sm:%s173]
                %373 = vst [vmem:[%s181 + $0x17c] sm:%s173] %v372
                %v374 = vld [vmem:[%s180 + $0x300] sm:%s173]
                %375 = vst [vmem:[%s181 + $0x180] sm:%s173] %v374
                %v376 = vld [vmem:[%s180 + $0x308] sm:%s173]
                %377 = vst [vmem:[%s181 + $0x184] sm:%s173] %v376
                %v378 = vld [vmem:[%s180 + $0x310] sm:%s173]
                %379 = vst [vmem:[%s181 + $0x188] sm:%s173] %v378
                %v380 = vld [vmem:[%s180 + $0x318] sm:%s173]
                %381 = vst [vmem:[%s181 + $0x18c] sm:%s173] %v380
                %v382 = vld [vmem:[%s180 + $0x320] sm:%s173]
                %383 = vst [vmem:[%s181 + $0x190] sm:%s173] %v382
                %v384 = vld [vmem:[%s180 + $0x328] sm:%s173]
                %385 = vst [vmem:[%s181 + $0x194] sm:%s173] %v384
                %v386 = vld [vmem:[%s180 + $0x330] sm:%s173]
                %387 = vst [vmem:[%s181 + $0x198] sm:%s173] %v386
                %v388 = vld [vmem:[%s180 + $0x338] sm:%s173]
                %389 = vst [vmem:[%s181 + $0x19c] sm:%s173] %v388
                %v390 = vld [vmem:[%s180 + $0x340] sm:%s173]
                %391 = vst [vmem:[%s181 + $0x1a0] sm:%s173] %v390
                %v392 = vld [vmem:[%s180 + $0x348] sm:%s173]
                %393 = vst [vmem:[%s181 + $0x1a4] sm:%s173] %v392
                %v394 = vld [vmem:[%s180 + $0x350] sm:%s173]
                %395 = vst [vmem:[%s181 + $0x1a8] sm:%s173] %v394
                %v396 = vld [vmem:[%s180 + $0x358] sm:%s173]
                %397 = vst [vmem:[%s181 + $0x1ac] sm:%s173] %v396
                %v398 = vld [vmem:[%s180 + $0x360] sm:%s173]
                %399 = vst [vmem:[%s181 + $0x1b0] sm:%s173] %v398
                %v400 = vld [vmem:[%s180 + $0x368] sm:%s173]
                %401 = vst [vmem:[%s181 + $0x1b4] sm:%s173] %v400
                %v402 = vld [vmem:[%s180 + $0x370] sm:%s173]
                %403 = vst [vmem:[%s181 + $0x1b8] sm:%s173] %v402
                %v404 = vld [vmem:[%s180 + $0x378] sm:%s173]
                %405 = vst [vmem:[%s181 + $0x1bc] sm:%s173] %v404
                %v406 = vld [vmem:[%s180 + $0x380] sm:%s173]
                %407 = vst [vmem:[%s181 + $0x1c0] sm:%s173] %v406
                %v408 = vld [vmem:[%s180 + $0x388] sm:%s173]
                %409 = vst [vmem:[%s181 + $0x1c4] sm:%s173] %v408
                %v410 = vld [vmem:[%s180 + $0x390] sm:%s173]
                %411 = vst [vmem:[%s181 + $0x1c8] sm:%s173] %v410
                %v412 = vld [vmem:[%s180 + $0x398] sm:%s173]
                %413 = vst [vmem:[%s181 + $0x1cc] sm:%s173] %v412
                %v414 = vld [vmem:[%s180 + $0x3a0] sm:%s173]
                %415 = vst [vmem:[%s181 + $0x1d0] sm:%s173] %v414
                %v416 = vld [vmem:[%s180 + $0x3a8] sm:%s173]
                %417 = vst [vmem:[%s181 + $0x1d4] sm:%s173] %v416
                %v418 = vld [vmem:[%s180 + $0x3b0] sm:%s173]
                %419 = vst [vmem:[%s181 + $0x1d8] sm:%s173] %v418
                %v420 = vld [vmem:[%s180 + $0x3b8] sm:%s173]
                %421 = vst [vmem:[%s181 + $0x1dc] sm:%s173] %v420
                %v422 = vld [vmem:[%s180 + $0x3c0] sm:%s173]
                %423 = vst [vmem:[%s181 + $0x1e0] sm:%s173] %v422
                %v424 = vld [vmem:[%s180 + $0x3c8] sm:%s173]
                %425 = vst [vmem:[%s181 + $0x1e4] sm:%s173] %v424
                %v426 = vld [vmem:[%s180 + $0x3d0] sm:%s173]
                %427 = vst [vmem:[%s181 + $0x1e8] sm:%s173] %v426
                %v428 = vld [vmem:[%s180 + $0x3d8] sm:%s173]
                %429 = vst [vmem:[%s181 + $0x1ec] sm:%s173] %v428
                %v430 = vld [vmem:[%s180 + $0x3e0] sm:%s173]
                %431 = vst [vmem:[%s181 + $0x1f0] sm:%s173] %v430
                %v432 = vld [vmem:[%s180 + $0x3e8] sm:%s173]
                %433 = vst [vmem:[%s181 + $0x1f4] sm:%s173] %v432
                %v434 = vld [vmem:[%s180 + $0x3f0] sm:%s173]
                %435 = vst [vmem:[%s181 + $0x1f8] sm:%s173] %v434
                %v436 = vld [vmem:[%s180 + $0x3f8] sm:%s173]
                %437 = vst [vmem:[%s181 + $0x1fc] sm:%s173] %v436
                %v438 = vld [vmem:[%s180 + $0x400] sm:%s173]
                %439 = vst [vmem:[%s181 + $0x200] sm:%s173] %v438
                %v440 = vld [vmem:[%s180 + $0x408] sm:%s173]
                %441 = vst [vmem:[%s181 + $0x204] sm:%s173] %v440
                %v442 = vld [vmem:[%s180 + $0x410] sm:%s173]
                %443 = vst [vmem:[%s181 + $0x208] sm:%s173] %v442
                %v444 = vld [vmem:[%s180 + $0x418] sm:%s173]
                %445 = vst [vmem:[%s181 + $0x20c] sm:%s173] %v444
                %v446 = vld [vmem:[%s180 + $0x420] sm:%s173]
                %447 = vst [vmem:[%s181 + $0x210] sm:%s173] %v446
                %v448 = vld [vmem:[%s180 + $0x428] sm:%s173]
                %449 = vst [vmem:[%s181 + $0x214] sm:%s173] %v448
                %v450 = vld [vmem:[%s180 + $0x430] sm:%s173]
                %451 = vst [vmem:[%s181 + $0x218] sm:%s173] %v450
                %v452 = vld [vmem:[%s180 + $0x438] sm:%s173]
                %453 = vst [vmem:[%s181 + $0x21c] sm:%s173] %v452
                %v454 = vld [vmem:[%s180 + $0x440] sm:%s173]
                %455 = vst [vmem:[%s181 + $0x220] sm:%s173] %v454
                %v456 = vld [vmem:[%s180 + $0x448] sm:%s173]
                %457 = vst [vmem:[%s181 + $0x224] sm:%s173] %v456
                %v458 = vld [vmem:[%s180 + $0x450] sm:%s173]
                %459 = vst [vmem:[%s181 + $0x228] sm:%s173] %v458
                %v460 = vld [vmem:[%s180 + $0x458] sm:%s173]
                %461 = vst [vmem:[%s181 + $0x22c] sm:%s173] %v460
                %v462 = vld [vmem:[%s180 + $0x460] sm:%s173]
                %463 = vst [vmem:[%s181 + $0x230] sm:%s173] %v462
                %v464 = vld [vmem:[%s180 + $0x468] sm:%s173]
                %465 = vst [vmem:[%s181 + $0x234] sm:%s173] %v464
                %v466 = vld [vmem:[%s180 + $0x470] sm:%s173]
                %467 = vst [vmem:[%s181 + $0x238] sm:%s173] %v466
                %v468 = vld [vmem:[%s180 + $0x478] sm:%s173]
                %469 = vst [vmem:[%s181 + $0x23c] sm:%s173] %v468
                %v470 = vld [vmem:[%s180 + $0x480] sm:%s173]
                %471 = vst [vmem:[%s181 + $0x240] sm:%s173] %v470
                %v472 = vld [vmem:[%s180 + $0x488] sm:%s173]
                %473 = vst [vmem:[%s181 + $0x244] sm:%s173] %v472
                %v474 = vld [vmem:[%s180 + $0x490] sm:%s173]
                %475 = vst [vmem:[%s181 + $0x248] sm:%s173] %v474
                %v476 = vld [vmem:[%s180 + $0x498] sm:%s173]
                %477 = vst [vmem:[%s181 + $0x24c] sm:%s173] %v476
                %v478 = vld [vmem:[%s180 + $0x4a0] sm:%s173]
                %479 = vst [vmem:[%s181 + $0x250] sm:%s173] %v478
                %v480 = vld [vmem:[%s180 + $0x4a8] sm:%s173]
                %481 = vst [vmem:[%s181 + $0x254] sm:%s173] %v480
                %v482 = vld [vmem:[%s180 + $0x4b0] sm:%s173]
                %483 = vst [vmem:[%s181 + $0x258] sm:%s173] %v482
                %v484 = vld [vmem:[%s180 + $0x4b8] sm:%s173]
                %485 = vst [vmem:[%s181 + $0x25c] sm:%s173] %v484
                %v486 = vld [vmem:[%s180 + $0x4c0] sm:%s173]
                %487 = vst [vmem:[%s181 + $0x260] sm:%s173] %v486
                %v488 = vld [vmem:[%s180 + $0x4c8] sm:%s173]
                %489 = vst [vmem:[%s181 + $0x264] sm:%s173] %v488
                %v490 = vld [vmem:[%s180 + $0x4d0] sm:%s173]
                %491 = vst [vmem:[%s181 + $0x268] sm:%s173] %v490
                %v492 = vld [vmem:[%s180 + $0x4d8] sm:%s173]
                %493 = vst [vmem:[%s181 + $0x26c] sm:%s173] %v492
                %v494 = vld [vmem:[%s180 + $0x4e0] sm:%s173]
                %495 = vst [vmem:[%s181 + $0x270] sm:%s173] %v494
                %v496 = vld [vmem:[%s180 + $0x4e8] sm:%s173]
                %497 = vst [vmem:[%s181 + $0x274] sm:%s173] %v496
                %v498 = vld [vmem:[%s180 + $0x4f0] sm:%s173]
                %499 = vst [vmem:[%s181 + $0x278] sm:%s173] %v498
                %v500 = vld [vmem:[%s180 + $0x4f8] sm:%s173]
                %501 = vst [vmem:[%s181 + $0x27c] sm:%s173] %v500
                %v502 = vld [vmem:[%s180 + $0x500] sm:%s173]
                %503 = vst [vmem:[%s181 + $0x280] sm:%s173] %v502
                %v504 = vld [vmem:[%s180 + $0x508] sm:%s173]
                %505 = vst [vmem:[%s181 + $0x284] sm:%s173] %v504
                %v506 = vld [vmem:[%s180 + $0x510] sm:%s173]
                %507 = vst [vmem:[%s181 + $0x288] sm:%s173] %v506
                %v508 = vld [vmem:[%s180 + $0x518] sm:%s173]
                %509 = vst [vmem:[%s181 + $0x28c] sm:%s173] %v508
                %v510 = vld [vmem:[%s180 + $0x520] sm:%s173]
                %511 = vst [vmem:[%s181 + $0x290] sm:%s173] %v510
                %v512 = vld [vmem:[%s180 + $0x528] sm:%s173]
                %513 = vst [vmem:[%s181 + $0x294] sm:%s173] %v512
                %v514 = vld [vmem:[%s180 + $0x530] sm:%s173]
                %515 = vst [vmem:[%s181 + $0x298] sm:%s173] %v514
                %v516 = vld [vmem:[%s180 + $0x538] sm:%s173]
                %517 = vst [vmem:[%s181 + $0x29c] sm:%s173] %v516
                %v518 = vld [vmem:[%s180 + $0x540] sm:%s173]
                %519 = vst [vmem:[%s181 + $0x2a0] sm:%s173] %v518
                %v520 = vld [vmem:[%s180 + $0x548] sm:%s173]
                %521 = vst [vmem:[%s181 + $0x2a4] sm:%s173] %v520
                %v522 = vld [vmem:[%s180 + $0x550] sm:%s173]
                %523 = vst [vmem:[%s181 + $0x2a8] sm:%s173] %v522
                %v524 = vld [vmem:[%s180 + $0x558] sm:%s173]
                %525 = vst [vmem:[%s181 + $0x2ac] sm:%s173] %v524
                %v526 = vld [vmem:[%s180 + $0x560] sm:%s173]
                %527 = vst [vmem:[%s181 + $0x2b0] sm:%s173] %v526
                %v528 = vld [vmem:[%s180 + $0x568] sm:%s173]
                %529 = vst [vmem:[%s181 + $0x2b4] sm:%s173] %v528
                %v530 = vld [vmem:[%s180 + $0x570] sm:%s173]
                %531 = vst [vmem:[%s181 + $0x2b8] sm:%s173] %v530
                %v532 = vld [vmem:[%s180 + $0x578] sm:%s173]
                %533 = vst [vmem:[%s181 + $0x2bc] sm:%s173] %v532
                %v534 = vld [vmem:[%s180 + $0x580] sm:%s173]
                %535 = vst [vmem:[%s181 + $0x2c0] sm:%s173] %v534
                %v536 = vld [vmem:[%s180 + $0x588] sm:%s173]
                %537 = vst [vmem:[%s181 + $0x2c4] sm:%s173] %v536
                %v538 = vld [vmem:[%s180 + $0x590] sm:%s173]
                %539 = vst [vmem:[%s181 + $0x2c8] sm:%s173] %v538
                %v540 = vld [vmem:[%s180 + $0x598] sm:%s173]
                %541 = vst [vmem:[%s181 + $0x2cc] sm:%s173] %v540
                %v542 = vld [vmem:[%s180 + $0x5a0] sm:%s173]
                %543 = vst [vmem:[%s181 + $0x2d0] sm:%s173] %v542
                %v544 = vld [vmem:[%s180 + $0x5a8] sm:%s173]
                %545 = vst [vmem:[%s181 + $0x2d4] sm:%s173] %v544
                %v546 = vld [vmem:[%s180 + $0x5b0] sm:%s173]
                %547 = vst [vmem:[%s181 + $0x2d8] sm:%s173] %v546
                %v548 = vld [vmem:[%s180 + $0x5b8] sm:%s173]
                %549 = vst [vmem:[%s181 + $0x2dc] sm:%s173] %v548
                %v550 = vld [vmem:[%s180 + $0x5c0] sm:%s173]
                %551 = vst [vmem:[%s181 + $0x2e0] sm:%s173] %v550
                %v552 = vld [vmem:[%s180 + $0x5c8] sm:%s173]
                %553 = vst [vmem:[%s181 + $0x2e4] sm:%s173] %v552
                %v554 = vld [vmem:[%s180 + $0x5d0] sm:%s173]
                %555 = vst [vmem:[%s181 + $0x2e8] sm:%s173] %v554
                %v556 = vld [vmem:[%s180 + $0x5d8] sm:%s173]
                %557 = vst [vmem:[%s181 + $0x2ec] sm:%s173] %v556
                %v558 = vld [vmem:[%s180 + $0x5e0] sm:%s173]
                %559 = vst [vmem:[%s181 + $0x2f0] sm:%s173] %v558
                %v560 = vld [vmem:[%s180 + $0x5e8] sm:%s173]
                %561 = vst [vmem:[%s181 + $0x2f4] sm:%s173] %v560
                %v562 = vld [vmem:[%s180 + $0x5f0] sm:%s173]
                %563 = vst [vmem:[%s181 + $0x2f8] sm:%s173] %v562
                %v564 = vld [vmem:[%s180 + $0x5f8] sm:%s173]
                %565 = vst [vmem:[%s181 + $0x2fc] sm:%s173] %v564
                %v566 = vld [vmem:[%s180 + $0x600] sm:%s173]
                %567 = vst [vmem:[%s181 + $0x300] sm:%s173] %v566
                %v568 = vld [vmem:[%s180 + $0x608] sm:%s173]
                %569 = vst [vmem:[%s181 + $0x304] sm:%s173] %v568
                %v570 = vld [vmem:[%s180 + $0x610] sm:%s173]
                %571 = vst [vmem:[%s181 + $0x308] sm:%s173] %v570
                %v572 = vld [vmem:[%s180 + $0x618] sm:%s173]
                %573 = vst [vmem:[%s181 + $0x30c] sm:%s173] %v572
                %v574 = vld [vmem:[%s180 + $0x620] sm:%s173]
                %575 = vst [vmem:[%s181 + $0x310] sm:%s173] %v574
                %v576 = vld [vmem:[%s180 + $0x628] sm:%s173]
                %577 = vst [vmem:[%s181 + $0x314] sm:%s173] %v576
                %v578 = vld [vmem:[%s180 + $0x630] sm:%s173]
                %579 = vst [vmem:[%s181 + $0x318] sm:%s173] %v578
                %v580 = vld [vmem:[%s180 + $0x638] sm:%s173]
                %581 = vst [vmem:[%s181 + $0x31c] sm:%s173] %v580
                %v582 = vld [vmem:[%s180 + $0x640] sm:%s173]
                %583 = vst [vmem:[%s181 + $0x320] sm:%s173] %v582
                %v584 = vld [vmem:[%s180 + $0x648] sm:%s173]
                %585 = vst [vmem:[%s181 + $0x324] sm:%s173] %v584
                %v586 = vld [vmem:[%s180 + $0x650] sm:%s173]
                %587 = vst [vmem:[%s181 + $0x328] sm:%s173] %v586
                %v588 = vld [vmem:[%s180 + $0x658] sm:%s173]
                %589 = vst [vmem:[%s181 + $0x32c] sm:%s173] %v588
                %v590 = vld [vmem:[%s180 + $0x660] sm:%s173]
                %591 = vst [vmem:[%s181 + $0x330] sm:%s173] %v590
                %v592 = vld [vmem:[%s180 + $0x668] sm:%s173]
                %593 = vst [vmem:[%s181 + $0x334] sm:%s173] %v592
                %v594 = vld [vmem:[%s180 + $0x670] sm:%s173]
                %595 = vst [vmem:[%s181 + $0x338] sm:%s173] %v594
                %v596 = vld [vmem:[%s180 + $0x678] sm:%s173]
                %597 = vst [vmem:[%s181 + $0x33c] sm:%s173] %v596
                %v598 = vld [vmem:[%s180 + $0x680] sm:%s173]
                %599 = vst [vmem:[%s181 + $0x340] sm:%s173] %v598
                %v600 = vld [vmem:[%s180 + $0x688] sm:%s173]
                %601 = vst [vmem:[%s181 + $0x344] sm:%s173] %v600
                %v602 = vld [vmem:[%s180 + $0x690] sm:%s173]
                %603 = vst [vmem:[%s181 + $0x348] sm:%s173] %v602
                %v604 = vld [vmem:[%s180 + $0x698] sm:%s173]
                %605 = vst [vmem:[%s181 + $0x34c] sm:%s173] %v604
                %v606 = vld [vmem:[%s180 + $0x6a0] sm:%s173]
                %607 = vst [vmem:[%s181 + $0x350] sm:%s173] %v606
                %v608 = vld [vmem:[%s180 + $0x6a8] sm:%s173]
                %609 = vst [vmem:[%s181 + $0x354] sm:%s173] %v608
                %v610 = vld [vmem:[%s180 + $0x6b0] sm:%s173]
                %611 = vst [vmem:[%s181 + $0x358] sm:%s173] %v610
                %v612 = vld [vmem:[%s180 + $0x6b8] sm:%s173]
                %613 = vst [vmem:[%s181 + $0x35c] sm:%s173] %v612
                %v614 = vld [vmem:[%s180 + $0x6c0] sm:%s173]
                %615 = vst [vmem:[%s181 + $0x360] sm:%s173] %v614
                %v616 = vld [vmem:[%s180 + $0x6c8] sm:%s173]
                %617 = vst [vmem:[%s181 + $0x364] sm:%s173] %v616
                %v618 = vld [vmem:[%s180 + $0x6d0] sm:%s173]
                %619 = vst [vmem:[%s181 + $0x368] sm:%s173] %v618
                %v620 = vld [vmem:[%s180 + $0x6d8] sm:%s173]
                %621 = vst [vmem:[%s181 + $0x36c] sm:%s173] %v620
                %v622 = vld [vmem:[%s180 + $0x6e0] sm:%s173]
                %623 = vst [vmem:[%s181 + $0x370] sm:%s173] %v622
                %v624 = vld [vmem:[%s180 + $0x6e8] sm:%s173]
                %625 = vst [vmem:[%s181 + $0x374] sm:%s173] %v624
                %v626 = vld [vmem:[%s180 + $0x6f0] sm:%s173]
                %627 = vst [vmem:[%s181 + $0x378] sm:%s173] %v626
                %v628 = vld [vmem:[%s180 + $0x6f8] sm:%s173]
                %629 = vst [vmem:[%s181 + $0x37c] sm:%s173] %v628
                %v630 = vld [vmem:[%s180 + $0x700] sm:%s173]
                %631 = vst [vmem:[%s181 + $0x380] sm:%s173] %v630
                %v632 = vld [vmem:[%s180 + $0x708] sm:%s173]
                %633 = vst [vmem:[%s181 + $0x384] sm:%s173] %v632
                %v634 = vld [vmem:[%s180 + $0x710] sm:%s173]
                %635 = vst [vmem:[%s181 + $0x388] sm:%s173] %v634
                %v636 = vld [vmem:[%s180 + $0x718] sm:%s173]
                %637 = vst [vmem:[%s181 + $0x38c] sm:%s173] %v636
                %v638 = vld [vmem:[%s180 + $0x720] sm:%s173]
                %639 = vst [vmem:[%s181 + $0x390] sm:%s173] %v638
                %v640 = vld [vmem:[%s180 + $0x728] sm:%s173]
                %641 = vst [vmem:[%s181 + $0x394] sm:%s173] %v640
                %v642 = vld [vmem:[%s180 + $0x730] sm:%s173]
                %643 = vst [vmem:[%s181 + $0x398] sm:%s173] %v642
                %v644 = vld [vmem:[%s180 + $0x738] sm:%s173]
                %645 = vst [vmem:[%s181 + $0x39c] sm:%s173] %v644
                %v646 = vld [vmem:[%s180 + $0x740] sm:%s173]
                %647 = vst [vmem:[%s181 + $0x3a0] sm:%s173] %v646
                %v648 = vld [vmem:[%s180 + $0x748] sm:%s173]
                %649 = vst [vmem:[%s181 + $0x3a4] sm:%s173] %v648
                %v650 = vld [vmem:[%s180 + $0x750] sm:%s173]
                %651 = vst [vmem:[%s181 + $0x3a8] sm:%s173] %v650
                %v652 = vld [vmem:[%s180 + $0x758] sm:%s173]
                %653 = vst [vmem:[%s181 + $0x3ac] sm:%s173] %v652
                %v654 = vld [vmem:[%s180 + $0x760] sm:%s173]
                %655 = vst [vmem:[%s181 + $0x3b0] sm:%s173] %v654
                %v656 = vld [vmem:[%s180 + $0x768] sm:%s173]
                %657 = vst [vmem:[%s181 + $0x3b4] sm:%s173] %v656
                %v658 = vld [vmem:[%s180 + $0x770] sm:%s173]
                %659 = vst [vmem:[%s181 + $0x3b8] sm:%s173] %v658
                %v660 = vld [vmem:[%s180 + $0x778] sm:%s173]
                %661 = vst [vmem:[%s181 + $0x3bc] sm:%s173] %v660
                %v662 = vld [vmem:[%s180 + $0x780] sm:%s173]
                %663 = vst [vmem:[%s181 + $0x3c0] sm:%s173] %v662
                %v664 = vld [vmem:[%s180 + $0x788] sm:%s173]
                %665 = vst [vmem:[%s181 + $0x3c4] sm:%s173] %v664
                %v666 = vld [vmem:[%s180 + $0x790] sm:%s173]
                %667 = vst [vmem:[%s181 + $0x3c8] sm:%s173] %v666
                %v668 = vld [vmem:[%s180 + $0x798] sm:%s173]
                %669 = vst [vmem:[%s181 + $0x3cc] sm:%s173] %v668
                %v670 = vld [vmem:[%s180 + $0x7a0] sm:%s173]
                %671 = vst [vmem:[%s181 + $0x3d0] sm:%s173] %v670
                %v672 = vld [vmem:[%s180 + $0x7a8] sm:%s173]
                %673 = vst [vmem:[%s181 + $0x3d4] sm:%s173] %v672
                %v674 = vld [vmem:[%s180 + $0x7b0] sm:%s173]
                %675 = vst [vmem:[%s181 + $0x3d8] sm:%s173] %v674
                %v676 = vld [vmem:[%s180 + $0x7b8] sm:%s173]
                %677 = vst [vmem:[%s181 + $0x3dc] sm:%s173] %v676
                %v678 = vld [vmem:[%s180 + $0x7c0] sm:%s173]
                %679 = vst [vmem:[%s181 + $0x3e0] sm:%s173] %v678
                %v680 = vld [vmem:[%s180 + $0x7c8] sm:%s173]
                %681 = vst [vmem:[%s181 + $0x3e4] sm:%s173] %v680
                %v682 = vld [vmem:[%s180 + $0x7d0] sm:%s173]
                %683 = vst [vmem:[%s181 + $0x3e8] sm:%s173] %v682
                %v684 = vld [vmem:[%s180 + $0x7d8] sm:%s173]
                %685 = vst [vmem:[%s181 + $0x3ec] sm:%s173] %v684
                %v686 = vld [vmem:[%s180 + $0x7e0] sm:%s173]
                %687 = vst [vmem:[%s181 + $0x3f0] sm:%s173] %v686
                %v688 = vld [vmem:[%s180 + $0x7e8] sm:%s173]
                %689 = vst [vmem:[%s181 + $0x3f4] sm:%s173] %v688
                %v690 = vld [vmem:[%s180 + $0x7f0] sm:%s173]
                %691 = vst [vmem:[%s181 + $0x3f8] sm:%s173] %v690
                %v692 = vld [vmem:[%s180 + $0x7f8] sm:%s173]
                %693 = vst [vmem:[%s181 + $0x3fc] sm:%s173] %v692
                %v694 = vld [vmem:[%s180 + $0x800] sm:%s173]
                %695 = vst [vmem:[%s181 + $0x400] sm:%s173] %v694
                %v696 = vld [vmem:[%s180 + $0x808] sm:%s173]
                %697 = vst [vmem:[%s181 + $0x404] sm:%s173] %v696
                %v698 = vld [vmem:[%s180 + $0x810] sm:%s173]
                %699 = vst [vmem:[%s181 + $0x408] sm:%s173] %v698
                %v700 = vld [vmem:[%s180 + $0x818] sm:%s173]
                %701 = vst [vmem:[%s181 + $0x40c] sm:%s173] %v700
                %v702 = vld [vmem:[%s180 + $0x820] sm:%s173]
                %703 = vst [vmem:[%s181 + $0x410] sm:%s173] %v702
                %v704 = vld [vmem:[%s180 + $0x828] sm:%s173]
                %705 = vst [vmem:[%s181 + $0x414] sm:%s173] %v704
                %v706 = vld [vmem:[%s180 + $0x830] sm:%s173]
                %707 = vst [vmem:[%s181 + $0x418] sm:%s173] %v706
                %v708 = vld [vmem:[%s180 + $0x838] sm:%s173]
                %709 = vst [vmem:[%s181 + $0x41c] sm:%s173] %v708
                %v710 = vld [vmem:[%s180 + $0x840] sm:%s173]
                %711 = vst [vmem:[%s181 + $0x420] sm:%s173] %v710
                %v712 = vld [vmem:[%s180 + $0x848] sm:%s173]
                %713 = vst [vmem:[%s181 + $0x424] sm:%s173] %v712
                %v714 = vld [vmem:[%s180 + $0x850] sm:%s173]
                %715 = vst [vmem:[%s181 + $0x428] sm:%s173] %v714
                %v716 = vld [vmem:[%s180 + $0x858] sm:%s173]
                %717 = vst [vmem:[%s181 + $0x42c] sm:%s173] %v716
                %v718 = vld [vmem:[%s180 + $0x860] sm:%s173]
                %719 = vst [vmem:[%s181 + $0x430] sm:%s173] %v718
                %v720 = vld [vmem:[%s180 + $0x868] sm:%s173]
                %721 = vst [vmem:[%s181 + $0x434] sm:%s173] %v720
                %v722 = vld [vmem:[%s180 + $0x870] sm:%s173]
                %723 = vst [vmem:[%s181 + $0x438] sm:%s173] %v722
                %v724 = vld [vmem:[%s180 + $0x878] sm:%s173]
                %725 = vst [vmem:[%s181 + $0x43c] sm:%s173] %v724
                %v726 = vld [vmem:[%s180 + $0x880] sm:%s173]
                %727 = vst [vmem:[%s181 + $0x440] sm:%s173] %v726
                %v728 = vld [vmem:[%s180 + $0x888] sm:%s173]
                %729 = vst [vmem:[%s181 + $0x444] sm:%s173] %v728
                %v730 = vld [vmem:[%s180 + $0x890] sm:%s173]
                %731 = vst [vmem:[%s181 + $0x448] sm:%s173] %v730
                %v732 = vld [vmem:[%s180 + $0x898] sm:%s173]
                %733 = vst [vmem:[%s181 + $0x44c] sm:%s173] %v732
                %v734 = vld [vmem:[%s180 + $0x8a0] sm:%s173]
                %735 = vst [vmem:[%s181 + $0x450] sm:%s173] %v734
                %v736 = vld [vmem:[%s180 + $0x8a8] sm:%s173]
                %737 = vst [vmem:[%s181 + $0x454] sm:%s173] %v736
                %v738 = vld [vmem:[%s180 + $0x8b0] sm:%s173]
                %739 = vst [vmem:[%s181 + $0x458] sm:%s173] %v738
                %v740 = vld [vmem:[%s180 + $0x8b8] sm:%s173]
                %741 = vst [vmem:[%s181 + $0x45c] sm:%s173] %v740
                %v742 = vld [vmem:[%s180 + $0x8c0] sm:%s173]
                %743 = vst [vmem:[%s181 + $0x460] sm:%s173] %v742
                %v744 = vld [vmem:[%s180 + $0x8c8] sm:%s173]
                %745 = vst [vmem:[%s181 + $0x464] sm:%s173] %v744
                %v746 = vld [vmem:[%s180 + $0x8d0] sm:%s173]
                %747 = vst [vmem:[%s181 + $0x468] sm:%s173] %v746
                %v748 = vld [vmem:[%s180 + $0x8d8] sm:%s173]
                %749 = vst [vmem:[%s181 + $0x46c] sm:%s173] %v748
                %v750 = vld [vmem:[%s180 + $0x8e0] sm:%s173]
                %751 = vst [vmem:[%s181 + $0x470] sm:%s173] %v750
                %v752 = vld [vmem:[%s180 + $0x8e8] sm:%s173]
                %753 = vst [vmem:[%s181 + $0x474] sm:%s173] %v752
                %v754 = vld [vmem:[%s180 + $0x8f0] sm:%s173]
                %755 = vst [vmem:[%s181 + $0x478] sm:%s173] %v754
                %v756 = vld [vmem:[%s180 + $0x8f8] sm:%s173]
                %757 = vst [vmem:[%s181 + $0x47c] sm:%s173] %v756
              $region41: #{relu_conv_bn_relu.1} parent=35 // loop_footer
                %s179 = sadd.s32 1, %s175
              $region42: #{relu_conv_bn_relu.1} parent=35 // loop_footer_branch
                %174 = sbr.rel target = $region38
              $region43: #{relu_conv_bn_relu.1} parent=35 // loop_exit
                _
            $region36: #{relu_conv_bn_relu.1} parent=27 // pred_fallthru
              _
          $region28: #{relu_conv_bn_relu.1} parent=23 // pred_fallthru
            _
          %1354 = vnop
        $region24: #{relu_conv_bn_relu.1} parent=19 // pred_fallthru
          _
        // Predicated region
        $region62: #{relu_conv_bn_relu.1} parent=19 // pred_check
          %p1355 = pneg %p77
        $region63: #{relu_conv_bn_relu.1} parent=19 // pred_check_branch
          %1357 = sbr.rel (%p1355) target = $region65
        $region64: #{relu_conv_bn_relu.1} parent=19 // pred_region
          %p1358 = scmp.lt.s32.totalorder %s10, 1
          %s1359 = scalar_select %p1358, %s10, 1
          %s1360 = scalar_lea.vmem %s2, %s1359
        $region65: #{relu_conv_bn_relu.1} parent=19 // pred_fallthru
          _
        // Predicated region
        $region66: #{relu_conv_bn_relu.1} parent=19 // pred_check
          %p1361 = pneg %p103
        $region67: #{relu_conv_bn_relu.1} parent=19 // pred_check_branch
          %1363 = sbr.rel (%p1361) target = $region69
        $region68: #{relu_conv_bn_relu.1} parent=19 // pred_region
          %p1364 = scmp.lt.s32.totalorder %s10, 1
          %s1365 = scalar_select %p1364, %s10, 1
          %s1366 = scalar_lea.vmem %s3, %s1365
        $region69: #{relu_conv_bn_relu.1} parent=19 // pred_fallthru
          _
      $region20: #{relu_conv_bn_relu.1} parent=5 // pred_fallthru
        _
      %p1367 = scmp.le.s32.totalorder 1, %s10
      %p1368 = scmp.lt.s32.totalorder %s10, 3
      %p1369 = pnand %p1367, %p1368
      %p1370 = pneg %p1369
      // Predicated region
      $region70: #{relu_conv_bn_relu.1} parent=5 // pred_check
        _
      $region71: #{relu_conv_bn_relu.1} parent=5 // pred_check_branch
        %1372 = sbr.rel (%p1369) target = $region73
      $region72: #{relu_conv_bn_relu.1} parent=5 // pred_region
        %s1373 = ssub.s32 %s10, 1
        %s1374 = sand.u32 %s44, 1
        %s1375 = sand.u32 %s44, 1
        %s1376 = smul.addr %s1375, 1152
        %s1377 = scalar_lea.vmem [#allocation2], %s1376
        // Predicated region
        $region74: #{relu_conv_bn_relu.1} parent=72 // pred_check
          %p1378 = pneg %p57
        $region75: #{relu_conv_bn_relu.1} parent=72 // pred_check_branch
          %1380 = sbr.rel (%p1378) target = $region77
        $region76: #{relu_conv_bn_relu.1} parent=72 // pred_region
          _
        $region77: #{relu_conv_bn_relu.1} parent=72 // pred_fallthru
          _
        %p1381 = pneg %p31
        %p1382 = pneg %p28
        %s1383 = sand.u32 %s44, 1
        %s1384 = sand.u32 %s44, 1
        %s1385 = smul.addr %s1384, 1152
        %s1386 = scalar_lea.vmem [#allocation2], %s1385
        %p1387 = pneg %p57
        %p1388 = pneg %p54
        %p1389 = scmp.lt.s32.totalorder %s15, 1
        %s1390 = scalar_select %p1389, %s15, 1
        %s1391 = scalar_lea.vmem %s2, %s1390
        %p1392 = pneg %p83
        %p1393 = pneg %p80
        %p1394 = scmp.lt.s32.totalorder %s15, 1
        %s1395 = scalar_select %p1394, %s15, 1
        %s1396 = scalar_lea.vmem %s3, %s1395
        %p1397 = pneg %p109
        %p1398 = pneg %p106
        %p1399 = pneg %p135
        %p1400 = pneg %p132
        %s1401 = sand.u32 %s122, 1
        %s1402 = sand.u32 %s122, 1
        %s1403 = smul.addr %s1402, 896
        %s1404 = scalar_lea.vmem [#allocation3], %s1403
        %p1405 = scmp.lt.s32.totalorder %s15, 1
        %s1406 = scalar_select %p1405, %s15, 1
        %s1407 = scalar_lea.vmem %s2, %s1406
        %p1408 = scmp.lt.s32.totalorder %s15, 1
        %s1409 = scalar_select %p1408, %s15, 1
        %s1410 = scalar_lea.vmem %s3, %s1409
        %v1412 = vld [vmem:[%s0] sm:$0xff]
        %v1413 = vld [vmem:[%s0 + $0x8] sm:$0xff]
        %v1414 = vld [vmem:[%s0 + $0x10] sm:$0xff]
        %v1415 = vld [vmem:[%s0 + $0x18] sm:$0xff]
        %v1416 = vld [vmem:[%s0 + $0x20] sm:$0xff]
        %v1417 = vld [vmem:[%s0 + $0x28] sm:$0xff]
        %v1418 = vld [vmem:[%s0 + $0x30] sm:$0xff]
        %v1419 = vld [vmem:[%s0 + $0x38] sm:$0xff]
        %v1420 = vld [vmem:[%s0 + $0x40] sm:$0xff]
        %v1421 = vld [vmem:[%s0 + $0x48] sm:$0xff]
        %v1422 = vld [vmem:[%s0 + $0x50] sm:$0xff]
        %v1423 = vld [vmem:[%s0 + $0x58] sm:$0xff]
        %v1424 = vld [vmem:[%s0 + $0x60] sm:$0xff]
        %v1425 = vld [vmem:[%s0 + $0x68] sm:$0xff]
        %v1426 = vld [vmem:[%s0 + $0x70] sm:$0xff]
        %v1427 = vld [vmem:[%s0 + $0x78] sm:$0xff]
        %v1428 = vld [vmem:[%s0 + $0x80] sm:$0xff]
        %v1429 = vld [vmem:[%s0 + $0x88] sm:$0xff]
        %v1430 = vld [vmem:[%s0 + $0x90] sm:$0xff]
        %v1431 = vld [vmem:[%s0 + $0x98] sm:$0xff]
        %v1432 = vld [vmem:[%s0 + $0xa0] sm:$0xff]
        %v1433 = vld [vmem:[%s0 + $0xa8] sm:$0xff]
        %v1434 = vld [vmem:[%s0 + $0xb0] sm:$0xff]
        %v1435 = vld [vmem:[%s0 + $0xb8] sm:$0xff]
        %v1436 = vld [vmem:[%s0 + $0xc0] sm:$0xff]
        %v1437 = vld [vmem:[%s0 + $0xc8] sm:$0xff]
        %v1438 = vld [vmem:[%s0 + $0xd0] sm:$0xff]
        %v1439 = vld [vmem:[%s0 + $0xd8] sm:$0xff]
        %v1440 = vld [vmem:[%s0 + $0xe0] sm:$0xff]
        %v1441 = vld [vmem:[%s0 + $0xe8] sm:$0xff]
        %v1442 = vld [vmem:[%s0 + $0xf0] sm:$0xff]
        %v1443 = vld [vmem:[%s0 + $0xf8] sm:$0xff]
        %v1444 = vld [vmem:[%s0 + $0x100] sm:$0xff]
        %v1445 = vld [vmem:[%s0 + $0x108] sm:$0xff]
        %v1446 = vld [vmem:[%s0 + $0x110] sm:$0xff]
        %v1447 = vld [vmem:[%s0 + $0x118] sm:$0xff]
        %v1448 = vld [vmem:[%s0 + $0x120] sm:$0xff]
        %v1449 = vld [vmem:[%s0 + $0x128] sm:$0xff]
        %v1450 = vld [vmem:[%s0 + $0x130] sm:$0xff]
        %v1451 = vld [vmem:[%s0 + $0x138] sm:$0xff]
        %v1452 = vld [vmem:[%s0 + $0x140] sm:$0xff]
        %v1453 = vld [vmem:[%s0 + $0x148] sm:$0xff]
        %v1454 = vld [vmem:[%s0 + $0x150] sm:$0xff]
        %v1455 = vld [vmem:[%s0 + $0x158] sm:$0xff]
        %v1456 = vld [vmem:[%s0 + $0x160] sm:$0xff]
        %v1457 = vld [vmem:[%s0 + $0x168] sm:$0xff]
        %v1458 = vld [vmem:[%s0 + $0x170] sm:$0xff]
        %v1459 = vld [vmem:[%s0 + $0x178] sm:$0xff]
        %v1460 = vld [vmem:[%s0 + $0x180] sm:$0xff]
        %v1461 = vld [vmem:[%s0 + $0x188] sm:$0xff]
        %v1462 = vld [vmem:[%s0 + $0x190] sm:$0xff]
        %v1463 = vld [vmem:[%s0 + $0x198] sm:$0xff]
        %v1464 = vld [vmem:[%s0 + $0x1a0] sm:$0xff]
        %v1465 = vld [vmem:[%s0 + $0x1a8] sm:$0xff]
        %v1466 = vld [vmem:[%s0 + $0x1b0] sm:$0xff]
        %v1467 = vld [vmem:[%s0 + $0x1b8] sm:$0xff]
        %v1468 = vld [vmem:[%s0 + $0x1c0] sm:$0xff]
        %v1469 = vld [vmem:[%s0 + $0x1c8] sm:$0xff]
        %v1470 = vld [vmem:[%s0 + $0x1d0] sm:$0xff]
        %v1471 = vld [vmem:[%s0 + $0x1d8] sm:$0xff]
        %v1472 = vld [vmem:[%s0 + $0x1e0] sm:$0xff]
        %v1473 = vld [vmem:[%s0 + $0x1e8] sm:$0xff]
        %v1474 = vld [vmem:[%s0 + $0x1f0] sm:$0xff]
        %v1475 = vld [vmem:[%s0 + $0x1f8] sm:$0xff]
        %v1476 = vld [vmem:[%s0 + $0x200] sm:$0xff]
        %v1477 = vld [vmem:[%s0 + $0x208] sm:$0xff]
        %v1478 = vld [vmem:[%s0 + $0x210] sm:$0xff]
        %v1479 = vld [vmem:[%s0 + $0x218] sm:$0xff]
        %v1480 = vld [vmem:[%s0 + $0x220] sm:$0xff]
        %v1481 = vld [vmem:[%s0 + $0x228] sm:$0xff]
        %v1482 = vld [vmem:[%s0 + $0x230] sm:$0xff]
        %v1483 = vld [vmem:[%s0 + $0x238] sm:$0xff]
        %v1484 = vld [vmem:[%s0 + $0x240] sm:$0xff]
        %v1485 = vld [vmem:[%s0 + $0x248] sm:$0xff]
        %v1486 = vld [vmem:[%s0 + $0x250] sm:$0xff]
        %v1487 = vld [vmem:[%s0 + $0x258] sm:$0xff]
        %v1488 = vld [vmem:[%s0 + $0x260] sm:$0xff]
        %v1489 = vld [vmem:[%s0 + $0x268] sm:$0xff]
        %v1490 = vld [vmem:[%s0 + $0x270] sm:$0xff]
        %v1491 = vld [vmem:[%s0 + $0x278] sm:$0xff]
        %v1492 = vld [vmem:[%s0 + $0x280] sm:$0xff]
        %v1493 = vld [vmem:[%s0 + $0x288] sm:$0xff]
        %v1494 = vld [vmem:[%s0 + $0x290] sm:$0xff]
        %v1495 = vld [vmem:[%s0 + $0x298] sm:$0xff]
        %v1496 = vld [vmem:[%s0 + $0x2a0] sm:$0xff]
        %v1497 = vld [vmem:[%s0 + $0x2a8] sm:$0xff]
        %v1498 = vld [vmem:[%s0 + $0x2b0] sm:$0xff]
        %v1499 = vld [vmem:[%s0 + $0x2b8] sm:$0xff]
        %v1500 = vld [vmem:[%s0 + $0x2c0] sm:$0xff]
        %v1501 = vld [vmem:[%s0 + $0x2c8] sm:$0xff]
        %v1502 = vld [vmem:[%s0 + $0x2d0] sm:$0xff]
        %v1503 = vld [vmem:[%s0 + $0x2d8] sm:$0xff]
        %v1504 = vld [vmem:[%s0 + $0x2e0] sm:$0xff]
        %v1505 = vld [vmem:[%s0 + $0x2e8] sm:$0xff]
        %v1506 = vld [vmem:[%s0 + $0x2f0] sm:$0xff]
        %v1507 = vld [vmem:[%s0 + $0x2f8] sm:$0xff]
        %v1508 = vld [vmem:[%s0 + $0x300] sm:$0xff]
        %v1509 = vld [vmem:[%s0 + $0x308] sm:$0xff]
        %v1510 = vld [vmem:[%s0 + $0x310] sm:$0xff]
        %v1511 = vld [vmem:[%s0 + $0x318] sm:$0xff]
        %v1512 = vld [vmem:[%s0 + $0x320] sm:$0xff]
        %v1513 = vld [vmem:[%s0 + $0x328] sm:$0xff]
        %v1514 = vld [vmem:[%s0 + $0x330] sm:$0xff]
        %v1515 = vld [vmem:[%s0 + $0x338] sm:$0xff]
        %v1516 = vld [vmem:[%s0 + $0x340] sm:$0xff]
        %v1517 = vld [vmem:[%s0 + $0x348] sm:$0xff]
        %v1518 = vld [vmem:[%s0 + $0x350] sm:$0xff]
        %v1519 = vld [vmem:[%s0 + $0x358] sm:$0xff]
        %v1520 = vld [vmem:[%s0 + $0x360] sm:$0xff]
        %v1521 = vld [vmem:[%s0 + $0x368] sm:$0xff]
        %v1522 = vld [vmem:[%s0 + $0x370] sm:$0xff]
        %v1523 = vld [vmem:[%s0 + $0x378] sm:$0xff]
        %v1524 = vld [vmem:[%s0 + $0x380] sm:$0xff]
        %v1525 = vld [vmem:[%s0 + $0x388] sm:$0xff]
        %v1526 = vld [vmem:[%s0 + $0x390] sm:$0xff]
        %v1527 = vld [vmem:[%s0 + $0x398] sm:$0xff]
        %v1528 = vld [vmem:[%s0 + $0x3a0] sm:$0xff]
        %v1529 = vld [vmem:[%s0 + $0x3a8] sm:$0xff]
        %v1530 = vld [vmem:[%s0 + $0x3b0] sm:$0xff]
        %v1531 = vld [vmem:[%s0 + $0x3b8] sm:$0xff]
        %v1532 = vld [vmem:[%s0 + $0x3c0] sm:$0xff]
        %v1533 = vld [vmem:[%s0 + $0x3c8] sm:$0xff]
        %v1534 = vld [vmem:[%s0 + $0x3d0] sm:$0xff]
        %v1535 = vld [vmem:[%s0 + $0x3d8] sm:$0xff]
        %v1536 = vld [vmem:[%s0 + $0x3e0] sm:$0xff]
        %v1537 = vld [vmem:[%s0 + $0x3e8] sm:$0xff]
        %v1538 = vld [vmem:[%s0 + $0x3f0] sm:$0xff]
        %v1539 = vld [vmem:[%s0 + $0x3f8] sm:$0xff]
        %v1540 = vld [vmem:[%s0 + $0x400] sm:$0xff]
        %v1541 = vmax.bf16 %v1412, 0
        %v1542 = vmax.bf16 %v1413, 0
        %v1543 = vmax.bf16 %v1414, 0
        %v1544 = vmax.bf16 %v1415, 0
        %v1545 = vmax.bf16 %v1416, 0
        %v1546 = vmax.bf16 %v1417, 0
        %v1547 = vmax.bf16 %v1418, 0
        %v1548 = vmax.bf16 %v1419, 0
        %v1549 = vmax.bf16 %v1420, 0
        %v1550 = vmax.bf16 %v1421, 0
        %v1551 = vmax.bf16 %v1422, 0
        %v1552 = vmax.bf16 %v1423, 0
        %v1553 = vmax.bf16 %v1424, 0
        %v1554 = vmax.bf16 %v1425, 0
        %v1555 = vmax.bf16 %v1426, 0
        %v1556 = vmax.bf16 %v1427, 0
        %v1557 = vmax.bf16 %v1428, 0
        %v1558 = vmax.bf16 %v1429, 0
        %v1559 = vmax.bf16 %v1430, 0
        %v1560 = vmax.bf16 %v1431, 0
        %v1561 = vmax.bf16 %v1432, 0
        %v1562 = vmax.bf16 %v1433, 0
        %v1563 = vmax.bf16 %v1434, 0
        %v1564 = vmax.bf16 %v1435, 0
        %v1565 = vmax.bf16 %v1436, 0
        %v1566 = vmax.bf16 %v1437, 0
        %v1567 = vmax.bf16 %v1438, 0
        %v1568 = vmax.bf16 %v1439, 0
        %v1569 = vmax.bf16 %v1440, 0
        %v1570 = vmax.bf16 %v1441, 0
        %v1571 = vmax.bf16 %v1442, 0
        %v1572 = vmax.bf16 %v1443, 0
        %v1573 = vmax.bf16 %v1444, 0
        %v1574 = vmax.bf16 %v1445, 0
        %v1575 = vmax.bf16 %v1446, 0
        %v1576 = vmax.bf16 %v1447, 0
        %v1577 = vmax.bf16 %v1448, 0
        %v1578 = vmax.bf16 %v1449, 0
        %v1579 = vmax.bf16 %v1450, 0
        %v1580 = vmax.bf16 %v1451, 0
        %v1581 = vmax.bf16 %v1452, 0
        %v1582 = vmax.bf16 %v1453, 0
        %v1583 = vmax.bf16 %v1454, 0
        %v1584 = vmax.bf16 %v1455, 0
        %v1585 = vmax.bf16 %v1456, 0
        %v1586 = vmax.bf16 %v1457, 0
        %v1587 = vmax.bf16 %v1458, 0
        %v1588 = vmax.bf16 %v1459, 0
        %v1589 = vmax.bf16 %v1460, 0
        %v1590 = vmax.bf16 %v1461, 0
        %v1591 = vmax.bf16 %v1462, 0
        %v1592 = vmax.bf16 %v1463, 0
        %v1593 = vmax.bf16 %v1464, 0
        %v1594 = vmax.bf16 %v1465, 0
        %v1595 = vmax.bf16 %v1466, 0
        %v1596 = vmax.bf16 %v1467, 0
        %v1597 = vmax.bf16 %v1468, 0
        %v1598 = vmax.bf16 %v1469, 0
        %v1599 = vmax.bf16 %v1470, 0
        %v1600 = vmax.bf16 %v1471, 0
        %v1601 = vmax.bf16 %v1472, 0
        %v1602 = vmax.bf16 %v1473, 0
        %v1603 = vmax.bf16 %v1474, 0
        %v1604 = vmax.bf16 %v1475, 0
        %v1605 = vmax.bf16 %v1476, 0
        %v1606 = vmax.bf16 %v1477, 0
        %v1607 = vmax.bf16 %v1478, 0
        %v1608 = vmax.bf16 %v1479, 0
        %v1609 = vmax.bf16 %v1480, 0
        %v1610 = vmax.bf16 %v1481, 0
        %v1611 = vmax.bf16 %v1482, 0
        %v1612 = vmax.bf16 %v1483, 0
        %v1613 = vmax.bf16 %v1484, 0
        %v1614 = vmax.bf16 %v1485, 0
        %v1615 = vmax.bf16 %v1486, 0
        %v1616 = vmax.bf16 %v1487, 0
        %v1617 = vmax.bf16 %v1488, 0
        %v1618 = vmax.bf16 %v1489, 0
        %v1619 = vmax.bf16 %v1490, 0
        %v1620 = vmax.bf16 %v1491, 0
        %v1621 = vmax.bf16 %v1492, 0
        %v1622 = vmax.bf16 %v1493, 0
        %v1623 = vmax.bf16 %v1494, 0
        %v1624 = vmax.bf16 %v1495, 0
        %v1625 = vmax.bf16 %v1496, 0
        %v1626 = vmax.bf16 %v1497, 0
        %v1627 = vmax.bf16 %v1498, 0
        %v1628 = vmax.bf16 %v1499, 0
        %v1629 = vmax.bf16 %v1500, 0
        %v1630 = vmax.bf16 %v1501, 0
        %v1631 = vmax.bf16 %v1502, 0
        %v1632 = vmax.bf16 %v1503, 0
        %v1633 = vmax.bf16 %v1504, 0
        %v1634 = vmax.bf16 %v1505, 0
        %v1635 = vmax.bf16 %v1506, 0
        %v1636 = vmax.bf16 %v1507, 0
        %v1637 = vmax.bf16 %v1508, 0
        %v1638 = vmax.bf16 %v1509, 0
        %v1639 = vmax.bf16 %v1510, 0
        %v1640 = vmax.bf16 %v1511, 0
        %v1641 = vmax.bf16 %v1512, 0
        %v1642 = vmax.bf16 %v1513, 0
        %v1643 = vmax.bf16 %v1514, 0
        %v1644 = vmax.bf16 %v1515, 0
        %v1645 = vmax.bf16 %v1516, 0
        %v1646 = vmax.bf16 %v1517, 0
        %v1647 = vmax.bf16 %v1518, 0
        %v1648 = vmax.bf16 %v1519, 0
        %v1649 = vmax.bf16 %v1520, 0
        %v1650 = vmax.bf16 %v1521, 0
        %v1651 = vmax.bf16 %v1522, 0
        %v1652 = vmax.bf16 %v1523, 0
        %v1653 = vmax.bf16 %v1524, 0
        %v1654 = vmax.bf16 %v1525, 0
        %v1655 = vmax.bf16 %v1526, 0
        %v1656 = vmax.bf16 %v1527, 0
        %v1657 = vmax.bf16 %v1528, 0
        %v1658 = vmax.bf16 %v1529, 0
        %v1659 = vmax.bf16 %v1530, 0
        %v1660 = vmax.bf16 %v1531, 0
        %v1661 = vmax.bf16 %v1532, 0
        %v1662 = vmax.bf16 %v1533, 0
        %v1663 = vmax.bf16 %v1534, 0
        %v1664 = vmax.bf16 %v1535, 0
        %v1665 = vmax.bf16 %v1536, 0
        %v1666 = vmax.bf16 %v1537, 0
        %v1667 = vmax.bf16 %v1538, 0
        %v1668 = vmax.bf16 %v1539, 0
        %v1669 = vmax.bf16 %v1540, 0
        %v1782 = vunpack.c.l.b16 %v1541
        %v1783 = vunpack.c.h.b16 %v1541
        %v1784 = vunpack.c.l.b16 %v1542
        %v1785 = vunpack.c.h.b16 %v1542
        %v1786 = vunpack.c.l.b16 %v1543
        %v1787 = vunpack.c.h.b16 %v1543
        %v1788 = vunpack.c.l.b16 %v1544
        %v1789 = vunpack.c.h.b16 %v1544
        %v1790 = vunpack.c.l.b16 %v1545
        %v1791 = vunpack.c.h.b16 %v1545
        %v1792 = vunpack.c.l.b16 %v1546
        %v1793 = vunpack.c.h.b16 %v1546
        %v1794 = vunpack.c.l.b16 %v1547
        %v1795 = vunpack.c.h.b16 %v1547
        %v1796 = vunpack.c.l.b16 %v1548
        %v1797 = vunpack.c.h.b16 %v1548
        %v1798 = vunpack.c.l.b16 %v1549
        %v1799 = vunpack.c.h.b16 %v1549
        %v1800 = vunpack.c.l.b16 %v1550
        %v1801 = vunpack.c.h.b16 %v1550
        %v1802 = vunpack.c.l.b16 %v1551
        %v1803 = vunpack.c.h.b16 %v1551
        %v1804 = vunpack.c.l.b16 %v1552
        %v1805 = vunpack.c.h.b16 %v1552
        %v1806 = vunpack.c.l.b16 %v1553
        %v1807 = vunpack.c.h.b16 %v1553
        %v1808 = vunpack.c.l.b16 %v1554
        %v1809 = vunpack.c.h.b16 %v1554
        %v1810 = vunpack.c.l.b16 %v1555
        %v1811 = vunpack.c.h.b16 %v1555
        %v1812 = vunpack.c.l.b16 %v1556
        %v1813 = vunpack.c.h.b16 %v1556
        %v1814 = vunpack.c.l.b16 %v1557
        %v1815 = vunpack.c.h.b16 %v1557
        %v1816 = vunpack.c.l.b16 %v1558
        %v1817 = vunpack.c.h.b16 %v1558
        %v1818 = vunpack.c.l.b16 %v1559
        %v1819 = vunpack.c.h.b16 %v1559
        %v1820 = vunpack.c.l.b16 %v1560
        %v1821 = vunpack.c.h.b16 %v1560
        %v1822 = vunpack.c.l.b16 %v1561
        %v1823 = vunpack.c.h.b16 %v1561
        %v1824 = vunpack.c.l.b16 %v1562
        %v1825 = vunpack.c.h.b16 %v1562
        %v1826 = vunpack.c.l.b16 %v1563
        %v1827 = vunpack.c.h.b16 %v1563
        %v1828 = vunpack.c.l.b16 %v1564
        %v1829 = vunpack.c.h.b16 %v1564
        %v1830 = vunpack.c.l.b16 %v1565
        %v1831 = vunpack.c.h.b16 %v1565
        %v1832 = vunpack.c.l.b16 %v1566
        %v1833 = vunpack.c.h.b16 %v1566
        %v1834 = vunpack.c.l.b16 %v1567
        %v1835 = vunpack.c.h.b16 %v1567
        %v1836 = vunpack.c.l.b16 %v1568
        %v1837 = vunpack.c.h.b16 %v1568
        %v1838 = vunpack.c.l.b16 %v1569
        %v1839 = vunpack.c.h.b16 %v1569
        %v1840 = vunpack.c.l.b16 %v1570
        %v1841 = vunpack.c.h.b16 %v1570
        %v1842 = vunpack.c.l.b16 %v1571
        %v1843 = vunpack.c.h.b16 %v1571
        %v1844 = vunpack.c.l.b16 %v1572
        %v1845 = vunpack.c.h.b16 %v1572
        %v1846 = vunpack.c.l.b16 %v1573
        %v1847 = vunpack.c.h.b16 %v1573
        %v1848 = vunpack.c.l.b16 %v1574
        %v1849 = vunpack.c.h.b16 %v1574
        %v1850 = vunpack.c.l.b16 %v1575
        %v1851 = vunpack.c.h.b16 %v1575
        %v1852 = vunpack.c.l.b16 %v1576
        %v1853 = vunpack.c.h.b16 %v1576
        %v1854 = vunpack.c.l.b16 %v1577
        %v1855 = vunpack.c.h.b16 %v1577
        %v1856 = vunpack.c.l.b16 %v1578
        %v1857 = vunpack.c.h.b16 %v1578
        %v1858 = vunpack.c.l.b16 %v1579
        %v1859 = vunpack.c.h.b16 %v1579
        %v1860 = vunpack.c.l.b16 %v1580
        %v1861 = vunpack.c.h.b16 %v1580
        %v1862 = vunpack.c.l.b16 %v1581
        %v1863 = vunpack.c.h.b16 %v1581
        %v1864 = vunpack.c.l.b16 %v1582
        %v1865 = vunpack.c.h.b16 %v1582
        %v1866 = vunpack.c.l.b16 %v1583
        %v1867 = vunpack.c.h.b16 %v1583
        %v1868 = vunpack.c.l.b16 %v1584
        %v1869 = vunpack.c.h.b16 %v1584
        %v1870 = vunpack.c.l.b16 %v1585
        %v1871 = vunpack.c.h.b16 %v1585
        %v1872 = vunpack.c.l.b16 %v1586
        %v1873 = vunpack.c.h.b16 %v1586
        %v1874 = vunpack.c.l.b16 %v1587
        %v1875 = vunpack.c.h.b16 %v1587
        %v1876 = vunpack.c.l.b16 %v1588
        %v1877 = vunpack.c.h.b16 %v1588
        %v1878 = vunpack.c.l.b16 %v1589
        %v1879 = vunpack.c.h.b16 %v1589
        %v1880 = vunpack.c.l.b16 %v1590
        %v1881 = vunpack.c.h.b16 %v1590
        %v1882 = vunpack.c.l.b16 %v1591
        %v1883 = vunpack.c.h.b16 %v1591
        %v1884 = vunpack.c.l.b16 %v1592
        %v1885 = vunpack.c.h.b16 %v1592
        %v1886 = vunpack.c.l.b16 %v1593
        %v1887 = vunpack.c.h.b16 %v1593
        %v1888 = vunpack.c.l.b16 %v1594
        %v1889 = vunpack.c.h.b16 %v1594
        %v1890 = vunpack.c.l.b16 %v1595
        %v1891 = vunpack.c.h.b16 %v1595
        %v1892 = vunpack.c.l.b16 %v1596
        %v1893 = vunpack.c.h.b16 %v1596
        %v1894 = vunpack.c.l.b16 %v1597
        %v1895 = vunpack.c.h.b16 %v1597
        %v1896 = vunpack.c.l.b16 %v1598
        %v1897 = vunpack.c.h.b16 %v1598
        %v1898 = vunpack.c.l.b16 %v1599
        %v1899 = vunpack.c.h.b16 %v1599
        %v1900 = vunpack.c.l.b16 %v1600
        %v1901 = vunpack.c.h.b16 %v1600
        %v1902 = vunpack.c.l.b16 %v1601
        %v1903 = vunpack.c.h.b16 %v1601
        %v1904 = vunpack.c.l.b16 %v1602
        %v1905 = vunpack.c.h.b16 %v1602
        %v1906 = vunpack.c.l.b16 %v1603
        %v1907 = vunpack.c.h.b16 %v1603
        %v1908 = vunpack.c.l.b16 %v1604
        %v1909 = vunpack.c.h.b16 %v1604
        %v1910 = vunpack.c.l.b16 %v1605
        %v1911 = vunpack.c.h.b16 %v1605
        %v1912 = vunpack.c.l.b16 %v1606
        %v1913 = vunpack.c.h.b16 %v1606
        %v1914 = vunpack.c.l.b16 %v1607
        %v1915 = vunpack.c.h.b16 %v1607
        %v1916 = vunpack.c.l.b16 %v1608
        %v1917 = vunpack.c.h.b16 %v1608
        %v1918 = vunpack.c.l.b16 %v1609
        %v1919 = vunpack.c.h.b16 %v1609
        %v1920 = vunpack.c.l.b16 %v1610
        %v1921 = vunpack.c.h.b16 %v1610
        %v1922 = vunpack.c.l.b16 %v1611
        %v1923 = vunpack.c.h.b16 %v1611
        %v1924 = vunpack.c.l.b16 %v1612
        %v1925 = vunpack.c.h.b16 %v1612
        %v1926 = vunpack.c.l.b16 %v1613
        %v1927 = vunpack.c.h.b16 %v1613
        %v1928 = vunpack.c.l.b16 %v1614
        %v1929 = vunpack.c.h.b16 %v1614
        %v1930 = vunpack.c.l.b16 %v1615
        %v1931 = vunpack.c.h.b16 %v1615
        %v1932 = vunpack.c.l.b16 %v1616
        %v1933 = vunpack.c.h.b16 %v1616
        %v1934 = vunpack.c.l.b16 %v1617
        %v1935 = vunpack.c.h.b16 %v1617
        %v1936 = vunpack.c.l.b16 %v1618
        %v1937 = vunpack.c.h.b16 %v1618
        %v1938 = vunpack.c.l.b16 %v1619
        %v1939 = vunpack.c.h.b16 %v1619
        %v1940 = vunpack.c.l.b16 %v1620
        %v1941 = vunpack.c.h.b16 %v1620
        %v1942 = vunpack.c.l.b16 %v1621
        %v1943 = vunpack.c.h.b16 %v1621
        %v1944 = vunpack.c.l.b16 %v1622
        %v1945 = vunpack.c.h.b16 %v1622
        %v1946 = vunpack.c.l.b16 %v1623
        %v1947 = vunpack.c.h.b16 %v1623
        %v1948 = vunpack.c.l.b16 %v1624
        %v1949 = vunpack.c.h.b16 %v1624
        %v1950 = vunpack.c.l.b16 %v1625
        %v1951 = vunpack.c.h.b16 %v1625
        %v1952 = vunpack.c.l.b16 %v1626
        %v1953 = vunpack.c.h.b16 %v1626
        %v1954 = vunpack.c.l.b16 %v1627
        %v1955 = vunpack.c.h.b16 %v1627
        %v1956 = vunpack.c.l.b16 %v1628
        %v1957 = vunpack.c.h.b16 %v1628
        %v1958 = vunpack.c.l.b16 %v1629
        %v1959 = vunpack.c.h.b16 %v1629
        %v1960 = vunpack.c.l.b16 %v1630
        %v1961 = vunpack.c.h.b16 %v1630
        %v1962 = vunpack.c.l.b16 %v1631
        %v1963 = vunpack.c.h.b16 %v1631
        %v1964 = vunpack.c.l.b16 %v1632
        %v1965 = vunpack.c.h.b16 %v1632
        %v1966 = vunpack.c.l.b16 %v1633
        %v1967 = vunpack.c.h.b16 %v1633
        %v1968 = vunpack.c.l.b16 %v1634
        %v1969 = vunpack.c.h.b16 %v1634
        %v1970 = vunpack.c.l.b16 %v1635
        %v1971 = vunpack.c.h.b16 %v1635
        %v1972 = vunpack.c.l.b16 %v1636
        %v1973 = vunpack.c.h.b16 %v1636
        %v1974 = vunpack.c.l.b16 %v1637
        %v1975 = vunpack.c.h.b16 %v1637
        %v1976 = vunpack.c.l.b16 %v1638
        %v1977 = vunpack.c.h.b16 %v1638
        %v1978 = vunpack.c.l.b16 %v1639
        %v1979 = vunpack.c.h.b16 %v1639
        %v1980 = vunpack.c.l.b16 %v1640
        %v1981 = vunpack.c.h.b16 %v1640
        %v1982 = vunpack.c.l.b16 %v1641
        %v1983 = vunpack.c.h.b16 %v1641
        %v1984 = vunpack.c.l.b16 %v1642
        %v1985 = vunpack.c.h.b16 %v1642
        %v1986 = vunpack.c.l.b16 %v1643
        %v1987 = vunpack.c.h.b16 %v1643
        %v1988 = vunpack.c.l.b16 %v1644
        %v1989 = vunpack.c.h.b16 %v1644
        %v1990 = vunpack.c.l.b16 %v1645
        %v1991 = vunpack.c.h.b16 %v1645
        %v1992 = vunpack.c.l.b16 %v1646
        %v1993 = vunpack.c.h.b16 %v1646
        %v1994 = vunpack.c.l.b16 %v1647
        %v1995 = vunpack.c.h.b16 %v1647
        %v1996 = vunpack.c.l.b16 %v1648
        %v1997 = vunpack.c.h.b16 %v1648
        %v1998 = vunpack.c.l.b16 %v1649
        %v1999 = vunpack.c.h.b16 %v1649
        %v2000 = vunpack.c.l.b16 %v1650
        %v2001 = vunpack.c.h.b16 %v1650
        %v2002 = vunpack.c.l.b16 %v1651
        %v2003 = vunpack.c.h.b16 %v1651
        %v2004 = vunpack.c.l.b16 %v1652
        %v2005 = vunpack.c.h.b16 %v1652
        %v2006 = vpack.c.b16 %v1784, %v1782
        %v2007 = vpack.c.b16 %v1785, %v1783
        %v2008 = vpack.c.b16 %v1788, %v1786
        %v2009 = vpack.c.b16 %v1789, %v1787
        %v2010 = vpack.c.b16 %v1792, %v1790
        %v2011 = vpack.c.b16 %v1793, %v1791
        %v2012 = vpack.c.b16 %v1796, %v1794
        %v2013 = vpack.c.b16 %v1797, %v1795
        %v2014 = vpack.c.b16 %v1800, %v1798
        %v2015 = vpack.c.b16 %v1801, %v1799
        %v2016 = vpack.c.b16 %v1804, %v1802
        %v2017 = vpack.c.b16 %v1805, %v1803
        %v2018 = vpack.c.b16 %v1808, %v1806
        %v2019 = vpack.c.b16 %v1809, %v1807
        %v2020 = vpack.c.b16 %v1812, %v1810
        %v2021 = vpack.c.b16 %v1813, %v1811
        %v2022 = vpack.c.b16 %v1816, %v1814
        %v2023 = vpack.c.b16 %v1817, %v1815
        %v2024 = vpack.c.b16 %v1820, %v1818
        %v2025 = vpack.c.b16 %v1821, %v1819
        %v2026 = vpack.c.b16 %v1824, %v1822
        %v2027 = vpack.c.b16 %v1825, %v1823
        %v2028 = vpack.c.b16 %v1828, %v1826
        %v2029 = vpack.c.b16 %v1829, %v1827
        %v2030 = vpack.c.b16 %v1832, %v1830
        %v2031 = vpack.c.b16 %v1833, %v1831
        %v2032 = vpack.c.b16 %v1836, %v1834
        %v2033 = vpack.c.b16 %v1837, %v1835
        %v2034 = vpack.c.b16 %v1840, %v1838
        %v2035 = vpack.c.b16 %v1841, %v1839
        %v2036 = vpack.c.b16 %v1844, %v1842
        %v2037 = vpack.c.b16 %v1845, %v1843
        %v2038 = vpack.c.b16 %v1848, %v1846
        %v2039 = vpack.c.b16 %v1849, %v1847
        %v2040 = vpack.c.b16 %v1852, %v1850
        %v2041 = vpack.c.b16 %v1853, %v1851
        %v2042 = vpack.c.b16 %v1856, %v1854
        %v2043 = vpack.c.b16 %v1857, %v1855
        %v2044 = vpack.c.b16 %v1860, %v1858
        %v2045 = vpack.c.b16 %v1861, %v1859
        %v2046 = vpack.c.b16 %v1864, %v1862
        %v2047 = vpack.c.b16 %v1865, %v1863
        %v2048 = vpack.c.b16 %v1868, %v1866
        %v2049 = vpack.c.b16 %v1869, %v1867
        %v2050 = vpack.c.b16 %v1872, %v1870
        %v2051 = vpack.c.b16 %v1873, %v1871
        %v2052 = vpack.c.b16 %v1876, %v1874
        %v2053 = vpack.c.b16 %v1877, %v1875
        %v2054 = vpack.c.b16 %v1880, %v1878
        %v2055 = vpack.c.b16 %v1881, %v1879
        %v2056 = vpack.c.b16 %v1884, %v1882
        %v2057 = vpack.c.b16 %v1885, %v1883
        %v2058 = vpack.c.b16 %v1888, %v1886
        %v2059 = vpack.c.b16 %v1889, %v1887
        %v2060 = vpack.c.b16 %v1892, %v1890
        %v2061 = vpack.c.b16 %v1893, %v1891
        %v2062 = vpack.c.b16 %v1896, %v1894
        %v2063 = vpack.c.b16 %v1897, %v1895
        %v2064 = vpack.c.b16 %v1900, %v1898
        %v2065 = vpack.c.b16 %v1901, %v1899
        %v2066 = vpack.c.b16 %v1904, %v1902
        %v2067 = vpack.c.b16 %v1905, %v1903
        %v2068 = vpack.c.b16 %v1908, %v1906
        %v2069 = vpack.c.b16 %v1909, %v1907
        %v2070 = vpack.c.b16 %v1912, %v1910
        %v2071 = vpack.c.b16 %v1913, %v1911
        %v2072 = vpack.c.b16 %v1916, %v1914
        %v2073 = vpack.c.b16 %v1917, %v1915
        %v2074 = vpack.c.b16 %v1920, %v1918
        %v2075 = vpack.c.b16 %v1921, %v1919
        %v2076 = vpack.c.b16 %v1924, %v1922
        %v2077 = vpack.c.b16 %v1925, %v1923
        %v2078 = vpack.c.b16 %v1928, %v1926
        %v2079 = vpack.c.b16 %v1929, %v1927
        %v2080 = vpack.c.b16 %v1932, %v1930
        %v2081 = vpack.c.b16 %v1933, %v1931
        %v2082 = vpack.c.b16 %v1936, %v1934
        %v2083 = vpack.c.b16 %v1937, %v1935
        %v2084 = vpack.c.b16 %v1940, %v1938
        %v2085 = vpack.c.b16 %v1941, %v1939
        %v2086 = vpack.c.b16 %v1944, %v1942
        %v2087 = vpack.c.b16 %v1945, %v1943
        %v2088 = vpack.c.b16 %v1948, %v1946
        %v2089 = vpack.c.b16 %v1949, %v1947
        %v2090 = vpack.c.b16 %v1952, %v1950
        %v2091 = vpack.c.b16 %v1953, %v1951
        %v2092 = vpack.c.b16 %v1956, %v1954
        %v2093 = vpack.c.b16 %v1957, %v1955
        %v2094 = vpack.c.b16 %v1960, %v1958
        %v2095 = vpack.c.b16 %v1961, %v1959
        %v2096 = vpack.c.b16 %v1964, %v1962
        %v2097 = vpack.c.b16 %v1965, %v1963
        %v2098 = vpack.c.b16 %v1968, %v1966
        %v2099 = vpack.c.b16 %v1969, %v1967
        %v2100 = vpack.c.b16 %v1972, %v1970
        %v2101 = vpack.c.b16 %v1973, %v1971
        %v2102 = vpack.c.b16 %v1976, %v1974
        %v2103 = vpack.c.b16 %v1977, %v1975
        %v2104 = vpack.c.b16 %v1980, %v1978
        %v2105 = vpack.c.b16 %v1981, %v1979
        %v2106 = vpack.c.b16 %v1984, %v1982
        %v2107 = vpack.c.b16 %v1985, %v1983
        %v2108 = vpack.c.b16 %v1988, %v1986
        %v2109 = vpack.c.b16 %v1989, %v1987
        %v2110 = vpack.c.b16 %v1992, %v1990
        %v2111 = vpack.c.b16 %v1993, %v1991
        %v2112 = vpack.c.b16 %v1996, %v1994
        %v2113 = vpack.c.b16 %v1997, %v1995
        %v2114 = vpack.c.b16 %v2000, %v1998
        %v2115 = vpack.c.b16 %v2001, %v1999
        %v2116 = vpack.c.b16 %v2004, %v2002
        %v2117 = vpack.c.b16 %v2005, %v2003
        %v2231 = vunpack.c.l.b16 %v1653
        %v2232 = vunpack.c.h.b16 %v1653
        %v2233 = vpack.c.b16 %v2231, %v2231
        %v2234 = vpack.c.b16 %v2232, %v2232
        %vm2235 = vcmask 1046528
        %v2236 = vrot.slane %v2006, 1
        %v2237 = vrot.slane %v2008, 1
        %v2238 = vsel %vm2235, %v2236, %v2237
        %v2239 = vrot.slane %v2007, 1
        %v2240 = vrot.slane %v2009, 1
        %v2241 = vsel %vm2235, %v2239, %v2240
        %v2242 = vrot.slane %v2010, 1
        %v2243 = vsel %vm2235, %v2237, %v2242
        %v2244 = vrot.slane %v2011, 1
        %v2245 = vsel %vm2235, %v2240, %v2244
        %v2246 = vrot.slane %v2012, 1
        %v2247 = vsel %vm2235, %v2242, %v2246
        %v2248 = vrot.slane %v2013, 1
        %v2249 = vsel %vm2235, %v2244, %v2248
        %v2250 = vrot.slane %v2014, 1
        %v2251 = vsel %vm2235, %v2246, %v2250
        %v2252 = vrot.slane %v2015, 1
        %v2253 = vsel %vm2235, %v2248, %v2252
        %v2254 = vrot.slane %v2016, 1
        %v2255 = vsel %vm2235, %v2250, %v2254
        %v2256 = vrot.slane %v2017, 1
        %v2257 = vsel %vm2235, %v2252, %v2256
        %v2258 = vrot.slane %v2018, 1
        %v2259 = vsel %vm2235, %v2254, %v2258
        %v2260 = vrot.slane %v2019, 1
        %v2261 = vsel %vm2235, %v2256, %v2260
        %v2262 = vrot.slane %v2020, 1
        %v2263 = vsel %vm2235, %v2258, %v2262
        %v2264 = vrot.slane %v2021, 1
        %v2265 = vsel %vm2235, %v2260, %v2264
        %v2266 = vrot.slane %v2022, 1
        %v2267 = vsel %vm2235, %v2262, %v2266
        %v2268 = vrot.slane %v2023, 1
        %v2269 = vsel %vm2235, %v2264, %v2268
        %v2270 = vrot.slane %v2024, 1
        %v2271 = vsel %vm2235, %v2266, %v2270
        %v2272 = vrot.slane %v2025, 1
        %v2273 = vsel %vm2235, %v2268, %v2272
        %v2274 = vrot.slane %v2026, 1
        %v2275 = vsel %vm2235, %v2270, %v2274
        %v2276 = vrot.slane %v2027, 1
        %v2277 = vsel %vm2235, %v2272, %v2276
        %v2278 = vrot.slane %v2028, 1
        %v2279 = vsel %vm2235, %v2274, %v2278
        %v2280 = vrot.slane %v2029, 1
        %v2281 = vsel %vm2235, %v2276, %v2280
        %v2282 = vrot.slane %v2030, 1
        %v2283 = vsel %vm2235, %v2278, %v2282
        %v2284 = vrot.slane %v2031, 1
        %v2285 = vsel %vm2235, %v2280, %v2284
        %v2286 = vrot.slane %v2032, 1
        %v2287 = vsel %vm2235, %v2282, %v2286
        %v2288 = vrot.slane %v2033, 1
        %v2289 = vsel %vm2235, %v2284, %v2288
        %v2290 = vrot.slane %v2034, 1
        %v2291 = vsel %vm2235, %v2286, %v2290
        %v2292 = vrot.slane %v2035, 1
        %v2293 = vsel %vm2235, %v2288, %v2292
        %v2294 = vrot.slane %v2036, 1
        %v2295 = vsel %vm2235, %v2290, %v2294
        %v2296 = vrot.slane %v2037, 1
        %v2297 = vsel %vm2235, %v2292, %v2296
        %v2298 = vrot.slane %v2038, 1
        %v2299 = vsel %vm2235, %v2294, %v2298
        %v2300 = vrot.slane %v2039, 1
        %v2301 = vsel %vm2235, %v2296, %v2300
        %v2302 = vrot.slane %v2040, 1
        %v2303 = vsel %vm2235, %v2298, %v2302
        %v2304 = vrot.slane %v2041, 1
        %v2305 = vsel %vm2235, %v2300, %v2304
        %v2306 = vrot.slane %v2042, 1
        %v2307 = vsel %vm2235, %v2302, %v2306
        %v2308 = vrot.slane %v2043, 1
        %v2309 = vsel %vm2235, %v2304, %v2308
        %v2310 = vrot.slane %v2044, 1
        %v2311 = vsel %vm2235, %v2306, %v2310
        %v2312 = vrot.slane %v2045, 1
        %v2313 = vsel %vm2235, %v2308, %v2312
        %v2314 = vrot.slane %v2046, 1
        %v2315 = vsel %vm2235, %v2310, %v2314
        %v2316 = vrot.slane %v2047, 1
        %v2317 = vsel %vm2235, %v2312, %v2316
        %v2318 = vrot.slane %v2048, 1
        %v2319 = vsel %vm2235, %v2314, %v2318
        %v2320 = vrot.slane %v2049, 1
        %v2321 = vsel %vm2235, %v2316, %v2320
        %v2322 = vrot.slane %v2050, 1
        %v2323 = vsel %vm2235, %v2318, %v2322
        %v2324 = vrot.slane %v2051, 1
        %v2325 = vsel %vm2235, %v2320, %v2324
        %v2326 = vrot.slane %v2052, 1
        %v2327 = vsel %vm2235, %v2322, %v2326
        %v2328 = vrot.slane %v2053, 1
        %v2329 = vsel %vm2235, %v2324, %v2328
        %v2330 = vrot.slane %v2054, 1
        %v2331 = vsel %vm2235, %v2326, %v2330
        %v2332 = vrot.slane %v2055, 1
        %v2333 = vsel %vm2235, %v2328, %v2332
        %v2334 = vrot.slane %v2056, 1
        %v2335 = vsel %vm2235, %v2330, %v2334
        %v2336 = vrot.slane %v2057, 1
        %v2337 = vsel %vm2235, %v2332, %v2336
        %v2338 = vrot.slane %v2058, 1
        %v2339 = vsel %vm2235, %v2334, %v2338
        %v2340 = vrot.slane %v2059, 1
        %v2341 = vsel %vm2235, %v2336, %v2340
        %v2342 = vrot.slane %v2060, 1
        %v2343 = vsel %vm2235, %v2338, %v2342
        %v2344 = vrot.slane %v2061, 1
        %v2345 = vsel %vm2235, %v2340, %v2344
        %v2346 = vrot.slane %v2062, 1
        %v2347 = vsel %vm2235, %v2342, %v2346
        %v2348 = vrot.slane %v2063, 1
        %v2349 = vsel %vm2235, %v2344, %v2348
        %v2350 = vrot.slane %v2064, 1
        %v2351 = vsel %vm2235, %v2346, %v2350
        %v2352 = vrot.slane %v2065, 1
        %v2353 = vsel %vm2235, %v2348, %v2352
        %v2354 = vrot.slane %v2066, 1
        %v2355 = vsel %vm2235, %v2350, %v2354
        %v2356 = vrot.slane %v2067, 1
        %v2357 = vsel %vm2235, %v2352, %v2356
        %v2358 = vrot.slane %v2068, 1
        %v2359 = vsel %vm2235, %v2354, %v2358
        %v2360 = vrot.slane %v2069, 1
        %v2361 = vsel %vm2235, %v2356, %v2360
        %v2362 = vrot.slane %v2070, 1
        %v2363 = vsel %vm2235, %v2358, %v2362
        %v2364 = vrot.slane %v2071, 1
        %v2365 = vsel %vm2235, %v2360, %v2364
        %v2366 = vrot.slane %v2072, 1
        %v2367 = vsel %vm2235, %v2362, %v2366
        %v2368 = vrot.slane %v2073, 1
        %v2369 = vsel %vm2235, %v2364, %v2368
        %v2370 = vrot.slane %v2074, 1
        %v2371 = vsel %vm2235, %v2366, %v2370
        %v2372 = vrot.slane %v2075, 1
        %v2373 = vsel %vm2235, %v2368, %v2372
        %v2374 = vrot.slane %v2076, 1
        %v2375 = vsel %vm2235, %v2370, %v2374
        %v2376 = vrot.slane %v2077, 1
        %v2377 = vsel %vm2235, %v2372, %v2376
        %v2378 = vrot.slane %v2078, 1
        %v2379 = vsel %vm2235, %v2374, %v2378
        %v2380 = vrot.slane %v2079, 1
        %v2381 = vsel %vm2235, %v2376, %v2380
        %v2382 = vrot.slane %v2080, 1
        %v2383 = vsel %vm2235, %v2378, %v2382
        %v2384 = vrot.slane %v2081, 1
        %v2385 = vsel %vm2235, %v2380, %v2384
        %v2386 = vrot.slane %v2082, 1
        %v2387 = vsel %vm2235, %v2382, %v2386
        %v2388 = vrot.slane %v2083, 1
        %v2389 = vsel %vm2235, %v2384, %v2388
        %v2390 = vrot.slane %v2084, 1
        %v2391 = vsel %vm2235, %v2386, %v2390
        %v2392 = vrot.slane %v2085, 1
        %v2393 = vsel %vm2235, %v2388, %v2392
        %v2394 = vrot.slane %v2086, 1
        %v2395 = vsel %vm2235, %v2390, %v2394
        %v2396 = vrot.slane %v2087, 1
        %v2397 = vsel %vm2235, %v2392, %v2396
        %v2398 = vrot.slane %v2088, 1
        %v2399 = vsel %vm2235, %v2394, %v2398
        %v2400 = vrot.slane %v2089, 1
        %v2401 = vsel %vm2235, %v2396, %v2400
        %v2402 = vrot.slane %v2090, 1
        %v2403 = vsel %vm2235, %v2398, %v2402
        %v2404 = vrot.slane %v2091, 1
        %v2405 = vsel %vm2235, %v2400, %v2404
        %v2406 = vrot.slane %v2092, 1
        %v2407 = vsel %vm2235, %v2402, %v2406
        %v2408 = vrot.slane %v2093, 1
        %v2409 = vsel %vm2235, %v2404, %v2408
        %v2410 = vrot.slane %v2094, 1
        %v2411 = vsel %vm2235, %v2406, %v2410
        %v2412 = vrot.slane %v2095, 1
        %v2413 = vsel %vm2235, %v2408, %v2412
        %v2414 = vrot.slane %v2096, 1
        %v2415 = vsel %vm2235, %v2410, %v2414
        %v2416 = vrot.slane %v2097, 1
        %v2417 = vsel %vm2235, %v2412, %v2416
        %v2418 = vrot.slane %v2098, 1
        %v2419 = vsel %vm2235, %v2414, %v2418
        %v2420 = vrot.slane %v2099, 1
        %v2421 = vsel %vm2235, %v2416, %v2420
        %v2422 = vrot.slane %v2100, 1
        %v2423 = vsel %vm2235, %v2418, %v2422
        %v2424 = vrot.slane %v2101, 1
        %v2425 = vsel %vm2235, %v2420, %v2424
        %v2426 = vrot.slane %v2102, 1
        %v2427 = vsel %vm2235, %v2422, %v2426
        %v2428 = vrot.slane %v2103, 1
        %v2429 = vsel %vm2235, %v2424, %v2428
        %v2430 = vrot.slane %v2104, 1
        %v2431 = vsel %vm2235, %v2426, %v2430
        %v2432 = vrot.slane %v2105, 1
        %v2433 = vsel %vm2235, %v2428, %v2432
        %v2434 = vrot.slane %v2106, 1
        %v2435 = vsel %vm2235, %v2430, %v2434
        %v2436 = vrot.slane %v2107, 1
        %v2437 = vsel %vm2235, %v2432, %v2436
        %v2438 = vrot.slane %v2108, 1
        %v2439 = vsel %vm2235, %v2434, %v2438
        %v2440 = vrot.slane %v2109, 1
        %v2441 = vsel %vm2235, %v2436, %v2440
        %v2442 = vrot.slane %v2110, 1
        %v2443 = vsel %vm2235, %v2438, %v2442
        %v2444 = vrot.slane %v2111, 1
        %v2445 = vsel %vm2235, %v2440, %v2444
        %v2446 = vrot.slane %v2112, 1
        %v2447 = vsel %vm2235, %v2442, %v2446
        %v2448 = vrot.slane %v2113, 1
        %v2449 = vsel %vm2235, %v2444, %v2448
        %v2450 = vrot.slane %v2114, 1
        %v2451 = vsel %vm2235, %v2446, %v2450
        %v2452 = vrot.slane %v2115, 1
        %v2453 = vsel %vm2235, %v2448, %v2452
        %v2454 = vrot.slane %v2116, 1
        %v2455 = vsel %vm2235, %v2450, %v2454
        %v2456 = vrot.slane %v2117, 1
        %v2457 = vsel %vm2235, %v2452, %v2456
        %v2458 = vrot.slane %v2233, 1
        %v2459 = vsel %vm2235, %v2454, %v2458
        %v2460 = vrot.slane %v2234, 1
        %v2461 = vsel %vm2235, %v2456, %v2460
        %vm2574 = vcmask 1045504
        %v2575 = vrot.slane %v2006, 2
        %v2576 = vrot.slane %v2008, 2
        %v2577 = vsel %vm2574, %v2575, %v2576
        %v2578 = vrot.slane %v2007, 2
        %v2579 = vrot.slane %v2009, 2
        %v2580 = vsel %vm2574, %v2578, %v2579
        %v2581 = vrot.slane %v2010, 2
        %v2582 = vsel %vm2574, %v2576, %v2581
        %v2583 = vrot.slane %v2011, 2
        %v2584 = vsel %vm2574, %v2579, %v2583
        %v2585 = vrot.slane %v2012, 2
        %v2586 = vsel %vm2574, %v2581, %v2585
        %v2587 = vrot.slane %v2013, 2
        %v2588 = vsel %vm2574, %v2583, %v2587
        %v2589 = vrot.slane %v2014, 2
        %v2590 = vsel %vm2574, %v2585, %v2589
        %v2591 = vrot.slane %v2015, 2
        %v2592 = vsel %vm2574, %v2587, %v2591
        %v2593 = vrot.slane %v2016, 2
        %v2594 = vsel %vm2574, %v2589, %v2593
        %v2595 = vrot.slane %v2017, 2
        %v2596 = vsel %vm2574, %v2591, %v2595
        %v2597 = vrot.slane %v2018, 2
        %v2598 = vsel %vm2574, %v2593, %v2597
        %v2599 = vrot.slane %v2019, 2
        %v2600 = vsel %vm2574, %v2595, %v2599
        %v2601 = vrot.slane %v2020, 2
        %v2602 = vsel %vm2574, %v2597, %v2601
        %v2603 = vrot.slane %v2021, 2
        %v2604 = vsel %vm2574, %v2599, %v2603
        %v2605 = vrot.slane %v2022, 2
        %v2606 = vsel %vm2574, %v2601, %v2605
        %v2607 = vrot.slane %v2023, 2
        %v2608 = vsel %vm2574, %v2603, %v2607
        %v2609 = vrot.slane %v2024, 2
        %v2610 = vsel %vm2574, %v2605, %v2609
        %v2611 = vrot.slane %v2025, 2
        %v2612 = vsel %vm2574, %v2607, %v2611
        %v2613 = vrot.slane %v2026, 2
        %v2614 = vsel %vm2574, %v2609, %v2613
        %v2615 = vrot.slane %v2027, 2
        %v2616 = vsel %vm2574, %v2611, %v2615
        %v2617 = vrot.slane %v2028, 2
        %v2618 = vsel %vm2574, %v2613, %v2617
        %v2619 = vrot.slane %v2029, 2
        %v2620 = vsel %vm2574, %v2615, %v2619
        %v2621 = vrot.slane %v2030, 2
        %v2622 = vsel %vm2574, %v2617, %v2621
        %v2623 = vrot.slane %v2031, 2
        %v2624 = vsel %vm2574, %v2619, %v2623
        %v2625 = vrot.slane %v2032, 2
        %v2626 = vsel %vm2574, %v2621, %v2625
        %v2627 = vrot.slane %v2033, 2
        %v2628 = vsel %vm2574, %v2623, %v2627
        %v2629 = vrot.slane %v2034, 2
        %v2630 = vsel %vm2574, %v2625, %v2629
        %v2631 = vrot.slane %v2035, 2
        %v2632 = vsel %vm2574, %v2627, %v2631
        %v2633 = vrot.slane %v2036, 2
        %v2634 = vsel %vm2574, %v2629, %v2633
        %v2635 = vrot.slane %v2037, 2
        %v2636 = vsel %vm2574, %v2631, %v2635
        %v2637 = vrot.slane %v2038, 2
        %v2638 = vsel %vm2574, %v2633, %v2637
        %v2639 = vrot.slane %v2039, 2
        %v2640 = vsel %vm2574, %v2635, %v2639
        %v2641 = vrot.slane %v2040, 2
        %v2642 = vsel %vm2574, %v2637, %v2641
        %v2643 = vrot.slane %v2041, 2
        %v2644 = vsel %vm2574, %v2639, %v2643
        %v2645 = vrot.slane %v2042, 2
        %v2646 = vsel %vm2574, %v2641, %v2645
        %v2647 = vrot.slane %v2043, 2
        %v2648 = vsel %vm2574, %v2643, %v2647
        %v2649 = vrot.slane %v2044, 2
        %v2650 = vsel %vm2574, %v2645, %v2649
        %v2651 = vrot.slane %v2045, 2
        %v2652 = vsel %vm2574, %v2647, %v2651
        %v2653 = vrot.slane %v2046, 2
        %v2654 = vsel %vm2574, %v2649, %v2653
        %v2655 = vrot.slane %v2047, 2
        %v2656 = vsel %vm2574, %v2651, %v2655
        %v2657 = vrot.slane %v2048, 2
        %v2658 = vsel %vm2574, %v2653, %v2657
        %v2659 = vrot.slane %v2049, 2
        %v2660 = vsel %vm2574, %v2655, %v2659
        %v2661 = vrot.slane %v2050, 2
        %v2662 = vsel %vm2574, %v2657, %v2661
        %v2663 = vrot.slane %v2051, 2
        %v2664 = vsel %vm2574, %v2659, %v2663
        %v2665 = vrot.slane %v2052, 2
        %v2666 = vsel %vm2574, %v2661, %v2665
        %v2667 = vrot.slane %v2053, 2
        %v2668 = vsel %vm2574, %v2663, %v2667
        %v2669 = vrot.slane %v2054, 2
        %v2670 = vsel %vm2574, %v2665, %v2669
        %v2671 = vrot.slane %v2055, 2
        %v2672 = vsel %vm2574, %v2667, %v2671
        %v2673 = vrot.slane %v2056, 2
        %v2674 = vsel %vm2574, %v2669, %v2673
        %v2675 = vrot.slane %v2057, 2
        %v2676 = vsel %vm2574, %v2671, %v2675
        %v2677 = vrot.slane %v2058, 2
        %v2678 = vsel %vm2574, %v2673, %v2677
        %v2679 = vrot.slane %v2059, 2
        %v2680 = vsel %vm2574, %v2675, %v2679
        %v2681 = vrot.slane %v2060, 2
        %v2682 = vsel %vm2574, %v2677, %v2681
        %v2683 = vrot.slane %v2061, 2
        %v2684 = vsel %vm2574, %v2679, %v2683
        %v2685 = vrot.slane %v2062, 2
        %v2686 = vsel %vm2574, %v2681, %v2685
        %v2687 = vrot.slane %v2063, 2
        %v2688 = vsel %vm2574, %v2683, %v2687
        %v2689 = vrot.slane %v2064, 2
        %v2690 = vsel %vm2574, %v2685, %v2689
        %v2691 = vrot.slane %v2065, 2
        %v2692 = vsel %vm2574, %v2687, %v2691
        %v2693 = vrot.slane %v2066, 2
        %v2694 = vsel %vm2574, %v2689, %v2693
        %v2695 = vrot.slane %v2067, 2
        %v2696 = vsel %vm2574, %v2691, %v2695
        %v2697 = vrot.slane %v2068, 2
        %v2698 = vsel %vm2574, %v2693, %v2697
        %v2699 = vrot.slane %v2069, 2
        %v2700 = vsel %vm2574, %v2695, %v2699
        %v2701 = vrot.slane %v2070, 2
        %v2702 = vsel %vm2574, %v2697, %v2701
        %v2703 = vrot.slane %v2071, 2
        %v2704 = vsel %vm2574, %v2699, %v2703
        %v2705 = vrot.slane %v2072, 2
        %v2706 = vsel %vm2574, %v2701, %v2705
        %v2707 = vrot.slane %v2073, 2
        %v2708 = vsel %vm2574, %v2703, %v2707
        %v2709 = vrot.slane %v2074, 2
        %v2710 = vsel %vm2574, %v2705, %v2709
        %v2711 = vrot.slane %v2075, 2
        %v2712 = vsel %vm2574, %v2707, %v2711
        %v2713 = vrot.slane %v2076, 2
        %v2714 = vsel %vm2574, %v2709, %v2713
        %v2715 = vrot.slane %v2077, 2
        %v2716 = vsel %vm2574, %v2711, %v2715
        %v2717 = vrot.slane %v2078, 2
        %v2718 = vsel %vm2574, %v2713, %v2717
        %v2719 = vrot.slane %v2079, 2
        %v2720 = vsel %vm2574, %v2715, %v2719
        %v2721 = vrot.slane %v2080, 2
        %v2722 = vsel %vm2574, %v2717, %v2721
        %v2723 = vrot.slane %v2081, 2
        %v2724 = vsel %vm2574, %v2719, %v2723
        %v2725 = vrot.slane %v2082, 2
        %v2726 = vsel %vm2574, %v2721, %v2725
        %v2727 = vrot.slane %v2083, 2
        %v2728 = vsel %vm2574, %v2723, %v2727
        %v2729 = vrot.slane %v2084, 2
        %v2730 = vsel %vm2574, %v2725, %v2729
        %v2731 = vrot.slane %v2085, 2
        %v2732 = vsel %vm2574, %v2727, %v2731
        %v2733 = vrot.slane %v2086, 2
        %v2734 = vsel %vm2574, %v2729, %v2733
        %v2735 = vrot.slane %v2087, 2
        %v2736 = vsel %vm2574, %v2731, %v2735
        %v2737 = vrot.slane %v2088, 2
        %v2738 = vsel %vm2574, %v2733, %v2737
        %v2739 = vrot.slane %v2089, 2
        %v2740 = vsel %vm2574, %v2735, %v2739
        %v2741 = vrot.slane %v2090, 2
        %v2742 = vsel %vm2574, %v2737, %v2741
        %v2743 = vrot.slane %v2091, 2
        %v2744 = vsel %vm2574, %v2739, %v2743
        %v2745 = vrot.slane %v2092, 2
        %v2746 = vsel %vm2574, %v2741, %v2745
        %v2747 = vrot.slane %v2093, 2
        %v2748 = vsel %vm2574, %v2743, %v2747
        %v2749 = vrot.slane %v2094, 2
        %v2750 = vsel %vm2574, %v2745, %v2749
        %v2751 = vrot.slane %v2095, 2
        %v2752 = vsel %vm2574, %v2747, %v2751
        %v2753 = vrot.slane %v2096, 2
        %v2754 = vsel %vm2574, %v2749, %v2753
        %v2755 = vrot.slane %v2097, 2
        %v2756 = vsel %vm2574, %v2751, %v2755
        %v2757 = vrot.slane %v2098, 2
        %v2758 = vsel %vm2574, %v2753, %v2757
        %v2759 = vrot.slane %v2099, 2
        %v2760 = vsel %vm2574, %v2755, %v2759
        %v2761 = vrot.slane %v2100, 2
        %v2762 = vsel %vm2574, %v2757, %v2761
        %v2763 = vrot.slane %v2101, 2
        %v2764 = vsel %vm2574, %v2759, %v2763
        %v2765 = vrot.slane %v2102, 2
        %v2766 = vsel %vm2574, %v2761, %v2765
        %v2767 = vrot.slane %v2103, 2
        %v2768 = vsel %vm2574, %v2763, %v2767
        %v2769 = vrot.slane %v2104, 2
        %v2770 = vsel %vm2574, %v2765, %v2769
        %v2771 = vrot.slane %v2105, 2
        %v2772 = vsel %vm2574, %v2767, %v2771
        %v2773 = vrot.slane %v2106, 2
        %v2774 = vsel %vm2574, %v2769, %v2773
        %v2775 = vrot.slane %v2107, 2
        %v2776 = vsel %vm2574, %v2771, %v2775
        %v2777 = vrot.slane %v2108, 2
        %v2778 = vsel %vm2574, %v2773, %v2777
        %v2779 = vrot.slane %v2109, 2
        %v2780 = vsel %vm2574, %v2775, %v2779
        %v2781 = vrot.slane %v2110, 2
        %v2782 = vsel %vm2574, %v2777, %v2781
        %v2783 = vrot.slane %v2111, 2
        %v2784 = vsel %vm2574, %v2779, %v2783
        %v2785 = vrot.slane %v2112, 2
        %v2786 = vsel %vm2574, %v2781, %v2785
        %v2787 = vrot.slane %v2113, 2
        %v2788 = vsel %vm2574, %v2783, %v2787
        %v2789 = vrot.slane %v2114, 2
        %v2790 = vsel %vm2574, %v2785, %v2789
        %v2791 = vrot.slane %v2115, 2
        %v2792 = vsel %vm2574, %v2787, %v2791
        %v2793 = vrot.slane %v2116, 2
        %v2794 = vsel %vm2574, %v2789, %v2793
        %v2795 = vrot.slane %v2117, 2
        %v2796 = vsel %vm2574, %v2791, %v2795
        %v2797 = vrot.slane %v2233, 2
        %v2798 = vsel %vm2574, %v2793, %v2797
        %v2799 = vrot.slane %v2234, 2
        %v2800 = vsel %vm2574, %v2795, %v2799
        %v2920 = vunpack.c.l.b16 %v1654
        %v2921 = vunpack.c.h.b16 %v1654
        %v2922 = vunpack.c.l.b16 %v1655
        %v2923 = vunpack.c.h.b16 %v1655
        %v2924 = vunpack.c.l.b16 %v1656
        %v2925 = vunpack.c.h.b16 %v1656
        %v2926 = vunpack.c.l.b16 %v1657
        %v2927 = vunpack.c.h.b16 %v1657
        %v2928 = vunpack.c.l.b16 %v1658
        %v2929 = vunpack.c.h.b16 %v1658
        %v2930 = vunpack.c.l.b16 %v1659
        %v2931 = vunpack.c.h.b16 %v1659
        %v2932 = vunpack.c.l.b16 %v1660
        %v2933 = vunpack.c.h.b16 %v1660
        %v2934 = vpack.c.b16 %v2920, %v2231
        %v2935 = vpack.c.b16 %v2921, %v2232
        %v2936 = vpack.c.b16 %v2924, %v2922
        %v2937 = vpack.c.b16 %v2925, %v2923
        %v2938 = vpack.c.b16 %v2928, %v2926
        %v2939 = vpack.c.b16 %v2929, %v2927
        %v2940 = vpack.c.b16 %v2932, %v2930
        %v2941 = vpack.c.b16 %v2933, %v2931
        %v2951 = vunpack.c.l.b16 %v1661
        %v2952 = vunpack.c.h.b16 %v1661
        %v2953 = vpack.c.b16 %v2951, %v2951
        %v2954 = vpack.c.b16 %v2952, %v2952
        %v2955 = vrot.slane %v2934, 1
        %v2956 = vsel %vm2235, %v2454, %v2955
        %v2957 = vrot.slane %v2935, 1
        %v2958 = vsel %vm2235, %v2456, %v2957
        %v2959 = vrot.slane %v2936, 1
        %v2960 = vsel %vm2235, %v2955, %v2959
        %v2961 = vrot.slane %v2937, 1
        %v2962 = vsel %vm2235, %v2957, %v2961
        %v2963 = vrot.slane %v2938, 1
        %v2964 = vsel %vm2235, %v2959, %v2963
        %v2965 = vrot.slane %v2939, 1
        %v2966 = vsel %vm2235, %v2961, %v2965
        %v2967 = vrot.slane %v2940, 1
        %v2968 = vsel %vm2235, %v2963, %v2967
        %v2969 = vrot.slane %v2941, 1
        %v2970 = vsel %vm2235, %v2965, %v2969
        %v2971 = vrot.slane %v2953, 1
        %v2972 = vsel %vm2235, %v2967, %v2971
        %v2973 = vrot.slane %v2954, 1
        %v2974 = vsel %vm2235, %v2969, %v2973
        %v2985 = vrot.slane %v2934, 2
        %v2986 = vsel %vm2574, %v2793, %v2985
        %v2987 = vrot.slane %v2935, 2
        %v2988 = vsel %vm2574, %v2795, %v2987
        %v2989 = vrot.slane %v2936, 2
        %v2990 = vsel %vm2574, %v2985, %v2989
        %v2991 = vrot.slane %v2937, 2
        %v2992 = vsel %vm2574, %v2987, %v2991
        %v2993 = vrot.slane %v2938, 2
        %v2994 = vsel %vm2574, %v2989, %v2993
        %v2995 = vrot.slane %v2939, 2
        %v2996 = vsel %vm2574, %v2991, %v2995
        %v2997 = vrot.slane %v2940, 2
        %v2998 = vsel %vm2574, %v2993, %v2997
        %v2999 = vrot.slane %v2941, 2
        %v3000 = vsel %vm2574, %v2995, %v2999
        %v3001 = vrot.slane %v2953, 2
        %v3002 = vsel %vm2574, %v2997, %v3001
        %v3003 = vrot.slane %v2954, 2
        %v3004 = vsel %vm2574, %v2999, %v3003
        %v3022 = vunpack.c.l.b16 %v1662
        %v3023 = vunpack.c.h.b16 %v1662
        %v3024 = vunpack.c.l.b16 %v1663
        %v3025 = vunpack.c.h.b16 %v1663
        %v3026 = vunpack.c.l.b16 %v1664
        %v3027 = vunpack.c.h.b16 %v1664
        %v3028 = vunpack.c.l.b16 %v1665
        %v3029 = vunpack.c.h.b16 %v1665
        %v3030 = vunpack.c.l.b16 %v1666
        %v3031 = vunpack.c.h.b16 %v1666
        %v3032 = vunpack.c.l.b16 %v1667
        %v3033 = vunpack.c.h.b16 %v1667
        %v3034 = vunpack.c.l.b16 %v1668
        %v3035 = vunpack.c.h.b16 %v1668
        %v3036 = vpack.c.b16 %v3022, %v2951
        %v3037 = vpack.c.b16 %v3023, %v2952
        %v3038 = vpack.c.b16 %v3026, %v3024
        %v3039 = vpack.c.b16 %v3027, %v3025
        %v3040 = vpack.c.b16 %v3030, %v3028
        %v3041 = vpack.c.b16 %v3031, %v3029
        %v3042 = vpack.c.b16 %v3034, %v3032
        %v3043 = vpack.c.b16 %v3035, %v3033
        %v3053 = vunpack.c.l.b16 %v1669
        %v3054 = vunpack.c.h.b16 %v1669
        %v3055 = vpack.c.b16 %v3053, %v3053
        %v3056 = vpack.c.b16 %v3054, %v3054
        %v3057 = vrot.slane %v3036, 1
        %v3058 = vsel %vm2235, %v2967, %v3057
        %v3059 = vrot.slane %v3037, 1
        %v3060 = vsel %vm2235, %v2969, %v3059
        %v3061 = vrot.slane %v3038, 1
        %v3062 = vsel %vm2235, %v3057, %v3061
        %v3063 = vrot.slane %v3039, 1
        %v3064 = vsel %vm2235, %v3059, %v3063
        %v3065 = vrot.slane %v3040, 1
        %v3066 = vsel %vm2235, %v3061, %v3065
        %v3067 = vrot.slane %v3041, 1
        %v3068 = vsel %vm2235, %v3063, %v3067
        %v3069 = vrot.slane %v3042, 1
        %v3070 = vsel %vm2235, %v3065, %v3069
        %v3071 = vrot.slane %v3043, 1
        %v3072 = vsel %vm2235, %v3067, %v3071
        %v3073 = vrot.slane %v3055, 1
        %v3074 = vsel %vm2235, %v3069, %v3073
        %v3075 = vrot.slane %v3056, 1
        %v3076 = vsel %vm2235, %v3071, %v3075
        %v3087 = vrot.slane %v3036, 2
        %v3088 = vsel %vm2574, %v2997, %v3087
        %v3089 = vrot.slane %v3037, 2
        %v3090 = vsel %vm2574, %v2999, %v3089
        %v3091 = vrot.slane %v3038, 2
        %v3092 = vsel %vm2574, %v3087, %v3091
        %v3093 = vrot.slane %v3039, 2
        %v3094 = vsel %vm2574, %v3089, %v3093
        %v3095 = vrot.slane %v3040, 2
        %v3096 = vsel %vm2574, %v3091, %v3095
        %v3097 = vrot.slane %v3041, 2
        %v3098 = vsel %vm2574, %v3093, %v3097
        %v3099 = vrot.slane %v3042, 2
        %v3100 = vsel %vm2574, %v3095, %v3099
        %v3101 = vrot.slane %v3043, 2
        %v3102 = vsel %vm2574, %v3097, %v3101
        %v3103 = vrot.slane %v3055, 2
        %v3104 = vsel %vm2574, %v3099, %v3103
        %v3105 = vrot.slane %v3056, 2
        %v3106 = vsel %vm2574, %v3101, %v3105
        %v3117 = vld [vmem:[%s1377] sm:$0xf]
        %v3118 = vld [vmem:[%s1377 + $0x4] sm:$0xf]
        %v3119 = vld [vmem:[%s1377 + $0x8] sm:$0xf]
        %v3120 = vld [vmem:[%s1377 + $0xc] sm:$0xf]
        %v3121 = vld [vmem:[%s1377 + $0x10] sm:$0xf]
        %v3122 = vld [vmem:[%s1377 + $0x14] sm:$0xf]
        %v3123 = vld [vmem:[%s1377 + $0x18] sm:$0xf]
        %v3124 = vld [vmem:[%s1377 + $0x1c] sm:$0xf]
        %v3125 = vld [vmem:[%s1377 + $0x20] sm:$0xf]
        %v3126 = vld [vmem:[%s1377 + $0x24] sm:$0xf]
        %v3127 = vld [vmem:[%s1377 + $0x28] sm:$0xf]
        %v3128 = vld [vmem:[%s1377 + $0x2c] sm:$0xf]
        %v3129 = vld [vmem:[%s1377 + $0x30] sm:$0xf]
        %v3130 = vld [vmem:[%s1377 + $0x34] sm:$0xf]
        %v3131 = vld [vmem:[%s1377 + $0x38] sm:$0xf]
        %v3132 = vld [vmem:[%s1377 + $0x3c] sm:$0xf]
        %v3133 = vld [vmem:[%s1377 + $0x40] sm:$0xf]
        %v3134 = vld [vmem:[%s1377 + $0x44] sm:$0xf]
        %v3135 = vld [vmem:[%s1377 + $0x48] sm:$0xf]
        %v3136 = vld [vmem:[%s1377 + $0x4c] sm:$0xf]
        %v3137 = vld [vmem:[%s1377 + $0x50] sm:$0xf]
        %v3138 = vld [vmem:[%s1377 + $0x54] sm:$0xf]
        %v3139 = vld [vmem:[%s1377 + $0x58] sm:$0xf]
        %v3140 = vld [vmem:[%s1377 + $0x5c] sm:$0xf]
        %v3141 = vld [vmem:[%s1377 + $0x60] sm:$0xf]
        %v3142 = vld [vmem:[%s1377 + $0x64] sm:$0xf]
        %v3143 = vld [vmem:[%s1377 + $0x68] sm:$0xf]
        %v3144 = vld [vmem:[%s1377 + $0x6c] sm:$0xf]
        %v3145 = vld [vmem:[%s1377 + $0x70] sm:$0xf]
        %v3146 = vld [vmem:[%s1377 + $0x74] sm:$0xf]
        %v3147 = vld [vmem:[%s1377 + $0x78] sm:$0xf]
        %v3148 = vld [vmem:[%s1377 + $0x7c] sm:$0xf]
        %v3149 = vld [vmem:[%s1377 + $0x80] sm:$0xf]
        %v3150 = vld [vmem:[%s1377 + $0x84] sm:$0xf]
        %v3151 = vld [vmem:[%s1377 + $0x88] sm:$0xf]
        %v3152 = vld [vmem:[%s1377 + $0x8c] sm:$0xf]
        %v3153 = vld [vmem:[%s1377 + $0x90] sm:$0xf]
        %v3154 = vld [vmem:[%s1377 + $0x94] sm:$0xf]
        %v3155 = vld [vmem:[%s1377 + $0x98] sm:$0xf]
        %v3156 = vld [vmem:[%s1377 + $0x9c] sm:$0xf]
        %v3157 = vld [vmem:[%s1377 + $0xa0] sm:$0xf]
        %v3158 = vld [vmem:[%s1377 + $0xa4] sm:$0xf]
        %v3159 = vld [vmem:[%s1377 + $0xa8] sm:$0xf]
        %v3160 = vld [vmem:[%s1377 + $0xac] sm:$0xf]
        %v3161 = vld [vmem:[%s1377 + $0xb0] sm:$0xf]
        %v3162 = vld [vmem:[%s1377 + $0xb4] sm:$0xf]
        %v3163 = vld [vmem:[%s1377 + $0xb8] sm:$0xf]
        %v3164 = vld [vmem:[%s1377 + $0xbc] sm:$0xf]
        %v3165 = vld [vmem:[%s1377 + $0xc0] sm:$0xf]
        %v3166 = vld [vmem:[%s1377 + $0xc4] sm:$0xf]
        %v3167 = vld [vmem:[%s1377 + $0xc8] sm:$0xf]
        %v3168 = vld [vmem:[%s1377 + $0xcc] sm:$0xf]
        %v3169 = vld [vmem:[%s1377 + $0xd0] sm:$0xf]
        %v3170 = vld [vmem:[%s1377 + $0xd4] sm:$0xf]
        %v3171 = vld [vmem:[%s1377 + $0xd8] sm:$0xf]
        %v3172 = vld [vmem:[%s1377 + $0xdc] sm:$0xf]
        %v3173 = vld [vmem:[%s1377 + $0xe0] sm:$0xf]
        %v3174 = vld [vmem:[%s1377 + $0xe4] sm:$0xf]
        %v3175 = vld [vmem:[%s1377 + $0xe8] sm:$0xf]
        %v3176 = vld [vmem:[%s1377 + $0xec] sm:$0xf]
        %v3177 = vld [vmem:[%s1377 + $0xf0] sm:$0xf]
        %v3178 = vld [vmem:[%s1377 + $0xf4] sm:$0xf]
        %v3179 = vld [vmem:[%s1377 + $0xf8] sm:$0xf]
        %v3180 = vld [vmem:[%s1377 + $0xfc] sm:$0xf]
        %v3181 = vld [vmem:[%s1377 + $0x100] sm:$0xf]
        %v3182 = vld [vmem:[%s1377 + $0x104] sm:$0xf]
        %v3183 = vld [vmem:[%s1377 + $0x108] sm:$0xf]
        %v3184 = vld [vmem:[%s1377 + $0x10c] sm:$0xf]
        %v3185 = vld [vmem:[%s1377 + $0x110] sm:$0xf]
        %v3186 = vld [vmem:[%s1377 + $0x114] sm:$0xf]
        %v3187 = vld [vmem:[%s1377 + $0x118] sm:$0xf]
        %v3188 = vld [vmem:[%s1377 + $0x11c] sm:$0xf]
        %v3189 = vld [vmem:[%s1377 + $0x120] sm:$0xf]
        %v3190 = vld [vmem:[%s1377 + $0x124] sm:$0xf]
        %v3191 = vld [vmem:[%s1377 + $0x128] sm:$0xf]
        %v3192 = vld [vmem:[%s1377 + $0x12c] sm:$0xf]
        %v3193 = vld [vmem:[%s1377 + $0x130] sm:$0xf]
        %v3194 = vld [vmem:[%s1377 + $0x134] sm:$0xf]
        %v3195 = vld [vmem:[%s1377 + $0x138] sm:$0xf]
        %v3196 = vld [vmem:[%s1377 + $0x13c] sm:$0xf]
        %v3197 = vld [vmem:[%s1377 + $0x140] sm:$0xf]
        %v3198 = vld [vmem:[%s1377 + $0x144] sm:$0xf]
        %v3199 = vld [vmem:[%s1377 + $0x148] sm:$0xf]
        %v3200 = vld [vmem:[%s1377 + $0x14c] sm:$0xf]
        %v3201 = vld [vmem:[%s1377 + $0x150] sm:$0xf]
        %v3202 = vld [vmem:[%s1377 + $0x154] sm:$0xf]
        %v3203 = vld [vmem:[%s1377 + $0x158] sm:$0xf]
        %v3204 = vld [vmem:[%s1377 + $0x15c] sm:$0xf]
        %v3205 = vld [vmem:[%s1377 + $0x160] sm:$0xf]
        %v3206 = vld [vmem:[%s1377 + $0x164] sm:$0xf]
        %v3207 = vld [vmem:[%s1377 + $0x168] sm:$0xf]
        %v3208 = vld [vmem:[%s1377 + $0x16c] sm:$0xf]
        %v3209 = vld [vmem:[%s1377 + $0x170] sm:$0xf]
        %v3210 = vld [vmem:[%s1377 + $0x174] sm:$0xf]
        %v3211 = vld [vmem:[%s1377 + $0x178] sm:$0xf]
        %v3212 = vld [vmem:[%s1377 + $0x17c] sm:$0xf]
        %v3213 = vld [vmem:[%s1377 + $0x180] sm:$0xf]
        %v3214 = vld [vmem:[%s1377 + $0x184] sm:$0xf]
        %v3215 = vld [vmem:[%s1377 + $0x188] sm:$0xf]
        %v3216 = vld [vmem:[%s1377 + $0x18c] sm:$0xf]
        %v3217 = vld [vmem:[%s1377 + $0x190] sm:$0xf]
        %v3218 = vld [vmem:[%s1377 + $0x194] sm:$0xf]
        %v3219 = vld [vmem:[%s1377 + $0x198] sm:$0xf]
        %v3220 = vld [vmem:[%s1377 + $0x19c] sm:$0xf]
        %v3221 = vld [vmem:[%s1377 + $0x1a0] sm:$0xf]
        %v3222 = vld [vmem:[%s1377 + $0x1a4] sm:$0xf]
        %v3223 = vld [vmem:[%s1377 + $0x1a8] sm:$0xf]
        %v3224 = vld [vmem:[%s1377 + $0x1ac] sm:$0xf]
        %v3225 = vld [vmem:[%s1377 + $0x1b0] sm:$0xf]
        %v3226 = vld [vmem:[%s1377 + $0x1b4] sm:$0xf]
        %v3227 = vld [vmem:[%s1377 + $0x1b8] sm:$0xf]
        %v3228 = vld [vmem:[%s1377 + $0x1bc] sm:$0xf]
        %v3229 = vld [vmem:[%s1377 + $0x1c0] sm:$0xf]
        %v3230 = vld [vmem:[%s1377 + $0x1c4] sm:$0xf]
        %v3231 = vld [vmem:[%s1377 + $0x1c8] sm:$0xf]
        %v3232 = vld [vmem:[%s1377 + $0x1cc] sm:$0xf]
        %v3233 = vld [vmem:[%s1377 + $0x1d0] sm:$0xf]
        %v3234 = vld [vmem:[%s1377 + $0x1d4] sm:$0xf]
        %v3235 = vld [vmem:[%s1377 + $0x1d8] sm:$0xf]
        %v3236 = vld [vmem:[%s1377 + $0x1dc] sm:$0xf]
        %v3237 = vld [vmem:[%s1377 + $0x1e0] sm:$0xf]
        %v3238 = vld [vmem:[%s1377 + $0x1e4] sm:$0xf]
        %v3239 = vld [vmem:[%s1377 + $0x1e8] sm:$0xf]
        %v3240 = vld [vmem:[%s1377 + $0x1ec] sm:$0xf]
        %v3241 = vld [vmem:[%s1377 + $0x1f0] sm:$0xf]
        %v3242 = vld [vmem:[%s1377 + $0x1f4] sm:$0xf]
        %v3243 = vld [vmem:[%s1377 + $0x1f8] sm:$0xf]
        %v3244 = vld [vmem:[%s1377 + $0x1fc] sm:$0xf]
        %v3245 = vld [vmem:[%s1377 + $0x200] sm:$0xf]
        %v3246 = vld [vmem:[%s1377 + $0x204] sm:$0xf]
        %v3247 = vld [vmem:[%s1377 + $0x208] sm:$0xf]
        %v3248 = vld [vmem:[%s1377 + $0x20c] sm:$0xf]
        %v3249 = vld [vmem:[%s1377 + $0x210] sm:$0xf]
        %v3250 = vld [vmem:[%s1377 + $0x214] sm:$0xf]
        %v3251 = vld [vmem:[%s1377 + $0x218] sm:$0xf]
        %v3252 = vld [vmem:[%s1377 + $0x21c] sm:$0xf]
        %v3253 = vld [vmem:[%s1377 + $0x220] sm:$0xf]
        %v3254 = vld [vmem:[%s1377 + $0x224] sm:$0xf]
        %v3255 = vld [vmem:[%s1377 + $0x228] sm:$0xf]
        %v3256 = vld [vmem:[%s1377 + $0x22c] sm:$0xf]
        %v3257 = vld [vmem:[%s1377 + $0x230] sm:$0xf]
        %v3258 = vld [vmem:[%s1377 + $0x234] sm:$0xf]
        %v3259 = vld [vmem:[%s1377 + $0x238] sm:$0xf]
        %v3260 = vld [vmem:[%s1377 + $0x23c] sm:$0xf]
        %v3261 = vld [vmem:[%s1377 + $0x240] sm:$0xf]
        %v3262 = vld [vmem:[%s1377 + $0x244] sm:$0xf]
        %v3263 = vld [vmem:[%s1377 + $0x248] sm:$0xf]
        %v3264 = vld [vmem:[%s1377 + $0x24c] sm:$0xf]
        %v3265 = vld [vmem:[%s1377 + $0x250] sm:$0xf]
        %v3266 = vld [vmem:[%s1377 + $0x254] sm:$0xf]
        %v3267 = vld [vmem:[%s1377 + $0x258] sm:$0xf]
        %v3268 = vld [vmem:[%s1377 + $0x25c] sm:$0xf]
        %v3269 = vld [vmem:[%s1377 + $0x260] sm:$0xf]
        %v3270 = vld [vmem:[%s1377 + $0x264] sm:$0xf]
        %v3271 = vld [vmem:[%s1377 + $0x268] sm:$0xf]
        %v3272 = vld [vmem:[%s1377 + $0x26c] sm:$0xf]
        %v3273 = vld [vmem:[%s1377 + $0x270] sm:$0xf]
        %v3274 = vld [vmem:[%s1377 + $0x274] sm:$0xf]
        %v3275 = vld [vmem:[%s1377 + $0x278] sm:$0xf]
        %v3276 = vld [vmem:[%s1377 + $0x27c] sm:$0xf]
        %v3277 = vld [vmem:[%s1377 + $0x280] sm:$0xf]
        %v3278 = vld [vmem:[%s1377 + $0x284] sm:$0xf]
        %v3279 = vld [vmem:[%s1377 + $0x288] sm:$0xf]
        %v3280 = vld [vmem:[%s1377 + $0x28c] sm:$0xf]
        %v3281 = vld [vmem:[%s1377 + $0x290] sm:$0xf]
        %v3282 = vld [vmem:[%s1377 + $0x294] sm:$0xf]
        %v3283 = vld [vmem:[%s1377 + $0x298] sm:$0xf]
        %v3284 = vld [vmem:[%s1377 + $0x29c] sm:$0xf]
        %v3285 = vld [vmem:[%s1377 + $0x2a0] sm:$0xf]
        %v3286 = vld [vmem:[%s1377 + $0x2a4] sm:$0xf]
        %v3287 = vld [vmem:[%s1377 + $0x2a8] sm:$0xf]
        %v3288 = vld [vmem:[%s1377 + $0x2ac] sm:$0xf]
        %v3289 = vld [vmem:[%s1377 + $0x2b0] sm:$0xf]
        %v3290 = vld [vmem:[%s1377 + $0x2b4] sm:$0xf]
        %v3291 = vld [vmem:[%s1377 + $0x2b8] sm:$0xf]
        %v3292 = vld [vmem:[%s1377 + $0x2bc] sm:$0xf]
        %v3293 = vld [vmem:[%s1377 + $0x2c0] sm:$0xf]
        %v3294 = vld [vmem:[%s1377 + $0x2c4] sm:$0xf]
        %v3295 = vld [vmem:[%s1377 + $0x2c8] sm:$0xf]
        %v3296 = vld [vmem:[%s1377 + $0x2cc] sm:$0xf]
        %v3297 = vld [vmem:[%s1377 + $0x2d0] sm:$0xf]
        %v3298 = vld [vmem:[%s1377 + $0x2d4] sm:$0xf]
        %v3299 = vld [vmem:[%s1377 + $0x2d8] sm:$0xf]
        %v3300 = vld [vmem:[%s1377 + $0x2dc] sm:$0xf]
        %v3301 = vld [vmem:[%s1377 + $0x2e0] sm:$0xf]
        %v3302 = vld [vmem:[%s1377 + $0x2e4] sm:$0xf]
        %v3303 = vld [vmem:[%s1377 + $0x2e8] sm:$0xf]
        %v3304 = vld [vmem:[%s1377 + $0x2ec] sm:$0xf]
        %v3305 = vld [vmem:[%s1377 + $0x2f0] sm:$0xf]
        %v3306 = vld [vmem:[%s1377 + $0x2f4] sm:$0xf]
        %v3307 = vld [vmem:[%s1377 + $0x2f8] sm:$0xf]
        %v3308 = vld [vmem:[%s1377 + $0x2fc] sm:$0xf]
        %v3309 = vld [vmem:[%s1377 + $0x300] sm:$0xf]
        %v3310 = vld [vmem:[%s1377 + $0x304] sm:$0xf]
        %v3311 = vld [vmem:[%s1377 + $0x308] sm:$0xf]
        %v3312 = vld [vmem:[%s1377 + $0x30c] sm:$0xf]
        %v3313 = vld [vmem:[%s1377 + $0x310] sm:$0xf]
        %v3314 = vld [vmem:[%s1377 + $0x314] sm:$0xf]
        %v3315 = vld [vmem:[%s1377 + $0x318] sm:$0xf]
        %v3316 = vld [vmem:[%s1377 + $0x31c] sm:$0xf]
        %v3317 = vld [vmem:[%s1377 + $0x320] sm:$0xf]
        %v3318 = vld [vmem:[%s1377 + $0x324] sm:$0xf]
        %v3319 = vld [vmem:[%s1377 + $0x328] sm:$0xf]
        %v3320 = vld [vmem:[%s1377 + $0x32c] sm:$0xf]
        %v3321 = vld [vmem:[%s1377 + $0x330] sm:$0xf]
        %v3322 = vld [vmem:[%s1377 + $0x334] sm:$0xf]
        %v3323 = vld [vmem:[%s1377 + $0x338] sm:$0xf]
        %v3324 = vld [vmem:[%s1377 + $0x33c] sm:$0xf]
        %v3325 = vld [vmem:[%s1377 + $0x340] sm:$0xf]
        %v3326 = vld [vmem:[%s1377 + $0x344] sm:$0xf]
        %v3327 = vld [vmem:[%s1377 + $0x348] sm:$0xf]
        %v3328 = vld [vmem:[%s1377 + $0x34c] sm:$0xf]
        %v3329 = vld [vmem:[%s1377 + $0x350] sm:$0xf]
        %v3330 = vld [vmem:[%s1377 + $0x354] sm:$0xf]
        %v3331 = vld [vmem:[%s1377 + $0x358] sm:$0xf]
        %v3332 = vld [vmem:[%s1377 + $0x35c] sm:$0xf]
        %v3333 = vld [vmem:[%s1377 + $0x360] sm:$0xf]
        %v3334 = vld [vmem:[%s1377 + $0x364] sm:$0xf]
        %v3335 = vld [vmem:[%s1377 + $0x368] sm:$0xf]
        %v3336 = vld [vmem:[%s1377 + $0x36c] sm:$0xf]
        %v3337 = vld [vmem:[%s1377 + $0x370] sm:$0xf]
        %v3338 = vld [vmem:[%s1377 + $0x374] sm:$0xf]
        %v3339 = vld [vmem:[%s1377 + $0x378] sm:$0xf]
        %v3340 = vld [vmem:[%s1377 + $0x37c] sm:$0xf]
        %v3341 = vld [vmem:[%s1377 + $0x380] sm:$0xf]
        %v3342 = vld [vmem:[%s1377 + $0x384] sm:$0xf]
        %v3343 = vld [vmem:[%s1377 + $0x388] sm:$0xf]
        %v3344 = vld [vmem:[%s1377 + $0x38c] sm:$0xf]
        %v3345 = vld [vmem:[%s1377 + $0x390] sm:$0xf]
        %v3346 = vld [vmem:[%s1377 + $0x394] sm:$0xf]
        %v3347 = vld [vmem:[%s1377 + $0x398] sm:$0xf]
        %v3348 = vld [vmem:[%s1377 + $0x39c] sm:$0xf]
        %v3349 = vld [vmem:[%s1377 + $0x3a0] sm:$0xf]
        %v3350 = vld [vmem:[%s1377 + $0x3a4] sm:$0xf]
        %v3351 = vld [vmem:[%s1377 + $0x3a8] sm:$0xf]
        %v3352 = vld [vmem:[%s1377 + $0x3ac] sm:$0xf]
        %v3353 = vld [vmem:[%s1377 + $0x3b0] sm:$0xf]
        %v3354 = vld [vmem:[%s1377 + $0x3b4] sm:$0xf]
        %v3355 = vld [vmem:[%s1377 + $0x3b8] sm:$0xf]
        %v3356 = vld [vmem:[%s1377 + $0x3bc] sm:$0xf]
        %v3357 = vld [vmem:[%s1377 + $0x3c0] sm:$0xf]
        %v3358 = vld [vmem:[%s1377 + $0x3c4] sm:$0xf]
        %v3359 = vld [vmem:[%s1377 + $0x3c8] sm:$0xf]
        %v3360 = vld [vmem:[%s1377 + $0x3cc] sm:$0xf]
        %v3361 = vld [vmem:[%s1377 + $0x3d0] sm:$0xf]
        %v3362 = vld [vmem:[%s1377 + $0x3d4] sm:$0xf]
        %v3363 = vld [vmem:[%s1377 + $0x3d8] sm:$0xf]
        %v3364 = vld [vmem:[%s1377 + $0x3dc] sm:$0xf]
        %v3365 = vld [vmem:[%s1377 + $0x3e0] sm:$0xf]
        %v3366 = vld [vmem:[%s1377 + $0x3e4] sm:$0xf]
        %v3367 = vld [vmem:[%s1377 + $0x3e8] sm:$0xf]
        %v3368 = vld [vmem:[%s1377 + $0x3ec] sm:$0xf]
        %v3369 = vld [vmem:[%s1377 + $0x3f0] sm:$0xf]
        %v3370 = vld [vmem:[%s1377 + $0x3f4] sm:$0xf]
        %v3371 = vld [vmem:[%s1377 + $0x3f8] sm:$0xf]
        %v3372 = vld [vmem:[%s1377 + $0x3fc] sm:$0xf]
        %v3373 = vld [vmem:[%s1377 + $0x400] sm:$0xf]
        %v3374 = vld [vmem:[%s1377 + $0x404] sm:$0xf]
        %v3375 = vld [vmem:[%s1377 + $0x408] sm:$0xf]
        %v3376 = vld [vmem:[%s1377 + $0x40c] sm:$0xf]
        %v3377 = vld [vmem:[%s1377 + $0x410] sm:$0xf]
        %v3378 = vld [vmem:[%s1377 + $0x414] sm:$0xf]
        %v3379 = vld [vmem:[%s1377 + $0x418] sm:$0xf]
        %v3380 = vld [vmem:[%s1377 + $0x41c] sm:$0xf]
        %v3381 = vld [vmem:[%s1377 + $0x420] sm:$0xf]
        %v3382 = vld [vmem:[%s1377 + $0x424] sm:$0xf]
        %v3383 = vld [vmem:[%s1377 + $0x428] sm:$0xf]
        %v3384 = vld [vmem:[%s1377 + $0x42c] sm:$0xf]
        %v3385 = vld [vmem:[%s1377 + $0x430] sm:$0xf]
        %v3386 = vld [vmem:[%s1377 + $0x434] sm:$0xf]
        %v3387 = vld [vmem:[%s1377 + $0x438] sm:$0xf]
        %v3388 = vld [vmem:[%s1377 + $0x43c] sm:$0xf]
        %v3389 = vld [vmem:[%s1377 + $0x440] sm:$0xf]
        %v3390 = vld [vmem:[%s1377 + $0x444] sm:$0xf]
        %v3391 = vld [vmem:[%s1377 + $0x448] sm:$0xf]
        %v3392 = vld [vmem:[%s1377 + $0x44c] sm:$0xf]
        %v3393 = vld [vmem:[%s1377 + $0x450] sm:$0xf]
        %v3394 = vld [vmem:[%s1377 + $0x454] sm:$0xf]
        %v3395 = vld [vmem:[%s1377 + $0x458] sm:$0xf]
        %v3396 = vld [vmem:[%s1377 + $0x45c] sm:$0xf]
        %v3397 = vld [vmem:[%s1377 + $0x460] sm:$0xf]
        %v3398 = vld [vmem:[%s1377 + $0x464] sm:$0xf]
        %v3399 = vld [vmem:[%s1377 + $0x468] sm:$0xf]
        %v3400 = vld [vmem:[%s1377 + $0x46c] sm:$0xf]
        %v3401 = vld [vmem:[%s1377 + $0x470] sm:$0xf]
        %v3402 = vld [vmem:[%s1377 + $0x474] sm:$0xf]
        %v3403 = vld [vmem:[%s1377 + $0x478] sm:$0xf]
        %v3404 = vld [vmem:[%s1377 + $0x47c] sm:$0xf]
        %v3693 = vunpack.c.l.b16 %v3117
        %v3694 = vunpack.c.l.b16 %v3118
        %v3695 = vunpack.c.l.b16 %v3119
        %v3696 = vunpack.c.l.b16 %v3120
        %v3697 = vunpack.c.l.b16 %v3121
        %v3698 = vunpack.c.l.b16 %v3122
        %v3699 = vunpack.c.l.b16 %v3123
        %v3700 = vunpack.c.l.b16 %v3124
        %v3701 = vunpack.c.l.b16 %v3125
        %v3702 = vunpack.c.l.b16 %v3126
        %v3703 = vunpack.c.l.b16 %v3127
        %v3704 = vunpack.c.l.b16 %v3128
        %v3705 = vunpack.c.l.b16 %v3129
        %v3706 = vunpack.c.l.b16 %v3130
        %v3707 = vunpack.c.l.b16 %v3131
        %v3708 = vunpack.c.l.b16 %v3132
        %v3709 = vunpack.c.l.b16 %v3133
        %v3710 = vunpack.c.l.b16 %v3134
        %v3711 = vunpack.c.l.b16 %v3135
        %v3712 = vunpack.c.l.b16 %v3136
        %v3713 = vunpack.c.l.b16 %v3137
        %v3714 = vunpack.c.l.b16 %v3138
        %v3715 = vunpack.c.l.b16 %v3139
        %v3716 = vunpack.c.l.b16 %v3140
        %v3717 = vunpack.c.l.b16 %v3141
        %v3718 = vunpack.c.l.b16 %v3142
        %v3719 = vunpack.c.l.b16 %v3143
        %v3720 = vunpack.c.l.b16 %v3144
        %v3721 = vunpack.c.l.b16 %v3145
        %v3722 = vunpack.c.l.b16 %v3146
        %v3723 = vunpack.c.l.b16 %v3147
        %v3724 = vunpack.c.l.b16 %v3148
        %v3725 = vunpack.c.l.b16 %v3149
        %v3726 = vunpack.c.l.b16 %v3150
        %v3727 = vunpack.c.l.b16 %v3151
        %v3728 = vunpack.c.l.b16 %v3152
        %v3729 = vunpack.c.l.b16 %v3153
        %v3730 = vunpack.c.l.b16 %v3154
        %v3731 = vunpack.c.l.b16 %v3155
        %v3732 = vunpack.c.l.b16 %v3156
        %v3733 = vunpack.c.l.b16 %v3157
        %v3734 = vunpack.c.l.b16 %v3158
        %v3735 = vunpack.c.l.b16 %v3159
        %v3736 = vunpack.c.l.b16 %v3160
        %v3737 = vunpack.c.l.b16 %v3161
        %v3738 = vunpack.c.l.b16 %v3162
        %v3739 = vunpack.c.l.b16 %v3163
        %v3740 = vunpack.c.l.b16 %v3164
        %v3741 = vunpack.c.l.b16 %v3165
        %v3742 = vunpack.c.l.b16 %v3166
        %v3743 = vunpack.c.l.b16 %v3167
        %v3744 = vunpack.c.l.b16 %v3168
        %v3745 = vunpack.c.l.b16 %v3169
        %v3746 = vunpack.c.l.b16 %v3170
        %v3747 = vunpack.c.l.b16 %v3171
        %v3748 = vunpack.c.l.b16 %v3172
        %v3749 = vunpack.c.l.b16 %v3173
        %v3750 = vunpack.c.l.b16 %v3174
        %v3751 = vunpack.c.l.b16 %v3175
        %v3752 = vunpack.c.l.b16 %v3176
        %v3753 = vunpack.c.l.b16 %v3177
        %v3754 = vunpack.c.l.b16 %v3178
        %v3755 = vunpack.c.l.b16 %v3179
        %v3756 = vunpack.c.l.b16 %v3180
        %v3757 = vunpack.c.l.b16 %v3181
        %v3758 = vunpack.c.l.b16 %v3182
        %v3759 = vunpack.c.l.b16 %v3183
        %v3760 = vunpack.c.l.b16 %v3184
        %v3761 = vunpack.c.l.b16 %v3185
        %v3762 = vunpack.c.l.b16 %v3186
        %v3763 = vunpack.c.l.b16 %v3187
        %v3764 = vunpack.c.l.b16 %v3188
        %v3765 = vunpack.c.l.b16 %v3189
        %v3766 = vunpack.c.l.b16 %v3190
        %v3767 = vunpack.c.l.b16 %v3191
        %v3768 = vunpack.c.l.b16 %v3192
        %v3769 = vunpack.c.l.b16 %v3193
        %v3770 = vunpack.c.l.b16 %v3194
        %v3771 = vunpack.c.l.b16 %v3195
        %v3772 = vunpack.c.l.b16 %v3196
        %v3773 = vunpack.c.l.b16 %v3197
        %v3774 = vunpack.c.l.b16 %v3198
        %v3775 = vunpack.c.l.b16 %v3199
        %v3776 = vunpack.c.l.b16 %v3200
        %v3777 = vunpack.c.l.b16 %v3201
        %v3778 = vunpack.c.l.b16 %v3202
        %v3779 = vunpack.c.l.b16 %v3203
        %v3780 = vunpack.c.l.b16 %v3204
        %v3781 = vunpack.c.l.b16 %v3205
        %v3782 = vunpack.c.l.b16 %v3206
        %v3783 = vunpack.c.l.b16 %v3207
        %v3784 = vunpack.c.l.b16 %v3208
        %v3785 = vunpack.c.l.b16 %v3209
        %v3786 = vunpack.c.l.b16 %v3210
        %v3787 = vunpack.c.l.b16 %v3211
        %v3788 = vunpack.c.l.b16 %v3212
        %v3789 = vunpack.c.l.b16 %v3213
        %v3790 = vunpack.c.l.b16 %v3214
        %v3791 = vunpack.c.l.b16 %v3215
        %v3792 = vunpack.c.l.b16 %v3216
        %v3793 = vunpack.c.l.b16 %v3217
        %v3794 = vunpack.c.l.b16 %v3218
        %v3795 = vunpack.c.l.b16 %v3219
        %v3796 = vunpack.c.l.b16 %v3220
        %v3797 = vunpack.c.l.b16 %v3221
        %v3798 = vunpack.c.l.b16 %v3222
        %v3799 = vunpack.c.l.b16 %v3223
        %v3800 = vunpack.c.l.b16 %v3224
        %v3801 = vunpack.c.l.b16 %v3225
        %v3802 = vunpack.c.l.b16 %v3226
        %v3803 = vunpack.c.l.b16 %v3227
        %v3804 = vunpack.c.l.b16 %v3228
        %v3805 = vunpack.c.l.b16 %v3229
        %v3806 = vunpack.c.l.b16 %v3230
        %v3807 = vunpack.c.l.b16 %v3231
        %v3808 = vunpack.c.l.b16 %v3232
        %v3809 = vunpack.c.l.b16 %v3233
        %v3810 = vunpack.c.l.b16 %v3234
        %v3811 = vunpack.c.l.b16 %v3235
        %v3812 = vunpack.c.l.b16 %v3236
        %v3813 = vunpack.c.l.b16 %v3237
        %v3814 = vunpack.c.l.b16 %v3238
        %v3815 = vunpack.c.l.b16 %v3239
        %v3816 = vunpack.c.l.b16 %v3240
        %v3817 = vunpack.c.l.b16 %v3241
        %v3818 = vunpack.c.l.b16 %v3242
        %v3819 = vunpack.c.l.b16 %v3243
        %v3820 = vunpack.c.l.b16 %v3244
        %v3821 = vunpack.c.l.b16 %v3245
        %v3822 = vunpack.c.l.b16 %v3246
        %v3823 = vunpack.c.l.b16 %v3247
        %v3824 = vunpack.c.l.b16 %v3248
        %v3825 = vunpack.c.l.b16 %v3249
        %v3826 = vunpack.c.l.b16 %v3250
        %v3827 = vunpack.c.l.b16 %v3251
        %v3828 = vunpack.c.l.b16 %v3252
        %v3829 = vunpack.c.l.b16 %v3253
        %v3830 = vunpack.c.l.b16 %v3254
        %v3831 = vunpack.c.l.b16 %v3255
        %v3832 = vunpack.c.l.b16 %v3256
        %v3833 = vunpack.c.l.b16 %v3257
        %v3834 = vunpack.c.l.b16 %v3258
        %v3835 = vunpack.c.l.b16 %v3259
        %v3836 = vunpack.c.l.b16 %v3260
        %v3837 = vunpack.c.l.b16 %v3261
        %v3838 = vunpack.c.l.b16 %v3262
        %v3839 = vunpack.c.l.b16 %v3263
        %v3840 = vunpack.c.l.b16 %v3264
        %v3841 = vunpack.c.l.b16 %v3265
        %v3842 = vunpack.c.l.b16 %v3266
        %v3843 = vunpack.c.l.b16 %v3267
        %v3844 = vunpack.c.l.b16 %v3268
        %v3845 = vunpack.c.l.b16 %v3269
        %v3846 = vunpack.c.l.b16 %v3270
        %v3847 = vunpack.c.l.b16 %v3271
        %v3848 = vunpack.c.l.b16 %v3272
        %v3849 = vunpack.c.l.b16 %v3273
        %v3850 = vunpack.c.l.b16 %v3274
        %v3851 = vunpack.c.l.b16 %v3275
        %v3852 = vunpack.c.l.b16 %v3276
        %v3853 = vunpack.c.l.b16 %v3277
        %v3854 = vunpack.c.l.b16 %v3278
        %v3855 = vunpack.c.l.b16 %v3279
        %v3856 = vunpack.c.l.b16 %v3280
        %v3857 = vunpack.c.l.b16 %v3281
        %v3858 = vunpack.c.l.b16 %v3282
        %v3859 = vunpack.c.l.b16 %v3283
        %v3860 = vunpack.c.l.b16 %v3284
        %v3861 = vunpack.c.l.b16 %v3285
        %v3862 = vunpack.c.l.b16 %v3286
        %v3863 = vunpack.c.l.b16 %v3287
        %v3864 = vunpack.c.l.b16 %v3288
        %v3865 = vunpack.c.l.b16 %v3289
        %v3866 = vunpack.c.l.b16 %v3290
        %v3867 = vunpack.c.l.b16 %v3291
        %v3868 = vunpack.c.l.b16 %v3292
        %v3869 = vunpack.c.l.b16 %v3293
        %v3870 = vunpack.c.l.b16 %v3294
        %v3871 = vunpack.c.l.b16 %v3295
        %v3872 = vunpack.c.l.b16 %v3296
        %v3873 = vunpack.c.l.b16 %v3297
        %v3874 = vunpack.c.l.b16 %v3298
        %v3875 = vunpack.c.l.b16 %v3299
        %v3876 = vunpack.c.l.b16 %v3300
        %v3877 = vunpack.c.l.b16 %v3301
        %v3878 = vunpack.c.l.b16 %v3302
        %v3879 = vunpack.c.l.b16 %v3303
        %v3880 = vunpack.c.l.b16 %v3304
        %v3881 = vunpack.c.l.b16 %v3305
        %v3882 = vunpack.c.l.b16 %v3306
        %v3883 = vunpack.c.l.b16 %v3307
        %v3884 = vunpack.c.l.b16 %v3308
        %v3885 = vunpack.c.l.b16 %v3309
        %v3886 = vunpack.c.l.b16 %v3310
        %v3887 = vunpack.c.l.b16 %v3311
        %v3888 = vunpack.c.l.b16 %v3312
        %v3889 = vunpack.c.l.b16 %v3313
        %v3890 = vunpack.c.l.b16 %v3314
        %v3891 = vunpack.c.l.b16 %v3315
        %v3892 = vunpack.c.l.b16 %v3316
        %v3893 = vunpack.c.l.b16 %v3317
        %v3894 = vunpack.c.l.b16 %v3318
        %v3895 = vunpack.c.l.b16 %v3319
        %v3896 = vunpack.c.l.b16 %v3320
        %v3897 = vunpack.c.l.b16 %v3321
        %v3898 = vunpack.c.l.b16 %v3322
        %v3899 = vunpack.c.l.b16 %v3323
        %v3900 = vunpack.c.l.b16 %v3324
        %v3901 = vunpack.c.l.b16 %v3325
        %v3902 = vunpack.c.l.b16 %v3326
        %v3903 = vunpack.c.l.b16 %v3327
        %v3904 = vunpack.c.l.b16 %v3328
        %v3905 = vunpack.c.l.b16 %v3329
        %v3906 = vunpack.c.l.b16 %v3330
        %v3907 = vunpack.c.l.b16 %v3331
        %v3908 = vunpack.c.l.b16 %v3332
        %v3909 = vunpack.c.l.b16 %v3333
        %v3910 = vunpack.c.l.b16 %v3334
        %v3911 = vunpack.c.l.b16 %v3335
        %v3912 = vunpack.c.l.b16 %v3336
        %v3913 = vunpack.c.l.b16 %v3337
        %v3914 = vunpack.c.l.b16 %v3338
        %v3915 = vunpack.c.l.b16 %v3339
        %v3916 = vunpack.c.l.b16 %v3340
        %v3917 = vunpack.c.l.b16 %v3341
        %v3918 = vunpack.c.l.b16 %v3342
        %v3919 = vunpack.c.l.b16 %v3343
        %v3920 = vunpack.c.l.b16 %v3344
        %v3921 = vunpack.c.l.b16 %v3345
        %v3922 = vunpack.c.l.b16 %v3346
        %v3923 = vunpack.c.l.b16 %v3347
        %v3924 = vunpack.c.l.b16 %v3348
        %v3925 = vunpack.c.l.b16 %v3349
        %v3926 = vunpack.c.l.b16 %v3350
        %v3927 = vunpack.c.l.b16 %v3351
        %v3928 = vunpack.c.l.b16 %v3352
        %v3929 = vunpack.c.l.b16 %v3353
        %v3930 = vunpack.c.l.b16 %v3354
        %v3931 = vunpack.c.l.b16 %v3355
        %v3932 = vunpack.c.l.b16 %v3356
        %v3933 = vunpack.c.l.b16 %v3357
        %v3934 = vunpack.c.l.b16 %v3358
        %v3935 = vunpack.c.l.b16 %v3359
        %v3936 = vunpack.c.l.b16 %v3360
        %v3937 = vunpack.c.l.b16 %v3361
        %v3938 = vunpack.c.l.b16 %v3362
        %v3939 = vunpack.c.l.b16 %v3363
        %v3940 = vunpack.c.l.b16 %v3364
        %v3941 = vunpack.c.l.b16 %v3365
        %v3942 = vunpack.c.l.b16 %v3366
        %v3943 = vunpack.c.l.b16 %v3367
        %v3944 = vunpack.c.l.b16 %v3368
        %v3945 = vunpack.c.l.b16 %v3369
        %v3946 = vunpack.c.l.b16 %v3370
        %v3947 = vunpack.c.l.b16 %v3371
        %v3948 = vunpack.c.l.b16 %v3372
        %v3949 = vunpack.c.l.b16 %v3373
        %v3950 = vunpack.c.l.b16 %v3374
        %v3951 = vunpack.c.l.b16 %v3375
        %v3952 = vunpack.c.l.b16 %v3376
        %v3953 = vunpack.c.l.b16 %v3377
        %v3954 = vunpack.c.l.b16 %v3378
        %v3955 = vunpack.c.l.b16 %v3379
        %v3956 = vunpack.c.l.b16 %v3380
        %v3957 = vunpack.c.l.b16 %v3381
        %v3958 = vunpack.c.l.b16 %v3382
        %v3959 = vunpack.c.l.b16 %v3383
        %v3960 = vunpack.c.l.b16 %v3384
        %v3961 = vunpack.c.l.b16 %v3385
        %v3962 = vunpack.c.l.b16 %v3386
        %v3963 = vunpack.c.l.b16 %v3387
        %v3964 = vunpack.c.l.b16 %v3388
        %v3965 = vunpack.c.l.b16 %v3389
        %v3966 = vunpack.c.l.b16 %v3390
        %v3967 = vunpack.c.l.b16 %v3391
        %v3968 = vunpack.c.l.b16 %v3392
        %v3969 = vunpack.c.l.b16 %v3393
        %v3970 = vunpack.c.l.b16 %v3394
        %v3971 = vunpack.c.l.b16 %v3395
        %v3972 = vunpack.c.l.b16 %v3396
        %v3973 = vunpack.c.l.b16 %v3397
        %v3974 = vunpack.c.l.b16 %v3398
        %v3975 = vunpack.c.l.b16 %v3399
        %v3976 = vunpack.c.l.b16 %v3400
        %v3977 = vunpack.c.l.b16 %v3401
        %v3978 = vunpack.c.l.b16 %v3402
        %v3979 = vunpack.c.l.b16 %v3403
        %v3980 = vunpack.c.l.b16 %v3404
        %v3981 = vpack.c.b16 %v3694, %v3693
        %v3982 = vpack.c.b16 %v3696, %v3695
        %v3983 = vpack.c.b16 %v3698, %v3697
        %v3984 = vpack.c.b16 %v3700, %v3699
        %v3985 = vpack.c.b16 %v3702, %v3701
        %v3986 = vpack.c.b16 %v3704, %v3703
        %v3987 = vpack.c.b16 %v3706, %v3705
        %v3988 = vpack.c.b16 %v3708, %v3707
        %v3989 = vpack.c.b16 %v3710, %v3709
        %v3990 = vpack.c.b16 %v3712, %v3711
        %v3991 = vpack.c.b16 %v3714, %v3713
        %v3992 = vpack.c.b16 %v3716, %v3715
        %v3993 = vpack.c.b16 %v3718, %v3717
        %v3994 = vpack.c.b16 %v3720, %v3719
        %v3995 = vpack.c.b16 %v3722, %v3721
        %v3996 = vpack.c.b16 %v3724, %v3723
        %v3997 = vpack.c.b16 %v3726, %v3725
        %v3998 = vpack.c.b16 %v3728, %v3727
        %v3999 = vpack.c.b16 %v3730, %v3729
        %v4000 = vpack.c.b16 %v3732, %v3731
        %v4001 = vpack.c.b16 %v3734, %v3733
        %v4002 = vpack.c.b16 %v3736, %v3735
        %v4003 = vpack.c.b16 %v3738, %v3737
        %v4004 = vpack.c.b16 %v3740, %v3739
        %v4005 = vpack.c.b16 %v3742, %v3741
        %v4006 = vpack.c.b16 %v3744, %v3743
        %v4007 = vpack.c.b16 %v3746, %v3745
        %v4008 = vpack.c.b16 %v3748, %v3747
        %v4009 = vpack.c.b16 %v3750, %v3749
        %v4010 = vpack.c.b16 %v3752, %v3751
        %v4011 = vpack.c.b16 %v3754, %v3753
        %v4012 = vpack.c.b16 %v3756, %v3755
        %v4013 = vpack.c.b16 %v3758, %v3757
        %v4014 = vpack.c.b16 %v3760, %v3759
        %v4015 = vpack.c.b16 %v3762, %v3761
        %v4016 = vpack.c.b16 %v3764, %v3763
        %v4017 = vpack.c.b16 %v3766, %v3765
        %v4018 = vpack.c.b16 %v3768, %v3767
        %v4019 = vpack.c.b16 %v3770, %v3769
        %v4020 = vpack.c.b16 %v3772, %v3771
        %v4021 = vpack.c.b16 %v3774, %v3773
        %v4022 = vpack.c.b16 %v3776, %v3775
        %v4023 = vpack.c.b16 %v3778, %v3777
        %v4024 = vpack.c.b16 %v3780, %v3779
        %v4025 = vpack.c.b16 %v3782, %v3781
        %v4026 = vpack.c.b16 %v3784, %v3783
        %v4027 = vpack.c.b16 %v3786, %v3785
        %v4028 = vpack.c.b16 %v3788, %v3787
        %v4029 = vpack.c.b16 %v3790, %v3789
        %v4030 = vpack.c.b16 %v3792, %v3791
        %v4031 = vpack.c.b16 %v3794, %v3793
        %v4032 = vpack.c.b16 %v3796, %v3795
        %v4033 = vpack.c.b16 %v3798, %v3797
        %v4034 = vpack.c.b16 %v3800, %v3799
        %v4035 = vpack.c.b16 %v3802, %v3801
        %v4036 = vpack.c.b16 %v3804, %v3803
        %v4037 = vpack.c.b16 %v3806, %v3805
        %v4038 = vpack.c.b16 %v3808, %v3807
        %v4039 = vpack.c.b16 %v3810, %v3809
        %v4040 = vpack.c.b16 %v3812, %v3811
        %v4041 = vpack.c.b16 %v3814, %v3813
        %v4042 = vpack.c.b16 %v3816, %v3815
        %v4043 = vpack.c.b16 %v3818, %v3817
        %v4044 = vpack.c.b16 %v3820, %v3819
        %v4045 = vpack.c.b16 %v3822, %v3821
        %v4046 = vpack.c.b16 %v3824, %v3823
        %v4047 = vpack.c.b16 %v3826, %v3825
        %v4048 = vpack.c.b16 %v3828, %v3827
        %v4049 = vpack.c.b16 %v3830, %v3829
        %v4050 = vpack.c.b16 %v3832, %v3831
        %v4051 = vpack.c.b16 %v3834, %v3833
        %v4052 = vpack.c.b16 %v3836, %v3835
        %v4053 = vpack.c.b16 %v3838, %v3837
        %v4054 = vpack.c.b16 %v3840, %v3839
        %v4055 = vpack.c.b16 %v3842, %v3841
        %v4056 = vpack.c.b16 %v3844, %v3843
        %v4057 = vpack.c.b16 %v3846, %v3845
        %v4058 = vpack.c.b16 %v3848, %v3847
        %v4059 = vpack.c.b16 %v3850, %v3849
        %v4060 = vpack.c.b16 %v3852, %v3851
        %v4061 = vpack.c.b16 %v3854, %v3853
        %v4062 = vpack.c.b16 %v3856, %v3855
        %v4063 = vpack.c.b16 %v3858, %v3857
        %v4064 = vpack.c.b16 %v3860, %v3859
        %v4065 = vpack.c.b16 %v3862, %v3861
        %v4066 = vpack.c.b16 %v3864, %v3863
        %v4067 = vpack.c.b16 %v3866, %v3865
        %v4068 = vpack.c.b16 %v3868, %v3867
        %v4069 = vpack.c.b16 %v3870, %v3869
        %v4070 = vpack.c.b16 %v3872, %v3871
        %v4071 = vpack.c.b16 %v3874, %v3873
        %v4072 = vpack.c.b16 %v3876, %v3875
        %v4073 = vpack.c.b16 %v3878, %v3877
        %v4074 = vpack.c.b16 %v3880, %v3879
        %v4075 = vpack.c.b16 %v3882, %v3881
        %v4076 = vpack.c.b16 %v3884, %v3883
        %v4077 = vpack.c.b16 %v3886, %v3885
        %v4078 = vpack.c.b16 %v3888, %v3887
        %v4079 = vpack.c.b16 %v3890, %v3889
        %v4080 = vpack.c.b16 %v3892, %v3891
        %v4081 = vpack.c.b16 %v3894, %v3893
        %v4082 = vpack.c.b16 %v3896, %v3895
        %v4083 = vpack.c.b16 %v3898, %v3897
        %v4084 = vpack.c.b16 %v3900, %v3899
        %v4085 = vpack.c.b16 %v3902, %v3901
        %v4086 = vpack.c.b16 %v3904, %v3903
        %v4087 = vpack.c.b16 %v3906, %v3905
        %v4088 = vpack.c.b16 %v3908, %v3907
        %v4089 = vpack.c.b16 %v3910, %v3909
        %v4090 = vpack.c.b16 %v3912, %v3911
        %v4091 = vpack.c.b16 %v3914, %v3913
        %v4092 = vpack.c.b16 %v3916, %v3915
        %v4093 = vpack.c.b16 %v3918, %v3917
        %v4094 = vpack.c.b16 %v3920, %v3919
        %v4095 = vpack.c.b16 %v3922, %v3921
        %v4096 = vpack.c.b16 %v3924, %v3923
        %v4097 = vpack.c.b16 %v3926, %v3925
        %v4098 = vpack.c.b16 %v3928, %v3927
        %v4099 = vpack.c.b16 %v3930, %v3929
        %v4100 = vpack.c.b16 %v3932, %v3931
        %v4101 = vpack.c.b16 %v3934, %v3933
        %v4102 = vpack.c.b16 %v3936, %v3935
        %v4103 = vpack.c.b16 %v3938, %v3937
        %v4104 = vpack.c.b16 %v3940, %v3939
        %v4105 = vpack.c.b16 %v3942, %v3941
        %v4106 = vpack.c.b16 %v3944, %v3943
        %v4107 = vpack.c.b16 %v3946, %v3945
        %v4108 = vpack.c.b16 %v3948, %v3947
        %v4109 = vpack.c.b16 %v3950, %v3949
        %v4110 = vpack.c.b16 %v3952, %v3951
        %v4111 = vpack.c.b16 %v3954, %v3953
        %v4112 = vpack.c.b16 %v3956, %v3955
        %v4113 = vpack.c.b16 %v3958, %v3957
        %v4114 = vpack.c.b16 %v3960, %v3959
        %v4115 = vpack.c.b16 %v3962, %v3961
        %v4116 = vpack.c.b16 %v3964, %v3963
        %v4117 = vpack.c.b16 %v3966, %v3965
        %v4118 = vpack.c.b16 %v3968, %v3967
        %v4119 = vpack.c.b16 %v3970, %v3969
        %v4120 = vpack.c.b16 %v3972, %v3971
        %v4121 = vpack.c.b16 %v3974, %v3973
        %v4122 = vpack.c.b16 %v3976, %v3975
        %v4123 = vpack.c.b16 %v3978, %v3977
        %v4124 = vpack.c.b16 %v3980, %v3979
        %4269 = vmatprep.subr.bf16.mxu0 0
        %4270 = vmatpush1.bf16.msra.mxu0 %v3988
        %4271 = vmatprep.subr.bf16.mxu0 0
        %4272 = vmatpush1.bf16.msra.mxu0 %v3987
        %4273 = vmatprep.subr.bf16.mxu0 0
        %4274 = vmatpush1.bf16.msra.mxu0 %v3986
        %4275 = vmatprep.subr.bf16.mxu0 0
        %4276 = vmatpush1.bf16.msra.mxu0 %v3985
        %4277 = vmatprep.subr.bf16.mxu0 0
        %4278 = vmatpush1.bf16.msra.mxu0 %v3984
        %4279 = vmatprep.subr.bf16.mxu0 0
        %4280 = vmatpush1.bf16.msra.mxu0 %v3983
        %4281 = vmatprep.subr.bf16.mxu0 0
        %4282 = vmatpush1.bf16.msra.mxu0 %v3982
        %4283 = vmatprep.subr.bf16.mxu0 0
        %4284 = vmatpush1.bf16.msra.mxu0 %v3981
        %4285 = vmatprep.subr.bf16.mxu0 0
        %4286 = vmatpush2.bf16.msra.mxu0 %v3996
        %4287 = vmatprep.subr.bf16.mxu0 0
        %4288 = vmatpush2.bf16.msra.mxu0 %v3995
        %4289 = vmatprep.subr.bf16.mxu0 0
        %4290 = vmatpush2.bf16.msra.mxu0 %v3994
        %4291 = vmatprep.subr.bf16.mxu0 0
        %4292 = vmatpush2.bf16.msra.mxu0 %v3993
        %4293 = vmatprep.subr.bf16.mxu0 0
        %4294 = vmatpush2.bf16.msra.mxu0 %v3992
        %4295 = vmatprep.subr.bf16.mxu0 0
        %4296 = vmatpush2.bf16.msra.mxu0 %v3991
        %4297 = vmatprep.subr.bf16.mxu0 0
        %4298 = vmatpush2.bf16.msra.mxu0 %v3990
        %4299 = vmatprep.subr.bf16.mxu0 0
        %4300 = vmatpush2.bf16.msra.mxu0 %v3989
        %4301 = vmatprep.mubr.bf16.mxu0 %v2007
        %4302 = vmatmul.mubr.bf16.gmra.mxu0 %v2006
        %v4303 = vpop.f32.mrf.mxu0
        %v4304 = vadd.f32 0.0, %v4303
        %v4305 = vpop.f32.mrf.mxu0
        %v4306 = vpop.f32.mrf.mxu0
        %v4307 = vadd.f32 0.0, %v4306
        %v4308 = vpop.f32.mrf.mxu0
        %4309 = vmatprep.mubr.bf16.mxu0 %v2009
        %4310 = vmatmul.mubr.bf16.gmra.mxu0 %v2008
        %v4311 = vpop.f32.mrf.mxu0
        %v4312 = vadd.f32 0.0, %v4311
        %v4313 = vpop.f32.mrf.mxu0
        %v4314 = vpop.f32.mrf.mxu0
        %v4315 = vadd.f32 0.0, %v4314
        %v4316 = vpop.f32.mrf.mxu0
        %4317 = vmatprep.mubr.bf16.mxu0 %v2011
        %4318 = vmatmul.mubr.bf16.gmra.mxu0 %v2010
        %v4319 = vpop.f32.mrf.mxu0
        %v4320 = vadd.f32 0.0, %v4319
        %v4321 = vpop.f32.mrf.mxu0
        %v4322 = vpop.f32.mrf.mxu0
        %v4323 = vadd.f32 0.0, %v4322
        %v4324 = vpop.f32.mrf.mxu0
        %4325 = vmatprep.mubr.bf16.mxu0 %v2013
        %4326 = vmatmul.mubr.bf16.gmra.mxu0 %v2012
        %v4327 = vpop.f32.mrf.mxu0
        %v4328 = vadd.f32 0.0, %v4327
        %v4329 = vpop.f32.mrf.mxu0
        %v4330 = vpop.f32.mrf.mxu0
        %v4331 = vadd.f32 0.0, %v4330
        %v4332 = vpop.f32.mrf.mxu0
        %4333 = vmatprep.mubr.bf16.mxu0 %v2015
        %4334 = vmatmul.mubr.bf16.gmra.mxu0 %v2014
        %v4335 = vpop.f32.mrf.mxu0
        %v4336 = vadd.f32 0.0, %v4335
        %v4337 = vpop.f32.mrf.mxu0
        %v4338 = vpop.f32.mrf.mxu0
        %v4339 = vadd.f32 0.0, %v4338
        %v4340 = vpop.f32.mrf.mxu0
        %4341 = vmatprep.mubr.bf16.mxu0 %v2017
        %4342 = vmatmul.mubr.bf16.gmra.mxu0 %v2016
        %v4343 = vpop.f32.mrf.mxu0
        %v4344 = vadd.f32 0.0, %v4343
        %v4345 = vpop.f32.mrf.mxu0
        %v4346 = vpop.f32.mrf.mxu0
        %v4347 = vadd.f32 0.0, %v4346
        %v4348 = vpop.f32.mrf.mxu0
        %4349 = vmatprep.mubr.bf16.mxu0 %v2019
        %4350 = vmatmul.mubr.bf16.gmra.mxu0 %v2018
        %v4351 = vpop.f32.mrf.mxu0
        %v4352 = vadd.f32 0.0, %v4351
        %v4353 = vpop.f32.mrf.mxu0
        %v4354 = vpop.f32.mrf.mxu0
        %v4355 = vadd.f32 0.0, %v4354
        %v4356 = vpop.f32.mrf.mxu0
        %4357 = vmatprep.mubr.bf16.mxu0 %v2021
        %4358 = vmatmul.mubr.bf16.gmra.mxu0 %v2020
        %v4359 = vpop.f32.mrf.mxu0
        %v4360 = vadd.f32 0.0, %v4359
        %v4361 = vpop.f32.mrf.mxu0
        %v4362 = vpop.f32.mrf.mxu0
        %v4363 = vadd.f32 0.0, %v4362
        %v4364 = vpop.f32.mrf.mxu0
        %4365 = vmatprep.mubr.bf16.mxu0 %v2023
        %4366 = vmatmul.mubr.bf16.gmra.mxu0 %v2022
        %v4367 = vpop.f32.mrf.mxu0
        %v4368 = vadd.f32 0.0, %v4367
        %v4369 = vpop.f32.mrf.mxu0
        %v4370 = vpop.f32.mrf.mxu0
        %v4371 = vadd.f32 0.0, %v4370
        %v4372 = vpop.f32.mrf.mxu0
        %4373 = vmatprep.mubr.bf16.mxu0 %v2025
        %4374 = vmatmul.mubr.bf16.gmra.mxu0 %v2024
        %v4375 = vpop.f32.mrf.mxu0
        %v4376 = vadd.f32 0.0, %v4375
        %v4377 = vpop.f32.mrf.mxu0
        %v4378 = vpop.f32.mrf.mxu0
        %v4379 = vadd.f32 0.0, %v4378
        %v4380 = vpop.f32.mrf.mxu0
        %4381 = vmatprep.mubr.bf16.mxu0 %v2027
        %4382 = vmatmul.mubr.bf16.gmra.mxu0 %v2026
        %v4383 = vpop.f32.mrf.mxu0
        %v4384 = vadd.f32 0.0, %v4383
        %v4385 = vpop.f32.mrf.mxu0
        %v4386 = vpop.f32.mrf.mxu0
        %v4387 = vadd.f32 0.0, %v4386
        %v4388 = vpop.f32.mrf.mxu0
        %4389 = vmatprep.mubr.bf16.mxu0 %v2029
        %4390 = vmatmul.mubr.bf16.gmra.mxu0 %v2028
        %v4391 = vpop.f32.mrf.mxu0
        %v4392 = vadd.f32 0.0, %v4391
        %v4393 = vpop.f32.mrf.mxu0
        %v4394 = vpop.f32.mrf.mxu0
        %v4395 = vadd.f32 0.0, %v4394
        %v4396 = vpop.f32.mrf.mxu0
        %4397 = vmatprep.mubr.bf16.mxu0 %v2031
        %4398 = vmatmul.mubr.bf16.gmra.mxu0 %v2030
        %v4399 = vpop.f32.mrf.mxu0
        %v4400 = vadd.f32 0.0, %v4399
        %v4401 = vpop.f32.mrf.mxu0
        %v4402 = vpop.f32.mrf.mxu0
        %v4403 = vadd.f32 0.0, %v4402
        %v4404 = vpop.f32.mrf.mxu0
        %4405 = vmatprep.mubr.bf16.mxu0 %v2033
        %4406 = vmatmul.mubr.bf16.gmra.mxu0 %v2032
        %v4407 = vpop.f32.mrf.mxu0
        %v4408 = vadd.f32 0.0, %v4407
        %v4409 = vpop.f32.mrf.mxu0
        %v4410 = vpop.f32.mrf.mxu0
        %v4411 = vadd.f32 0.0, %v4410
        %v4412 = vpop.f32.mrf.mxu0
        %4413 = vmatprep.mubr.bf16.mxu0 %v2035
        %4414 = vmatmul.mubr.bf16.gmra.mxu0 %v2034
        %v4415 = vpop.f32.mrf.mxu0
        %v4416 = vadd.f32 0.0, %v4415
        %v4417 = vpop.f32.mrf.mxu0
        %v4418 = vpop.f32.mrf.mxu0
        %v4419 = vadd.f32 0.0, %v4418
        %v4420 = vpop.f32.mrf.mxu0
        %4421 = vmatprep.mubr.bf16.mxu0 %v2037
        %4422 = vmatmul.mubr.bf16.gmra.mxu0 %v2036
        %v4423 = vpop.f32.mrf.mxu0
        %v4424 = vadd.f32 0.0, %v4423
        %v4425 = vpop.f32.mrf.mxu0
        %v4426 = vpop.f32.mrf.mxu0
        %v4427 = vadd.f32 0.0, %v4426
        %v4428 = vpop.f32.mrf.mxu0
        %4429 = vmatprep.mubr.bf16.mxu0 %v2039
        %4430 = vmatmul.mubr.bf16.gmra.mxu0 %v2038
        %v4431 = vpop.f32.mrf.mxu0
        %v4432 = vadd.f32 0.0, %v4431
        %v4433 = vpop.f32.mrf.mxu0
        %v4434 = vpop.f32.mrf.mxu0
        %v4435 = vadd.f32 0.0, %v4434
        %v4436 = vpop.f32.mrf.mxu0
        %4437 = vmatprep.mubr.bf16.mxu0 %v2041
        %4438 = vmatmul.mubr.bf16.gmra.mxu0 %v2040
        %v4439 = vpop.f32.mrf.mxu0
        %v4440 = vadd.f32 0.0, %v4439
        %v4441 = vpop.f32.mrf.mxu0
        %v4442 = vpop.f32.mrf.mxu0
        %v4443 = vadd.f32 0.0, %v4442
        %v4444 = vpop.f32.mrf.mxu0
        %4445 = vmatprep.mubr.bf16.mxu0 %v2043
        %4446 = vmatmul.mubr.bf16.gmra.mxu0 %v2042
        %v4447 = vpop.f32.mrf.mxu0
        %v4448 = vadd.f32 0.0, %v4447
        %v4449 = vpop.f32.mrf.mxu0
        %v4450 = vpop.f32.mrf.mxu0
        %v4451 = vadd.f32 0.0, %v4450
        %v4452 = vpop.f32.mrf.mxu0
        %4453 = vmatprep.mubr.bf16.mxu0 %v2045
        %4454 = vmatmul.mubr.bf16.gmra.mxu0 %v2044
        %v4455 = vpop.f32.mrf.mxu0
        %v4456 = vadd.f32 0.0, %v4455
        %v4457 = vpop.f32.mrf.mxu0
        %v4458 = vpop.f32.mrf.mxu0
        %v4459 = vadd.f32 0.0, %v4458
        %v4460 = vpop.f32.mrf.mxu0
        %4461 = vmatprep.mubr.bf16.mxu0 %v2047
        %4462 = vmatmul.mubr.bf16.gmra.mxu0 %v2046
        %v4463 = vpop.f32.mrf.mxu0
        %v4464 = vadd.f32 0.0, %v4463
        %v4465 = vpop.f32.mrf.mxu0
        %v4466 = vpop.f32.mrf.mxu0
        %v4467 = vadd.f32 0.0, %v4466
        %v4468 = vpop.f32.mrf.mxu0
        %4469 = vmatprep.mubr.bf16.mxu0 %v2049
        %4470 = vmatmul.mubr.bf16.gmra.mxu0 %v2048
        %v4471 = vpop.f32.mrf.mxu0
        %v4472 = vadd.f32 0.0, %v4471
        %v4473 = vpop.f32.mrf.mxu0
        %v4474 = vpop.f32.mrf.mxu0
        %v4475 = vadd.f32 0.0, %v4474
        %v4476 = vpop.f32.mrf.mxu0
        %4477 = vmatprep.mubr.bf16.mxu0 %v2051
        %4478 = vmatmul.mubr.bf16.gmra.mxu0 %v2050
        %v4479 = vpop.f32.mrf.mxu0
        %v4480 = vadd.f32 0.0, %v4479
        %v4481 = vpop.f32.mrf.mxu0
        %v4482 = vpop.f32.mrf.mxu0
        %v4483 = vadd.f32 0.0, %v4482
        %v4484 = vpop.f32.mrf.mxu0
        %4485 = vmatprep.mubr.bf16.mxu0 %v2053
        %4486 = vmatmul.mubr.bf16.gmra.mxu0 %v2052
        %v4487 = vpop.f32.mrf.mxu0
        %v4488 = vadd.f32 0.0, %v4487
        %v4489 = vpop.f32.mrf.mxu0
        %v4490 = vpop.f32.mrf.mxu0
        %v4491 = vadd.f32 0.0, %v4490
        %v4492 = vpop.f32.mrf.mxu0
        %4493 = vmatprep.mubr.bf16.mxu0 %v2055
        %4494 = vmatmul.mubr.bf16.gmra.mxu0 %v2054
        %v4495 = vpop.f32.mrf.mxu0
        %v4496 = vadd.f32 0.0, %v4495
        %v4497 = vpop.f32.mrf.mxu0
        %v4498 = vpop.f32.mrf.mxu0
        %v4499 = vadd.f32 0.0, %v4498
        %v4500 = vpop.f32.mrf.mxu0
        %4501 = vmatprep.mubr.bf16.mxu0 %v2057
        %4502 = vmatmul.mubr.bf16.gmra.mxu0 %v2056
        %v4503 = vpop.f32.mrf.mxu0
        %v4504 = vadd.f32 0.0, %v4503
        %v4505 = vpop.f32.mrf.mxu0
        %v4506 = vpop.f32.mrf.mxu0
        %v4507 = vadd.f32 0.0, %v4506
        %v4508 = vpop.f32.mrf.mxu0
        %4509 = vmatprep.mubr.bf16.mxu0 %v2059
        %4510 = vmatmul.mubr.bf16.gmra.mxu0 %v2058
        %v4511 = vpop.f32.mrf.mxu0
        %v4512 = vadd.f32 0.0, %v4511
        %v4513 = vpop.f32.mrf.mxu0
        %v4514 = vpop.f32.mrf.mxu0
        %v4515 = vadd.f32 0.0, %v4514
        %v4516 = vpop.f32.mrf.mxu0
        %4517 = vmatprep.mubr.bf16.mxu0 %v2061
        %4518 = vmatmul.mubr.bf16.gmra.mxu0 %v2060
        %v4519 = vpop.f32.mrf.mxu0
        %v4520 = vadd.f32 0.0, %v4519
        %v4521 = vpop.f32.mrf.mxu0
        %v4522 = vpop.f32.mrf.mxu0
        %v4523 = vadd.f32 0.0, %v4522
        %v4524 = vpop.f32.mrf.mxu0
        %4525 = vmatprep.mubr.bf16.mxu0 %v2063
        %4526 = vmatmul.mubr.bf16.gmra.mxu0 %v2062
        %v4527 = vpop.f32.mrf.mxu0
        %v4528 = vadd.f32 0.0, %v4527
        %v4529 = vpop.f32.mrf.mxu0
        %v4530 = vpop.f32.mrf.mxu0
        %v4531 = vadd.f32 0.0, %v4530
        %v4532 = vpop.f32.mrf.mxu0
        %4533 = vmatprep.mubr.bf16.mxu0 %v2065
        %4534 = vmatmul.mubr.bf16.gmra.mxu0 %v2064
        %v4535 = vpop.f32.mrf.mxu0
        %v4536 = vadd.f32 0.0, %v4535
        %v4537 = vpop.f32.mrf.mxu0
        %v4538 = vpop.f32.mrf.mxu0
        %v4539 = vadd.f32 0.0, %v4538
        %v4540 = vpop.f32.mrf.mxu0
        %4541 = vmatprep.mubr.bf16.mxu0 %v2067
        %4542 = vmatmul.mubr.bf16.gmra.mxu0 %v2066
        %v4543 = vpop.f32.mrf.mxu0
        %v4544 = vadd.f32 0.0, %v4543
        %v4545 = vpop.f32.mrf.mxu0
        %v4546 = vpop.f32.mrf.mxu0
        %v4547 = vadd.f32 0.0, %v4546
        %v4548 = vpop.f32.mrf.mxu0
        %4549 = vmatprep.mubr.bf16.mxu0 %v2069
        %4550 = vmatmul.mubr.bf16.gmra.mxu0 %v2068
        %v4551 = vpop.f32.mrf.mxu0
        %v4552 = vadd.f32 0.0, %v4551
        %v4553 = vpop.f32.mrf.mxu0
        %v4554 = vpop.f32.mrf.mxu0
        %v4555 = vadd.f32 0.0, %v4554
        %v4556 = vpop.f32.mrf.mxu0
        %4557 = vmatprep.mubr.bf16.mxu0 %v2071
        %4558 = vmatmul.mubr.bf16.gmra.mxu0 %v2070
        %v4559 = vpop.f32.mrf.mxu0
        %v4560 = vadd.f32 0.0, %v4559
        %v4561 = vpop.f32.mrf.mxu0
        %v4562 = vpop.f32.mrf.mxu0
        %v4563 = vadd.f32 0.0, %v4562
        %v4564 = vpop.f32.mrf.mxu0
        %4565 = vmatprep.mubr.bf16.mxu0 %v2073
        %4566 = vmatmul.mubr.bf16.gmra.mxu0 %v2072
        %v4567 = vpop.f32.mrf.mxu0
        %v4568 = vadd.f32 0.0, %v4567
        %v4569 = vpop.f32.mrf.mxu0
        %v4570 = vpop.f32.mrf.mxu0
        %v4571 = vadd.f32 0.0, %v4570
        %v4572 = vpop.f32.mrf.mxu0
        %4573 = vmatprep.mubr.bf16.mxu0 %v2075
        %4574 = vmatmul.mubr.bf16.gmra.mxu0 %v2074
        %v4575 = vpop.f32.mrf.mxu0
        %v4576 = vadd.f32 0.0, %v4575
        %v4577 = vpop.f32.mrf.mxu0
        %v4578 = vpop.f32.mrf.mxu0
        %v4579 = vadd.f32 0.0, %v4578
        %v4580 = vpop.f32.mrf.mxu0
        %4581 = vmatprep.mubr.bf16.mxu0 %v2077
        %4582 = vmatmul.mubr.bf16.gmra.mxu0 %v2076
        %v4583 = vpop.f32.mrf.mxu0
        %v4584 = vadd.f32 0.0, %v4583
        %v4585 = vpop.f32.mrf.mxu0
        %v4586 = vpop.f32.mrf.mxu0
        %v4587 = vadd.f32 0.0, %v4586
        %v4588 = vpop.f32.mrf.mxu0
        %4589 = vmatprep.mubr.bf16.mxu0 %v2079
        %4590 = vmatmul.mubr.bf16.gmra.mxu0 %v2078
        %v4591 = vpop.f32.mrf.mxu0
        %v4592 = vadd.f32 0.0, %v4591
        %v4593 = vpop.f32.mrf.mxu0
        %v4594 = vpop.f32.mrf.mxu0
        %v4595 = vadd.f32 0.0, %v4594
        %v4596 = vpop.f32.mrf.mxu0
        %4597 = vmatprep.mubr.bf16.mxu0 %v2081
        %4598 = vmatmul.mubr.bf16.gmra.mxu0 %v2080
        %v4599 = vpop.f32.mrf.mxu0
        %v4600 = vadd.f32 0.0, %v4599
        %v4601 = vpop.f32.mrf.mxu0
        %v4602 = vpop.f32.mrf.mxu0
        %v4603 = vadd.f32 0.0, %v4602
        %v4604 = vpop.f32.mrf.mxu0
        %4605 = vmatprep.mubr.bf16.mxu0 %v2083
        %4606 = vmatmul.mubr.bf16.gmra.mxu0 %v2082
        %v4607 = vpop.f32.mrf.mxu0
        %v4608 = vadd.f32 0.0, %v4607
        %v4609 = vpop.f32.mrf.mxu0
        %v4610 = vpop.f32.mrf.mxu0
        %v4611 = vadd.f32 0.0, %v4610
        %v4612 = vpop.f32.mrf.mxu0
        %4613 = vmatprep.mubr.bf16.mxu0 %v2085
        %4614 = vmatmul.mubr.bf16.gmra.mxu0 %v2084
        %v4615 = vpop.f32.mrf.mxu0
        %v4616 = vadd.f32 0.0, %v4615
        %v4617 = vpop.f32.mrf.mxu0
        %v4618 = vpop.f32.mrf.mxu0
        %v4619 = vadd.f32 0.0, %v4618
        %v4620 = vpop.f32.mrf.mxu0
        %4621 = vmatprep.mubr.bf16.mxu0 %v2087
        %4622 = vmatmul.mubr.bf16.gmra.mxu0 %v2086
        %v4623 = vpop.f32.mrf.mxu0
        %v4624 = vadd.f32 0.0, %v4623
        %v4625 = vpop.f32.mrf.mxu0
        %v4626 = vpop.f32.mrf.mxu0
        %v4627 = vadd.f32 0.0, %v4626
        %v4628 = vpop.f32.mrf.mxu0
        %4629 = vmatprep.mubr.bf16.mxu0 %v2089
        %4630 = vmatmul.mubr.bf16.gmra.mxu0 %v2088
        %v4631 = vpop.f32.mrf.mxu0
        %v4632 = vadd.f32 0.0, %v4631
        %v4633 = vpop.f32.mrf.mxu0
        %v4634 = vpop.f32.mrf.mxu0
        %v4635 = vadd.f32 0.0, %v4634
        %v4636 = vpop.f32.mrf.mxu0
        %4637 = vmatprep.mubr.bf16.mxu0 %v2091
        %4638 = vmatmul.mubr.bf16.gmra.mxu0 %v2090
        %v4639 = vpop.f32.mrf.mxu0
        %v4640 = vadd.f32 0.0, %v4639
        %v4641 = vpop.f32.mrf.mxu0
        %v4642 = vpop.f32.mrf.mxu0
        %v4643 = vadd.f32 0.0, %v4642
        %v4644 = vpop.f32.mrf.mxu0
        %4645 = vmatprep.mubr.bf16.mxu0 %v2093
        %4646 = vmatmul.mubr.bf16.gmra.mxu0 %v2092
        %v4647 = vpop.f32.mrf.mxu0
        %v4648 = vadd.f32 0.0, %v4647
        %v4649 = vpop.f32.mrf.mxu0
        %v4650 = vpop.f32.mrf.mxu0
        %v4651 = vadd.f32 0.0, %v4650
        %v4652 = vpop.f32.mrf.mxu0
        %4653 = vmatprep.mubr.bf16.mxu0 %v2095
        %4654 = vmatmul.mubr.bf16.gmra.mxu0 %v2094
        %v4655 = vpop.f32.mrf.mxu0
        %v4656 = vadd.f32 0.0, %v4655
        %v4657 = vpop.f32.mrf.mxu0
        %v4658 = vpop.f32.mrf.mxu0
        %v4659 = vadd.f32 0.0, %v4658
        %v4660 = vpop.f32.mrf.mxu0
        %4661 = vmatprep.mubr.bf16.mxu0 %v2097
        %4662 = vmatmul.mubr.bf16.gmra.mxu0 %v2096
        %v4663 = vpop.f32.mrf.mxu0
        %v4664 = vadd.f32 0.0, %v4663
        %v4665 = vpop.f32.mrf.mxu0
        %v4666 = vpop.f32.mrf.mxu0
        %v4667 = vadd.f32 0.0, %v4666
        %v4668 = vpop.f32.mrf.mxu0
        %4669 = vmatprep.mubr.bf16.mxu0 %v2099
        %4670 = vmatmul.mubr.bf16.gmra.mxu0 %v2098
        %v4671 = vpop.f32.mrf.mxu0
        %v4672 = vadd.f32 0.0, %v4671
        %v4673 = vpop.f32.mrf.mxu0
        %v4674 = vpop.f32.mrf.mxu0
        %v4675 = vadd.f32 0.0, %v4674
        %v4676 = vpop.f32.mrf.mxu0
        %4677 = vmatprep.mubr.bf16.mxu0 %v2101
        %4678 = vmatmul.mubr.bf16.gmra.mxu0 %v2100
        %v4679 = vpop.f32.mrf.mxu0
        %v4680 = vadd.f32 0.0, %v4679
        %v4681 = vpop.f32.mrf.mxu0
        %v4682 = vpop.f32.mrf.mxu0
        %v4683 = vadd.f32 0.0, %v4682
        %v4684 = vpop.f32.mrf.mxu0
        %4685 = vmatprep.mubr.bf16.mxu0 %v2103
        %4686 = vmatmul.mubr.bf16.gmra.mxu0 %v2102
        %v4687 = vpop.f32.mrf.mxu0
        %v4688 = vadd.f32 0.0, %v4687
        %v4689 = vpop.f32.mrf.mxu0
        %v4690 = vpop.f32.mrf.mxu0
        %v4691 = vadd.f32 0.0, %v4690
        %v4692 = vpop.f32.mrf.mxu0
        %4693 = vmatprep.mubr.bf16.mxu0 %v2105
        %4694 = vmatmul.mubr.bf16.gmra.mxu0 %v2104
        %v4695 = vpop.f32.mrf.mxu0
        %v4696 = vadd.f32 0.0, %v4695
        %v4697 = vpop.f32.mrf.mxu0
        %v4698 = vpop.f32.mrf.mxu0
        %v4699 = vadd.f32 0.0, %v4698
        %v4700 = vpop.f32.mrf.mxu0
        %4701 = vmatprep.mubr.bf16.mxu0 %v2107
        %4702 = vmatmul.mubr.bf16.gmra.mxu0 %v2106
        %v4703 = vpop.f32.mrf.mxu0
        %v4704 = vadd.f32 0.0, %v4703
        %v4705 = vpop.f32.mrf.mxu0
        %v4706 = vpop.f32.mrf.mxu0
        %v4707 = vadd.f32 0.0, %v4706
        %v4708 = vpop.f32.mrf.mxu0
        %4709 = vmatprep.mubr.bf16.mxu0 %v2109
        %4710 = vmatmul.mubr.bf16.gmra.mxu0 %v2108
        %v4711 = vpop.f32.mrf.mxu0
        %v4712 = vadd.f32 0.0, %v4711
        %v4713 = vpop.f32.mrf.mxu0
        %v4714 = vpop.f32.mrf.mxu0
        %v4715 = vadd.f32 0.0, %v4714
        %v4716 = vpop.f32.mrf.mxu0
        %4717 = vmatprep.mubr.bf16.mxu0 %v2111
        %4718 = vmatmul.mubr.bf16.gmra.mxu0 %v2110
        %v4719 = vpop.f32.mrf.mxu0
        %v4720 = vadd.f32 0.0, %v4719
        %v4721 = vpop.f32.mrf.mxu0
        %v4722 = vpop.f32.mrf.mxu0
        %v4723 = vadd.f32 0.0, %v4722
        %v4724 = vpop.f32.mrf.mxu0
        %4725 = vmatprep.mubr.bf16.mxu0 %v2113
        %4726 = vmatmul.mubr.bf16.gmra.mxu0 %v2112
        %v4727 = vpop.f32.mrf.mxu0
        %v4728 = vadd.f32 0.0, %v4727
        %v4729 = vpop.f32.mrf.mxu0
        %v4730 = vpop.f32.mrf.mxu0
        %v4731 = vadd.f32 0.0, %v4730
        %v4732 = vpop.f32.mrf.mxu0
        %4733 = vmatprep.mubr.bf16.mxu0 %v2115
        %4734 = vmatmul.mubr.bf16.gmra.mxu0 %v2114
        %v4735 = vpop.f32.mrf.mxu0
        %v4736 = vadd.f32 0.0, %v4735
        %v4737 = vpop.f32.mrf.mxu0
        %v4738 = vpop.f32.mrf.mxu0
        %v4739 = vadd.f32 0.0, %v4738
        %v4740 = vpop.f32.mrf.mxu0
        %4741 = vmatprep.mubr.bf16.mxu0 %v2117
        %4742 = vmatmul.mubr.bf16.gmra.mxu0 %v2116
        %v4743 = vpop.f32.mrf.mxu0
        %v4744 = vadd.f32 0.0, %v4743
        %v4745 = vpop.f32.mrf.mxu0
        %v4746 = vpop.f32.mrf.mxu0
        %v4747 = vadd.f32 0.0, %v4746
        %v4748 = vpop.f32.mrf.mxu0
        %4749 = vdwg.mxu0
        %4750 = vmatprep.subr.bf16.mxu0 0
        %4751 = vmatpush1.bf16.msra.mxu0 %v4004
        %4752 = vmatprep.subr.bf16.mxu0 0
        %4753 = vmatpush1.bf16.msra.mxu0 %v4003
        %4754 = vmatprep.subr.bf16.mxu0 0
        %4755 = vmatpush1.bf16.msra.mxu0 %v4002
        %4756 = vmatprep.subr.bf16.mxu0 0
        %4757 = vmatpush1.bf16.msra.mxu0 %v4001
        %4758 = vmatprep.subr.bf16.mxu0 0
        %4759 = vmatpush1.bf16.msra.mxu0 %v4000
        %4760 = vmatprep.subr.bf16.mxu0 0
        %4761 = vmatpush1.bf16.msra.mxu0 %v3999
        %4762 = vmatprep.subr.bf16.mxu0 0
        %4763 = vmatpush1.bf16.msra.mxu0 %v3998
        %4764 = vmatprep.subr.bf16.mxu0 0
        %4765 = vmatpush1.bf16.msra.mxu0 %v3997
        %4766 = vmatprep.subr.bf16.mxu0 0
        %4767 = vmatpush2.bf16.msra.mxu0 %v4012
        %4768 = vmatprep.subr.bf16.mxu0 0
        %4769 = vmatpush2.bf16.msra.mxu0 %v4011
        %4770 = vmatprep.subr.bf16.mxu0 0
        %4771 = vmatpush2.bf16.msra.mxu0 %v4010
        %4772 = vmatprep.subr.bf16.mxu0 0
        %4773 = vmatpush2.bf16.msra.mxu0 %v4009
        %4774 = vmatprep.subr.bf16.mxu0 0
        %4775 = vmatpush2.bf16.msra.mxu0 %v4008
        %4776 = vmatprep.subr.bf16.mxu0 0
        %4777 = vmatpush2.bf16.msra.mxu0 %v4007
        %4778 = vmatprep.subr.bf16.mxu0 0
        %4779 = vmatpush2.bf16.msra.mxu0 %v4006
        %4780 = vmatprep.subr.bf16.mxu0 0
        %4781 = vmatpush2.bf16.msra.mxu0 %v4005
        %4782 = vmatprep.mubr.bf16.mxu0 %v2241
        %4783 = vmatmul.mubr.bf16.gmra.mxu0 %v2238
        %v4784 = vpop.f32.mrf.mxu0
        %v4785 = vadd.f32 %v4304, %v4784
        %v4786 = vpop.f32.mrf.mxu0
        %v4787 = vpop.f32.mrf.mxu0
        %v4788 = vadd.f32 %v4307, %v4787
        %v4789 = vpop.f32.mrf.mxu0
        %4790 = vmatprep.mubr.bf16.mxu0 %v2245
        %4791 = vmatmul.mubr.bf16.gmra.mxu0 %v2243
        %v4792 = vpop.f32.mrf.mxu0
        %v4793 = vadd.f32 %v4312, %v4792
        %v4794 = vpop.f32.mrf.mxu0
        %v4795 = vpop.f32.mrf.mxu0
        %v4796 = vadd.f32 %v4315, %v4795
        %v4797 = vpop.f32.mrf.mxu0
        %4798 = vmatprep.mubr.bf16.mxu0 %v2249
        %4799 = vmatmul.mubr.bf16.gmra.mxu0 %v2247
        %v4800 = vpop.f32.mrf.mxu0
        %v4801 = vadd.f32 %v4320, %v4800
        %v4802 = vpop.f32.mrf.mxu0
        %v4803 = vpop.f32.mrf.mxu0
        %v4804 = vadd.f32 %v4323, %v4803
        %v4805 = vpop.f32.mrf.mxu0
        %4806 = vmatprep.mubr.bf16.mxu0 %v2253
        %4807 = vmatmul.mubr.bf16.gmra.mxu0 %v2251
        %v4808 = vpop.f32.mrf.mxu0
        %v4809 = vadd.f32 %v4328, %v4808
        %v4810 = vpop.f32.mrf.mxu0
        %v4811 = vpop.f32.mrf.mxu0
        %v4812 = vadd.f32 %v4331, %v4811
        %v4813 = vpop.f32.mrf.mxu0
        %4814 = vmatprep.mubr.bf16.mxu0 %v2257
        %4815 = vmatmul.mubr.bf16.gmra.mxu0 %v2255
        %v4816 = vpop.f32.mrf.mxu0
        %v4817 = vadd.f32 %v4336, %v4816
        %v4818 = vpop.f32.mrf.mxu0
        %v4819 = vpop.f32.mrf.mxu0
        %v4820 = vadd.f32 %v4339, %v4819
        %v4821 = vpop.f32.mrf.mxu0
        %4822 = vmatprep.mubr.bf16.mxu0 %v2261
        %4823 = vmatmul.mubr.bf16.gmra.mxu0 %v2259
        %v4824 = vpop.f32.mrf.mxu0
        %v4825 = vadd.f32 %v4344, %v4824
        %v4826 = vpop.f32.mrf.mxu0
        %v4827 = vpop.f32.mrf.mxu0
        %v4828 = vadd.f32 %v4347, %v4827
        %v4829 = vpop.f32.mrf.mxu0
        %4830 = vmatprep.mubr.bf16.mxu0 %v2265
        %4831 = vmatmul.mubr.bf16.gmra.mxu0 %v2263
        %v4832 = vpop.f32.mrf.mxu0
        %v4833 = vadd.f32 %v4352, %v4832
        %v4834 = vpop.f32.mrf.mxu0
        %v4835 = vpop.f32.mrf.mxu0
        %v4836 = vadd.f32 %v4355, %v4835
        %v4837 = vpop.f32.mrf.mxu0
        %4838 = vmatprep.mubr.bf16.mxu0 %v2269
        %4839 = vmatmul.mubr.bf16.gmra.mxu0 %v2267
        %v4840 = vpop.f32.mrf.mxu0
        %v4841 = vadd.f32 %v4360, %v4840
        %v4842 = vpop.f32.mrf.mxu0
        %v4843 = vpop.f32.mrf.mxu0
        %v4844 = vadd.f32 %v4363, %v4843
        %v4845 = vpop.f32.mrf.mxu0
        %4846 = vmatprep.mubr.bf16.mxu0 %v2273
        %4847 = vmatmul.mubr.bf16.gmra.mxu0 %v2271
        %v4848 = vpop.f32.mrf.mxu0
        %v4849 = vadd.f32 %v4368, %v4848
        %v4850 = vpop.f32.mrf.mxu0
        %v4851 = vpop.f32.mrf.mxu0
        %v4852 = vadd.f32 %v4371, %v4851
        %v4853 = vpop.f32.mrf.mxu0
        %4854 = vmatprep.mubr.bf16.mxu0 %v2277
        %4855 = vmatmul.mubr.bf16.gmra.mxu0 %v2275
        %v4856 = vpop.f32.mrf.mxu0
        %v4857 = vadd.f32 %v4376, %v4856
        %v4858 = vpop.f32.mrf.mxu0
        %v4859 = vpop.f32.mrf.mxu0
        %v4860 = vadd.f32 %v4379, %v4859
        %v4861 = vpop.f32.mrf.mxu0
        %4862 = vmatprep.mubr.bf16.mxu0 %v2281
        %4863 = vmatmul.mubr.bf16.gmra.mxu0 %v2279
        %v4864 = vpop.f32.mrf.mxu0
        %v4865 = vadd.f32 %v4384, %v4864
        %v4866 = vpop.f32.mrf.mxu0
        %v4867 = vpop.f32.mrf.mxu0
        %v4868 = vadd.f32 %v4387, %v4867
        %v4869 = vpop.f32.mrf.mxu0
        %4870 = vmatprep.mubr.bf16.mxu0 %v2285
        %4871 = vmatmul.mubr.bf16.gmra.mxu0 %v2283
        %v4872 = vpop.f32.mrf.mxu0
        %v4873 = vadd.f32 %v4392, %v4872
        %v4874 = vpop.f32.mrf.mxu0
        %v4875 = vpop.f32.mrf.mxu0
        %v4876 = vadd.f32 %v4395, %v4875
        %v4877 = vpop.f32.mrf.mxu0
        %4878 = vmatprep.mubr.bf16.mxu0 %v2289
        %4879 = vmatmul.mubr.bf16.gmra.mxu0 %v2287
        %v4880 = vpop.f32.mrf.mxu0
        %v4881 = vadd.f32 %v4400, %v4880
        %v4882 = vpop.f32.mrf.mxu0
        %v4883 = vpop.f32.mrf.mxu0
        %v4884 = vadd.f32 %v4403, %v4883
        %v4885 = vpop.f32.mrf.mxu0
        %4886 = vmatprep.mubr.bf16.mxu0 %v2293
        %4887 = vmatmul.mubr.bf16.gmra.mxu0 %v2291
        %v4888 = vpop.f32.mrf.mxu0
        %v4889 = vadd.f32 %v4408, %v4888
        %v4890 = vpop.f32.mrf.mxu0
        %v4891 = vpop.f32.mrf.mxu0
        %v4892 = vadd.f32 %v4411, %v4891
        %v4893 = vpop.f32.mrf.mxu0
        %4894 = vmatprep.mubr.bf16.mxu0 %v2297
        %4895 = vmatmul.mubr.bf16.gmra.mxu0 %v2295
        %v4896 = vpop.f32.mrf.mxu0
        %v4897 = vadd.f32 %v4416, %v4896
        %v4898 = vpop.f32.mrf.mxu0
        %v4899 = vpop.f32.mrf.mxu0
        %v4900 = vadd.f32 %v4419, %v4899
        %v4901 = vpop.f32.mrf.mxu0
        %4902 = vmatprep.mubr.bf16.mxu0 %v2301
        %4903 = vmatmul.mubr.bf16.gmra.mxu0 %v2299
        %v4904 = vpop.f32.mrf.mxu0
        %v4905 = vadd.f32 %v4424, %v4904
        %v4906 = vpop.f32.mrf.mxu0
        %v4907 = vpop.f32.mrf.mxu0
        %v4908 = vadd.f32 %v4427, %v4907
        %v4909 = vpop.f32.mrf.mxu0
        %4910 = vmatprep.mubr.bf16.mxu0 %v2305
        %4911 = vmatmul.mubr.bf16.gmra.mxu0 %v2303
        %v4912 = vpop.f32.mrf.mxu0
        %v4913 = vadd.f32 %v4432, %v4912
        %v4914 = vpop.f32.mrf.mxu0
        %v4915 = vpop.f32.mrf.mxu0
        %v4916 = vadd.f32 %v4435, %v4915
        %v4917 = vpop.f32.mrf.mxu0
        %4918 = vmatprep.mubr.bf16.mxu0 %v2309
        %4919 = vmatmul.mubr.bf16.gmra.mxu0 %v2307
        %v4920 = vpop.f32.mrf.mxu0
        %v4921 = vadd.f32 %v4440, %v4920
        %v4922 = vpop.f32.mrf.mxu0
        %v4923 = vpop.f32.mrf.mxu0
        %v4924 = vadd.f32 %v4443, %v4923
        %v4925 = vpop.f32.mrf.mxu0
        %4926 = vmatprep.mubr.bf16.mxu0 %v2313
        %4927 = vmatmul.mubr.bf16.gmra.mxu0 %v2311
        %v4928 = vpop.f32.mrf.mxu0
        %v4929 = vadd.f32 %v4448, %v4928
        %v4930 = vpop.f32.mrf.mxu0
        %v4931 = vpop.f32.mrf.mxu0
        %v4932 = vadd.f32 %v4451, %v4931
        %v4933 = vpop.f32.mrf.mxu0
        %4934 = vmatprep.mubr.bf16.mxu0 %v2317
        %4935 = vmatmul.mubr.bf16.gmra.mxu0 %v2315
        %v4936 = vpop.f32.mrf.mxu0
        %v4937 = vadd.f32 %v4456, %v4936
        %v4938 = vpop.f32.mrf.mxu0
        %v4939 = vpop.f32.mrf.mxu0
        %v4940 = vadd.f32 %v4459, %v4939
        %v4941 = vpop.f32.mrf.mxu0
        %4942 = vmatprep.mubr.bf16.mxu0 %v2321
        %4943 = vmatmul.mubr.bf16.gmra.mxu0 %v2319
        %v4944 = vpop.f32.mrf.mxu0
        %v4945 = vadd.f32 %v4464, %v4944
        %v4946 = vpop.f32.mrf.mxu0
        %v4947 = vpop.f32.mrf.mxu0
        %v4948 = vadd.f32 %v4467, %v4947
        %v4949 = vpop.f32.mrf.mxu0
        %4950 = vmatprep.mubr.bf16.mxu0 %v2325
        %4951 = vmatmul.mubr.bf16.gmra.mxu0 %v2323
        %v4952 = vpop.f32.mrf.mxu0
        %v4953 = vadd.f32 %v4472, %v4952
        %v4954 = vpop.f32.mrf.mxu0
        %v4955 = vpop.f32.mrf.mxu0
        %v4956 = vadd.f32 %v4475, %v4955
        %v4957 = vpop.f32.mrf.mxu0
        %4958 = vmatprep.mubr.bf16.mxu0 %v2329
        %4959 = vmatmul.mubr.bf16.gmra.mxu0 %v2327
        %v4960 = vpop.f32.mrf.mxu0
        %v4961 = vadd.f32 %v4480, %v4960
        %v4962 = vpop.f32.mrf.mxu0
        %v4963 = vpop.f32.mrf.mxu0
        %v4964 = vadd.f32 %v4483, %v4963
        %v4965 = vpop.f32.mrf.mxu0
        %4966 = vmatprep.mubr.bf16.mxu0 %v2333
        %4967 = vmatmul.mubr.bf16.gmra.mxu0 %v2331
        %v4968 = vpop.f32.mrf.mxu0
        %v4969 = vadd.f32 %v4488, %v4968
        %v4970 = vpop.f32.mrf.mxu0
        %v4971 = vpop.f32.mrf.mxu0
        %v4972 = vadd.f32 %v4491, %v4971
        %v4973 = vpop.f32.mrf.mxu0
        %4974 = vmatprep.mubr.bf16.mxu0 %v2337
        %4975 = vmatmul.mubr.bf16.gmra.mxu0 %v2335
        %v4976 = vpop.f32.mrf.mxu0
        %v4977 = vadd.f32 %v4496, %v4976
        %v4978 = vpop.f32.mrf.mxu0
        %v4979 = vpop.f32.mrf.mxu0
        %v4980 = vadd.f32 %v4499, %v4979
        %v4981 = vpop.f32.mrf.mxu0
        %4982 = vmatprep.mubr.bf16.mxu0 %v2341
        %4983 = vmatmul.mubr.bf16.gmra.mxu0 %v2339
        %v4984 = vpop.f32.mrf.mxu0
        %v4985 = vadd.f32 %v4504, %v4984
        %v4986 = vpop.f32.mrf.mxu0
        %v4987 = vpop.f32.mrf.mxu0
        %v4988 = vadd.f32 %v4507, %v4987
        %v4989 = vpop.f32.mrf.mxu0
        %4990 = vmatprep.mubr.bf16.mxu0 %v2345
        %4991 = vmatmul.mubr.bf16.gmra.mxu0 %v2343
        %v4992 = vpop.f32.mrf.mxu0
        %v4993 = vadd.f32 %v4512, %v4992
        %v4994 = vpop.f32.mrf.mxu0
        %v4995 = vpop.f32.mrf.mxu0
        %v4996 = vadd.f32 %v4515, %v4995
        %v4997 = vpop.f32.mrf.mxu0
        %4998 = vmatprep.mubr.bf16.mxu0 %v2349
        %4999 = vmatmul.mubr.bf16.gmra.mxu0 %v2347
        %v5000 = vpop.f32.mrf.mxu0
        %v5001 = vadd.f32 %v4520, %v5000
        %v5002 = vpop.f32.mrf.mxu0
        %v5003 = vpop.f32.mrf.mxu0
        %v5004 = vadd.f32 %v4523, %v5003
        %v5005 = vpop.f32.mrf.mxu0
        %5006 = vmatprep.mubr.bf16.mxu0 %v2353
        %5007 = vmatmul.mubr.bf16.gmra.mxu0 %v2351
        %v5008 = vpop.f32.mrf.mxu0
        %v5009 = vadd.f32 %v4528, %v5008
        %v5010 = vpop.f32.mrf.mxu0
        %v5011 = vpop.f32.mrf.mxu0
        %v5012 = vadd.f32 %v4531, %v5011
        %v5013 = vpop.f32.mrf.mxu0
        %5014 = vmatprep.mubr.bf16.mxu0 %v2357
        %5015 = vmatmul.mubr.bf16.gmra.mxu0 %v2355
        %v5016 = vpop.f32.mrf.mxu0
        %v5017 = vadd.f32 %v4536, %v5016
        %v5018 = vpop.f32.mrf.mxu0
        %v5019 = vpop.f32.mrf.mxu0
        %v5020 = vadd.f32 %v4539, %v5019
        %v5021 = vpop.f32.mrf.mxu0
        %5022 = vmatprep.mubr.bf16.mxu0 %v2361
        %5023 = vmatmul.mubr.bf16.gmra.mxu0 %v2359
        %v5024 = vpop.f32.mrf.mxu0
        %v5025 = vadd.f32 %v4544, %v5024
        %v5026 = vpop.f32.mrf.mxu0
        %v5027 = vpop.f32.mrf.mxu0
        %v5028 = vadd.f32 %v4547, %v5027
        %v5029 = vpop.f32.mrf.mxu0
        %5030 = vmatprep.mubr.bf16.mxu0 %v2365
        %5031 = vmatmul.mubr.bf16.gmra.mxu0 %v2363
        %v5032 = vpop.f32.mrf.mxu0
        %v5033 = vadd.f32 %v4552, %v5032
        %v5034 = vpop.f32.mrf.mxu0
        %v5035 = vpop.f32.mrf.mxu0
        %v5036 = vadd.f32 %v4555, %v5035
        %v5037 = vpop.f32.mrf.mxu0
        %5038 = vmatprep.mubr.bf16.mxu0 %v2369
        %5039 = vmatmul.mubr.bf16.gmra.mxu0 %v2367
        %v5040 = vpop.f32.mrf.mxu0
        %v5041 = vadd.f32 %v4560, %v5040
        %v5042 = vpop.f32.mrf.mxu0
        %v5043 = vpop.f32.mrf.mxu0
        %v5044 = vadd.f32 %v4563, %v5043
        %v5045 = vpop.f32.mrf.mxu0
        %5046 = vmatprep.mubr.bf16.mxu0 %v2373
        %5047 = vmatmul.mubr.bf16.gmra.mxu0 %v2371
        %v5048 = vpop.f32.mrf.mxu0
        %v5049 = vadd.f32 %v4568, %v5048
        %v5050 = vpop.f32.mrf.mxu0
        %v5051 = vpop.f32.mrf.mxu0
        %v5052 = vadd.f32 %v4571, %v5051
        %v5053 = vpop.f32.mrf.mxu0
        %5054 = vmatprep.mubr.bf16.mxu0 %v2377
        %5055 = vmatmul.mubr.bf16.gmra.mxu0 %v2375
        %v5056 = vpop.f32.mrf.mxu0
        %v5057 = vadd.f32 %v4576, %v5056
        %v5058 = vpop.f32.mrf.mxu0
        %v5059 = vpop.f32.mrf.mxu0
        %v5060 = vadd.f32 %v4579, %v5059
        %v5061 = vpop.f32.mrf.mxu0
        %5062 = vmatprep.mubr.bf16.mxu0 %v2381
        %5063 = vmatmul.mubr.bf16.gmra.mxu0 %v2379
        %v5064 = vpop.f32.mrf.mxu0
        %v5065 = vadd.f32 %v4584, %v5064
        %v5066 = vpop.f32.mrf.mxu0
        %v5067 = vpop.f32.mrf.mxu0
        %v5068 = vadd.f32 %v4587, %v5067
        %v5069 = vpop.f32.mrf.mxu0
        %5070 = vmatprep.mubr.bf16.mxu0 %v2385
        %5071 = vmatmul.mubr.bf16.gmra.mxu0 %v2383
        %v5072 = vpop.f32.mrf.mxu0
        %v5073 = vadd.f32 %v4592, %v5072
        %v5074 = vpop.f32.mrf.mxu0
        %v5075 = vpop.f32.mrf.mxu0
        %v5076 = vadd.f32 %v4595, %v5075
        %v5077 = vpop.f32.mrf.mxu0
        %5078 = vmatprep.mubr.bf16.mxu0 %v2389
        %5079 = vmatmul.mubr.bf16.gmra.mxu0 %v2387
        %v5080 = vpop.f32.mrf.mxu0
        %v5081 = vadd.f32 %v4600, %v5080
        %v5082 = vpop.f32.mrf.mxu0
        %v5083 = vpop.f32.mrf.mxu0
        %v5084 = vadd.f32 %v4603, %v5083
        %v5085 = vpop.f32.mrf.mxu0
        %5086 = vmatprep.mubr.bf16.mxu0 %v2393
        %5087 = vmatmul.mubr.bf16.gmra.mxu0 %v2391
        %v5088 = vpop.f32.mrf.mxu0
        %v5089 = vadd.f32 %v4608, %v5088
        %v5090 = vpop.f32.mrf.mxu0
        %v5091 = vpop.f32.mrf.mxu0
        %v5092 = vadd.f32 %v4611, %v5091
        %v5093 = vpop.f32.mrf.mxu0
        %5094 = vmatprep.mubr.bf16.mxu0 %v2397
        %5095 = vmatmul.mubr.bf16.gmra.mxu0 %v2395
        %v5096 = vpop.f32.mrf.mxu0
        %v5097 = vadd.f32 %v4616, %v5096
        %v5098 = vpop.f32.mrf.mxu0
        %v5099 = vpop.f32.mrf.mxu0
        %v5100 = vadd.f32 %v4619, %v5099
        %v5101 = vpop.f32.mrf.mxu0
        %5102 = vmatprep.mubr.bf16.mxu0 %v2401
        %5103 = vmatmul.mubr.bf16.gmra.mxu0 %v2399
        %v5104 = vpop.f32.mrf.mxu0
        %v5105 = vadd.f32 %v4624, %v5104
        %v5106 = vpop.f32.mrf.mxu0
        %v5107 = vpop.f32.mrf.mxu0
        %v5108 = vadd.f32 %v4627, %v5107
        %v5109 = vpop.f32.mrf.mxu0
        %5110 = vmatprep.mubr.bf16.mxu0 %v2405
        %5111 = vmatmul.mubr.bf16.gmra.mxu0 %v2403
        %v5112 = vpop.f32.mrf.mxu0
        %v5113 = vadd.f32 %v4632, %v5112
        %v5114 = vpop.f32.mrf.mxu0
        %v5115 = vpop.f32.mrf.mxu0
        %v5116 = vadd.f32 %v4635, %v5115
        %v5117 = vpop.f32.mrf.mxu0
        %5118 = vmatprep.mubr.bf16.mxu0 %v2409
        %5119 = vmatmul.mubr.bf16.gmra.mxu0 %v2407
        %v5120 = vpop.f32.mrf.mxu0
        %v5121 = vadd.f32 %v4640, %v5120
        %v5122 = vpop.f32.mrf.mxu0
        %v5123 = vpop.f32.mrf.mxu0
        %v5124 = vadd.f32 %v4643, %v5123
        %v5125 = vpop.f32.mrf.mxu0
        %5126 = vmatprep.mubr.bf16.mxu0 %v2413
        %5127 = vmatmul.mubr.bf16.gmra.mxu0 %v2411
        %v5128 = vpop.f32.mrf.mxu0
        %v5129 = vadd.f32 %v4648, %v5128
        %v5130 = vpop.f32.mrf.mxu0
        %v5131 = vpop.f32.mrf.mxu0
        %v5132 = vadd.f32 %v4651, %v5131
        %v5133 = vpop.f32.mrf.mxu0
        %5134 = vmatprep.mubr.bf16.mxu0 %v2417
        %5135 = vmatmul.mubr.bf16.gmra.mxu0 %v2415
        %v5136 = vpop.f32.mrf.mxu0
        %v5137 = vadd.f32 %v4656, %v5136
        %v5138 = vpop.f32.mrf.mxu0
        %v5139 = vpop.f32.mrf.mxu0
        %v5140 = vadd.f32 %v4659, %v5139
        %v5141 = vpop.f32.mrf.mxu0
        %5142 = vmatprep.mubr.bf16.mxu0 %v2421
        %5143 = vmatmul.mubr.bf16.gmra.mxu0 %v2419
        %v5144 = vpop.f32.mrf.mxu0
        %v5145 = vadd.f32 %v4664, %v5144
        %v5146 = vpop.f32.mrf.mxu0
        %v5147 = vpop.f32.mrf.mxu0
        %v5148 = vadd.f32 %v4667, %v5147
        %v5149 = vpop.f32.mrf.mxu0
        %5150 = vmatprep.mubr.bf16.mxu0 %v2425
        %5151 = vmatmul.mubr.bf16.gmra.mxu0 %v2423
        %v5152 = vpop.f32.mrf.mxu0
        %v5153 = vadd.f32 %v4672, %v5152
        %v5154 = vpop.f32.mrf.mxu0
        %v5155 = vpop.f32.mrf.mxu0
        %v5156 = vadd.f32 %v4675, %v5155
        %v5157 = vpop.f32.mrf.mxu0
        %5158 = vmatprep.mubr.bf16.mxu0 %v2429
        %5159 = vmatmul.mubr.bf16.gmra.mxu0 %v2427
        %v5160 = vpop.f32.mrf.mxu0
        %v5161 = vadd.f32 %v4680, %v5160
        %v5162 = vpop.f32.mrf.mxu0
        %v5163 = vpop.f32.mrf.mxu0
        %v5164 = vadd.f32 %v4683, %v5163
        %v5165 = vpop.f32.mrf.mxu0
        %5166 = vmatprep.mubr.bf16.mxu0 %v2433
        %5167 = vmatmul.mubr.bf16.gmra.mxu0 %v2431
        %v5168 = vpop.f32.mrf.mxu0
        %v5169 = vadd.f32 %v4688, %v5168
        %v5170 = vpop.f32.mrf.mxu0
        %v5171 = vpop.f32.mrf.mxu0
        %v5172 = vadd.f32 %v4691, %v5171
        %v5173 = vpop.f32.mrf.mxu0
        %5174 = vmatprep.mubr.bf16.mxu0 %v2437
        %5175 = vmatmul.mubr.bf16.gmra.mxu0 %v2435
        %v5176 = vpop.f32.mrf.mxu0
        %v5177 = vadd.f32 %v4696, %v5176
        %v5178 = vpop.f32.mrf.mxu0
        %v5179 = vpop.f32.mrf.mxu0
        %v5180 = vadd.f32 %v4699, %v5179
        %v5181 = vpop.f32.mrf.mxu0
        %5182 = vmatprep.mubr.bf16.mxu0 %v2441
        %5183 = vmatmul.mubr.bf16.gmra.mxu0 %v2439
        %v5184 = vpop.f32.mrf.mxu0
        %v5185 = vadd.f32 %v4704, %v5184
        %v5186 = vpop.f32.mrf.mxu0
        %v5187 = vpop.f32.mrf.mxu0
        %v5188 = vadd.f32 %v4707, %v5187
        %v5189 = vpop.f32.mrf.mxu0
        %5190 = vmatprep.mubr.bf16.mxu0 %v2445
        %5191 = vmatmul.mubr.bf16.gmra.mxu0 %v2443
        %v5192 = vpop.f32.mrf.mxu0
        %v5193 = vadd.f32 %v4712, %v5192
        %v5194 = vpop.f32.mrf.mxu0
        %v5195 = vpop.f32.mrf.mxu0
        %v5196 = vadd.f32 %v4715, %v5195
        %v5197 = vpop.f32.mrf.mxu0
        %5198 = vmatprep.mubr.bf16.mxu0 %v2449
        %5199 = vmatmul.mubr.bf16.gmra.mxu0 %v2447
        %v5200 = vpop.f32.mrf.mxu0
        %v5201 = vadd.f32 %v4720, %v5200
        %v5202 = vpop.f32.mrf.mxu0
        %v5203 = vpop.f32.mrf.mxu0
        %v5204 = vadd.f32 %v4723, %v5203
        %v5205 = vpop.f32.mrf.mxu0
        %5206 = vmatprep.mubr.bf16.mxu0 %v2453
        %5207 = vmatmul.mubr.bf16.gmra.mxu0 %v2451
        %v5208 = vpop.f32.mrf.mxu0
        %v5209 = vadd.f32 %v4728, %v5208
        %v5210 = vpop.f32.mrf.mxu0
        %v5211 = vpop.f32.mrf.mxu0
        %v5212 = vadd.f32 %v4731, %v5211
        %v5213 = vpop.f32.mrf.mxu0
        %5214 = vmatprep.mubr.bf16.mxu0 %v2457
        %5215 = vmatmul.mubr.bf16.gmra.mxu0 %v2455
        %v5216 = vpop.f32.mrf.mxu0
        %v5217 = vadd.f32 %v4736, %v5216
        %v5218 = vpop.f32.mrf.mxu0
        %v5219 = vpop.f32.mrf.mxu0
        %v5220 = vadd.f32 %v4739, %v5219
        %v5221 = vpop.f32.mrf.mxu0
        %5222 = vmatprep.mubr.bf16.mxu0 %v2461
        %5223 = vmatmul.mubr.bf16.gmra.mxu0 %v2459
        %v5224 = vpop.f32.mrf.mxu0
        %v5225 = vadd.f32 %v4744, %v5224
        %v5226 = vpop.f32.mrf.mxu0
        %v5227 = vpop.f32.mrf.mxu0
        %v5228 = vadd.f32 %v4747, %v5227
        %v5229 = vpop.f32.mrf.mxu0
        %5230 = vdwg.mxu0
        %5231 = vmatprep.subr.bf16.mxu0 0
        %5232 = vmatpush1.bf16.msra.mxu0 %v4020
        %5233 = vmatprep.subr.bf16.mxu0 0
        %5234 = vmatpush1.bf16.msra.mxu0 %v4019
        %5235 = vmatprep.subr.bf16.mxu0 0
        %5236 = vmatpush1.bf16.msra.mxu0 %v4018
        %5237 = vmatprep.subr.bf16.mxu0 0
        %5238 = vmatpush1.bf16.msra.mxu0 %v4017
        %5239 = vmatprep.subr.bf16.mxu0 0
        %5240 = vmatpush1.bf16.msra.mxu0 %v4016
        %5241 = vmatprep.subr.bf16.mxu0 0
        %5242 = vmatpush1.bf16.msra.mxu0 %v4015
        %5243 = vmatprep.subr.bf16.mxu0 0
        %5244 = vmatpush1.bf16.msra.mxu0 %v4014
        %5245 = vmatprep.subr.bf16.mxu0 0
        %5246 = vmatpush1.bf16.msra.mxu0 %v4013
        %5247 = vmatprep.subr.bf16.mxu0 0
        %5248 = vmatpush2.bf16.msra.mxu0 %v4028
        %5249 = vmatprep.subr.bf16.mxu0 0
        %5250 = vmatpush2.bf16.msra.mxu0 %v4027
        %5251 = vmatprep.subr.bf16.mxu0 0
        %5252 = vmatpush2.bf16.msra.mxu0 %v4026
        %5253 = vmatprep.subr.bf16.mxu0 0
        %5254 = vmatpush2.bf16.msra.mxu0 %v4025
        %5255 = vmatprep.subr.bf16.mxu0 0
        %5256 = vmatpush2.bf16.msra.mxu0 %v4024
        %5257 = vmatprep.subr.bf16.mxu0 0
        %5258 = vmatpush2.bf16.msra.mxu0 %v4023
        %5259 = vmatprep.subr.bf16.mxu0 0
        %5260 = vmatpush2.bf16.msra.mxu0 %v4022
        %5261 = vmatprep.subr.bf16.mxu0 0
        %5262 = vmatpush2.bf16.msra.mxu0 %v4021
        %5263 = vmatprep.mubr.bf16.mxu0 %v2580
        %5264 = vmatmul.mubr.bf16.gmra.mxu0 %v2577
        %v5265 = vpop.f32.mrf.mxu0
        %v5266 = vadd.f32 %v4785, %v5265
        %v5267 = vpop.f32.mrf.mxu0
        %v5268 = vpop.f32.mrf.mxu0
        %v5269 = vadd.f32 %v4788, %v5268
        %v5270 = vpop.f32.mrf.mxu0
        %5271 = vmatprep.mubr.bf16.mxu0 %v2584
        %5272 = vmatmul.mubr.bf16.gmra.mxu0 %v2582
        %v5273 = vpop.f32.mrf.mxu0
        %v5274 = vadd.f32 %v4793, %v5273
        %v5275 = vpop.f32.mrf.mxu0
        %v5276 = vpop.f32.mrf.mxu0
        %v5277 = vadd.f32 %v4796, %v5276
        %v5278 = vpop.f32.mrf.mxu0
        %5279 = vmatprep.mubr.bf16.mxu0 %v2588
        %5280 = vmatmul.mubr.bf16.gmra.mxu0 %v2586
        %v5281 = vpop.f32.mrf.mxu0
        %v5282 = vadd.f32 %v4801, %v5281
        %v5283 = vpop.f32.mrf.mxu0
        %v5284 = vpop.f32.mrf.mxu0
        %v5285 = vadd.f32 %v4804, %v5284
        %v5286 = vpop.f32.mrf.mxu0
        %5287 = vmatprep.mubr.bf16.mxu0 %v2592
        %5288 = vmatmul.mubr.bf16.gmra.mxu0 %v2590
        %v5289 = vpop.f32.mrf.mxu0
        %v5290 = vadd.f32 %v4809, %v5289
        %v5291 = vpop.f32.mrf.mxu0
        %v5292 = vpop.f32.mrf.mxu0
        %v5293 = vadd.f32 %v4812, %v5292
        %v5294 = vpop.f32.mrf.mxu0
        %5295 = vmatprep.mubr.bf16.mxu0 %v2596
        %5296 = vmatmul.mubr.bf16.gmra.mxu0 %v2594
        %v5297 = vpop.f32.mrf.mxu0
        %v5298 = vadd.f32 %v4817, %v5297
        %v5299 = vpop.f32.mrf.mxu0
        %v5300 = vpop.f32.mrf.mxu0
        %v5301 = vadd.f32 %v4820, %v5300
        %v5302 = vpop.f32.mrf.mxu0
        %5303 = vmatprep.mubr.bf16.mxu0 %v2600
        %5304 = vmatmul.mubr.bf16.gmra.mxu0 %v2598
        %v5305 = vpop.f32.mrf.mxu0
        %v5306 = vadd.f32 %v4825, %v5305
        %v5307 = vpop.f32.mrf.mxu0
        %v5308 = vpop.f32.mrf.mxu0
        %v5309 = vadd.f32 %v4828, %v5308
        %v5310 = vpop.f32.mrf.mxu0
        %5311 = vmatprep.mubr.bf16.mxu0 %v2604
        %5312 = vmatmul.mubr.bf16.gmra.mxu0 %v2602
        %v5313 = vpop.f32.mrf.mxu0
        %v5314 = vadd.f32 %v4833, %v5313
        %v5315 = vpop.f32.mrf.mxu0
        %v5316 = vpop.f32.mrf.mxu0
        %v5317 = vadd.f32 %v4836, %v5316
        %v5318 = vpop.f32.mrf.mxu0
        %5319 = vmatprep.mubr.bf16.mxu0 %v2608
        %5320 = vmatmul.mubr.bf16.gmra.mxu0 %v2606
        %v5321 = vpop.f32.mrf.mxu0
        %v5322 = vadd.f32 %v4841, %v5321
        %v5323 = vpop.f32.mrf.mxu0
        %v5324 = vpop.f32.mrf.mxu0
        %v5325 = vadd.f32 %v4844, %v5324
        %v5326 = vpop.f32.mrf.mxu0
        %5327 = vmatprep.mubr.bf16.mxu0 %v2612
        %5328 = vmatmul.mubr.bf16.gmra.mxu0 %v2610
        %v5329 = vpop.f32.mrf.mxu0
        %v5330 = vadd.f32 %v4849, %v5329
        %v5331 = vpop.f32.mrf.mxu0
        %v5332 = vpop.f32.mrf.mxu0
        %v5333 = vadd.f32 %v4852, %v5332
        %v5334 = vpop.f32.mrf.mxu0
        %5335 = vmatprep.mubr.bf16.mxu0 %v2616
        %5336 = vmatmul.mubr.bf16.gmra.mxu0 %v2614
        %v5337 = vpop.f32.mrf.mxu0
        %v5338 = vadd.f32 %v4857, %v5337
        %v5339 = vpop.f32.mrf.mxu0
        %v5340 = vpop.f32.mrf.mxu0
        %v5341 = vadd.f32 %v4860, %v5340
        %v5342 = vpop.f32.mrf.mxu0
        %5343 = vmatprep.mubr.bf16.mxu0 %v2620
        %5344 = vmatmul.mubr.bf16.gmra.mxu0 %v2618
        %v5345 = vpop.f32.mrf.mxu0
        %v5346 = vadd.f32 %v4865, %v5345
        %v5347 = vpop.f32.mrf.mxu0
        %v5348 = vpop.f32.mrf.mxu0
        %v5349 = vadd.f32 %v4868, %v5348
        %v5350 = vpop.f32.mrf.mxu0
        %5351 = vmatprep.mubr.bf16.mxu0 %v2624
        %5352 = vmatmul.mubr.bf16.gmra.mxu0 %v2622
        %v5353 = vpop.f32.mrf.mxu0
        %v5354 = vadd.f32 %v4873, %v5353
        %v5355 = vpop.f32.mrf.mxu0
        %v5356 = vpop.f32.mrf.mxu0
        %v5357 = vadd.f32 %v4876, %v5356
        %v5358 = vpop.f32.mrf.mxu0
        %5359 = vmatprep.mubr.bf16.mxu0 %v2628
        %5360 = vmatmul.mubr.bf16.gmra.mxu0 %v2626
        %v5361 = vpop.f32.mrf.mxu0
        %v5362 = vadd.f32 %v4881, %v5361
        %v5363 = vpop.f32.mrf.mxu0
        %v5364 = vpop.f32.mrf.mxu0
        %v5365 = vadd.f32 %v4884, %v5364
        %v5366 = vpop.f32.mrf.mxu0
        %5367 = vmatprep.mubr.bf16.mxu0 %v2632
        %5368 = vmatmul.mubr.bf16.gmra.mxu0 %v2630
        %v5369 = vpop.f32.mrf.mxu0
        %v5370 = vadd.f32 %v4889, %v5369
        %v5371 = vpop.f32.mrf.mxu0
        %v5372 = vpop.f32.mrf.mxu0
        %v5373 = vadd.f32 %v4892, %v5372
        %v5374 = vpop.f32.mrf.mxu0
        %5375 = vmatprep.mubr.bf16.mxu0 %v2636
        %5376 = vmatmul.mubr.bf16.gmra.mxu0 %v2634
        %v5377 = vpop.f32.mrf.mxu0
        %v5378 = vadd.f32 %v4897, %v5377
        %v5379 = vpop.f32.mrf.mxu0
        %v5380 = vpop.f32.mrf.mxu0
        %v5381 = vadd.f32 %v4900, %v5380
        %v5382 = vpop.f32.mrf.mxu0
        %5383 = vmatprep.mubr.bf16.mxu0 %v2640
        %5384 = vmatmul.mubr.bf16.gmra.mxu0 %v2638
        %v5385 = vpop.f32.mrf.mxu0
        %v5386 = vadd.f32 %v4905, %v5385
        %v5387 = vpop.f32.mrf.mxu0
        %v5388 = vpop.f32.mrf.mxu0
        %v5389 = vadd.f32 %v4908, %v5388
        %v5390 = vpop.f32.mrf.mxu0
        %5391 = vmatprep.mubr.bf16.mxu0 %v2644
        %5392 = vmatmul.mubr.bf16.gmra.mxu0 %v2642
        %v5393 = vpop.f32.mrf.mxu0
        %v5394 = vadd.f32 %v4913, %v5393
        %v5395 = vpop.f32.mrf.mxu0
        %v5396 = vpop.f32.mrf.mxu0
        %v5397 = vadd.f32 %v4916, %v5396
        %v5398 = vpop.f32.mrf.mxu0
        %5399 = vmatprep.mubr.bf16.mxu0 %v2648
        %5400 = vmatmul.mubr.bf16.gmra.mxu0 %v2646
        %v5401 = vpop.f32.mrf.mxu0
        %v5402 = vadd.f32 %v4921, %v5401
        %v5403 = vpop.f32.mrf.mxu0
        %v5404 = vpop.f32.mrf.mxu0
        %v5405 = vadd.f32 %v4924, %v5404
        %v5406 = vpop.f32.mrf.mxu0
        %5407 = vmatprep.mubr.bf16.mxu0 %v2652
        %5408 = vmatmul.mubr.bf16.gmra.mxu0 %v2650
        %v5409 = vpop.f32.mrf.mxu0
        %v5410 = vadd.f32 %v4929, %v5409
        %v5411 = vpop.f32.mrf.mxu0
        %v5412 = vpop.f32.mrf.mxu0
        %v5413 = vadd.f32 %v4932, %v5412
        %v5414 = vpop.f32.mrf.mxu0
        %5415 = vmatprep.mubr.bf16.mxu0 %v2656
        %5416 = vmatmul.mubr.bf16.gmra.mxu0 %v2654
        %v5417 = vpop.f32.mrf.mxu0
        %v5418 = vadd.f32 %v4937, %v5417
        %v5419 = vpop.f32.mrf.mxu0
        %v5420 = vpop.f32.mrf.mxu0
        %v5421 = vadd.f32 %v4940, %v5420
        %v5422 = vpop.f32.mrf.mxu0
        %5423 = vmatprep.mubr.bf16.mxu0 %v2660
        %5424 = vmatmul.mubr.bf16.gmra.mxu0 %v2658
        %v5425 = vpop.f32.mrf.mxu0
        %v5426 = vadd.f32 %v4945, %v5425
        %v5427 = vpop.f32.mrf.mxu0
        %v5428 = vpop.f32.mrf.mxu0
        %v5429 = vadd.f32 %v4948, %v5428
        %v5430 = vpop.f32.mrf.mxu0
        %5431 = vmatprep.mubr.bf16.mxu0 %v2664
        %5432 = vmatmul.mubr.bf16.gmra.mxu0 %v2662
        %v5433 = vpop.f32.mrf.mxu0
        %v5434 = vadd.f32 %v4953, %v5433
        %v5435 = vpop.f32.mrf.mxu0
        %v5436 = vpop.f32.mrf.mxu0
        %v5437 = vadd.f32 %v4956, %v5436
        %v5438 = vpop.f32.mrf.mxu0
        %5439 = vmatprep.mubr.bf16.mxu0 %v2668
        %5440 = vmatmul.mubr.bf16.gmra.mxu0 %v2666
        %v5441 = vpop.f32.mrf.mxu0
        %v5442 = vadd.f32 %v4961, %v5441
        %v5443 = vpop.f32.mrf.mxu0
        %v5444 = vpop.f32.mrf.mxu0
        %v5445 = vadd.f32 %v4964, %v5444
        %v5446 = vpop.f32.mrf.mxu0
        %5447 = vmatprep.mubr.bf16.mxu0 %v2672
        %5448 = vmatmul.mubr.bf16.gmra.mxu0 %v2670
        %v5449 = vpop.f32.mrf.mxu0
        %v5450 = vadd.f32 %v4969, %v5449
        %v5451 = vpop.f32.mrf.mxu0
        %v5452 = vpop.f32.mrf.mxu0
        %v5453 = vadd.f32 %v4972, %v5452
        %v5454 = vpop.f32.mrf.mxu0
        %5455 = vmatprep.mubr.bf16.mxu0 %v2676
        %5456 = vmatmul.mubr.bf16.gmra.mxu0 %v2674
        %v5457 = vpop.f32.mrf.mxu0
        %v5458 = vadd.f32 %v4977, %v5457
        %v5459 = vpop.f32.mrf.mxu0
        %v5460 = vpop.f32.mrf.mxu0
        %v5461 = vadd.f32 %v4980, %v5460
        %v5462 = vpop.f32.mrf.mxu0
        %5463 = vmatprep.mubr.bf16.mxu0 %v2680
        %5464 = vmatmul.mubr.bf16.gmra.mxu0 %v2678
        %v5465 = vpop.f32.mrf.mxu0
        %v5466 = vadd.f32 %v4985, %v5465
        %v5467 = vpop.f32.mrf.mxu0
        %v5468 = vpop.f32.mrf.mxu0
        %v5469 = vadd.f32 %v4988, %v5468
        %v5470 = vpop.f32.mrf.mxu0
        %5471 = vmatprep.mubr.bf16.mxu0 %v2684
        %5472 = vmatmul.mubr.bf16.gmra.mxu0 %v2682
        %v5473 = vpop.f32.mrf.mxu0
        %v5474 = vadd.f32 %v4993, %v5473
        %v5475 = vpop.f32.mrf.mxu0
        %v5476 = vpop.f32.mrf.mxu0
        %v5477 = vadd.f32 %v4996, %v5476
        %v5478 = vpop.f32.mrf.mxu0
        %5479 = vmatprep.mubr.bf16.mxu0 %v2688
        %5480 = vmatmul.mubr.bf16.gmra.mxu0 %v2686
        %v5481 = vpop.f32.mrf.mxu0
        %v5482 = vadd.f32 %v5001, %v5481
        %v5483 = vpop.f32.mrf.mxu0
        %v5484 = vpop.f32.mrf.mxu0
        %v5485 = vadd.f32 %v5004, %v5484
        %v5486 = vpop.f32.mrf.mxu0
        %5487 = vmatprep.mubr.bf16.mxu0 %v2692
        %5488 = vmatmul.mubr.bf16.gmra.mxu0 %v2690
        %v5489 = vpop.f32.mrf.mxu0
        %v5490 = vadd.f32 %v5009, %v5489
        %v5491 = vpop.f32.mrf.mxu0
        %v5492 = vpop.f32.mrf.mxu0
        %v5493 = vadd.f32 %v5012, %v5492
        %v5494 = vpop.f32.mrf.mxu0
        %5495 = vmatprep.mubr.bf16.mxu0 %v2696
        %5496 = vmatmul.mubr.bf16.gmra.mxu0 %v2694
        %v5497 = vpop.f32.mrf.mxu0
        %v5498 = vadd.f32 %v5017, %v5497
        %v5499 = vpop.f32.mrf.mxu0
        %v5500 = vpop.f32.mrf.mxu0
        %v5501 = vadd.f32 %v5020, %v5500
        %v5502 = vpop.f32.mrf.mxu0
        %5503 = vmatprep.mubr.bf16.mxu0 %v2700
        %5504 = vmatmul.mubr.bf16.gmra.mxu0 %v2698
        %v5505 = vpop.f32.mrf.mxu0
        %v5506 = vadd.f32 %v5025, %v5505
        %v5507 = vpop.f32.mrf.mxu0
        %v5508 = vpop.f32.mrf.mxu0
        %v5509 = vadd.f32 %v5028, %v5508
        %v5510 = vpop.f32.mrf.mxu0
        %5511 = vmatprep.mubr.bf16.mxu0 %v2704
        %5512 = vmatmul.mubr.bf16.gmra.mxu0 %v2702
        %v5513 = vpop.f32.mrf.mxu0
        %v5514 = vadd.f32 %v5033, %v5513
        %v5515 = vpop.f32.mrf.mxu0
        %v5516 = vpop.f32.mrf.mxu0
        %v5517 = vadd.f32 %v5036, %v5516
        %v5518 = vpop.f32.mrf.mxu0
        %5519 = vmatprep.mubr.bf16.mxu0 %v2708
        %5520 = vmatmul.mubr.bf16.gmra.mxu0 %v2706
        %v5521 = vpop.f32.mrf.mxu0
        %v5522 = vadd.f32 %v5041, %v5521
        %v5523 = vpop.f32.mrf.mxu0
        %v5524 = vpop.f32.mrf.mxu0
        %v5525 = vadd.f32 %v5044, %v5524
        %v5526 = vpop.f32.mrf.mxu0
        %5527 = vmatprep.mubr.bf16.mxu0 %v2712
        %5528 = vmatmul.mubr.bf16.gmra.mxu0 %v2710
        %v5529 = vpop.f32.mrf.mxu0
        %v5530 = vadd.f32 %v5049, %v5529
        %v5531 = vpop.f32.mrf.mxu0
        %v5532 = vpop.f32.mrf.mxu0
        %v5533 = vadd.f32 %v5052, %v5532
        %v5534 = vpop.f32.mrf.mxu0
        %5535 = vmatprep.mubr.bf16.mxu0 %v2716
        %5536 = vmatmul.mubr.bf16.gmra.mxu0 %v2714
        %v5537 = vpop.f32.mrf.mxu0
        %v5538 = vadd.f32 %v5057, %v5537
        %v5539 = vpop.f32.mrf.mxu0
        %v5540 = vpop.f32.mrf.mxu0
        %v5541 = vadd.f32 %v5060, %v5540
        %v5542 = vpop.f32.mrf.mxu0
        %5543 = vmatprep.mubr.bf16.mxu0 %v2720
        %5544 = vmatmul.mubr.bf16.gmra.mxu0 %v2718
        %v5545 = vpop.f32.mrf.mxu0
        %v5546 = vadd.f32 %v5065, %v5545
        %v5547 = vpop.f32.mrf.mxu0
        %v5548 = vpop.f32.mrf.mxu0
        %v5549 = vadd.f32 %v5068, %v5548
        %v5550 = vpop.f32.mrf.mxu0
        %5551 = vmatprep.mubr.bf16.mxu0 %v2724
        %5552 = vmatmul.mubr.bf16.gmra.mxu0 %v2722
        %v5553 = vpop.f32.mrf.mxu0
        %v5554 = vadd.f32 %v5073, %v5553
        %v5555 = vpop.f32.mrf.mxu0
        %v5556 = vpop.f32.mrf.mxu0
        %v5557 = vadd.f32 %v5076, %v5556
        %v5558 = vpop.f32.mrf.mxu0
        %5559 = vmatprep.mubr.bf16.mxu0 %v2728
        %5560 = vmatmul.mubr.bf16.gmra.mxu0 %v2726
        %v5561 = vpop.f32.mrf.mxu0
        %v5562 = vadd.f32 %v5081, %v5561
        %v5563 = vpop.f32.mrf.mxu0
        %v5564 = vpop.f32.mrf.mxu0
        %v5565 = vadd.f32 %v5084, %v5564
        %v5566 = vpop.f32.mrf.mxu0
        %5567 = vmatprep.mubr.bf16.mxu0 %v2732
        %5568 = vmatmul.mubr.bf16.gmra.mxu0 %v2730
        %v5569 = vpop.f32.mrf.mxu0
        %v5570 = vadd.f32 %v5089, %v5569
        %v5571 = vpop.f32.mrf.mxu0
        %v5572 = vpop.f32.mrf.mxu0
        %v5573 = vadd.f32 %v5092, %v5572
        %v5574 = vpop.f32.mrf.mxu0
        %5575 = vmatprep.mubr.bf16.mxu0 %v2736
        %5576 = vmatmul.mubr.bf16.gmra.mxu0 %v2734
        %v5577 = vpop.f32.mrf.mxu0
        %v5578 = vadd.f32 %v5097, %v5577
        %v5579 = vpop.f32.mrf.mxu0
        %v5580 = vpop.f32.mrf.mxu0
        %v5581 = vadd.f32 %v5100, %v5580
        %v5582 = vpop.f32.mrf.mxu0
        %5583 = vmatprep.mubr.bf16.mxu0 %v2740
        %5584 = vmatmul.mubr.bf16.gmra.mxu0 %v2738
        %v5585 = vpop.f32.mrf.mxu0
        %v5586 = vadd.f32 %v5105, %v5585
        %v5587 = vpop.f32.mrf.mxu0
        %v5588 = vpop.f32.mrf.mxu0
        %v5589 = vadd.f32 %v5108, %v5588
        %v5590 = vpop.f32.mrf.mxu0
        %5591 = vmatprep.mubr.bf16.mxu0 %v2744
        %5592 = vmatmul.mubr.bf16.gmra.mxu0 %v2742
        %v5593 = vpop.f32.mrf.mxu0
        %v5594 = vadd.f32 %v5113, %v5593
        %v5595 = vpop.f32.mrf.mxu0
        %v5596 = vpop.f32.mrf.mxu0
        %v5597 = vadd.f32 %v5116, %v5596
        %v5598 = vpop.f32.mrf.mxu0
        %5599 = vmatprep.mubr.bf16.mxu0 %v2748
        %5600 = vmatmul.mubr.bf16.gmra.mxu0 %v2746
        %v5601 = vpop.f32.mrf.mxu0
        %v5602 = vadd.f32 %v5121, %v5601
        %v5603 = vpop.f32.mrf.mxu0
        %v5604 = vpop.f32.mrf.mxu0
        %v5605 = vadd.f32 %v5124, %v5604
        %v5606 = vpop.f32.mrf.mxu0
        %5607 = vmatprep.mubr.bf16.mxu0 %v2752
        %5608 = vmatmul.mubr.bf16.gmra.mxu0 %v2750
        %v5609 = vpop.f32.mrf.mxu0
        %v5610 = vadd.f32 %v5129, %v5609
        %v5611 = vpop.f32.mrf.mxu0
        %v5612 = vpop.f32.mrf.mxu0
        %v5613 = vadd.f32 %v5132, %v5612
        %v5614 = vpop.f32.mrf.mxu0
        %5615 = vmatprep.mubr.bf16.mxu0 %v2756
        %5616 = vmatmul.mubr.bf16.gmra.mxu0 %v2754
        %v5617 = vpop.f32.mrf.mxu0
        %v5618 = vadd.f32 %v5137, %v5617
        %v5619 = vpop.f32.mrf.mxu0
        %v5620 = vpop.f32.mrf.mxu0
        %v5621 = vadd.f32 %v5140, %v5620
        %v5622 = vpop.f32.mrf.mxu0
        %5623 = vmatprep.mubr.bf16.mxu0 %v2760
        %5624 = vmatmul.mubr.bf16.gmra.mxu0 %v2758
        %v5625 = vpop.f32.mrf.mxu0
        %v5626 = vadd.f32 %v5145, %v5625
        %v5627 = vpop.f32.mrf.mxu0
        %v5628 = vpop.f32.mrf.mxu0
        %v5629 = vadd.f32 %v5148, %v5628
        %v5630 = vpop.f32.mrf.mxu0
        %5631 = vmatprep.mubr.bf16.mxu0 %v2764
        %5632 = vmatmul.mubr.bf16.gmra.mxu0 %v2762
        %v5633 = vpop.f32.mrf.mxu0
        %v5634 = vadd.f32 %v5153, %v5633
        %v5635 = vpop.f32.mrf.mxu0
        %v5636 = vpop.f32.mrf.mxu0
        %v5637 = vadd.f32 %v5156, %v5636
        %v5638 = vpop.f32.mrf.mxu0
        %5639 = vmatprep.mubr.bf16.mxu0 %v2768
        %5640 = vmatmul.mubr.bf16.gmra.mxu0 %v2766
        %v5641 = vpop.f32.mrf.mxu0
        %v5642 = vadd.f32 %v5161, %v5641
        %v5643 = vpop.f32.mrf.mxu0
        %v5644 = vpop.f32.mrf.mxu0
        %v5645 = vadd.f32 %v5164, %v5644
        %v5646 = vpop.f32.mrf.mxu0
        %5647 = vmatprep.mubr.bf16.mxu0 %v2772
        %5648 = vmatmul.mubr.bf16.gmra.mxu0 %v2770
        %v5649 = vpop.f32.mrf.mxu0
        %v5650 = vadd.f32 %v5169, %v5649
        %v5651 = vpop.f32.mrf.mxu0
        %v5652 = vpop.f32.mrf.mxu0
        %v5653 = vadd.f32 %v5172, %v5652
        %v5654 = vpop.f32.mrf.mxu0
        %5655 = vmatprep.mubr.bf16.mxu0 %v2776
        %5656 = vmatmul.mubr.bf16.gmra.mxu0 %v2774
        %v5657 = vpop.f32.mrf.mxu0
        %v5658 = vadd.f32 %v5177, %v5657
        %v5659 = vpop.f32.mrf.mxu0
        %v5660 = vpop.f32.mrf.mxu0
        %v5661 = vadd.f32 %v5180, %v5660
        %v5662 = vpop.f32.mrf.mxu0
        %5663 = vmatprep.mubr.bf16.mxu0 %v2780
        %5664 = vmatmul.mubr.bf16.gmra.mxu0 %v2778
        %v5665 = vpop.f32.mrf.mxu0
        %v5666 = vadd.f32 %v5185, %v5665
        %v5667 = vpop.f32.mrf.mxu0
        %v5668 = vpop.f32.mrf.mxu0
        %v5669 = vadd.f32 %v5188, %v5668
        %v5670 = vpop.f32.mrf.mxu0
        %5671 = vmatprep.mubr.bf16.mxu0 %v2784
        %5672 = vmatmul.mubr.bf16.gmra.mxu0 %v2782
        %v5673 = vpop.f32.mrf.mxu0
        %v5674 = vadd.f32 %v5193, %v5673
        %v5675 = vpop.f32.mrf.mxu0
        %v5676 = vpop.f32.mrf.mxu0
        %v5677 = vadd.f32 %v5196, %v5676
        %v5678 = vpop.f32.mrf.mxu0
        %5679 = vmatprep.mubr.bf16.mxu0 %v2788
        %5680 = vmatmul.mubr.bf16.gmra.mxu0 %v2786
        %v5681 = vpop.f32.mrf.mxu0
        %v5682 = vadd.f32 %v5201, %v5681
        %v5683 = vpop.f32.mrf.mxu0
        %v5684 = vpop.f32.mrf.mxu0
        %v5685 = vadd.f32 %v5204, %v5684
        %v5686 = vpop.f32.mrf.mxu0
        %5687 = vmatprep.mubr.bf16.mxu0 %v2792
        %5688 = vmatmul.mubr.bf16.gmra.mxu0 %v2790
        %v5689 = vpop.f32.mrf.mxu0
        %v5690 = vadd.f32 %v5209, %v5689
        %v5691 = vpop.f32.mrf.mxu0
        %v5692 = vpop.f32.mrf.mxu0
        %v5693 = vadd.f32 %v5212, %v5692
        %v5694 = vpop.f32.mrf.mxu0
        %5695 = vmatprep.mubr.bf16.mxu0 %v2796
        %5696 = vmatmul.mubr.bf16.gmra.mxu0 %v2794
        %v5697 = vpop.f32.mrf.mxu0
        %v5698 = vadd.f32 %v5217, %v5697
        %v5699 = vpop.f32.mrf.mxu0
        %v5700 = vpop.f32.mrf.mxu0
        %v5701 = vadd.f32 %v5220, %v5700
        %v5702 = vpop.f32.mrf.mxu0
        %5703 = vmatprep.mubr.bf16.mxu0 %v2800
        %5704 = vmatmul.mubr.bf16.gmra.mxu0 %v2798
        %v5705 = vpop.f32.mrf.mxu0
        %v5706 = vadd.f32 %v5225, %v5705
        %v5707 = vpop.f32.mrf.mxu0
        %v5708 = vpop.f32.mrf.mxu0
        %v5709 = vadd.f32 %v5228, %v5708
        %v5710 = vpop.f32.mrf.mxu0
        %5711 = vdwg.mxu0
        %5712 = vmatprep.subr.bf16.mxu0 0
        %5713 = vmatpush1.bf16.msra.mxu0 %v4036
        %5714 = vmatprep.subr.bf16.mxu0 0
        %5715 = vmatpush1.bf16.msra.mxu0 %v4035
        %5716 = vmatprep.subr.bf16.mxu0 0
        %5717 = vmatpush1.bf16.msra.mxu0 %v4034
        %5718 = vmatprep.subr.bf16.mxu0 0
        %5719 = vmatpush1.bf16.msra.mxu0 %v4033
        %5720 = vmatprep.subr.bf16.mxu0 0
        %5721 = vmatpush1.bf16.msra.mxu0 %v4032
        %5722 = vmatprep.subr.bf16.mxu0 0
        %5723 = vmatpush1.bf16.msra.mxu0 %v4031
        %5724 = vmatprep.subr.bf16.mxu0 0
        %5725 = vmatpush1.bf16.msra.mxu0 %v4030
        %5726 = vmatprep.subr.bf16.mxu0 0
        %5727 = vmatpush1.bf16.msra.mxu0 %v4029
        %5728 = vmatprep.subr.bf16.mxu0 0
        %5729 = vmatpush2.bf16.msra.mxu0 %v4044
        %5730 = vmatprep.subr.bf16.mxu0 0
        %5731 = vmatpush2.bf16.msra.mxu0 %v4043
        %5732 = vmatprep.subr.bf16.mxu0 0
        %5733 = vmatpush2.bf16.msra.mxu0 %v4042
        %5734 = vmatprep.subr.bf16.mxu0 0
        %5735 = vmatpush2.bf16.msra.mxu0 %v4041
        %5736 = vmatprep.subr.bf16.mxu0 0
        %5737 = vmatpush2.bf16.msra.mxu0 %v4040
        %5738 = vmatprep.subr.bf16.mxu0 0
        %5739 = vmatpush2.bf16.msra.mxu0 %v4039
        %5740 = vmatprep.subr.bf16.mxu0 0
        %5741 = vmatpush2.bf16.msra.mxu0 %v4038
        %5742 = vmatprep.subr.bf16.mxu0 0
        %5743 = vmatpush2.bf16.msra.mxu0 %v4037
        %5744 = vmatprep.mubr.bf16.mxu0 %v2015
        %5745 = vmatmul.mubr.bf16.gmra.mxu0 %v2014
        %v5746 = vpop.f32.mrf.mxu0
        %v5747 = vadd.f32 %v5266, %v5746
        %v5748 = vpop.f32.mrf.mxu0
        %v5749 = vpop.f32.mrf.mxu0
        %v5750 = vadd.f32 %v5269, %v5749
        %v5751 = vpop.f32.mrf.mxu0
        %5752 = vmatprep.mubr.bf16.mxu0 %v2017
        %5753 = vmatmul.mubr.bf16.gmra.mxu0 %v2016
        %v5754 = vpop.f32.mrf.mxu0
        %v5755 = vadd.f32 %v5274, %v5754
        %v5756 = vpop.f32.mrf.mxu0
        %v5757 = vpop.f32.mrf.mxu0
        %v5758 = vadd.f32 %v5277, %v5757
        %v5759 = vpop.f32.mrf.mxu0
        %5760 = vmatprep.mubr.bf16.mxu0 %v2019
        %5761 = vmatmul.mubr.bf16.gmra.mxu0 %v2018
        %v5762 = vpop.f32.mrf.mxu0
        %v5763 = vadd.f32 %v5282, %v5762
        %v5764 = vpop.f32.mrf.mxu0
        %v5765 = vpop.f32.mrf.mxu0
        %v5766 = vadd.f32 %v5285, %v5765
        %v5767 = vpop.f32.mrf.mxu0
        %5768 = vmatprep.mubr.bf16.mxu0 %v2021
        %5769 = vmatmul.mubr.bf16.gmra.mxu0 %v2020
        %v5770 = vpop.f32.mrf.mxu0
        %v5771 = vadd.f32 %v5290, %v5770
        %v5772 = vpop.f32.mrf.mxu0
        %v5773 = vpop.f32.mrf.mxu0
        %v5774 = vadd.f32 %v5293, %v5773
        %v5775 = vpop.f32.mrf.mxu0
        %5776 = vmatprep.mubr.bf16.mxu0 %v2023
        %5777 = vmatmul.mubr.bf16.gmra.mxu0 %v2022
        %v5778 = vpop.f32.mrf.mxu0
        %v5779 = vadd.f32 %v5298, %v5778
        %v5780 = vpop.f32.mrf.mxu0
        %v5781 = vpop.f32.mrf.mxu0
        %v5782 = vadd.f32 %v5301, %v5781
        %v5783 = vpop.f32.mrf.mxu0
        %5784 = vmatprep.mubr.bf16.mxu0 %v2025
        %5785 = vmatmul.mubr.bf16.gmra.mxu0 %v2024
        %v5786 = vpop.f32.mrf.mxu0
        %v5787 = vadd.f32 %v5306, %v5786
        %v5788 = vpop.f32.mrf.mxu0
        %v5789 = vpop.f32.mrf.mxu0
        %v5790 = vadd.f32 %v5309, %v5789
        %v5791 = vpop.f32.mrf.mxu0
        %5792 = vmatprep.mubr.bf16.mxu0 %v2027
        %5793 = vmatmul.mubr.bf16.gmra.mxu0 %v2026
        %v5794 = vpop.f32.mrf.mxu0
        %v5795 = vadd.f32 %v5314, %v5794
        %v5796 = vpop.f32.mrf.mxu0
        %v5797 = vpop.f32.mrf.mxu0
        %v5798 = vadd.f32 %v5317, %v5797
        %v5799 = vpop.f32.mrf.mxu0
        %5800 = vmatprep.mubr.bf16.mxu0 %v2029
        %5801 = vmatmul.mubr.bf16.gmra.mxu0 %v2028
        %v5802 = vpop.f32.mrf.mxu0
        %v5803 = vadd.f32 %v5322, %v5802
        %v5804 = vpop.f32.mrf.mxu0
        %v5805 = vpop.f32.mrf.mxu0
        %v5806 = vadd.f32 %v5325, %v5805
        %v5807 = vpop.f32.mrf.mxu0
        %5808 = vmatprep.mubr.bf16.mxu0 %v2031
        %5809 = vmatmul.mubr.bf16.gmra.mxu0 %v2030
        %v5810 = vpop.f32.mrf.mxu0
        %v5811 = vadd.f32 %v5330, %v5810
        %v5812 = vpop.f32.mrf.mxu0
        %v5813 = vpop.f32.mrf.mxu0
        %v5814 = vadd.f32 %v5333, %v5813
        %v5815 = vpop.f32.mrf.mxu0
        %5816 = vmatprep.mubr.bf16.mxu0 %v2033
        %5817 = vmatmul.mubr.bf16.gmra.mxu0 %v2032
        %v5818 = vpop.f32.mrf.mxu0
        %v5819 = vadd.f32 %v5338, %v5818
        %v5820 = vpop.f32.mrf.mxu0
        %v5821 = vpop.f32.mrf.mxu0
        %v5822 = vadd.f32 %v5341, %v5821
        %v5823 = vpop.f32.mrf.mxu0
        %5824 = vmatprep.mubr.bf16.mxu0 %v2035
        %5825 = vmatmul.mubr.bf16.gmra.mxu0 %v2034
        %v5826 = vpop.f32.mrf.mxu0
        %v5827 = vadd.f32 %v5346, %v5826
        %v5828 = vpop.f32.mrf.mxu0
        %v5829 = vpop.f32.mrf.mxu0
        %v5830 = vadd.f32 %v5349, %v5829
        %v5831 = vpop.f32.mrf.mxu0
        %5832 = vmatprep.mubr.bf16.mxu0 %v2037
        %5833 = vmatmul.mubr.bf16.gmra.mxu0 %v2036
        %v5834 = vpop.f32.mrf.mxu0
        %v5835 = vadd.f32 %v5354, %v5834
        %v5836 = vpop.f32.mrf.mxu0
        %v5837 = vpop.f32.mrf.mxu0
        %v5838 = vadd.f32 %v5357, %v5837
        %v5839 = vpop.f32.mrf.mxu0
        %5840 = vmatprep.mubr.bf16.mxu0 %v2039
        %5841 = vmatmul.mubr.bf16.gmra.mxu0 %v2038
        %v5842 = vpop.f32.mrf.mxu0
        %v5843 = vadd.f32 %v5362, %v5842
        %v5844 = vpop.f32.mrf.mxu0
        %v5845 = vpop.f32.mrf.mxu0
        %v5846 = vadd.f32 %v5365, %v5845
        %v5847 = vpop.f32.mrf.mxu0
        %5848 = vmatprep.mubr.bf16.mxu0 %v2041
        %5849 = vmatmul.mubr.bf16.gmra.mxu0 %v2040
        %v5850 = vpop.f32.mrf.mxu0
        %v5851 = vadd.f32 %v5370, %v5850
        %v5852 = vpop.f32.mrf.mxu0
        %v5853 = vpop.f32.mrf.mxu0
        %v5854 = vadd.f32 %v5373, %v5853
        %v5855 = vpop.f32.mrf.mxu0
        %5856 = vmatprep.mubr.bf16.mxu0 %v2043
        %5857 = vmatmul.mubr.bf16.gmra.mxu0 %v2042
        %v5858 = vpop.f32.mrf.mxu0
        %v5859 = vadd.f32 %v5378, %v5858
        %v5860 = vpop.f32.mrf.mxu0
        %v5861 = vpop.f32.mrf.mxu0
        %v5862 = vadd.f32 %v5381, %v5861
        %v5863 = vpop.f32.mrf.mxu0
        %5864 = vmatprep.mubr.bf16.mxu0 %v2045
        %5865 = vmatmul.mubr.bf16.gmra.mxu0 %v2044
        %v5866 = vpop.f32.mrf.mxu0
        %v5867 = vadd.f32 %v5386, %v5866
        %v5868 = vpop.f32.mrf.mxu0
        %v5869 = vpop.f32.mrf.mxu0
        %v5870 = vadd.f32 %v5389, %v5869
        %v5871 = vpop.f32.mrf.mxu0
        %5872 = vmatprep.mubr.bf16.mxu0 %v2047
        %5873 = vmatmul.mubr.bf16.gmra.mxu0 %v2046
        %v5874 = vpop.f32.mrf.mxu0
        %v5875 = vadd.f32 %v5394, %v5874
        %v5876 = vpop.f32.mrf.mxu0
        %v5877 = vpop.f32.mrf.mxu0
        %v5878 = vadd.f32 %v5397, %v5877
        %v5879 = vpop.f32.mrf.mxu0
        %5880 = vmatprep.mubr.bf16.mxu0 %v2049
        %5881 = vmatmul.mubr.bf16.gmra.mxu0 %v2048
        %v5882 = vpop.f32.mrf.mxu0
        %v5883 = vadd.f32 %v5402, %v5882
        %v5884 = vpop.f32.mrf.mxu0
        %v5885 = vpop.f32.mrf.mxu0
        %v5886 = vadd.f32 %v5405, %v5885
        %v5887 = vpop.f32.mrf.mxu0
        %5888 = vmatprep.mubr.bf16.mxu0 %v2051
        %5889 = vmatmul.mubr.bf16.gmra.mxu0 %v2050
        %v5890 = vpop.f32.mrf.mxu0
        %v5891 = vadd.f32 %v5410, %v5890
        %v5892 = vpop.f32.mrf.mxu0
        %v5893 = vpop.f32.mrf.mxu0
        %v5894 = vadd.f32 %v5413, %v5893
        %v5895 = vpop.f32.mrf.mxu0
        %5896 = vmatprep.mubr.bf16.mxu0 %v2053
        %5897 = vmatmul.mubr.bf16.gmra.mxu0 %v2052
        %v5898 = vpop.f32.mrf.mxu0
        %v5899 = vadd.f32 %v5418, %v5898
        %v5900 = vpop.f32.mrf.mxu0
        %v5901 = vpop.f32.mrf.mxu0
        %v5902 = vadd.f32 %v5421, %v5901
        %v5903 = vpop.f32.mrf.mxu0
        %5904 = vmatprep.mubr.bf16.mxu0 %v2055
        %5905 = vmatmul.mubr.bf16.gmra.mxu0 %v2054
        %v5906 = vpop.f32.mrf.mxu0
        %v5907 = vadd.f32 %v5426, %v5906
        %v5908 = vpop.f32.mrf.mxu0
        %v5909 = vpop.f32.mrf.mxu0
        %v5910 = vadd.f32 %v5429, %v5909
        %v5911 = vpop.f32.mrf.mxu0
        %5912 = vmatprep.mubr.bf16.mxu0 %v2057
        %5913 = vmatmul.mubr.bf16.gmra.mxu0 %v2056
        %v5914 = vpop.f32.mrf.mxu0
        %v5915 = vadd.f32 %v5434, %v5914
        %v5916 = vpop.f32.mrf.mxu0
        %v5917 = vpop.f32.mrf.mxu0
        %v5918 = vadd.f32 %v5437, %v5917
        %v5919 = vpop.f32.mrf.mxu0
        %5920 = vmatprep.mubr.bf16.mxu0 %v2059
        %5921 = vmatmul.mubr.bf16.gmra.mxu0 %v2058
        %v5922 = vpop.f32.mrf.mxu0
        %v5923 = vadd.f32 %v5442, %v5922
        %v5924 = vpop.f32.mrf.mxu0
        %v5925 = vpop.f32.mrf.mxu0
        %v5926 = vadd.f32 %v5445, %v5925
        %v5927 = vpop.f32.mrf.mxu0
        %5928 = vmatprep.mubr.bf16.mxu0 %v2061
        %5929 = vmatmul.mubr.bf16.gmra.mxu0 %v2060
        %v5930 = vpop.f32.mrf.mxu0
        %v5931 = vadd.f32 %v5450, %v5930
        %v5932 = vpop.f32.mrf.mxu0
        %v5933 = vpop.f32.mrf.mxu0
        %v5934 = vadd.f32 %v5453, %v5933
        %v5935 = vpop.f32.mrf.mxu0
        %5936 = vmatprep.mubr.bf16.mxu0 %v2063
        %5937 = vmatmul.mubr.bf16.gmra.mxu0 %v2062
        %v5938 = vpop.f32.mrf.mxu0
        %v5939 = vadd.f32 %v5458, %v5938
        %v5940 = vpop.f32.mrf.mxu0
        %v5941 = vpop.f32.mrf.mxu0
        %v5942 = vadd.f32 %v5461, %v5941
        %v5943 = vpop.f32.mrf.mxu0
        %5944 = vmatprep.mubr.bf16.mxu0 %v2065
        %5945 = vmatmul.mubr.bf16.gmra.mxu0 %v2064
        %v5946 = vpop.f32.mrf.mxu0
        %v5947 = vadd.f32 %v5466, %v5946
        %v5948 = vpop.f32.mrf.mxu0
        %v5949 = vpop.f32.mrf.mxu0
        %v5950 = vadd.f32 %v5469, %v5949
        %v5951 = vpop.f32.mrf.mxu0
        %5952 = vmatprep.mubr.bf16.mxu0 %v2067
        %5953 = vmatmul.mubr.bf16.gmra.mxu0 %v2066
        %v5954 = vpop.f32.mrf.mxu0
        %v5955 = vadd.f32 %v5474, %v5954
        %v5956 = vpop.f32.mrf.mxu0
        %v5957 = vpop.f32.mrf.mxu0
        %v5958 = vadd.f32 %v5477, %v5957
        %v5959 = vpop.f32.mrf.mxu0
        %5960 = vmatprep.mubr.bf16.mxu0 %v2069
        %5961 = vmatmul.mubr.bf16.gmra.mxu0 %v2068
        %v5962 = vpop.f32.mrf.mxu0
        %v5963 = vadd.f32 %v5482, %v5962
        %v5964 = vpop.f32.mrf.mxu0
        %v5965 = vpop.f32.mrf.mxu0
        %v5966 = vadd.f32 %v5485, %v5965
        %v5967 = vpop.f32.mrf.mxu0
        %5968 = vmatprep.mubr.bf16.mxu0 %v2071
        %5969 = vmatmul.mubr.bf16.gmra.mxu0 %v2070
        %v5970 = vpop.f32.mrf.mxu0
        %v5971 = vadd.f32 %v5490, %v5970
        %v5972 = vpop.f32.mrf.mxu0
        %v5973 = vpop.f32.mrf.mxu0
        %v5974 = vadd.f32 %v5493, %v5973
        %v5975 = vpop.f32.mrf.mxu0
        %5976 = vmatprep.mubr.bf16.mxu0 %v2073
        %5977 = vmatmul.mubr.bf16.gmra.mxu0 %v2072
        %v5978 = vpop.f32.mrf.mxu0
        %v5979 = vadd.f32 %v5498, %v5978
        %v5980 = vpop.f32.mrf.mxu0
        %v5981 = vpop.f32.mrf.mxu0
        %v5982 = vadd.f32 %v5501, %v5981
        %v5983 = vpop.f32.mrf.mxu0
        %5984 = vmatprep.mubr.bf16.mxu0 %v2075
        %5985 = vmatmul.mubr.bf16.gmra.mxu0 %v2074
        %v5986 = vpop.f32.mrf.mxu0
        %v5987 = vadd.f32 %v5506, %v5986
        %v5988 = vpop.f32.mrf.mxu0
        %v5989 = vpop.f32.mrf.mxu0
        %v5990 = vadd.f32 %v5509, %v5989
        %v5991 = vpop.f32.mrf.mxu0
        %5992 = vmatprep.mubr.bf16.mxu0 %v2077
        %5993 = vmatmul.mubr.bf16.gmra.mxu0 %v2076
        %v5994 = vpop.f32.mrf.mxu0
        %v5995 = vadd.f32 %v5514, %v5994
        %v5996 = vpop.f32.mrf.mxu0
        %v5997 = vpop.f32.mrf.mxu0
        %v5998 = vadd.f32 %v5517, %v5997
        %v5999 = vpop.f32.mrf.mxu0
        %6000 = vmatprep.mubr.bf16.mxu0 %v2079
        %6001 = vmatmul.mubr.bf16.gmra.mxu0 %v2078
        %v6002 = vpop.f32.mrf.mxu0
        %v6003 = vadd.f32 %v5522, %v6002
        %v6004 = vpop.f32.mrf.mxu0
        %v6005 = vpop.f32.mrf.mxu0
        %v6006 = vadd.f32 %v5525, %v6005
        %v6007 = vpop.f32.mrf.mxu0
        %6008 = vmatprep.mubr.bf16.mxu0 %v2081
        %6009 = vmatmul.mubr.bf16.gmra.mxu0 %v2080
        %v6010 = vpop.f32.mrf.mxu0
        %v6011 = vadd.f32 %v5530, %v6010
        %v6012 = vpop.f32.mrf.mxu0
        %v6013 = vpop.f32.mrf.mxu0
        %v6014 = vadd.f32 %v5533, %v6013
        %v6015 = vpop.f32.mrf.mxu0
        %6016 = vmatprep.mubr.bf16.mxu0 %v2083
        %6017 = vmatmul.mubr.bf16.gmra.mxu0 %v2082
        %v6018 = vpop.f32.mrf.mxu0
        %v6019 = vadd.f32 %v5538, %v6018
        %v6020 = vpop.f32.mrf.mxu0
        %v6021 = vpop.f32.mrf.mxu0
        %v6022 = vadd.f32 %v5541, %v6021
        %v6023 = vpop.f32.mrf.mxu0
        %6024 = vmatprep.mubr.bf16.mxu0 %v2085
        %6025 = vmatmul.mubr.bf16.gmra.mxu0 %v2084
        %v6026 = vpop.f32.mrf.mxu0
        %v6027 = vadd.f32 %v5546, %v6026
        %v6028 = vpop.f32.mrf.mxu0
        %v6029 = vpop.f32.mrf.mxu0
        %v6030 = vadd.f32 %v5549, %v6029
        %v6031 = vpop.f32.mrf.mxu0
        %6032 = vmatprep.mubr.bf16.mxu0 %v2087
        %6033 = vmatmul.mubr.bf16.gmra.mxu0 %v2086
        %v6034 = vpop.f32.mrf.mxu0
        %v6035 = vadd.f32 %v5554, %v6034
        %v6036 = vpop.f32.mrf.mxu0
        %v6037 = vpop.f32.mrf.mxu0
        %v6038 = vadd.f32 %v5557, %v6037
        %v6039 = vpop.f32.mrf.mxu0
        %6040 = vmatprep.mubr.bf16.mxu0 %v2089
        %6041 = vmatmul.mubr.bf16.gmra.mxu0 %v2088
        %v6042 = vpop.f32.mrf.mxu0
        %v6043 = vadd.f32 %v5562, %v6042
        %v6044 = vpop.f32.mrf.mxu0
        %v6045 = vpop.f32.mrf.mxu0
        %v6046 = vadd.f32 %v5565, %v6045
        %v6047 = vpop.f32.mrf.mxu0
        %6048 = vmatprep.mubr.bf16.mxu0 %v2091
        %6049 = vmatmul.mubr.bf16.gmra.mxu0 %v2090
        %v6050 = vpop.f32.mrf.mxu0
        %v6051 = vadd.f32 %v5570, %v6050
        %v6052 = vpop.f32.mrf.mxu0
        %v6053 = vpop.f32.mrf.mxu0
        %v6054 = vadd.f32 %v5573, %v6053
        %v6055 = vpop.f32.mrf.mxu0
        %6056 = vmatprep.mubr.bf16.mxu0 %v2093
        %6057 = vmatmul.mubr.bf16.gmra.mxu0 %v2092
        %v6058 = vpop.f32.mrf.mxu0
        %v6059 = vadd.f32 %v5578, %v6058
        %v6060 = vpop.f32.mrf.mxu0
        %v6061 = vpop.f32.mrf.mxu0
        %v6062 = vadd.f32 %v5581, %v6061
        %v6063 = vpop.f32.mrf.mxu0
        %6064 = vmatprep.mubr.bf16.mxu0 %v2095
        %6065 = vmatmul.mubr.bf16.gmra.mxu0 %v2094
        %v6066 = vpop.f32.mrf.mxu0
        %v6067 = vadd.f32 %v5586, %v6066
        %v6068 = vpop.f32.mrf.mxu0
        %v6069 = vpop.f32.mrf.mxu0
        %v6070 = vadd.f32 %v5589, %v6069
        %v6071 = vpop.f32.mrf.mxu0
        %6072 = vmatprep.mubr.bf16.mxu0 %v2097
        %6073 = vmatmul.mubr.bf16.gmra.mxu0 %v2096
        %v6074 = vpop.f32.mrf.mxu0
        %v6075 = vadd.f32 %v5594, %v6074
        %v6076 = vpop.f32.mrf.mxu0
        %v6077 = vpop.f32.mrf.mxu0
        %v6078 = vadd.f32 %v5597, %v6077
        %v6079 = vpop.f32.mrf.mxu0
        %6080 = vmatprep.mubr.bf16.mxu0 %v2099
        %6081 = vmatmul.mubr.bf16.gmra.mxu0 %v2098
        %v6082 = vpop.f32.mrf.mxu0
        %v6083 = vadd.f32 %v5602, %v6082
        %v6084 = vpop.f32.mrf.mxu0
        %v6085 = vpop.f32.mrf.mxu0
        %v6086 = vadd.f32 %v5605, %v6085
        %v6087 = vpop.f32.mrf.mxu0
        %6088 = vmatprep.mubr.bf16.mxu0 %v2101
        %6089 = vmatmul.mubr.bf16.gmra.mxu0 %v2100
        %v6090 = vpop.f32.mrf.mxu0
        %v6091 = vadd.f32 %v5610, %v6090
        %v6092 = vpop.f32.mrf.mxu0
        %v6093 = vpop.f32.mrf.mxu0
        %v6094 = vadd.f32 %v5613, %v6093
        %v6095 = vpop.f32.mrf.mxu0
        %6096 = vmatprep.mubr.bf16.mxu0 %v2103
        %6097 = vmatmul.mubr.bf16.gmra.mxu0 %v2102
        %v6098 = vpop.f32.mrf.mxu0
        %v6099 = vadd.f32 %v5618, %v6098
        %v6100 = vpop.f32.mrf.mxu0
        %v6101 = vpop.f32.mrf.mxu0
        %v6102 = vadd.f32 %v5621, %v6101
        %v6103 = vpop.f32.mrf.mxu0
        %6104 = vmatprep.mubr.bf16.mxu0 %v2105
        %6105 = vmatmul.mubr.bf16.gmra.mxu0 %v2104
        %v6106 = vpop.f32.mrf.mxu0
        %v6107 = vadd.f32 %v5626, %v6106
        %v6108 = vpop.f32.mrf.mxu0
        %v6109 = vpop.f32.mrf.mxu0
        %v6110 = vadd.f32 %v5629, %v6109
        %v6111 = vpop.f32.mrf.mxu0
        %6112 = vmatprep.mubr.bf16.mxu0 %v2107
        %6113 = vmatmul.mubr.bf16.gmra.mxu0 %v2106
        %v6114 = vpop.f32.mrf.mxu0
        %v6115 = vadd.f32 %v5634, %v6114
        %v6116 = vpop.f32.mrf.mxu0
        %v6117 = vpop.f32.mrf.mxu0
        %v6118 = vadd.f32 %v5637, %v6117
        %v6119 = vpop.f32.mrf.mxu0
        %6120 = vmatprep.mubr.bf16.mxu0 %v2109
        %6121 = vmatmul.mubr.bf16.gmra.mxu0 %v2108
        %v6122 = vpop.f32.mrf.mxu0
        %v6123 = vadd.f32 %v5642, %v6122
        %v6124 = vpop.f32.mrf.mxu0
        %v6125 = vpop.f32.mrf.mxu0
        %v6126 = vadd.f32 %v5645, %v6125
        %v6127 = vpop.f32.mrf.mxu0
        %6128 = vmatprep.mubr.bf16.mxu0 %v2111
        %6129 = vmatmul.mubr.bf16.gmra.mxu0 %v2110
        %v6130 = vpop.f32.mrf.mxu0
        %v6131 = vadd.f32 %v5650, %v6130
        %v6132 = vpop.f32.mrf.mxu0
        %v6133 = vpop.f32.mrf.mxu0
        %v6134 = vadd.f32 %v5653, %v6133
        %v6135 = vpop.f32.mrf.mxu0
        %6136 = vmatprep.mubr.bf16.mxu0 %v2113
        %6137 = vmatmul.mubr.bf16.gmra.mxu0 %v2112
        %v6138 = vpop.f32.mrf.mxu0
        %v6139 = vadd.f32 %v5658, %v6138
        %v6140 = vpop.f32.mrf.mxu0
        %v6141 = vpop.f32.mrf.mxu0
        %v6142 = vadd.f32 %v5661, %v6141
        %v6143 = vpop.f32.mrf.mxu0
        %6144 = vmatprep.mubr.bf16.mxu0 %v2115
        %6145 = vmatmul.mubr.bf16.gmra.mxu0 %v2114
        %v6146 = vpop.f32.mrf.mxu0
        %v6147 = vadd.f32 %v5666, %v6146
        %v6148 = vpop.f32.mrf.mxu0
        %v6149 = vpop.f32.mrf.mxu0
        %v6150 = vadd.f32 %v5669, %v6149
        %v6151 = vpop.f32.mrf.mxu0
        %6152 = vmatprep.mubr.bf16.mxu0 %v2117
        %6153 = vmatmul.mubr.bf16.gmra.mxu0 %v2116
        %v6154 = vpop.f32.mrf.mxu0
        %v6155 = vadd.f32 %v5674, %v6154
        %v6156 = vpop.f32.mrf.mxu0
        %v6157 = vpop.f32.mrf.mxu0
        %v6158 = vadd.f32 %v5677, %v6157
        %v6159 = vpop.f32.mrf.mxu0
        %6160 = vmatprep.mubr.bf16.mxu0 %v2935
        %6161 = vmatmul.mubr.bf16.gmra.mxu0 %v2934
        %v6162 = vpop.f32.mrf.mxu0
        %v6163 = vadd.f32 %v5682, %v6162
        %v6164 = vpop.f32.mrf.mxu0
        %v6165 = vpop.f32.mrf.mxu0
        %v6166 = vadd.f32 %v5685, %v6165
        %v6167 = vpop.f32.mrf.mxu0
        %6168 = vmatprep.mubr.bf16.mxu0 %v2937
        %6169 = vmatmul.mubr.bf16.gmra.mxu0 %v2936
        %v6170 = vpop.f32.mrf.mxu0
        %v6171 = vadd.f32 %v5690, %v6170
        %v6172 = vpop.f32.mrf.mxu0
        %v6173 = vpop.f32.mrf.mxu0
        %v6174 = vadd.f32 %v5693, %v6173
        %v6175 = vpop.f32.mrf.mxu0
        %6176 = vmatprep.mubr.bf16.mxu0 %v2939
        %6177 = vmatmul.mubr.bf16.gmra.mxu0 %v2938
        %v6178 = vpop.f32.mrf.mxu0
        %v6179 = vadd.f32 %v5698, %v6178
        %v6180 = vpop.f32.mrf.mxu0
        %v6181 = vpop.f32.mrf.mxu0
        %v6182 = vadd.f32 %v5701, %v6181
        %v6183 = vpop.f32.mrf.mxu0
        %6184 = vmatprep.mubr.bf16.mxu0 %v2941
        %6185 = vmatmul.mubr.bf16.gmra.mxu0 %v2940
        %v6186 = vpop.f32.mrf.mxu0
        %v6187 = vadd.f32 %v5706, %v6186
        %v6188 = vpop.f32.mrf.mxu0
        %v6189 = vpop.f32.mrf.mxu0
        %v6190 = vadd.f32 %v5709, %v6189
        %v6191 = vpop.f32.mrf.mxu0
        %6192 = vdwg.mxu0
        %6193 = vmatprep.subr.bf16.mxu0 0
        %6194 = vmatpush1.bf16.msra.mxu0 %v4052
        %6195 = vmatprep.subr.bf16.mxu0 0
        %6196 = vmatpush1.bf16.msra.mxu0 %v4051
        %6197 = vmatprep.subr.bf16.mxu0 0
        %6198 = vmatpush1.bf16.msra.mxu0 %v4050
        %6199 = vmatprep.subr.bf16.mxu0 0
        %6200 = vmatpush1.bf16.msra.mxu0 %v4049
        %6201 = vmatprep.subr.bf16.mxu0 0
        %6202 = vmatpush1.bf16.msra.mxu0 %v4048
        %6203 = vmatprep.subr.bf16.mxu0 0
        %6204 = vmatpush1.bf16.msra.mxu0 %v4047
        %6205 = vmatprep.subr.bf16.mxu0 0
        %6206 = vmatpush1.bf16.msra.mxu0 %v4046
        %6207 = vmatprep.subr.bf16.mxu0 0
        %6208 = vmatpush1.bf16.msra.mxu0 %v4045
        %6209 = vmatprep.subr.bf16.mxu0 0
        %6210 = vmatpush2.bf16.msra.mxu0 %v4060
        %6211 = vmatprep.subr.bf16.mxu0 0
        %6212 = vmatpush2.bf16.msra.mxu0 %v4059
        %6213 = vmatprep.subr.bf16.mxu0 0
        %6214 = vmatpush2.bf16.msra.mxu0 %v4058
        %6215 = vmatprep.subr.bf16.mxu0 0
        %6216 = vmatpush2.bf16.msra.mxu0 %v4057
        %6217 = vmatprep.subr.bf16.mxu0 0
        %6218 = vmatpush2.bf16.msra.mxu0 %v4056
        %6219 = vmatprep.subr.bf16.mxu0 0
        %6220 = vmatpush2.bf16.msra.mxu0 %v4055
        %6221 = vmatprep.subr.bf16.mxu0 0
        %6222 = vmatpush2.bf16.msra.mxu0 %v4054
        %6223 = vmatprep.subr.bf16.mxu0 0
        %6224 = vmatpush2.bf16.msra.mxu0 %v4053
        %6225 = vmatprep.mubr.bf16.mxu0 %v2257
        %6226 = vmatmul.mubr.bf16.gmra.mxu0 %v2255
        %v6227 = vpop.f32.mrf.mxu0
        %v6228 = vadd.f32 %v5747, %v6227
        %v6229 = vpop.f32.mrf.mxu0
        %v6230 = vpop.f32.mrf.mxu0
        %v6231 = vadd.f32 %v5750, %v6230
        %v6232 = vpop.f32.mrf.mxu0
        %6233 = vmatprep.mubr.bf16.mxu0 %v2261
        %6234 = vmatmul.mubr.bf16.gmra.mxu0 %v2259
        %v6235 = vpop.f32.mrf.mxu0
        %v6236 = vadd.f32 %v5755, %v6235
        %v6237 = vpop.f32.mrf.mxu0
        %v6238 = vpop.f32.mrf.mxu0
        %v6239 = vadd.f32 %v5758, %v6238
        %v6240 = vpop.f32.mrf.mxu0
        %6241 = vmatprep.mubr.bf16.mxu0 %v2265
        %6242 = vmatmul.mubr.bf16.gmra.mxu0 %v2263
        %v6243 = vpop.f32.mrf.mxu0
        %v6244 = vadd.f32 %v5763, %v6243
        %v6245 = vpop.f32.mrf.mxu0
        %v6246 = vpop.f32.mrf.mxu0
        %v6247 = vadd.f32 %v5766, %v6246
        %v6248 = vpop.f32.mrf.mxu0
        %6249 = vmatprep.mubr.bf16.mxu0 %v2269
        %6250 = vmatmul.mubr.bf16.gmra.mxu0 %v2267
        %v6251 = vpop.f32.mrf.mxu0
        %v6252 = vadd.f32 %v5771, %v6251
        %v6253 = vpop.f32.mrf.mxu0
        %v6254 = vpop.f32.mrf.mxu0
        %v6255 = vadd.f32 %v5774, %v6254
        %v6256 = vpop.f32.mrf.mxu0
        %6257 = vmatprep.mubr.bf16.mxu0 %v2273
        %6258 = vmatmul.mubr.bf16.gmra.mxu0 %v2271
        %v6259 = vpop.f32.mrf.mxu0
        %v6260 = vadd.f32 %v5779, %v6259
        %v6261 = vpop.f32.mrf.mxu0
        %v6262 = vpop.f32.mrf.mxu0
        %v6263 = vadd.f32 %v5782, %v6262
        %v6264 = vpop.f32.mrf.mxu0
        %6265 = vmatprep.mubr.bf16.mxu0 %v2277
        %6266 = vmatmul.mubr.bf16.gmra.mxu0 %v2275
        %v6267 = vpop.f32.mrf.mxu0
        %v6268 = vadd.f32 %v5787, %v6267
        %v6269 = vpop.f32.mrf.mxu0
        %v6270 = vpop.f32.mrf.mxu0
        %v6271 = vadd.f32 %v5790, %v6270
        %v6272 = vpop.f32.mrf.mxu0
        %6273 = vmatprep.mubr.bf16.mxu0 %v2281
        %6274 = vmatmul.mubr.bf16.gmra.mxu0 %v2279
        %v6275 = vpop.f32.mrf.mxu0
        %v6276 = vadd.f32 %v5795, %v6275
        %v6277 = vpop.f32.mrf.mxu0
        %v6278 = vpop.f32.mrf.mxu0
        %v6279 = vadd.f32 %v5798, %v6278
        %v6280 = vpop.f32.mrf.mxu0
        %6281 = vmatprep.mubr.bf16.mxu0 %v2285
        %6282 = vmatmul.mubr.bf16.gmra.mxu0 %v2283
        %v6283 = vpop.f32.mrf.mxu0
        %v6284 = vadd.f32 %v5803, %v6283
        %v6285 = vpop.f32.mrf.mxu0
        %v6286 = vpop.f32.mrf.mxu0
        %v6287 = vadd.f32 %v5806, %v6286
        %v6288 = vpop.f32.mrf.mxu0
        %6289 = vmatprep.mubr.bf16.mxu0 %v2289
        %6290 = vmatmul.mubr.bf16.gmra.mxu0 %v2287
        %v6291 = vpop.f32.mrf.mxu0
        %v6292 = vadd.f32 %v5811, %v6291
        %v6293 = vpop.f32.mrf.mxu0
        %v6294 = vpop.f32.mrf.mxu0
        %v6295 = vadd.f32 %v5814, %v6294
        %v6296 = vpop.f32.mrf.mxu0
        %6297 = vmatprep.mubr.bf16.mxu0 %v2293
        %6298 = vmatmul.mubr.bf16.gmra.mxu0 %v2291
        %v6299 = vpop.f32.mrf.mxu0
        %v6300 = vadd.f32 %v5819, %v6299
        %v6301 = vpop.f32.mrf.mxu0
        %v6302 = vpop.f32.mrf.mxu0
        %v6303 = vadd.f32 %v5822, %v6302
        %v6304 = vpop.f32.mrf.mxu0
        %6305 = vmatprep.mubr.bf16.mxu0 %v2297
        %6306 = vmatmul.mubr.bf16.gmra.mxu0 %v2295
        %v6307 = vpop.f32.mrf.mxu0
        %v6308 = vadd.f32 %v5827, %v6307
        %v6309 = vpop.f32.mrf.mxu0
        %v6310 = vpop.f32.mrf.mxu0
        %v6311 = vadd.f32 %v5830, %v6310
        %v6312 = vpop.f32.mrf.mxu0
        %6313 = vmatprep.mubr.bf16.mxu0 %v2301
        %6314 = vmatmul.mubr.bf16.gmra.mxu0 %v2299
        %v6315 = vpop.f32.mrf.mxu0
        %v6316 = vadd.f32 %v5835, %v6315
        %v6317 = vpop.f32.mrf.mxu0
        %v6318 = vpop.f32.mrf.mxu0
        %v6319 = vadd.f32 %v5838, %v6318
        %v6320 = vpop.f32.mrf.mxu0
        %6321 = vmatprep.mubr.bf16.mxu0 %v2305
        %6322 = vmatmul.mubr.bf16.gmra.mxu0 %v2303
        %v6323 = vpop.f32.mrf.mxu0
        %v6324 = vadd.f32 %v5843, %v6323
        %v6325 = vpop.f32.mrf.mxu0
        %v6326 = vpop.f32.mrf.mxu0
        %v6327 = vadd.f32 %v5846, %v6326
        %v6328 = vpop.f32.mrf.mxu0
        %6329 = vmatprep.mubr.bf16.mxu0 %v2309
        %6330 = vmatmul.mubr.bf16.gmra.mxu0 %v2307
        %v6331 = vpop.f32.mrf.mxu0
        %v6332 = vadd.f32 %v5851, %v6331
        %v6333 = vpop.f32.mrf.mxu0
        %v6334 = vpop.f32.mrf.mxu0
        %v6335 = vadd.f32 %v5854, %v6334
        %v6336 = vpop.f32.mrf.mxu0
        %6337 = vmatprep.mubr.bf16.mxu0 %v2313
        %6338 = vmatmul.mubr.bf16.gmra.mxu0 %v2311
        %v6339 = vpop.f32.mrf.mxu0
        %v6340 = vadd.f32 %v5859, %v6339
        %v6341 = vpop.f32.mrf.mxu0
        %v6342 = vpop.f32.mrf.mxu0
        %v6343 = vadd.f32 %v5862, %v6342
        %v6344 = vpop.f32.mrf.mxu0
        %6345 = vmatprep.mubr.bf16.mxu0 %v2317
        %6346 = vmatmul.mubr.bf16.gmra.mxu0 %v2315
        %v6347 = vpop.f32.mrf.mxu0
        %v6348 = vadd.f32 %v5867, %v6347
        %v6349 = vpop.f32.mrf.mxu0
        %v6350 = vpop.f32.mrf.mxu0
        %v6351 = vadd.f32 %v5870, %v6350
        %v6352 = vpop.f32.mrf.mxu0
        %6353 = vmatprep.mubr.bf16.mxu0 %v2321
        %6354 = vmatmul.mubr.bf16.gmra.mxu0 %v2319
        %v6355 = vpop.f32.mrf.mxu0
        %v6356 = vadd.f32 %v5875, %v6355
        %v6357 = vpop.f32.mrf.mxu0
        %v6358 = vpop.f32.mrf.mxu0
        %v6359 = vadd.f32 %v5878, %v6358
        %v6360 = vpop.f32.mrf.mxu0
        %6361 = vmatprep.mubr.bf16.mxu0 %v2325
        %6362 = vmatmul.mubr.bf16.gmra.mxu0 %v2323
        %v6363 = vpop.f32.mrf.mxu0
        %v6364 = vadd.f32 %v5883, %v6363
        %v6365 = vpop.f32.mrf.mxu0
        %v6366 = vpop.f32.mrf.mxu0
        %v6367 = vadd.f32 %v5886, %v6366
        %v6368 = vpop.f32.mrf.mxu0
        %6369 = vmatprep.mubr.bf16.mxu0 %v2329
        %6370 = vmatmul.mubr.bf16.gmra.mxu0 %v2327
        %v6371 = vpop.f32.mrf.mxu0
        %v6372 = vadd.f32 %v5891, %v6371
        %v6373 = vpop.f32.mrf.mxu0
        %v6374 = vpop.f32.mrf.mxu0
        %v6375 = vadd.f32 %v5894, %v6374
        %v6376 = vpop.f32.mrf.mxu0
        %6377 = vmatprep.mubr.bf16.mxu0 %v2333
        %6378 = vmatmul.mubr.bf16.gmra.mxu0 %v2331
        %v6379 = vpop.f32.mrf.mxu0
        %v6380 = vadd.f32 %v5899, %v6379
        %v6381 = vpop.f32.mrf.mxu0
        %v6382 = vpop.f32.mrf.mxu0
        %v6383 = vadd.f32 %v5902, %v6382
        %v6384 = vpop.f32.mrf.mxu0
        %6385 = vmatprep.mubr.bf16.mxu0 %v2337
        %6386 = vmatmul.mubr.bf16.gmra.mxu0 %v2335
        %v6387 = vpop.f32.mrf.mxu0
        %v6388 = vadd.f32 %v5907, %v6387
        %v6389 = vpop.f32.mrf.mxu0
        %v6390 = vpop.f32.mrf.mxu0
        %v6391 = vadd.f32 %v5910, %v6390
        %v6392 = vpop.f32.mrf.mxu0
        %6393 = vmatprep.mubr.bf16.mxu0 %v2341
        %6394 = vmatmul.mubr.bf16.gmra.mxu0 %v2339
        %v6395 = vpop.f32.mrf.mxu0
        %v6396 = vadd.f32 %v5915, %v6395
        %v6397 = vpop.f32.mrf.mxu0
        %v6398 = vpop.f32.mrf.mxu0
        %v6399 = vadd.f32 %v5918, %v6398
        %v6400 = vpop.f32.mrf.mxu0
        %6401 = vmatprep.mubr.bf16.mxu0 %v2345
        %6402 = vmatmul.mubr.bf16.gmra.mxu0 %v2343
        %v6403 = vpop.f32.mrf.mxu0
        %v6404 = vadd.f32 %v5923, %v6403
        %v6405 = vpop.f32.mrf.mxu0
        %v6406 = vpop.f32.mrf.mxu0
        %v6407 = vadd.f32 %v5926, %v6406
        %v6408 = vpop.f32.mrf.mxu0
        %6409 = vmatprep.mubr.bf16.mxu0 %v2349
        %6410 = vmatmul.mubr.bf16.gmra.mxu0 %v2347
        %v6411 = vpop.f32.mrf.mxu0
        %v6412 = vadd.f32 %v5931, %v6411
        %v6413 = vpop.f32.mrf.mxu0
        %v6414 = vpop.f32.mrf.mxu0
        %v6415 = vadd.f32 %v5934, %v6414
        %v6416 = vpop.f32.mrf.mxu0
        %6417 = vmatprep.mubr.bf16.mxu0 %v2353
        %6418 = vmatmul.mubr.bf16.gmra.mxu0 %v2351
        %v6419 = vpop.f32.mrf.mxu0
        %v6420 = vadd.f32 %v5939, %v6419
        %v6421 = vpop.f32.mrf.mxu0
        %v6422 = vpop.f32.mrf.mxu0
        %v6423 = vadd.f32 %v5942, %v6422
        %v6424 = vpop.f32.mrf.mxu0
        %6425 = vmatprep.mubr.bf16.mxu0 %v2357
        %6426 = vmatmul.mubr.bf16.gmra.mxu0 %v2355
        %v6427 = vpop.f32.mrf.mxu0
        %v6428 = vadd.f32 %v5947, %v6427
        %v6429 = vpop.f32.mrf.mxu0
        %v6430 = vpop.f32.mrf.mxu0
        %v6431 = vadd.f32 %v5950, %v6430
        %v6432 = vpop.f32.mrf.mxu0
        %6433 = vmatprep.mubr.bf16.mxu0 %v2361
        %6434 = vmatmul.mubr.bf16.gmra.mxu0 %v2359
        %v6435 = vpop.f32.mrf.mxu0
        %v6436 = vadd.f32 %v5955, %v6435
        %v6437 = vpop.f32.mrf.mxu0
        %v6438 = vpop.f32.mrf.mxu0
        %v6439 = vadd.f32 %v5958, %v6438
        %v6440 = vpop.f32.mrf.mxu0
        %6441 = vmatprep.mubr.bf16.mxu0 %v2365
        %6442 = vmatmul.mubr.bf16.gmra.mxu0 %v2363
        %v6443 = vpop.f32.mrf.mxu0
        %v6444 = vadd.f32 %v5963, %v6443
        %v6445 = vpop.f32.mrf.mxu0
        %v6446 = vpop.f32.mrf.mxu0
        %v6447 = vadd.f32 %v5966, %v6446
        %v6448 = vpop.f32.mrf.mxu0
        %6449 = vmatprep.mubr.bf16.mxu0 %v2369
        %6450 = vmatmul.mubr.bf16.gmra.mxu0 %v2367
        %v6451 = vpop.f32.mrf.mxu0
        %v6452 = vadd.f32 %v5971, %v6451
        %v6453 = vpop.f32.mrf.mxu0
        %v6454 = vpop.f32.mrf.mxu0
        %v6455 = vadd.f32 %v5974, %v6454
        %v6456 = vpop.f32.mrf.mxu0
        %6457 = vmatprep.mubr.bf16.mxu0 %v2373
        %6458 = vmatmul.mubr.bf16.gmra.mxu0 %v2371
        %v6459 = vpop.f32.mrf.mxu0
        %v6460 = vadd.f32 %v5979, %v6459
        %v6461 = vpop.f32.mrf.mxu0
        %v6462 = vpop.f32.mrf.mxu0
        %v6463 = vadd.f32 %v5982, %v6462
        %v6464 = vpop.f32.mrf.mxu0
        %6465 = vmatprep.mubr.bf16.mxu0 %v2377
        %6466 = vmatmul.mubr.bf16.gmra.mxu0 %v2375
        %v6467 = vpop.f32.mrf.mxu0
        %v6468 = vadd.f32 %v5987, %v6467
        %v6469 = vpop.f32.mrf.mxu0
        %v6470 = vpop.f32.mrf.mxu0
        %v6471 = vadd.f32 %v5990, %v6470
        %v6472 = vpop.f32.mrf.mxu0
        %6473 = vmatprep.mubr.bf16.mxu0 %v2381
        %6474 = vmatmul.mubr.bf16.gmra.mxu0 %v2379
        %v6475 = vpop.f32.mrf.mxu0
        %v6476 = vadd.f32 %v5995, %v6475
        %v6477 = vpop.f32.mrf.mxu0
        %v6478 = vpop.f32.mrf.mxu0
        %v6479 = vadd.f32 %v5998, %v6478
        %v6480 = vpop.f32.mrf.mxu0
        %6481 = vmatprep.mubr.bf16.mxu0 %v2385
        %6482 = vmatmul.mubr.bf16.gmra.mxu0 %v2383
        %v6483 = vpop.f32.mrf.mxu0
        %v6484 = vadd.f32 %v6003, %v6483
        %v6485 = vpop.f32.mrf.mxu0
        %v6486 = vpop.f32.mrf.mxu0
        %v6487 = vadd.f32 %v6006, %v6486
        %v6488 = vpop.f32.mrf.mxu0
        %6489 = vmatprep.mubr.bf16.mxu0 %v2389
        %6490 = vmatmul.mubr.bf16.gmra.mxu0 %v2387
        %v6491 = vpop.f32.mrf.mxu0
        %v6492 = vadd.f32 %v6011, %v6491
        %v6493 = vpop.f32.mrf.mxu0
        %v6494 = vpop.f32.mrf.mxu0
        %v6495 = vadd.f32 %v6014, %v6494
        %v6496 = vpop.f32.mrf.mxu0
        %6497 = vmatprep.mubr.bf16.mxu0 %v2393
        %6498 = vmatmul.mubr.bf16.gmra.mxu0 %v2391
        %v6499 = vpop.f32.mrf.mxu0
        %v6500 = vadd.f32 %v6019, %v6499
        %v6501 = vpop.f32.mrf.mxu0
        %v6502 = vpop.f32.mrf.mxu0
        %v6503 = vadd.f32 %v6022, %v6502
        %v6504 = vpop.f32.mrf.mxu0
        %6505 = vmatprep.mubr.bf16.mxu0 %v2397
        %6506 = vmatmul.mubr.bf16.gmra.mxu0 %v2395
        %v6507 = vpop.f32.mrf.mxu0
        %v6508 = vadd.f32 %v6027, %v6507
        %v6509 = vpop.f32.mrf.mxu0
        %v6510 = vpop.f32.mrf.mxu0
        %v6511 = vadd.f32 %v6030, %v6510
        %v6512 = vpop.f32.mrf.mxu0
        %6513 = vmatprep.mubr.bf16.mxu0 %v2401
        %6514 = vmatmul.mubr.bf16.gmra.mxu0 %v2399
        %v6515 = vpop.f32.mrf.mxu0
        %v6516 = vadd.f32 %v6035, %v6515
        %v6517 = vpop.f32.mrf.mxu0
        %v6518 = vpop.f32.mrf.mxu0
        %v6519 = vadd.f32 %v6038, %v6518
        %v6520 = vpop.f32.mrf.mxu0
        %6521 = vmatprep.mubr.bf16.mxu0 %v2405
        %6522 = vmatmul.mubr.bf16.gmra.mxu0 %v2403
        %v6523 = vpop.f32.mrf.mxu0
        %v6524 = vadd.f32 %v6043, %v6523
        %v6525 = vpop.f32.mrf.mxu0
        %v6526 = vpop.f32.mrf.mxu0
        %v6527 = vadd.f32 %v6046, %v6526
        %v6528 = vpop.f32.mrf.mxu0
        %6529 = vmatprep.mubr.bf16.mxu0 %v2409
        %6530 = vmatmul.mubr.bf16.gmra.mxu0 %v2407
        %v6531 = vpop.f32.mrf.mxu0
        %v6532 = vadd.f32 %v6051, %v6531
        %v6533 = vpop.f32.mrf.mxu0
        %v6534 = vpop.f32.mrf.mxu0
        %v6535 = vadd.f32 %v6054, %v6534
        %v6536 = vpop.f32.mrf.mxu0
        %6537 = vmatprep.mubr.bf16.mxu0 %v2413
        %6538 = vmatmul.mubr.bf16.gmra.mxu0 %v2411
        %v6539 = vpop.f32.mrf.mxu0
        %v6540 = vadd.f32 %v6059, %v6539
        %v6541 = vpop.f32.mrf.mxu0
        %v6542 = vpop.f32.mrf.mxu0
        %v6543 = vadd.f32 %v6062, %v6542
        %v6544 = vpop.f32.mrf.mxu0
        %6545 = vmatprep.mubr.bf16.mxu0 %v2417
        %6546 = vmatmul.mubr.bf16.gmra.mxu0 %v2415
        %v6547 = vpop.f32.mrf.mxu0
        %v6548 = vadd.f32 %v6067, %v6547
        %v6549 = vpop.f32.mrf.mxu0
        %v6550 = vpop.f32.mrf.mxu0
        %v6551 = vadd.f32 %v6070, %v6550
        %v6552 = vpop.f32.mrf.mxu0
        %6553 = vmatprep.mubr.bf16.mxu0 %v2421
        %6554 = vmatmul.mubr.bf16.gmra.mxu0 %v2419
        %v6555 = vpop.f32.mrf.mxu0
        %v6556 = vadd.f32 %v6075, %v6555
        %v6557 = vpop.f32.mrf.mxu0
        %v6558 = vpop.f32.mrf.mxu0
        %v6559 = vadd.f32 %v6078, %v6558
        %v6560 = vpop.f32.mrf.mxu0
        %6561 = vmatprep.mubr.bf16.mxu0 %v2425
        %6562 = vmatmul.mubr.bf16.gmra.mxu0 %v2423
        %v6563 = vpop.f32.mrf.mxu0
        %v6564 = vadd.f32 %v6083, %v6563
        %v6565 = vpop.f32.mrf.mxu0
        %v6566 = vpop.f32.mrf.mxu0
        %v6567 = vadd.f32 %v6086, %v6566
        %v6568 = vpop.f32.mrf.mxu0
        %6569 = vmatprep.mubr.bf16.mxu0 %v2429
        %6570 = vmatmul.mubr.bf16.gmra.mxu0 %v2427
        %v6571 = vpop.f32.mrf.mxu0
        %v6572 = vadd.f32 %v6091, %v6571
        %v6573 = vpop.f32.mrf.mxu0
        %v6574 = vpop.f32.mrf.mxu0
        %v6575 = vadd.f32 %v6094, %v6574
        %v6576 = vpop.f32.mrf.mxu0
        %6577 = vmatprep.mubr.bf16.mxu0 %v2433
        %6578 = vmatmul.mubr.bf16.gmra.mxu0 %v2431
        %v6579 = vpop.f32.mrf.mxu0
        %v6580 = vadd.f32 %v6099, %v6579
        %v6581 = vpop.f32.mrf.mxu0
        %v6582 = vpop.f32.mrf.mxu0
        %v6583 = vadd.f32 %v6102, %v6582
        %v6584 = vpop.f32.mrf.mxu0
        %6585 = vmatprep.mubr.bf16.mxu0 %v2437
        %6586 = vmatmul.mubr.bf16.gmra.mxu0 %v2435
        %v6587 = vpop.f32.mrf.mxu0
        %v6588 = vadd.f32 %v6107, %v6587
        %v6589 = vpop.f32.mrf.mxu0
        %v6590 = vpop.f32.mrf.mxu0
        %v6591 = vadd.f32 %v6110, %v6590
        %v6592 = vpop.f32.mrf.mxu0
        %6593 = vmatprep.mubr.bf16.mxu0 %v2441
        %6594 = vmatmul.mubr.bf16.gmra.mxu0 %v2439
        %v6595 = vpop.f32.mrf.mxu0
        %v6596 = vadd.f32 %v6115, %v6595
        %v6597 = vpop.f32.mrf.mxu0
        %v6598 = vpop.f32.mrf.mxu0
        %v6599 = vadd.f32 %v6118, %v6598
        %v6600 = vpop.f32.mrf.mxu0
        %6601 = vmatprep.mubr.bf16.mxu0 %v2445
        %6602 = vmatmul.mubr.bf16.gmra.mxu0 %v2443
        %v6603 = vpop.f32.mrf.mxu0
        %v6604 = vadd.f32 %v6123, %v6603
        %v6605 = vpop.f32.mrf.mxu0
        %v6606 = vpop.f32.mrf.mxu0
        %v6607 = vadd.f32 %v6126, %v6606
        %v6608 = vpop.f32.mrf.mxu0
        %6609 = vmatprep.mubr.bf16.mxu0 %v2449
        %6610 = vmatmul.mubr.bf16.gmra.mxu0 %v2447
        %v6611 = vpop.f32.mrf.mxu0
        %v6612 = vadd.f32 %v6131, %v6611
        %v6613 = vpop.f32.mrf.mxu0
        %v6614 = vpop.f32.mrf.mxu0
        %v6615 = vadd.f32 %v6134, %v6614
        %v6616 = vpop.f32.mrf.mxu0
        %6617 = vmatprep.mubr.bf16.mxu0 %v2453
        %6618 = vmatmul.mubr.bf16.gmra.mxu0 %v2451
        %v6619 = vpop.f32.mrf.mxu0
        %v6620 = vadd.f32 %v6139, %v6619
        %v6621 = vpop.f32.mrf.mxu0
        %v6622 = vpop.f32.mrf.mxu0
        %v6623 = vadd.f32 %v6142, %v6622
        %v6624 = vpop.f32.mrf.mxu0
        %6625 = vmatprep.mubr.bf16.mxu0 %v2457
        %6626 = vmatmul.mubr.bf16.gmra.mxu0 %v2455
        %v6627 = vpop.f32.mrf.mxu0
        %v6628 = vadd.f32 %v6147, %v6627
        %v6629 = vpop.f32.mrf.mxu0
        %v6630 = vpop.f32.mrf.mxu0
        %v6631 = vadd.f32 %v6150, %v6630
        %v6632 = vpop.f32.mrf.mxu0
        %6633 = vmatprep.mubr.bf16.mxu0 %v2958
        %6634 = vmatmul.mubr.bf16.gmra.mxu0 %v2956
        %v6635 = vpop.f32.mrf.mxu0
        %v6636 = vadd.f32 %v6155, %v6635
        %v6637 = vpop.f32.mrf.mxu0
        %v6638 = vpop.f32.mrf.mxu0
        %v6639 = vadd.f32 %v6158, %v6638
        %v6640 = vpop.f32.mrf.mxu0
        %6641 = vmatprep.mubr.bf16.mxu0 %v2962
        %6642 = vmatmul.mubr.bf16.gmra.mxu0 %v2960
        %v6643 = vpop.f32.mrf.mxu0
        %v6644 = vadd.f32 %v6163, %v6643
        %v6645 = vpop.f32.mrf.mxu0
        %v6646 = vpop.f32.mrf.mxu0
        %v6647 = vadd.f32 %v6166, %v6646
        %v6648 = vpop.f32.mrf.mxu0
        %6649 = vmatprep.mubr.bf16.mxu0 %v2966
        %6650 = vmatmul.mubr.bf16.gmra.mxu0 %v2964
        %v6651 = vpop.f32.mrf.mxu0
        %v6652 = vadd.f32 %v6171, %v6651
        %v6653 = vpop.f32.mrf.mxu0
        %v6654 = vpop.f32.mrf.mxu0
        %v6655 = vadd.f32 %v6174, %v6654
        %v6656 = vpop.f32.mrf.mxu0
        %6657 = vmatprep.mubr.bf16.mxu0 %v2970
        %6658 = vmatmul.mubr.bf16.gmra.mxu0 %v2968
        %v6659 = vpop.f32.mrf.mxu0
        %v6660 = vadd.f32 %v6179, %v6659
        %v6661 = vpop.f32.mrf.mxu0
        %v6662 = vpop.f32.mrf.mxu0
        %v6663 = vadd.f32 %v6182, %v6662
        %v6664 = vpop.f32.mrf.mxu0
        %6665 = vmatprep.mubr.bf16.mxu0 %v2974
        %6666 = vmatmul.mubr.bf16.gmra.mxu0 %v2972
        %v6667 = vpop.f32.mrf.mxu0
        %v6668 = vadd.f32 %v6187, %v6667
        %v6669 = vpop.f32.mrf.mxu0
        %v6670 = vpop.f32.mrf.mxu0
        %v6671 = vadd.f32 %v6190, %v6670
        %v6672 = vpop.f32.mrf.mxu0
        %6673 = vdwg.mxu0
        %6674 = vmatprep.subr.bf16.mxu0 0
        %6675 = vmatpush1.bf16.msra.mxu0 %v4068
        %6676 = vmatprep.subr.bf16.mxu0 0
        %6677 = vmatpush1.bf16.msra.mxu0 %v4067
        %6678 = vmatprep.subr.bf16.mxu0 0
        %6679 = vmatpush1.bf16.msra.mxu0 %v4066
        %6680 = vmatprep.subr.bf16.mxu0 0
        %6681 = vmatpush1.bf16.msra.mxu0 %v4065
        %6682 = vmatprep.subr.bf16.mxu0 0
        %6683 = vmatpush1.bf16.msra.mxu0 %v4064
        %6684 = vmatprep.subr.bf16.mxu0 0
        %6685 = vmatpush1.bf16.msra.mxu0 %v4063
        %6686 = vmatprep.subr.bf16.mxu0 0
        %6687 = vmatpush1.bf16.msra.mxu0 %v4062
        %6688 = vmatprep.subr.bf16.mxu0 0
        %6689 = vmatpush1.bf16.msra.mxu0 %v4061
        %6690 = vmatprep.subr.bf16.mxu0 0
        %6691 = vmatpush2.bf16.msra.mxu0 %v4076
        %6692 = vmatprep.subr.bf16.mxu0 0
        %6693 = vmatpush2.bf16.msra.mxu0 %v4075
        %6694 = vmatprep.subr.bf16.mxu0 0
        %6695 = vmatpush2.bf16.msra.mxu0 %v4074
        %6696 = vmatprep.subr.bf16.mxu0 0
        %6697 = vmatpush2.bf16.msra.mxu0 %v4073
        %6698 = vmatprep.subr.bf16.mxu0 0
        %6699 = vmatpush2.bf16.msra.mxu0 %v4072
        %6700 = vmatprep.subr.bf16.mxu0 0
        %6701 = vmatpush2.bf16.msra.mxu0 %v4071
        %6702 = vmatprep.subr.bf16.mxu0 0
        %6703 = vmatpush2.bf16.msra.mxu0 %v4070
        %6704 = vmatprep.subr.bf16.mxu0 0
        %6705 = vmatpush2.bf16.msra.mxu0 %v4069
        %6706 = vmatprep.mubr.bf16.mxu0 %v2596
        %6707 = vmatmul.mubr.bf16.gmra.mxu0 %v2594
        %v6708 = vpop.f32.mrf.mxu0
        %v6709 = vadd.f32 %v6228, %v6708
        %v6710 = vpop.f32.mrf.mxu0
        %v6711 = vpop.f32.mrf.mxu0
        %v6712 = vadd.f32 %v6231, %v6711
        %v6713 = vpop.f32.mrf.mxu0
        %6714 = vmatprep.mubr.bf16.mxu0 %v2600
        %6715 = vmatmul.mubr.bf16.gmra.mxu0 %v2598
        %v6716 = vpop.f32.mrf.mxu0
        %v6717 = vadd.f32 %v6236, %v6716
        %v6718 = vpop.f32.mrf.mxu0
        %v6719 = vpop.f32.mrf.mxu0
        %v6720 = vadd.f32 %v6239, %v6719
        %v6721 = vpop.f32.mrf.mxu0
        %6722 = vmatprep.mubr.bf16.mxu0 %v2604
        %6723 = vmatmul.mubr.bf16.gmra.mxu0 %v2602
        %v6724 = vpop.f32.mrf.mxu0
        %v6725 = vadd.f32 %v6244, %v6724
        %v6726 = vpop.f32.mrf.mxu0
        %v6727 = vpop.f32.mrf.mxu0
        %v6728 = vadd.f32 %v6247, %v6727
        %v6729 = vpop.f32.mrf.mxu0
        %6730 = vmatprep.mubr.bf16.mxu0 %v2608
        %6731 = vmatmul.mubr.bf16.gmra.mxu0 %v2606
        %v6732 = vpop.f32.mrf.mxu0
        %v6733 = vadd.f32 %v6252, %v6732
        %v6734 = vpop.f32.mrf.mxu0
        %v6735 = vpop.f32.mrf.mxu0
        %v6736 = vadd.f32 %v6255, %v6735
        %v6737 = vpop.f32.mrf.mxu0
        %6738 = vmatprep.mubr.bf16.mxu0 %v2612
        %6739 = vmatmul.mubr.bf16.gmra.mxu0 %v2610
        %v6740 = vpop.f32.mrf.mxu0
        %v6741 = vadd.f32 %v6260, %v6740
        %v6742 = vpop.f32.mrf.mxu0
        %v6743 = vpop.f32.mrf.mxu0
        %v6744 = vadd.f32 %v6263, %v6743
        %v6745 = vpop.f32.mrf.mxu0
        %6746 = vmatprep.mubr.bf16.mxu0 %v2616
        %6747 = vmatmul.mubr.bf16.gmra.mxu0 %v2614
        %v6748 = vpop.f32.mrf.mxu0
        %v6749 = vadd.f32 %v6268, %v6748
        %v6750 = vpop.f32.mrf.mxu0
        %v6751 = vpop.f32.mrf.mxu0
        %v6752 = vadd.f32 %v6271, %v6751
        %v6753 = vpop.f32.mrf.mxu0
        %6754 = vmatprep.mubr.bf16.mxu0 %v2620
        %6755 = vmatmul.mubr.bf16.gmra.mxu0 %v2618
        %v6756 = vpop.f32.mrf.mxu0
        %v6757 = vadd.f32 %v6276, %v6756
        %v6758 = vpop.f32.mrf.mxu0
        %v6759 = vpop.f32.mrf.mxu0
        %v6760 = vadd.f32 %v6279, %v6759
        %v6761 = vpop.f32.mrf.mxu0
        %6762 = vmatprep.mubr.bf16.mxu0 %v2624
        %6763 = vmatmul.mubr.bf16.gmra.mxu0 %v2622
        %v6764 = vpop.f32.mrf.mxu0
        %v6765 = vadd.f32 %v6284, %v6764
        %v6766 = vpop.f32.mrf.mxu0
        %v6767 = vpop.f32.mrf.mxu0
        %v6768 = vadd.f32 %v6287, %v6767
        %v6769 = vpop.f32.mrf.mxu0
        %6770 = vmatprep.mubr.bf16.mxu0 %v2628
        %6771 = vmatmul.mubr.bf16.gmra.mxu0 %v2626
        %v6772 = vpop.f32.mrf.mxu0
        %v6773 = vadd.f32 %v6292, %v6772
        %v6774 = vpop.f32.mrf.mxu0
        %v6775 = vpop.f32.mrf.mxu0
        %v6776 = vadd.f32 %v6295, %v6775
        %v6777 = vpop.f32.mrf.mxu0
        %6778 = vmatprep.mubr.bf16.mxu0 %v2632
        %6779 = vmatmul.mubr.bf16.gmra.mxu0 %v2630
        %v6780 = vpop.f32.mrf.mxu0
        %v6781 = vadd.f32 %v6300, %v6780
        %v6782 = vpop.f32.mrf.mxu0
        %v6783 = vpop.f32.mrf.mxu0
        %v6784 = vadd.f32 %v6303, %v6783
        %v6785 = vpop.f32.mrf.mxu0
        %6786 = vmatprep.mubr.bf16.mxu0 %v2636
        %6787 = vmatmul.mubr.bf16.gmra.mxu0 %v2634
        %v6788 = vpop.f32.mrf.mxu0
        %v6789 = vadd.f32 %v6308, %v6788
        %v6790 = vpop.f32.mrf.mxu0
        %v6791 = vpop.f32.mrf.mxu0
        %v6792 = vadd.f32 %v6311, %v6791
        %v6793 = vpop.f32.mrf.mxu0
        %6794 = vmatprep.mubr.bf16.mxu0 %v2640
        %6795 = vmatmul.mubr.bf16.gmra.mxu0 %v2638
        %v6796 = vpop.f32.mrf.mxu0
        %v6797 = vadd.f32 %v6316, %v6796
        %v6798 = vpop.f32.mrf.mxu0
        %v6799 = vpop.f32.mrf.mxu0
        %v6800 = vadd.f32 %v6319, %v6799
        %v6801 = vpop.f32.mrf.mxu0
        %6802 = vmatprep.mubr.bf16.mxu0 %v2644
        %6803 = vmatmul.mubr.bf16.gmra.mxu0 %v2642
        %v6804 = vpop.f32.mrf.mxu0
        %v6805 = vadd.f32 %v6324, %v6804
        %v6806 = vpop.f32.mrf.mxu0
        %v6807 = vpop.f32.mrf.mxu0
        %v6808 = vadd.f32 %v6327, %v6807
        %v6809 = vpop.f32.mrf.mxu0
        %6810 = vmatprep.mubr.bf16.mxu0 %v2648
        %6811 = vmatmul.mubr.bf16.gmra.mxu0 %v2646
        %v6812 = vpop.f32.mrf.mxu0
        %v6813 = vadd.f32 %v6332, %v6812
        %v6814 = vpop.f32.mrf.mxu0
        %v6815 = vpop.f32.mrf.mxu0
        %v6816 = vadd.f32 %v6335, %v6815
        %v6817 = vpop.f32.mrf.mxu0
        %6818 = vmatprep.mubr.bf16.mxu0 %v2652
        %6819 = vmatmul.mubr.bf16.gmra.mxu0 %v2650
        %v6820 = vpop.f32.mrf.mxu0
        %v6821 = vadd.f32 %v6340, %v6820
        %v6822 = vpop.f32.mrf.mxu0
        %v6823 = vpop.f32.mrf.mxu0
        %v6824 = vadd.f32 %v6343, %v6823
        %v6825 = vpop.f32.mrf.mxu0
        %6826 = vmatprep.mubr.bf16.mxu0 %v2656
        %6827 = vmatmul.mubr.bf16.gmra.mxu0 %v2654
        %v6828 = vpop.f32.mrf.mxu0
        %v6829 = vadd.f32 %v6348, %v6828
        %v6830 = vpop.f32.mrf.mxu0
        %v6831 = vpop.f32.mrf.mxu0
        %v6832 = vadd.f32 %v6351, %v6831
        %v6833 = vpop.f32.mrf.mxu0
        %6834 = vmatprep.mubr.bf16.mxu0 %v2660
        %6835 = vmatmul.mubr.bf16.gmra.mxu0 %v2658
        %v6836 = vpop.f32.mrf.mxu0
        %v6837 = vadd.f32 %v6356, %v6836
        %v6838 = vpop.f32.mrf.mxu0
        %v6839 = vpop.f32.mrf.mxu0
        %v6840 = vadd.f32 %v6359, %v6839
        %v6841 = vpop.f32.mrf.mxu0
        %6842 = vmatprep.mubr.bf16.mxu0 %v2664
        %6843 = vmatmul.mubr.bf16.gmra.mxu0 %v2662
        %v6844 = vpop.f32.mrf.mxu0
        %v6845 = vadd.f32 %v6364, %v6844
        %v6846 = vpop.f32.mrf.mxu0
        %v6847 = vpop.f32.mrf.mxu0
        %v6848 = vadd.f32 %v6367, %v6847
        %v6849 = vpop.f32.mrf.mxu0
        %6850 = vmatprep.mubr.bf16.mxu0 %v2668
        %6851 = vmatmul.mubr.bf16.gmra.mxu0 %v2666
        %v6852 = vpop.f32.mrf.mxu0
        %v6853 = vadd.f32 %v6372, %v6852
        %v6854 = vpop.f32.mrf.mxu0
        %v6855 = vpop.f32.mrf.mxu0
        %v6856 = vadd.f32 %v6375, %v6855
        %v6857 = vpop.f32.mrf.mxu0
        %6858 = vmatprep.mubr.bf16.mxu0 %v2672
        %6859 = vmatmul.mubr.bf16.gmra.mxu0 %v2670
        %v6860 = vpop.f32.mrf.mxu0
        %v6861 = vadd.f32 %v6380, %v6860
        %v6862 = vpop.f32.mrf.mxu0
        %v6863 = vpop.f32.mrf.mxu0
        %v6864 = vadd.f32 %v6383, %v6863
        %v6865 = vpop.f32.mrf.mxu0
        %6866 = vmatprep.mubr.bf16.mxu0 %v2676
        %6867 = vmatmul.mubr.bf16.gmra.mxu0 %v2674
        %v6868 = vpop.f32.mrf.mxu0
        %v6869 = vadd.f32 %v6388, %v6868
        %v6870 = vpop.f32.mrf.mxu0
        %v6871 = vpop.f32.mrf.mxu0
        %v6872 = vadd.f32 %v6391, %v6871
        %v6873 = vpop.f32.mrf.mxu0
        %6874 = vmatprep.mubr.bf16.mxu0 %v2680
        %6875 = vmatmul.mubr.bf16.gmra.mxu0 %v2678
        %v6876 = vpop.f32.mrf.mxu0
        %v6877 = vadd.f32 %v6396, %v6876
        %v6878 = vpop.f32.mrf.mxu0
        %v6879 = vpop.f32.mrf.mxu0
        %v6880 = vadd.f32 %v6399, %v6879
        %v6881 = vpop.f32.mrf.mxu0
        %6882 = vmatprep.mubr.bf16.mxu0 %v2684
        %6883 = vmatmul.mubr.bf16.gmra.mxu0 %v2682
        %v6884 = vpop.f32.mrf.mxu0
        %v6885 = vadd.f32 %v6404, %v6884
        %v6886 = vpop.f32.mrf.mxu0
        %v6887 = vpop.f32.mrf.mxu0
        %v6888 = vadd.f32 %v6407, %v6887
        %v6889 = vpop.f32.mrf.mxu0
        %6890 = vmatprep.mubr.bf16.mxu0 %v2688
        %6891 = vmatmul.mubr.bf16.gmra.mxu0 %v2686
        %v6892 = vpop.f32.mrf.mxu0
        %v6893 = vadd.f32 %v6412, %v6892
        %v6894 = vpop.f32.mrf.mxu0
        %v6895 = vpop.f32.mrf.mxu0
        %v6896 = vadd.f32 %v6415, %v6895
        %v6897 = vpop.f32.mrf.mxu0
        %6898 = vmatprep.mubr.bf16.mxu0 %v2692
        %6899 = vmatmul.mubr.bf16.gmra.mxu0 %v2690
        %v6900 = vpop.f32.mrf.mxu0
        %v6901 = vadd.f32 %v6420, %v6900
        %v6902 = vpop.f32.mrf.mxu0
        %v6903 = vpop.f32.mrf.mxu0
        %v6904 = vadd.f32 %v6423, %v6903
        %v6905 = vpop.f32.mrf.mxu0
        %6906 = vmatprep.mubr.bf16.mxu0 %v2696
        %6907 = vmatmul.mubr.bf16.gmra.mxu0 %v2694
        %v6908 = vpop.f32.mrf.mxu0
        %v6909 = vadd.f32 %v6428, %v6908
        %v6910 = vpop.f32.mrf.mxu0
        %v6911 = vpop.f32.mrf.mxu0
        %v6912 = vadd.f32 %v6431, %v6911
        %v6913 = vpop.f32.mrf.mxu0
        %6914 = vmatprep.mubr.bf16.mxu0 %v2700
        %6915 = vmatmul.mubr.bf16.gmra.mxu0 %v2698
        %v6916 = vpop.f32.mrf.mxu0
        %v6917 = vadd.f32 %v6436, %v6916
        %v6918 = vpop.f32.mrf.mxu0
        %v6919 = vpop.f32.mrf.mxu0
        %v6920 = vadd.f32 %v6439, %v6919
        %v6921 = vpop.f32.mrf.mxu0
        %6922 = vmatprep.mubr.bf16.mxu0 %v2704
        %6923 = vmatmul.mubr.bf16.gmra.mxu0 %v2702
        %v6924 = vpop.f32.mrf.mxu0
        %v6925 = vadd.f32 %v6444, %v6924
        %v6926 = vpop.f32.mrf.mxu0
        %v6927 = vpop.f32.mrf.mxu0
        %v6928 = vadd.f32 %v6447, %v6927
        %v6929 = vpop.f32.mrf.mxu0
        %6930 = vmatprep.mubr.bf16.mxu0 %v2708
        %6931 = vmatmul.mubr.bf16.gmra.mxu0 %v2706
        %v6932 = vpop.f32.mrf.mxu0
        %v6933 = vadd.f32 %v6452, %v6932
        %v6934 = vpop.f32.mrf.mxu0
        %v6935 = vpop.f32.mrf.mxu0
        %v6936 = vadd.f32 %v6455, %v6935
        %v6937 = vpop.f32.mrf.mxu0
        %6938 = vmatprep.mubr.bf16.mxu0 %v2712
        %6939 = vmatmul.mubr.bf16.gmra.mxu0 %v2710
        %v6940 = vpop.f32.mrf.mxu0
        %v6941 = vadd.f32 %v6460, %v6940
        %v6942 = vpop.f32.mrf.mxu0
        %v6943 = vpop.f32.mrf.mxu0
        %v6944 = vadd.f32 %v6463, %v6943
        %v6945 = vpop.f32.mrf.mxu0
        %6946 = vmatprep.mubr.bf16.mxu0 %v2716
        %6947 = vmatmul.mubr.bf16.gmra.mxu0 %v2714
        %v6948 = vpop.f32.mrf.mxu0
        %v6949 = vadd.f32 %v6468, %v6948
        %v6950 = vpop.f32.mrf.mxu0
        %v6951 = vpop.f32.mrf.mxu0
        %v6952 = vadd.f32 %v6471, %v6951
        %v6953 = vpop.f32.mrf.mxu0
        %6954 = vmatprep.mubr.bf16.mxu0 %v2720
        %6955 = vmatmul.mubr.bf16.gmra.mxu0 %v2718
        %v6956 = vpop.f32.mrf.mxu0
        %v6957 = vadd.f32 %v6476, %v6956
        %v6958 = vpop.f32.mrf.mxu0
        %v6959 = vpop.f32.mrf.mxu0
        %v6960 = vadd.f32 %v6479, %v6959
        %v6961 = vpop.f32.mrf.mxu0
        %6962 = vmatprep.mubr.bf16.mxu0 %v2724
        %6963 = vmatmul.mubr.bf16.gmra.mxu0 %v2722
        %v6964 = vpop.f32.mrf.mxu0
        %v6965 = vadd.f32 %v6484, %v6964
        %v6966 = vpop.f32.mrf.mxu0
        %v6967 = vpop.f32.mrf.mxu0
        %v6968 = vadd.f32 %v6487, %v6967
        %v6969 = vpop.f32.mrf.mxu0
        %6970 = vmatprep.mubr.bf16.mxu0 %v2728
        %6971 = vmatmul.mubr.bf16.gmra.mxu0 %v2726
        %v6972 = vpop.f32.mrf.mxu0
        %v6973 = vadd.f32 %v6492, %v6972
        %v6974 = vpop.f32.mrf.mxu0
        %v6975 = vpop.f32.mrf.mxu0
        %v6976 = vadd.f32 %v6495, %v6975
        %v6977 = vpop.f32.mrf.mxu0
        %6978 = vmatprep.mubr.bf16.mxu0 %v2732
        %6979 = vmatmul.mubr.bf16.gmra.mxu0 %v2730
        %v6980 = vpop.f32.mrf.mxu0
        %v6981 = vadd.f32 %v6500, %v6980
        %v6982 = vpop.f32.mrf.mxu0
        %v6983 = vpop.f32.mrf.mxu0
        %v6984 = vadd.f32 %v6503, %v6983
        %v6985 = vpop.f32.mrf.mxu0
        %6986 = vmatprep.mubr.bf16.mxu0 %v2736
        %6987 = vmatmul.mubr.bf16.gmra.mxu0 %v2734
        %v6988 = vpop.f32.mrf.mxu0
        %v6989 = vadd.f32 %v6508, %v6988
        %v6990 = vpop.f32.mrf.mxu0
        %v6991 = vpop.f32.mrf.mxu0
        %v6992 = vadd.f32 %v6511, %v6991
        %v6993 = vpop.f32.mrf.mxu0
        %6994 = vmatprep.mubr.bf16.mxu0 %v2740
        %6995 = vmatmul.mubr.bf16.gmra.mxu0 %v2738
        %v6996 = vpop.f32.mrf.mxu0
        %v6997 = vadd.f32 %v6516, %v6996
        %v6998 = vpop.f32.mrf.mxu0
        %v6999 = vpop.f32.mrf.mxu0
        %v7000 = vadd.f32 %v6519, %v6999
        %v7001 = vpop.f32.mrf.mxu0
        %7002 = vmatprep.mubr.bf16.mxu0 %v2744
        %7003 = vmatmul.mubr.bf16.gmra.mxu0 %v2742
        %v7004 = vpop.f32.mrf.mxu0
        %v7005 = vadd.f32 %v6524, %v7004
        %v7006 = vpop.f32.mrf.mxu0
        %v7007 = vpop.f32.mrf.mxu0
        %v7008 = vadd.f32 %v6527, %v7007
        %v7009 = vpop.f32.mrf.mxu0
        %7010 = vmatprep.mubr.bf16.mxu0 %v2748
        %7011 = vmatmul.mubr.bf16.gmra.mxu0 %v2746
        %v7012 = vpop.f32.mrf.mxu0
        %v7013 = vadd.f32 %v6532, %v7012
        %v7014 = vpop.f32.mrf.mxu0
        %v7015 = vpop.f32.mrf.mxu0
        %v7016 = vadd.f32 %v6535, %v7015
        %v7017 = vpop.f32.mrf.mxu0
        %7018 = vmatprep.mubr.bf16.mxu0 %v2752
        %7019 = vmatmul.mubr.bf16.gmra.mxu0 %v2750
        %v7020 = vpop.f32.mrf.mxu0
        %v7021 = vadd.f32 %v6540, %v7020
        %v7022 = vpop.f32.mrf.mxu0
        %v7023 = vpop.f32.mrf.mxu0
        %v7024 = vadd.f32 %v6543, %v7023
        %v7025 = vpop.f32.mrf.mxu0
        %7026 = vmatprep.mubr.bf16.mxu0 %v2756
        %7027 = vmatmul.mubr.bf16.gmra.mxu0 %v2754
        %v7028 = vpop.f32.mrf.mxu0
        %v7029 = vadd.f32 %v6548, %v7028
        %v7030 = vpop.f32.mrf.mxu0
        %v7031 = vpop.f32.mrf.mxu0
        %v7032 = vadd.f32 %v6551, %v7031
        %v7033 = vpop.f32.mrf.mxu0
        %7034 = vmatprep.mubr.bf16.mxu0 %v2760
        %7035 = vmatmul.mubr.bf16.gmra.mxu0 %v2758
        %v7036 = vpop.f32.mrf.mxu0
        %v7037 = vadd.f32 %v6556, %v7036
        %v7038 = vpop.f32.mrf.mxu0
        %v7039 = vpop.f32.mrf.mxu0
        %v7040 = vadd.f32 %v6559, %v7039
        %v7041 = vpop.f32.mrf.mxu0
        %7042 = vmatprep.mubr.bf16.mxu0 %v2764
        %7043 = vmatmul.mubr.bf16.gmra.mxu0 %v2762
        %v7044 = vpop.f32.mrf.mxu0
        %v7045 = vadd.f32 %v6564, %v7044
        %v7046 = vpop.f32.mrf.mxu0
        %v7047 = vpop.f32.mrf.mxu0
        %v7048 = vadd.f32 %v6567, %v7047
        %v7049 = vpop.f32.mrf.mxu0
        %7050 = vmatprep.mubr.bf16.mxu0 %v2768
        %7051 = vmatmul.mubr.bf16.gmra.mxu0 %v2766
        %v7052 = vpop.f32.mrf.mxu0
        %v7053 = vadd.f32 %v6572, %v7052
        %v7054 = vpop.f32.mrf.mxu0
        %v7055 = vpop.f32.mrf.mxu0
        %v7056 = vadd.f32 %v6575, %v7055
        %v7057 = vpop.f32.mrf.mxu0
        %7058 = vmatprep.mubr.bf16.mxu0 %v2772
        %7059 = vmatmul.mubr.bf16.gmra.mxu0 %v2770
        %v7060 = vpop.f32.mrf.mxu0
        %v7061 = vadd.f32 %v6580, %v7060
        %v7062 = vpop.f32.mrf.mxu0
        %v7063 = vpop.f32.mrf.mxu0
        %v7064 = vadd.f32 %v6583, %v7063
        %v7065 = vpop.f32.mrf.mxu0
        %7066 = vmatprep.mubr.bf16.mxu0 %v2776
        %7067 = vmatmul.mubr.bf16.gmra.mxu0 %v2774
        %v7068 = vpop.f32.mrf.mxu0
        %v7069 = vadd.f32 %v6588, %v7068
        %v7070 = vpop.f32.mrf.mxu0
        %v7071 = vpop.f32.mrf.mxu0
        %v7072 = vadd.f32 %v6591, %v7071
        %v7073 = vpop.f32.mrf.mxu0
        %7074 = vmatprep.mubr.bf16.mxu0 %v2780
        %7075 = vmatmul.mubr.bf16.gmra.mxu0 %v2778
        %v7076 = vpop.f32.mrf.mxu0
        %v7077 = vadd.f32 %v6596, %v7076
        %v7078 = vpop.f32.mrf.mxu0
        %v7079 = vpop.f32.mrf.mxu0
        %v7080 = vadd.f32 %v6599, %v7079
        %v7081 = vpop.f32.mrf.mxu0
        %7082 = vmatprep.mubr.bf16.mxu0 %v2784
        %7083 = vmatmul.mubr.bf16.gmra.mxu0 %v2782
        %v7084 = vpop.f32.mrf.mxu0
        %v7085 = vadd.f32 %v6604, %v7084
        %v7086 = vpop.f32.mrf.mxu0
        %v7087 = vpop.f32.mrf.mxu0
        %v7088 = vadd.f32 %v6607, %v7087
        %v7089 = vpop.f32.mrf.mxu0
        %7090 = vmatprep.mubr.bf16.mxu0 %v2788
        %7091 = vmatmul.mubr.bf16.gmra.mxu0 %v2786
        %v7092 = vpop.f32.mrf.mxu0
        %v7093 = vadd.f32 %v6612, %v7092
        %v7094 = vpop.f32.mrf.mxu0
        %v7095 = vpop.f32.mrf.mxu0
        %v7096 = vadd.f32 %v6615, %v7095
        %v7097 = vpop.f32.mrf.mxu0
        %7098 = vmatprep.mubr.bf16.mxu0 %v2792
        %7099 = vmatmul.mubr.bf16.gmra.mxu0 %v2790
        %v7100 = vpop.f32.mrf.mxu0
        %v7101 = vadd.f32 %v6620, %v7100
        %v7102 = vpop.f32.mrf.mxu0
        %v7103 = vpop.f32.mrf.mxu0
        %v7104 = vadd.f32 %v6623, %v7103
        %v7105 = vpop.f32.mrf.mxu0
        %7106 = vmatprep.mubr.bf16.mxu0 %v2796
        %7107 = vmatmul.mubr.bf16.gmra.mxu0 %v2794
        %v7108 = vpop.f32.mrf.mxu0
        %v7109 = vadd.f32 %v6628, %v7108
        %v7110 = vpop.f32.mrf.mxu0
        %v7111 = vpop.f32.mrf.mxu0
        %v7112 = vadd.f32 %v6631, %v7111
        %v7113 = vpop.f32.mrf.mxu0
        %7114 = vmatprep.mubr.bf16.mxu0 %v2988
        %7115 = vmatmul.mubr.bf16.gmra.mxu0 %v2986
        %v7116 = vpop.f32.mrf.mxu0
        %v7117 = vadd.f32 %v6636, %v7116
        %v7118 = vpop.f32.mrf.mxu0
        %v7119 = vpop.f32.mrf.mxu0
        %v7120 = vadd.f32 %v6639, %v7119
        %v7121 = vpop.f32.mrf.mxu0
        %7122 = vmatprep.mubr.bf16.mxu0 %v2992
        %7123 = vmatmul.mubr.bf16.gmra.mxu0 %v2990
        %v7124 = vpop.f32.mrf.mxu0
        %v7125 = vadd.f32 %v6644, %v7124
        %v7126 = vpop.f32.mrf.mxu0
        %v7127 = vpop.f32.mrf.mxu0
        %v7128 = vadd.f32 %v6647, %v7127
        %v7129 = vpop.f32.mrf.mxu0
        %7130 = vmatprep.mubr.bf16.mxu0 %v2996
        %7131 = vmatmul.mubr.bf16.gmra.mxu0 %v2994
        %v7132 = vpop.f32.mrf.mxu0
        %v7133 = vadd.f32 %v6652, %v7132
        %v7134 = vpop.f32.mrf.mxu0
        %v7135 = vpop.f32.mrf.mxu0
        %v7136 = vadd.f32 %v6655, %v7135
        %v7137 = vpop.f32.mrf.mxu0
        %7138 = vmatprep.mubr.bf16.mxu0 %v3000
        %7139 = vmatmul.mubr.bf16.gmra.mxu0 %v2998
        %v7140 = vpop.f32.mrf.mxu0
        %v7141 = vadd.f32 %v6660, %v7140
        %v7142 = vpop.f32.mrf.mxu0
        %v7143 = vpop.f32.mrf.mxu0
        %v7144 = vadd.f32 %v6663, %v7143
        %v7145 = vpop.f32.mrf.mxu0
        %7146 = vmatprep.mubr.bf16.mxu0 %v3004
        %7147 = vmatmul.mubr.bf16.gmra.mxu0 %v3002
        %v7148 = vpop.f32.mrf.mxu0
        %v7149 = vadd.f32 %v6668, %v7148
        %v7150 = vpop.f32.mrf.mxu0
        %v7151 = vpop.f32.mrf.mxu0
        %v7152 = vadd.f32 %v6671, %v7151
        %v7153 = vpop.f32.mrf.mxu0
        %7154 = vdwg.mxu0
        %7155 = vmatprep.subr.bf16.mxu0 0
        %7156 = vmatpush1.bf16.msra.mxu0 %v4084
        %7157 = vmatprep.subr.bf16.mxu0 0
        %7158 = vmatpush1.bf16.msra.mxu0 %v4083
        %7159 = vmatprep.subr.bf16.mxu0 0
        %7160 = vmatpush1.bf16.msra.mxu0 %v4082
        %7161 = vmatprep.subr.bf16.mxu0 0
        %7162 = vmatpush1.bf16.msra.mxu0 %v4081
        %7163 = vmatprep.subr.bf16.mxu0 0
        %7164 = vmatpush1.bf16.msra.mxu0 %v4080
        %7165 = vmatprep.subr.bf16.mxu0 0
        %7166 = vmatpush1.bf16.msra.mxu0 %v4079
        %7167 = vmatprep.subr.bf16.mxu0 0
        %7168 = vmatpush1.bf16.msra.mxu0 %v4078
        %7169 = vmatprep.subr.bf16.mxu0 0
        %7170 = vmatpush1.bf16.msra.mxu0 %v4077
        %7171 = vmatprep.subr.bf16.mxu0 0
        %7172 = vmatpush2.bf16.msra.mxu0 %v4092
        %7173 = vmatprep.subr.bf16.mxu0 0
        %7174 = vmatpush2.bf16.msra.mxu0 %v4091
        %7175 = vmatprep.subr.bf16.mxu0 0
        %7176 = vmatpush2.bf16.msra.mxu0 %v4090
        %7177 = vmatprep.subr.bf16.mxu0 0
        %7178 = vmatpush2.bf16.msra.mxu0 %v4089
        %7179 = vmatprep.subr.bf16.mxu0 0
        %7180 = vmatpush2.bf16.msra.mxu0 %v4088
        %7181 = vmatprep.subr.bf16.mxu0 0
        %7182 = vmatpush2.bf16.msra.mxu0 %v4087
        %7183 = vmatprep.subr.bf16.mxu0 0
        %7184 = vmatpush2.bf16.msra.mxu0 %v4086
        %7185 = vmatprep.subr.bf16.mxu0 0
        %7186 = vmatpush2.bf16.msra.mxu0 %v4085
        %7187 = vmatprep.mubr.bf16.mxu0 %v2023
        %7188 = vmatmul.mubr.bf16.gmra.mxu0 %v2022
        %v7189 = vpop.f32.mrf.mxu0
        %v7190 = vadd.f32 %v6709, %v7189
        %v7191 = vpop.f32.mrf.mxu0
        %v7192 = vpop.f32.mrf.mxu0
        %v7193 = vadd.f32 %v6712, %v7192
        %v7194 = vpop.f32.mrf.mxu0
        %7195 = vmatprep.mubr.bf16.mxu0 %v2025
        %7196 = vmatmul.mubr.bf16.gmra.mxu0 %v2024
        %v7197 = vpop.f32.mrf.mxu0
        %v7198 = vadd.f32 %v6717, %v7197
        %v7199 = vpop.f32.mrf.mxu0
        %v7200 = vpop.f32.mrf.mxu0
        %v7201 = vadd.f32 %v6720, %v7200
        %v7202 = vpop.f32.mrf.mxu0
        %7203 = vmatprep.mubr.bf16.mxu0 %v2027
        %7204 = vmatmul.mubr.bf16.gmra.mxu0 %v2026
        %v7205 = vpop.f32.mrf.mxu0
        %v7206 = vadd.f32 %v6725, %v7205
        %v7207 = vpop.f32.mrf.mxu0
        %v7208 = vpop.f32.mrf.mxu0
        %v7209 = vadd.f32 %v6728, %v7208
        %v7210 = vpop.f32.mrf.mxu0
        %7211 = vmatprep.mubr.bf16.mxu0 %v2029
        %7212 = vmatmul.mubr.bf16.gmra.mxu0 %v2028
        %v7213 = vpop.f32.mrf.mxu0
        %v7214 = vadd.f32 %v6733, %v7213
        %v7215 = vpop.f32.mrf.mxu0
        %v7216 = vpop.f32.mrf.mxu0
        %v7217 = vadd.f32 %v6736, %v7216
        %v7218 = vpop.f32.mrf.mxu0
        %7219 = vmatprep.mubr.bf16.mxu0 %v2031
        %7220 = vmatmul.mubr.bf16.gmra.mxu0 %v2030
        %v7221 = vpop.f32.mrf.mxu0
        %v7222 = vadd.f32 %v6741, %v7221
        %v7223 = vpop.f32.mrf.mxu0
        %v7224 = vpop.f32.mrf.mxu0
        %v7225 = vadd.f32 %v6744, %v7224
        %v7226 = vpop.f32.mrf.mxu0
        %7227 = vmatprep.mubr.bf16.mxu0 %v2033
        %7228 = vmatmul.mubr.bf16.gmra.mxu0 %v2032
        %v7229 = vpop.f32.mrf.mxu0
        %v7230 = vadd.f32 %v6749, %v7229
        %v7231 = vpop.f32.mrf.mxu0
        %v7232 = vpop.f32.mrf.mxu0
        %v7233 = vadd.f32 %v6752, %v7232
        %v7234 = vpop.f32.mrf.mxu0
        %7235 = vmatprep.mubr.bf16.mxu0 %v2035
        %7236 = vmatmul.mubr.bf16.gmra.mxu0 %v2034
        %v7237 = vpop.f32.mrf.mxu0
        %v7238 = vadd.f32 %v6757, %v7237
        %v7239 = vpop.f32.mrf.mxu0
        %v7240 = vpop.f32.mrf.mxu0
        %v7241 = vadd.f32 %v6760, %v7240
        %v7242 = vpop.f32.mrf.mxu0
        %7243 = vmatprep.mubr.bf16.mxu0 %v2037
        %7244 = vmatmul.mubr.bf16.gmra.mxu0 %v2036
        %v7245 = vpop.f32.mrf.mxu0
        %v7246 = vadd.f32 %v6765, %v7245
        %v7247 = vpop.f32.mrf.mxu0
        %v7248 = vpop.f32.mrf.mxu0
        %v7249 = vadd.f32 %v6768, %v7248
        %v7250 = vpop.f32.mrf.mxu0
        %7251 = vmatprep.mubr.bf16.mxu0 %v2039
        %7252 = vmatmul.mubr.bf16.gmra.mxu0 %v2038
        %v7253 = vpop.f32.mrf.mxu0
        %v7254 = vadd.f32 %v6773, %v7253
        %v7255 = vpop.f32.mrf.mxu0
        %v7256 = vpop.f32.mrf.mxu0
        %v7257 = vadd.f32 %v6776, %v7256
        %v7258 = vpop.f32.mrf.mxu0
        %7259 = vmatprep.mubr.bf16.mxu0 %v2041
        %7260 = vmatmul.mubr.bf16.gmra.mxu0 %v2040
        %v7261 = vpop.f32.mrf.mxu0
        %v7262 = vadd.f32 %v6781, %v7261
        %v7263 = vpop.f32.mrf.mxu0
        %v7264 = vpop.f32.mrf.mxu0
        %v7265 = vadd.f32 %v6784, %v7264
        %v7266 = vpop.f32.mrf.mxu0
        %7267 = vmatprep.mubr.bf16.mxu0 %v2043
        %7268 = vmatmul.mubr.bf16.gmra.mxu0 %v2042
        %v7269 = vpop.f32.mrf.mxu0
        %v7270 = vadd.f32 %v6789, %v7269
        %v7271 = vpop.f32.mrf.mxu0
        %v7272 = vpop.f32.mrf.mxu0
        %v7273 = vadd.f32 %v6792, %v7272
        %v7274 = vpop.f32.mrf.mxu0
        %7275 = vmatprep.mubr.bf16.mxu0 %v2045
        %7276 = vmatmul.mubr.bf16.gmra.mxu0 %v2044
        %v7277 = vpop.f32.mrf.mxu0
        %v7278 = vadd.f32 %v6797, %v7277
        %v7279 = vpop.f32.mrf.mxu0
        %v7280 = vpop.f32.mrf.mxu0
        %v7281 = vadd.f32 %v6800, %v7280
        %v7282 = vpop.f32.mrf.mxu0
        %7283 = vmatprep.mubr.bf16.mxu0 %v2047
        %7284 = vmatmul.mubr.bf16.gmra.mxu0 %v2046
        %v7285 = vpop.f32.mrf.mxu0
        %v7286 = vadd.f32 %v6805, %v7285
        %v7287 = vpop.f32.mrf.mxu0
        %v7288 = vpop.f32.mrf.mxu0
        %v7289 = vadd.f32 %v6808, %v7288
        %v7290 = vpop.f32.mrf.mxu0
        %7291 = vmatprep.mubr.bf16.mxu0 %v2049
        %7292 = vmatmul.mubr.bf16.gmra.mxu0 %v2048
        %v7293 = vpop.f32.mrf.mxu0
        %v7294 = vadd.f32 %v6813, %v7293
        %v7295 = vpop.f32.mrf.mxu0
        %v7296 = vpop.f32.mrf.mxu0
        %v7297 = vadd.f32 %v6816, %v7296
        %v7298 = vpop.f32.mrf.mxu0
        %7299 = vmatprep.mubr.bf16.mxu0 %v2051
        %7300 = vmatmul.mubr.bf16.gmra.mxu0 %v2050
        %v7301 = vpop.f32.mrf.mxu0
        %v7302 = vadd.f32 %v6821, %v7301
        %v7303 = vpop.f32.mrf.mxu0
        %v7304 = vpop.f32.mrf.mxu0
        %v7305 = vadd.f32 %v6824, %v7304
        %v7306 = vpop.f32.mrf.mxu0
        %7307 = vmatprep.mubr.bf16.mxu0 %v2053
        %7308 = vmatmul.mubr.bf16.gmra.mxu0 %v2052
        %v7309 = vpop.f32.mrf.mxu0
        %v7310 = vadd.f32 %v6829, %v7309
        %v7311 = vpop.f32.mrf.mxu0
        %v7312 = vpop.f32.mrf.mxu0
        %v7313 = vadd.f32 %v6832, %v7312
        %v7314 = vpop.f32.mrf.mxu0
        %7315 = vmatprep.mubr.bf16.mxu0 %v2055
        %7316 = vmatmul.mubr.bf16.gmra.mxu0 %v2054
        %v7317 = vpop.f32.mrf.mxu0
        %v7318 = vadd.f32 %v6837, %v7317
        %v7319 = vpop.f32.mrf.mxu0
        %v7320 = vpop.f32.mrf.mxu0
        %v7321 = vadd.f32 %v6840, %v7320
        %v7322 = vpop.f32.mrf.mxu0
        %7323 = vmatprep.mubr.bf16.mxu0 %v2057
        %7324 = vmatmul.mubr.bf16.gmra.mxu0 %v2056
        %v7325 = vpop.f32.mrf.mxu0
        %v7326 = vadd.f32 %v6845, %v7325
        %v7327 = vpop.f32.mrf.mxu0
        %v7328 = vpop.f32.mrf.mxu0
        %v7329 = vadd.f32 %v6848, %v7328
        %v7330 = vpop.f32.mrf.mxu0
        %7331 = vmatprep.mubr.bf16.mxu0 %v2059
        %7332 = vmatmul.mubr.bf16.gmra.mxu0 %v2058
        %v7333 = vpop.f32.mrf.mxu0
        %v7334 = vadd.f32 %v6853, %v7333
        %v7335 = vpop.f32.mrf.mxu0
        %v7336 = vpop.f32.mrf.mxu0
        %v7337 = vadd.f32 %v6856, %v7336
        %v7338 = vpop.f32.mrf.mxu0
        %7339 = vmatprep.mubr.bf16.mxu0 %v2061
        %7340 = vmatmul.mubr.bf16.gmra.mxu0 %v2060
        %v7341 = vpop.f32.mrf.mxu0
        %v7342 = vadd.f32 %v6861, %v7341
        %v7343 = vpop.f32.mrf.mxu0
        %v7344 = vpop.f32.mrf.mxu0
        %v7345 = vadd.f32 %v6864, %v7344
        %v7346 = vpop.f32.mrf.mxu0
        %7347 = vmatprep.mubr.bf16.mxu0 %v2063
        %7348 = vmatmul.mubr.bf16.gmra.mxu0 %v2062
        %v7349 = vpop.f32.mrf.mxu0
        %v7350 = vadd.f32 %v6869, %v7349
        %v7351 = vpop.f32.mrf.mxu0
        %v7352 = vpop.f32.mrf.mxu0
        %v7353 = vadd.f32 %v6872, %v7352
        %v7354 = vpop.f32.mrf.mxu0
        %7355 = vmatprep.mubr.bf16.mxu0 %v2065
        %7356 = vmatmul.mubr.bf16.gmra.mxu0 %v2064
        %v7357 = vpop.f32.mrf.mxu0
        %v7358 = vadd.f32 %v6877, %v7357
        %v7359 = vpop.f32.mrf.mxu0
        %v7360 = vpop.f32.mrf.mxu0
        %v7361 = vadd.f32 %v6880, %v7360
        %v7362 = vpop.f32.mrf.mxu0
        %7363 = vmatprep.mubr.bf16.mxu0 %v2067
        %7364 = vmatmul.mubr.bf16.gmra.mxu0 %v2066
        %v7365 = vpop.f32.mrf.mxu0
        %v7366 = vadd.f32 %v6885, %v7365
        %v7367 = vpop.f32.mrf.mxu0
        %v7368 = vpop.f32.mrf.mxu0
        %v7369 = vadd.f32 %v6888, %v7368
        %v7370 = vpop.f32.mrf.mxu0
        %7371 = vmatprep.mubr.bf16.mxu0 %v2069
        %7372 = vmatmul.mubr.bf16.gmra.mxu0 %v2068
        %v7373 = vpop.f32.mrf.mxu0
        %v7374 = vadd.f32 %v6893, %v7373
        %v7375 = vpop.f32.mrf.mxu0
        %v7376 = vpop.f32.mrf.mxu0
        %v7377 = vadd.f32 %v6896, %v7376
        %v7378 = vpop.f32.mrf.mxu0
        %7379 = vmatprep.mubr.bf16.mxu0 %v2071
        %7380 = vmatmul.mubr.bf16.gmra.mxu0 %v2070
        %v7381 = vpop.f32.mrf.mxu0
        %v7382 = vadd.f32 %v6901, %v7381
        %v7383 = vpop.f32.mrf.mxu0
        %v7384 = vpop.f32.mrf.mxu0
        %v7385 = vadd.f32 %v6904, %v7384
        %v7386 = vpop.f32.mrf.mxu0
        %7387 = vmatprep.mubr.bf16.mxu0 %v2073
        %7388 = vmatmul.mubr.bf16.gmra.mxu0 %v2072
        %v7389 = vpop.f32.mrf.mxu0
        %v7390 = vadd.f32 %v6909, %v7389
        %v7391 = vpop.f32.mrf.mxu0
        %v7392 = vpop.f32.mrf.mxu0
        %v7393 = vadd.f32 %v6912, %v7392
        %v7394 = vpop.f32.mrf.mxu0
        %7395 = vmatprep.mubr.bf16.mxu0 %v2075
        %7396 = vmatmul.mubr.bf16.gmra.mxu0 %v2074
        %v7397 = vpop.f32.mrf.mxu0
        %v7398 = vadd.f32 %v6917, %v7397
        %v7399 = vpop.f32.mrf.mxu0
        %v7400 = vpop.f32.mrf.mxu0
        %v7401 = vadd.f32 %v6920, %v7400
        %v7402 = vpop.f32.mrf.mxu0
        %7403 = vmatprep.mubr.bf16.mxu0 %v2077
        %7404 = vmatmul.mubr.bf16.gmra.mxu0 %v2076
        %v7405 = vpop.f32.mrf.mxu0
        %v7406 = vadd.f32 %v6925, %v7405
        %v7407 = vpop.f32.mrf.mxu0
        %v7408 = vpop.f32.mrf.mxu0
        %v7409 = vadd.f32 %v6928, %v7408
        %v7410 = vpop.f32.mrf.mxu0
        %7411 = vmatprep.mubr.bf16.mxu0 %v2079
        %7412 = vmatmul.mubr.bf16.gmra.mxu0 %v2078
        %v7413 = vpop.f32.mrf.mxu0
        %v7414 = vadd.f32 %v6933, %v7413
        %v7415 = vpop.f32.mrf.mxu0
        %v7416 = vpop.f32.mrf.mxu0
        %v7417 = vadd.f32 %v6936, %v7416
        %v7418 = vpop.f32.mrf.mxu0
        %7419 = vmatprep.mubr.bf16.mxu0 %v2081
        %7420 = vmatmul.mubr.bf16.gmra.mxu0 %v2080
        %v7421 = vpop.f32.mrf.mxu0
        %v7422 = vadd.f32 %v6941, %v7421
        %v7423 = vpop.f32.mrf.mxu0
        %v7424 = vpop.f32.mrf.mxu0
        %v7425 = vadd.f32 %v6944, %v7424
        %v7426 = vpop.f32.mrf.mxu0
        %7427 = vmatprep.mubr.bf16.mxu0 %v2083
        %7428 = vmatmul.mubr.bf16.gmra.mxu0 %v2082
        %v7429 = vpop.f32.mrf.mxu0
        %v7430 = vadd.f32 %v6949, %v7429
        %v7431 = vpop.f32.mrf.mxu0
        %v7432 = vpop.f32.mrf.mxu0
        %v7433 = vadd.f32 %v6952, %v7432
        %v7434 = vpop.f32.mrf.mxu0
        %7435 = vmatprep.mubr.bf16.mxu0 %v2085
        %7436 = vmatmul.mubr.bf16.gmra.mxu0 %v2084
        %v7437 = vpop.f32.mrf.mxu0
        %v7438 = vadd.f32 %v6957, %v7437
        %v7439 = vpop.f32.mrf.mxu0
        %v7440 = vpop.f32.mrf.mxu0
        %v7441 = vadd.f32 %v6960, %v7440
        %v7442 = vpop.f32.mrf.mxu0
        %7443 = vmatprep.mubr.bf16.mxu0 %v2087
        %7444 = vmatmul.mubr.bf16.gmra.mxu0 %v2086
        %v7445 = vpop.f32.mrf.mxu0
        %v7446 = vadd.f32 %v6965, %v7445
        %v7447 = vpop.f32.mrf.mxu0
        %v7448 = vpop.f32.mrf.mxu0
        %v7449 = vadd.f32 %v6968, %v7448
        %v7450 = vpop.f32.mrf.mxu0
        %7451 = vmatprep.mubr.bf16.mxu0 %v2089
        %7452 = vmatmul.mubr.bf16.gmra.mxu0 %v2088
        %v7453 = vpop.f32.mrf.mxu0
        %v7454 = vadd.f32 %v6973, %v7453
        %v7455 = vpop.f32.mrf.mxu0
        %v7456 = vpop.f32.mrf.mxu0
        %v7457 = vadd.f32 %v6976, %v7456
        %v7458 = vpop.f32.mrf.mxu0
        %7459 = vmatprep.mubr.bf16.mxu0 %v2091
        %7460 = vmatmul.mubr.bf16.gmra.mxu0 %v2090
        %v7461 = vpop.f32.mrf.mxu0
        %v7462 = vadd.f32 %v6981, %v7461
        %v7463 = vpop.f32.mrf.mxu0
        %v7464 = vpop.f32.mrf.mxu0
        %v7465 = vadd.f32 %v6984, %v7464
        %v7466 = vpop.f32.mrf.mxu0
        %7467 = vmatprep.mubr.bf16.mxu0 %v2093
        %7468 = vmatmul.mubr.bf16.gmra.mxu0 %v2092
        %v7469 = vpop.f32.mrf.mxu0
        %v7470 = vadd.f32 %v6989, %v7469
        %v7471 = vpop.f32.mrf.mxu0
        %v7472 = vpop.f32.mrf.mxu0
        %v7473 = vadd.f32 %v6992, %v7472
        %v7474 = vpop.f32.mrf.mxu0
        %7475 = vmatprep.mubr.bf16.mxu0 %v2095
        %7476 = vmatmul.mubr.bf16.gmra.mxu0 %v2094
        %v7477 = vpop.f32.mrf.mxu0
        %v7478 = vadd.f32 %v6997, %v7477
        %v7479 = vpop.f32.mrf.mxu0
        %v7480 = vpop.f32.mrf.mxu0
        %v7481 = vadd.f32 %v7000, %v7480
        %v7482 = vpop.f32.mrf.mxu0
        %7483 = vmatprep.mubr.bf16.mxu0 %v2097
        %7484 = vmatmul.mubr.bf16.gmra.mxu0 %v2096
        %v7485 = vpop.f32.mrf.mxu0
        %v7486 = vadd.f32 %v7005, %v7485
        %v7487 = vpop.f32.mrf.mxu0
        %v7488 = vpop.f32.mrf.mxu0
        %v7489 = vadd.f32 %v7008, %v7488
        %v7490 = vpop.f32.mrf.mxu0
        %7491 = vmatprep.mubr.bf16.mxu0 %v2099
        %7492 = vmatmul.mubr.bf16.gmra.mxu0 %v2098
        %v7493 = vpop.f32.mrf.mxu0
        %v7494 = vadd.f32 %v7013, %v7493
        %v7495 = vpop.f32.mrf.mxu0
        %v7496 = vpop.f32.mrf.mxu0
        %v7497 = vadd.f32 %v7016, %v7496
        %v7498 = vpop.f32.mrf.mxu0
        %7499 = vmatprep.mubr.bf16.mxu0 %v2101
        %7500 = vmatmul.mubr.bf16.gmra.mxu0 %v2100
        %v7501 = vpop.f32.mrf.mxu0
        %v7502 = vadd.f32 %v7021, %v7501
        %v7503 = vpop.f32.mrf.mxu0
        %v7504 = vpop.f32.mrf.mxu0
        %v7505 = vadd.f32 %v7024, %v7504
        %v7506 = vpop.f32.mrf.mxu0
        %7507 = vmatprep.mubr.bf16.mxu0 %v2103
        %7508 = vmatmul.mubr.bf16.gmra.mxu0 %v2102
        %v7509 = vpop.f32.mrf.mxu0
        %v7510 = vadd.f32 %v7029, %v7509
        %v7511 = vpop.f32.mrf.mxu0
        %v7512 = vpop.f32.mrf.mxu0
        %v7513 = vadd.f32 %v7032, %v7512
        %v7514 = vpop.f32.mrf.mxu0
        %7515 = vmatprep.mubr.bf16.mxu0 %v2105
        %7516 = vmatmul.mubr.bf16.gmra.mxu0 %v2104
        %v7517 = vpop.f32.mrf.mxu0
        %v7518 = vadd.f32 %v7037, %v7517
        %v7519 = vpop.f32.mrf.mxu0
        %v7520 = vpop.f32.mrf.mxu0
        %v7521 = vadd.f32 %v7040, %v7520
        %v7522 = vpop.f32.mrf.mxu0
        %7523 = vmatprep.mubr.bf16.mxu0 %v2107
        %7524 = vmatmul.mubr.bf16.gmra.mxu0 %v2106
        %v7525 = vpop.f32.mrf.mxu0
        %v7526 = vadd.f32 %v7045, %v7525
        %v7527 = vpop.f32.mrf.mxu0
        %v7528 = vpop.f32.mrf.mxu0
        %v7529 = vadd.f32 %v7048, %v7528
        %v7530 = vpop.f32.mrf.mxu0
        %7531 = vmatprep.mubr.bf16.mxu0 %v2109
        %7532 = vmatmul.mubr.bf16.gmra.mxu0 %v2108
        %v7533 = vpop.f32.mrf.mxu0
        %v7534 = vadd.f32 %v7053, %v7533
        %v7535 = vpop.f32.mrf.mxu0
        %v7536 = vpop.f32.mrf.mxu0
        %v7537 = vadd.f32 %v7056, %v7536
        %v7538 = vpop.f32.mrf.mxu0
        %7539 = vmatprep.mubr.bf16.mxu0 %v2111
        %7540 = vmatmul.mubr.bf16.gmra.mxu0 %v2110
        %v7541 = vpop.f32.mrf.mxu0
        %v7542 = vadd.f32 %v7061, %v7541
        %v7543 = vpop.f32.mrf.mxu0
        %v7544 = vpop.f32.mrf.mxu0
        %v7545 = vadd.f32 %v7064, %v7544
        %v7546 = vpop.f32.mrf.mxu0
        %7547 = vmatprep.mubr.bf16.mxu0 %v2113
        %7548 = vmatmul.mubr.bf16.gmra.mxu0 %v2112
        %v7549 = vpop.f32.mrf.mxu0
        %v7550 = vadd.f32 %v7069, %v7549
        %v7551 = vpop.f32.mrf.mxu0
        %v7552 = vpop.f32.mrf.mxu0
        %v7553 = vadd.f32 %v7072, %v7552
        %v7554 = vpop.f32.mrf.mxu0
        %7555 = vmatprep.mubr.bf16.mxu0 %v2115
        %7556 = vmatmul.mubr.bf16.gmra.mxu0 %v2114
        %v7557 = vpop.f32.mrf.mxu0
        %v7558 = vadd.f32 %v7077, %v7557
        %v7559 = vpop.f32.mrf.mxu0
        %v7560 = vpop.f32.mrf.mxu0
        %v7561 = vadd.f32 %v7080, %v7560
        %v7562 = vpop.f32.mrf.mxu0
        %7563 = vmatprep.mubr.bf16.mxu0 %v2117
        %7564 = vmatmul.mubr.bf16.gmra.mxu0 %v2116
        %v7565 = vpop.f32.mrf.mxu0
        %v7566 = vadd.f32 %v7085, %v7565
        %v7567 = vpop.f32.mrf.mxu0
        %v7568 = vpop.f32.mrf.mxu0
        %v7569 = vadd.f32 %v7088, %v7568
        %v7570 = vpop.f32.mrf.mxu0
        %7571 = vmatprep.mubr.bf16.mxu0 %v2935
        %7572 = vmatmul.mubr.bf16.gmra.mxu0 %v2934
        %v7573 = vpop.f32.mrf.mxu0
        %v7574 = vadd.f32 %v7093, %v7573
        %v7575 = vpop.f32.mrf.mxu0
        %v7576 = vpop.f32.mrf.mxu0
        %v7577 = vadd.f32 %v7096, %v7576
        %v7578 = vpop.f32.mrf.mxu0
        %7579 = vmatprep.mubr.bf16.mxu0 %v2937
        %7580 = vmatmul.mubr.bf16.gmra.mxu0 %v2936
        %v7581 = vpop.f32.mrf.mxu0
        %v7582 = vadd.f32 %v7101, %v7581
        %v7583 = vpop.f32.mrf.mxu0
        %v7584 = vpop.f32.mrf.mxu0
        %v7585 = vadd.f32 %v7104, %v7584
        %v7586 = vpop.f32.mrf.mxu0
        %7587 = vmatprep.mubr.bf16.mxu0 %v2939
        %7588 = vmatmul.mubr.bf16.gmra.mxu0 %v2938
        %v7589 = vpop.f32.mrf.mxu0
        %v7590 = vadd.f32 %v7109, %v7589
        %v7591 = vpop.f32.mrf.mxu0
        %v7592 = vpop.f32.mrf.mxu0
        %v7593 = vadd.f32 %v7112, %v7592
        %v7594 = vpop.f32.mrf.mxu0
        %7595 = vmatprep.mubr.bf16.mxu0 %v2941
        %7596 = vmatmul.mubr.bf16.gmra.mxu0 %v2940
        %v7597 = vpop.f32.mrf.mxu0
        %v7598 = vadd.f32 %v7117, %v7597
        %v7599 = vpop.f32.mrf.mxu0
        %v7600 = vpop.f32.mrf.mxu0
        %v7601 = vadd.f32 %v7120, %v7600
        %v7602 = vpop.f32.mrf.mxu0
        %7603 = vmatprep.mubr.bf16.mxu0 %v3037
        %7604 = vmatmul.mubr.bf16.gmra.mxu0 %v3036
        %v7605 = vpop.f32.mrf.mxu0
        %v7606 = vadd.f32 %v7125, %v7605
        %v7607 = vpop.f32.mrf.mxu0
        %v7608 = vpop.f32.mrf.mxu0
        %v7609 = vadd.f32 %v7128, %v7608
        %v7610 = vpop.f32.mrf.mxu0
        %7611 = vmatprep.mubr.bf16.mxu0 %v3039
        %7612 = vmatmul.mubr.bf16.gmra.mxu0 %v3038
        %v7613 = vpop.f32.mrf.mxu0
        %v7614 = vadd.f32 %v7133, %v7613
        %v7615 = vpop.f32.mrf.mxu0
        %v7616 = vpop.f32.mrf.mxu0
        %v7617 = vadd.f32 %v7136, %v7616
        %v7618 = vpop.f32.mrf.mxu0
        %7619 = vmatprep.mubr.bf16.mxu0 %v3041
        %7620 = vmatmul.mubr.bf16.gmra.mxu0 %v3040
        %v7621 = vpop.f32.mrf.mxu0
        %v7622 = vadd.f32 %v7141, %v7621
        %v7623 = vpop.f32.mrf.mxu0
        %v7624 = vpop.f32.mrf.mxu0
        %v7625 = vadd.f32 %v7144, %v7624
        %v7626 = vpop.f32.mrf.mxu0
        %7627 = vmatprep.mubr.bf16.mxu0 %v3043
        %7628 = vmatmul.mubr.bf16.gmra.mxu0 %v3042
        %v7629 = vpop.f32.mrf.mxu0
        %v7630 = vadd.f32 %v7149, %v7629
        %v7631 = vpop.f32.mrf.mxu0
        %v7632 = vpop.f32.mrf.mxu0
        %v7633 = vadd.f32 %v7152, %v7632
        %v7634 = vpop.f32.mrf.mxu0
        %7635 = vdwg.mxu0
        %7636 = vmatprep.subr.bf16.mxu0 0
        %7637 = vmatpush1.bf16.msra.mxu0 %v4100
        %7638 = vmatprep.subr.bf16.mxu0 0
        %7639 = vmatpush1.bf16.msra.mxu0 %v4099
        %7640 = vmatprep.subr.bf16.mxu0 0
        %7641 = vmatpush1.bf16.msra.mxu0 %v4098
        %7642 = vmatprep.subr.bf16.mxu0 0
        %7643 = vmatpush1.bf16.msra.mxu0 %v4097
        %7644 = vmatprep.subr.bf16.mxu0 0
        %7645 = vmatpush1.bf16.msra.mxu0 %v4096
        %7646 = vmatprep.subr.bf16.mxu0 0
        %7647 = vmatpush1.bf16.msra.mxu0 %v4095
        %7648 = vmatprep.subr.bf16.mxu0 0
        %7649 = vmatpush1.bf16.msra.mxu0 %v4094
        %7650 = vmatprep.subr.bf16.mxu0 0
        %7651 = vmatpush1.bf16.msra.mxu0 %v4093
        %7652 = vmatprep.subr.bf16.mxu0 0
        %7653 = vmatpush2.bf16.msra.mxu0 %v4108
        %7654 = vmatprep.subr.bf16.mxu0 0
        %7655 = vmatpush2.bf16.msra.mxu0 %v4107
        %7656 = vmatprep.subr.bf16.mxu0 0
        %7657 = vmatpush2.bf16.msra.mxu0 %v4106
        %7658 = vmatprep.subr.bf16.mxu0 0
        %7659 = vmatpush2.bf16.msra.mxu0 %v4105
        %7660 = vmatprep.subr.bf16.mxu0 0
        %7661 = vmatpush2.bf16.msra.mxu0 %v4104
        %7662 = vmatprep.subr.bf16.mxu0 0
        %7663 = vmatpush2.bf16.msra.mxu0 %v4103
        %7664 = vmatprep.subr.bf16.mxu0 0
        %7665 = vmatpush2.bf16.msra.mxu0 %v4102
        %7666 = vmatprep.subr.bf16.mxu0 0
        %7667 = vmatpush2.bf16.msra.mxu0 %v4101
        %7668 = vmatprep.mubr.bf16.mxu0 %v2273
        %7669 = vmatmul.mubr.bf16.gmra.mxu0 %v2271
        %v7670 = vpop.f32.mrf.mxu0
        %v7671 = vadd.f32 %v7190, %v7670
        %v7672 = vpop.f32.mrf.mxu0
        %v7673 = vpop.f32.mrf.mxu0
        %v7674 = vadd.f32 %v7193, %v7673
        %v7675 = vpop.f32.mrf.mxu0
        %7676 = vmatprep.mubr.bf16.mxu0 %v2277
        %7677 = vmatmul.mubr.bf16.gmra.mxu0 %v2275
        %v7678 = vpop.f32.mrf.mxu0
        %v7679 = vadd.f32 %v7198, %v7678
        %v7680 = vpop.f32.mrf.mxu0
        %v7681 = vpop.f32.mrf.mxu0
        %v7682 = vadd.f32 %v7201, %v7681
        %v7683 = vpop.f32.mrf.mxu0
        %7684 = vmatprep.mubr.bf16.mxu0 %v2281
        %7685 = vmatmul.mubr.bf16.gmra.mxu0 %v2279
        %v7686 = vpop.f32.mrf.mxu0
        %v7687 = vadd.f32 %v7206, %v7686
        %v7688 = vpop.f32.mrf.mxu0
        %v7689 = vpop.f32.mrf.mxu0
        %v7690 = vadd.f32 %v7209, %v7689
        %v7691 = vpop.f32.mrf.mxu0
        %7692 = vmatprep.mubr.bf16.mxu0 %v2285
        %7693 = vmatmul.mubr.bf16.gmra.mxu0 %v2283
        %v7694 = vpop.f32.mrf.mxu0
        %v7695 = vadd.f32 %v7214, %v7694
        %v7696 = vpop.f32.mrf.mxu0
        %v7697 = vpop.f32.mrf.mxu0
        %v7698 = vadd.f32 %v7217, %v7697
        %v7699 = vpop.f32.mrf.mxu0
        %7700 = vmatprep.mubr.bf16.mxu0 %v2289
        %7701 = vmatmul.mubr.bf16.gmra.mxu0 %v2287
        %v7702 = vpop.f32.mrf.mxu0
        %v7703 = vadd.f32 %v7222, %v7702
        %v7704 = vpop.f32.mrf.mxu0
        %v7705 = vpop.f32.mrf.mxu0
        %v7706 = vadd.f32 %v7225, %v7705
        %v7707 = vpop.f32.mrf.mxu0
        %7708 = vmatprep.mubr.bf16.mxu0 %v2293
        %7709 = vmatmul.mubr.bf16.gmra.mxu0 %v2291
        %v7710 = vpop.f32.mrf.mxu0
        %v7711 = vadd.f32 %v7230, %v7710
        %v7712 = vpop.f32.mrf.mxu0
        %v7713 = vpop.f32.mrf.mxu0
        %v7714 = vadd.f32 %v7233, %v7713
        %v7715 = vpop.f32.mrf.mxu0
        %7716 = vmatprep.mubr.bf16.mxu0 %v2297
        %7717 = vmatmul.mubr.bf16.gmra.mxu0 %v2295
        %v7718 = vpop.f32.mrf.mxu0
        %v7719 = vadd.f32 %v7238, %v7718
        %v7720 = vpop.f32.mrf.mxu0
        %v7721 = vpop.f32.mrf.mxu0
        %v7722 = vadd.f32 %v7241, %v7721
        %v7723 = vpop.f32.mrf.mxu0
        %7724 = vmatprep.mubr.bf16.mxu0 %v2301
        %7725 = vmatmul.mubr.bf16.gmra.mxu0 %v2299
        %v7726 = vpop.f32.mrf.mxu0
        %v7727 = vadd.f32 %v7246, %v7726
        %v7728 = vpop.f32.mrf.mxu0
        %v7729 = vpop.f32.mrf.mxu0
        %v7730 = vadd.f32 %v7249, %v7729
        %v7731 = vpop.f32.mrf.mxu0
        %7732 = vmatprep.mubr.bf16.mxu0 %v2305
        %7733 = vmatmul.mubr.bf16.gmra.mxu0 %v2303
        %v7734 = vpop.f32.mrf.mxu0
        %v7735 = vadd.f32 %v7254, %v7734
        %v7736 = vpop.f32.mrf.mxu0
        %v7737 = vpop.f32.mrf.mxu0
        %v7738 = vadd.f32 %v7257, %v7737
        %v7739 = vpop.f32.mrf.mxu0
        %7740 = vmatprep.mubr.bf16.mxu0 %v2309
        %7741 = vmatmul.mubr.bf16.gmra.mxu0 %v2307
        %v7742 = vpop.f32.mrf.mxu0
        %v7743 = vadd.f32 %v7262, %v7742
        %v7744 = vpop.f32.mrf.mxu0
        %v7745 = vpop.f32.mrf.mxu0
        %v7746 = vadd.f32 %v7265, %v7745
        %v7747 = vpop.f32.mrf.mxu0
        %7748 = vmatprep.mubr.bf16.mxu0 %v2313
        %7749 = vmatmul.mubr.bf16.gmra.mxu0 %v2311
        %v7750 = vpop.f32.mrf.mxu0
        %v7751 = vadd.f32 %v7270, %v7750
        %v7752 = vpop.f32.mrf.mxu0
        %v7753 = vpop.f32.mrf.mxu0
        %v7754 = vadd.f32 %v7273, %v7753
        %v7755 = vpop.f32.mrf.mxu0
        %7756 = vmatprep.mubr.bf16.mxu0 %v2317
        %7757 = vmatmul.mubr.bf16.gmra.mxu0 %v2315
        %v7758 = vpop.f32.mrf.mxu0
        %v7759 = vadd.f32 %v7278, %v7758
        %v7760 = vpop.f32.mrf.mxu0
        %v7761 = vpop.f32.mrf.mxu0
        %v7762 = vadd.f32 %v7281, %v7761
        %v7763 = vpop.f32.mrf.mxu0
        %7764 = vmatprep.mubr.bf16.mxu0 %v2321
        %7765 = vmatmul.mubr.bf16.gmra.mxu0 %v2319
        %v7766 = vpop.f32.mrf.mxu0
        %v7767 = vadd.f32 %v7286, %v7766
        %v7768 = vpop.f32.mrf.mxu0
        %v7769 = vpop.f32.mrf.mxu0
        %v7770 = vadd.f32 %v7289, %v7769
        %v7771 = vpop.f32.mrf.mxu0
        %7772 = vmatprep.mubr.bf16.mxu0 %v2325
        %7773 = vmatmul.mubr.bf16.gmra.mxu0 %v2323
        %v7774 = vpop.f32.mrf.mxu0
        %v7775 = vadd.f32 %v7294, %v7774
        %v7776 = vpop.f32.mrf.mxu0
        %v7777 = vpop.f32.mrf.mxu0
        %v7778 = vadd.f32 %v7297, %v7777
        %v7779 = vpop.f32.mrf.mxu0
        %7780 = vmatprep.mubr.bf16.mxu0 %v2329
        %7781 = vmatmul.mubr.bf16.gmra.mxu0 %v2327
        %v7782 = vpop.f32.mrf.mxu0
        %v7783 = vadd.f32 %v7302, %v7782
        %v7784 = vpop.f32.mrf.mxu0
        %v7785 = vpop.f32.mrf.mxu0
        %v7786 = vadd.f32 %v7305, %v7785
        %v7787 = vpop.f32.mrf.mxu0
        %7788 = vmatprep.mubr.bf16.mxu0 %v2333
        %7789 = vmatmul.mubr.bf16.gmra.mxu0 %v2331
        %v7790 = vpop.f32.mrf.mxu0
        %v7791 = vadd.f32 %v7310, %v7790
        %v7792 = vpop.f32.mrf.mxu0
        %v7793 = vpop.f32.mrf.mxu0
        %v7794 = vadd.f32 %v7313, %v7793
        %v7795 = vpop.f32.mrf.mxu0
        %7796 = vmatprep.mubr.bf16.mxu0 %v2337
        %7797 = vmatmul.mubr.bf16.gmra.mxu0 %v2335
        %v7798 = vpop.f32.mrf.mxu0
        %v7799 = vadd.f32 %v7318, %v7798
        %v7800 = vpop.f32.mrf.mxu0
        %v7801 = vpop.f32.mrf.mxu0
        %v7802 = vadd.f32 %v7321, %v7801
        %v7803 = vpop.f32.mrf.mxu0
        %7804 = vmatprep.mubr.bf16.mxu0 %v2341
        %7805 = vmatmul.mubr.bf16.gmra.mxu0 %v2339
        %v7806 = vpop.f32.mrf.mxu0
        %v7807 = vadd.f32 %v7326, %v7806
        %v7808 = vpop.f32.mrf.mxu0
        %v7809 = vpop.f32.mrf.mxu0
        %v7810 = vadd.f32 %v7329, %v7809
        %v7811 = vpop.f32.mrf.mxu0
        %7812 = vmatprep.mubr.bf16.mxu0 %v2345
        %7813 = vmatmul.mubr.bf16.gmra.mxu0 %v2343
        %v7814 = vpop.f32.mrf.mxu0
        %v7815 = vadd.f32 %v7334, %v7814
        %v7816 = vpop.f32.mrf.mxu0
        %v7817 = vpop.f32.mrf.mxu0
        %v7818 = vadd.f32 %v7337, %v7817
        %v7819 = vpop.f32.mrf.mxu0
        %7820 = vmatprep.mubr.bf16.mxu0 %v2349
        %7821 = vmatmul.mubr.bf16.gmra.mxu0 %v2347
        %v7822 = vpop.f32.mrf.mxu0
        %v7823 = vadd.f32 %v7342, %v7822
        %v7824 = vpop.f32.mrf.mxu0
        %v7825 = vpop.f32.mrf.mxu0
        %v7826 = vadd.f32 %v7345, %v7825
        %v7827 = vpop.f32.mrf.mxu0
        %7828 = vmatprep.mubr.bf16.mxu0 %v2353
        %7829 = vmatmul.mubr.bf16.gmra.mxu0 %v2351
        %v7830 = vpop.f32.mrf.mxu0
        %v7831 = vadd.f32 %v7350, %v7830
        %v7832 = vpop.f32.mrf.mxu0
        %v7833 = vpop.f32.mrf.mxu0
        %v7834 = vadd.f32 %v7353, %v7833
        %v7835 = vpop.f32.mrf.mxu0
        %7836 = vmatprep.mubr.bf16.mxu0 %v2357
        %7837 = vmatmul.mubr.bf16.gmra.mxu0 %v2355
        %v7838 = vpop.f32.mrf.mxu0
        %v7839 = vadd.f32 %v7358, %v7838
        %v7840 = vpop.f32.mrf.mxu0
        %v7841 = vpop.f32.mrf.mxu0
        %v7842 = vadd.f32 %v7361, %v7841
        %v7843 = vpop.f32.mrf.mxu0
        %7844 = vmatprep.mubr.bf16.mxu0 %v2361
        %7845 = vmatmul.mubr.bf16.gmra.mxu0 %v2359
        %v7846 = vpop.f32.mrf.mxu0
        %v7847 = vadd.f32 %v7366, %v7846
        %v7848 = vpop.f32.mrf.mxu0
        %v7849 = vpop.f32.mrf.mxu0
        %v7850 = vadd.f32 %v7369, %v7849
        %v7851 = vpop.f32.mrf.mxu0
        %7852 = vmatprep.mubr.bf16.mxu0 %v2365
        %7853 = vmatmul.mubr.bf16.gmra.mxu0 %v2363
        %v7854 = vpop.f32.mrf.mxu0
        %v7855 = vadd.f32 %v7374, %v7854
        %v7856 = vpop.f32.mrf.mxu0
        %v7857 = vpop.f32.mrf.mxu0
        %v7858 = vadd.f32 %v7377, %v7857
        %v7859 = vpop.f32.mrf.mxu0
        %7860 = vmatprep.mubr.bf16.mxu0 %v2369
        %7861 = vmatmul.mubr.bf16.gmra.mxu0 %v2367
        %v7862 = vpop.f32.mrf.mxu0
        %v7863 = vadd.f32 %v7382, %v7862
        %v7864 = vpop.f32.mrf.mxu0
        %v7865 = vpop.f32.mrf.mxu0
        %v7866 = vadd.f32 %v7385, %v7865
        %v7867 = vpop.f32.mrf.mxu0
        %7868 = vmatprep.mubr.bf16.mxu0 %v2373
        %7869 = vmatmul.mubr.bf16.gmra.mxu0 %v2371
        %v7870 = vpop.f32.mrf.mxu0
        %v7871 = vadd.f32 %v7390, %v7870
        %v7872 = vpop.f32.mrf.mxu0
        %v7873 = vpop.f32.mrf.mxu0
        %v7874 = vadd.f32 %v7393, %v7873
        %v7875 = vpop.f32.mrf.mxu0
        %7876 = vmatprep.mubr.bf16.mxu0 %v2377
        %7877 = vmatmul.mubr.bf16.gmra.mxu0 %v2375
        %v7878 = vpop.f32.mrf.mxu0
        %v7879 = vadd.f32 %v7398, %v7878
        %v7880 = vpop.f32.mrf.mxu0
        %v7881 = vpop.f32.mrf.mxu0
        %v7882 = vadd.f32 %v7401, %v7881
        %v7883 = vpop.f32.mrf.mxu0
        %7884 = vmatprep.mubr.bf16.mxu0 %v2381
        %7885 = vmatmul.mubr.bf16.gmra.mxu0 %v2379
        %v7886 = vpop.f32.mrf.mxu0
        %v7887 = vadd.f32 %v7406, %v7886
        %v7888 = vpop.f32.mrf.mxu0
        %v7889 = vpop.f32.mrf.mxu0
        %v7890 = vadd.f32 %v7409, %v7889
        %v7891 = vpop.f32.mrf.mxu0
        %7892 = vmatprep.mubr.bf16.mxu0 %v2385
        %7893 = vmatmul.mubr.bf16.gmra.mxu0 %v2383
        %v7894 = vpop.f32.mrf.mxu0
        %v7895 = vadd.f32 %v7414, %v7894
        %v7896 = vpop.f32.mrf.mxu0
        %v7897 = vpop.f32.mrf.mxu0
        %v7898 = vadd.f32 %v7417, %v7897
        %v7899 = vpop.f32.mrf.mxu0
        %7900 = vmatprep.mubr.bf16.mxu0 %v2389
        %7901 = vmatmul.mubr.bf16.gmra.mxu0 %v2387
        %v7902 = vpop.f32.mrf.mxu0
        %v7903 = vadd.f32 %v7422, %v7902
        %v7904 = vpop.f32.mrf.mxu0
        %v7905 = vpop.f32.mrf.mxu0
        %v7906 = vadd.f32 %v7425, %v7905
        %v7907 = vpop.f32.mrf.mxu0
        %7908 = vmatprep.mubr.bf16.mxu0 %v2393
        %7909 = vmatmul.mubr.bf16.gmra.mxu0 %v2391
        %v7910 = vpop.f32.mrf.mxu0
        %v7911 = vadd.f32 %v7430, %v7910
        %v7912 = vpop.f32.mrf.mxu0
        %v7913 = vpop.f32.mrf.mxu0
        %v7914 = vadd.f32 %v7433, %v7913
        %v7915 = vpop.f32.mrf.mxu0
        %7916 = vmatprep.mubr.bf16.mxu0 %v2397
        %7917 = vmatmul.mubr.bf16.gmra.mxu0 %v2395
        %v7918 = vpop.f32.mrf.mxu0
        %v7919 = vadd.f32 %v7438, %v7918
        %v7920 = vpop.f32.mrf.mxu0
        %v7921 = vpop.f32.mrf.mxu0
        %v7922 = vadd.f32 %v7441, %v7921
        %v7923 = vpop.f32.mrf.mxu0
        %7924 = vmatprep.mubr.bf16.mxu0 %v2401
        %7925 = vmatmul.mubr.bf16.gmra.mxu0 %v2399
        %v7926 = vpop.f32.mrf.mxu0
        %v7927 = vadd.f32 %v7446, %v7926
        %v7928 = vpop.f32.mrf.mxu0
        %v7929 = vpop.f32.mrf.mxu0
        %v7930 = vadd.f32 %v7449, %v7929
        %v7931 = vpop.f32.mrf.mxu0
        %7932 = vmatprep.mubr.bf16.mxu0 %v2405
        %7933 = vmatmul.mubr.bf16.gmra.mxu0 %v2403
        %v7934 = vpop.f32.mrf.mxu0
        %v7935 = vadd.f32 %v7454, %v7934
        %v7936 = vpop.f32.mrf.mxu0
        %v7937 = vpop.f32.mrf.mxu0
        %v7938 = vadd.f32 %v7457, %v7937
        %v7939 = vpop.f32.mrf.mxu0
        %7940 = vmatprep.mubr.bf16.mxu0 %v2409
        %7941 = vmatmul.mubr.bf16.gmra.mxu0 %v2407
        %v7942 = vpop.f32.mrf.mxu0
        %v7943 = vadd.f32 %v7462, %v7942
        %v7944 = vpop.f32.mrf.mxu0
        %v7945 = vpop.f32.mrf.mxu0
        %v7946 = vadd.f32 %v7465, %v7945
        %v7947 = vpop.f32.mrf.mxu0
        %7948 = vmatprep.mubr.bf16.mxu0 %v2413
        %7949 = vmatmul.mubr.bf16.gmra.mxu0 %v2411
        %v7950 = vpop.f32.mrf.mxu0
        %v7951 = vadd.f32 %v7470, %v7950
        %v7952 = vpop.f32.mrf.mxu0
        %v7953 = vpop.f32.mrf.mxu0
        %v7954 = vadd.f32 %v7473, %v7953
        %v7955 = vpop.f32.mrf.mxu0
        %7956 = vmatprep.mubr.bf16.mxu0 %v2417
        %7957 = vmatmul.mubr.bf16.gmra.mxu0 %v2415
        %v7958 = vpop.f32.mrf.mxu0
        %v7959 = vadd.f32 %v7478, %v7958
        %v7960 = vpop.f32.mrf.mxu0
        %v7961 = vpop.f32.mrf.mxu0
        %v7962 = vadd.f32 %v7481, %v7961
        %v7963 = vpop.f32.mrf.mxu0
        %7964 = vmatprep.mubr.bf16.mxu0 %v2421
        %7965 = vmatmul.mubr.bf16.gmra.mxu0 %v2419
        %v7966 = vpop.f32.mrf.mxu0
        %v7967 = vadd.f32 %v7486, %v7966
        %v7968 = vpop.f32.mrf.mxu0
        %v7969 = vpop.f32.mrf.mxu0
        %v7970 = vadd.f32 %v7489, %v7969
        %v7971 = vpop.f32.mrf.mxu0
        %7972 = vmatprep.mubr.bf16.mxu0 %v2425
        %7973 = vmatmul.mubr.bf16.gmra.mxu0 %v2423
        %v7974 = vpop.f32.mrf.mxu0
        %v7975 = vadd.f32 %v7494, %v7974
        %v7976 = vpop.f32.mrf.mxu0
        %v7977 = vpop.f32.mrf.mxu0
        %v7978 = vadd.f32 %v7497, %v7977
        %v7979 = vpop.f32.mrf.mxu0
        %7980 = vmatprep.mubr.bf16.mxu0 %v2429
        %7981 = vmatmul.mubr.bf16.gmra.mxu0 %v2427
        %v7982 = vpop.f32.mrf.mxu0
        %v7983 = vadd.f32 %v7502, %v7982
        %v7984 = vpop.f32.mrf.mxu0
        %v7985 = vpop.f32.mrf.mxu0
        %v7986 = vadd.f32 %v7505, %v7985
        %v7987 = vpop.f32.mrf.mxu0
        %7988 = vmatprep.mubr.bf16.mxu0 %v2433
        %7989 = vmatmul.mubr.bf16.gmra.mxu0 %v2431
        %v7990 = vpop.f32.mrf.mxu0
        %v7991 = vadd.f32 %v7510, %v7990
        %v7992 = vpop.f32.mrf.mxu0
        %v7993 = vpop.f32.mrf.mxu0
        %v7994 = vadd.f32 %v7513, %v7993
        %v7995 = vpop.f32.mrf.mxu0
        %7996 = vmatprep.mubr.bf16.mxu0 %v2437
        %7997 = vmatmul.mubr.bf16.gmra.mxu0 %v2435
        %v7998 = vpop.f32.mrf.mxu0
        %v7999 = vadd.f32 %v7518, %v7998
        %v8000 = vpop.f32.mrf.mxu0
        %v8001 = vpop.f32.mrf.mxu0
        %v8002 = vadd.f32 %v7521, %v8001
        %v8003 = vpop.f32.mrf.mxu0
        %8004 = vmatprep.mubr.bf16.mxu0 %v2441
        %8005 = vmatmul.mubr.bf16.gmra.mxu0 %v2439
        %v8006 = vpop.f32.mrf.mxu0
        %v8007 = vadd.f32 %v7526, %v8006
        %v8008 = vpop.f32.mrf.mxu0
        %v8009 = vpop.f32.mrf.mxu0
        %v8010 = vadd.f32 %v7529, %v8009
        %v8011 = vpop.f32.mrf.mxu0
        %8012 = vmatprep.mubr.bf16.mxu0 %v2445
        %8013 = vmatmul.mubr.bf16.gmra.mxu0 %v2443
        %v8014 = vpop.f32.mrf.mxu0
        %v8015 = vadd.f32 %v7534, %v8014
        %v8016 = vpop.f32.mrf.mxu0
        %v8017 = vpop.f32.mrf.mxu0
        %v8018 = vadd.f32 %v7537, %v8017
        %v8019 = vpop.f32.mrf.mxu0
        %8020 = vmatprep.mubr.bf16.mxu0 %v2449
        %8021 = vmatmul.mubr.bf16.gmra.mxu0 %v2447
        %v8022 = vpop.f32.mrf.mxu0
        %v8023 = vadd.f32 %v7542, %v8022
        %v8024 = vpop.f32.mrf.mxu0
        %v8025 = vpop.f32.mrf.mxu0
        %v8026 = vadd.f32 %v7545, %v8025
        %v8027 = vpop.f32.mrf.mxu0
        %8028 = vmatprep.mubr.bf16.mxu0 %v2453
        %8029 = vmatmul.mubr.bf16.gmra.mxu0 %v2451
        %v8030 = vpop.f32.mrf.mxu0
        %v8031 = vadd.f32 %v7550, %v8030
        %v8032 = vpop.f32.mrf.mxu0
        %v8033 = vpop.f32.mrf.mxu0
        %v8034 = vadd.f32 %v7553, %v8033
        %v8035 = vpop.f32.mrf.mxu0
        %8036 = vmatprep.mubr.bf16.mxu0 %v2457
        %8037 = vmatmul.mubr.bf16.gmra.mxu0 %v2455
        %v8038 = vpop.f32.mrf.mxu0
        %v8039 = vadd.f32 %v7558, %v8038
        %v8040 = vpop.f32.mrf.mxu0
        %v8041 = vpop.f32.mrf.mxu0
        %v8042 = vadd.f32 %v7561, %v8041
        %v8043 = vpop.f32.mrf.mxu0
        %8044 = vmatprep.mubr.bf16.mxu0 %v2958
        %8045 = vmatmul.mubr.bf16.gmra.mxu0 %v2956
        %v8046 = vpop.f32.mrf.mxu0
        %v8047 = vadd.f32 %v7566, %v8046
        %v8048 = vpop.f32.mrf.mxu0
        %v8049 = vpop.f32.mrf.mxu0
        %v8050 = vadd.f32 %v7569, %v8049
        %v8051 = vpop.f32.mrf.mxu0
        %8052 = vmatprep.mubr.bf16.mxu0 %v2962
        %8053 = vmatmul.mubr.bf16.gmra.mxu0 %v2960
        %v8054 = vpop.f32.mrf.mxu0
        %v8055 = vadd.f32 %v7574, %v8054
        %v8056 = vpop.f32.mrf.mxu0
        %v8057 = vpop.f32.mrf.mxu0
        %v8058 = vadd.f32 %v7577, %v8057
        %v8059 = vpop.f32.mrf.mxu0
        %8060 = vmatprep.mubr.bf16.mxu0 %v2966
        %8061 = vmatmul.mubr.bf16.gmra.mxu0 %v2964
        %v8062 = vpop.f32.mrf.mxu0
        %v8063 = vadd.f32 %v7582, %v8062
        %v8064 = vpop.f32.mrf.mxu0
        %v8065 = vpop.f32.mrf.mxu0
        %v8066 = vadd.f32 %v7585, %v8065
        %v8067 = vpop.f32.mrf.mxu0
        %8068 = vmatprep.mubr.bf16.mxu0 %v2970
        %8069 = vmatmul.mubr.bf16.gmra.mxu0 %v2968
        %v8070 = vpop.f32.mrf.mxu0
        %v8071 = vadd.f32 %v7590, %v8070
        %v8072 = vpop.f32.mrf.mxu0
        %v8073 = vpop.f32.mrf.mxu0
        %v8074 = vadd.f32 %v7593, %v8073
        %v8075 = vpop.f32.mrf.mxu0
        %8076 = vmatprep.mubr.bf16.mxu0 %v3060
        %8077 = vmatmul.mubr.bf16.gmra.mxu0 %v3058
        %v8078 = vpop.f32.mrf.mxu0
        %v8079 = vadd.f32 %v7598, %v8078
        %v8080 = vpop.f32.mrf.mxu0
        %v8081 = vpop.f32.mrf.mxu0
        %v8082 = vadd.f32 %v7601, %v8081
        %v8083 = vpop.f32.mrf.mxu0
        %8084 = vmatprep.mubr.bf16.mxu0 %v3064
        %8085 = vmatmul.mubr.bf16.gmra.mxu0 %v3062
        %v8086 = vpop.f32.mrf.mxu0
        %v8087 = vadd.f32 %v7606, %v8086
        %v8088 = vpop.f32.mrf.mxu0
        %v8089 = vpop.f32.mrf.mxu0
        %v8090 = vadd.f32 %v7609, %v8089
        %v8091 = vpop.f32.mrf.mxu0
        %8092 = vmatprep.mubr.bf16.mxu0 %v3068
        %8093 = vmatmul.mubr.bf16.gmra.mxu0 %v3066
        %v8094 = vpop.f32.mrf.mxu0
        %v8095 = vadd.f32 %v7614, %v8094
        %v8096 = vpop.f32.mrf.mxu0
        %v8097 = vpop.f32.mrf.mxu0
        %v8098 = vadd.f32 %v7617, %v8097
        %v8099 = vpop.f32.mrf.mxu0
        %8100 = vmatprep.mubr.bf16.mxu0 %v3072
        %8101 = vmatmul.mubr.bf16.gmra.mxu0 %v3070
        %v8102 = vpop.f32.mrf.mxu0
        %v8103 = vadd.f32 %v7622, %v8102
        %v8104 = vpop.f32.mrf.mxu0
        %v8105 = vpop.f32.mrf.mxu0
        %v8106 = vadd.f32 %v7625, %v8105
        %v8107 = vpop.f32.mrf.mxu0
        %8108 = vmatprep.mubr.bf16.mxu0 %v3076
        %8109 = vmatmul.mubr.bf16.gmra.mxu0 %v3074
        %v8110 = vpop.f32.mrf.mxu0
        %v8111 = vadd.f32 %v7630, %v8110
        %v8112 = vpop.f32.mrf.mxu0
        %v8113 = vpop.f32.mrf.mxu0
        %v8114 = vadd.f32 %v7633, %v8113
        %v8115 = vpop.f32.mrf.mxu0
        %8116 = vdwg.mxu0
        %8117 = vmatprep.subr.bf16.mxu0 0
        %8118 = vmatpush1.bf16.msra.mxu0 %v4116
        %8119 = vmatprep.subr.bf16.mxu0 0
        %8120 = vmatpush1.bf16.msra.mxu0 %v4115
        %8121 = vmatprep.subr.bf16.mxu0 0
        %8122 = vmatpush1.bf16.msra.mxu0 %v4114
        %8123 = vmatprep.subr.bf16.mxu0 0
        %8124 = vmatpush1.bf16.msra.mxu0 %v4113
        %8125 = vmatprep.subr.bf16.mxu0 0
        %8126 = vmatpush1.bf16.msra.mxu0 %v4112
        %8127 = vmatprep.subr.bf16.mxu0 0
        %8128 = vmatpush1.bf16.msra.mxu0 %v4111
        %8129 = vmatprep.subr.bf16.mxu0 0
        %8130 = vmatpush1.bf16.msra.mxu0 %v4110
        %8131 = vmatprep.subr.bf16.mxu0 0
        %8132 = vmatpush1.bf16.msra.mxu0 %v4109
        %8133 = vmatprep.subr.bf16.mxu0 0
        %8134 = vmatpush2.bf16.msra.mxu0 %v4124
        %8135 = vmatprep.subr.bf16.mxu0 0
        %8136 = vmatpush2.bf16.msra.mxu0 %v4123
        %8137 = vmatprep.subr.bf16.mxu0 0
        %8138 = vmatpush2.bf16.msra.mxu0 %v4122
        %8139 = vmatprep.subr.bf16.mxu0 0
        %8140 = vmatpush2.bf16.msra.mxu0 %v4121
        %8141 = vmatprep.subr.bf16.mxu0 0
        %8142 = vmatpush2.bf16.msra.mxu0 %v4120
        %8143 = vmatprep.subr.bf16.mxu0 0
        %8144 = vmatpush2.bf16.msra.mxu0 %v4119
        %8145 = vmatprep.subr.bf16.mxu0 0
        %8146 = vmatpush2.bf16.msra.mxu0 %v4118
        %8147 = vmatprep.subr.bf16.mxu0 0
        %8148 = vmatpush2.bf16.msra.mxu0 %v4117
        %8149 = vmatprep.mubr.bf16.mxu0 %v2612
        %8150 = vmatmul.mubr.bf16.gmra.mxu0 %v2610
        %v8151 = vpop.f32.mrf.mxu0
        %v8152 = vadd.f32 %v7671, %v8151
        %v8153 = vpop.f32.mrf.mxu0
        %v8154 = vpop.f32.mrf.mxu0
        %v8155 = vadd.f32 %v7674, %v8154
        %v8156 = vpop.f32.mrf.mxu0
        %8157 = vmatprep.mubr.bf16.mxu0 %v2616
        %8158 = vmatmul.mubr.bf16.gmra.mxu0 %v2614
        %v8159 = vpop.f32.mrf.mxu0
        %v8160 = vadd.f32 %v7679, %v8159
        %v8161 = vpop.f32.mrf.mxu0
        %v8162 = vpop.f32.mrf.mxu0
        %v8163 = vadd.f32 %v7682, %v8162
        %v8164 = vpop.f32.mrf.mxu0
        %8165 = vmatprep.mubr.bf16.mxu0 %v2620
        %8166 = vmatmul.mubr.bf16.gmra.mxu0 %v2618
        %v8167 = vpop.f32.mrf.mxu0
        %v8168 = vadd.f32 %v7687, %v8167
        %v8169 = vpop.f32.mrf.mxu0
        %v8170 = vpop.f32.mrf.mxu0
        %v8171 = vadd.f32 %v7690, %v8170
        %v8172 = vpop.f32.mrf.mxu0
        %8173 = vmatprep.mubr.bf16.mxu0 %v2624
        %8174 = vmatmul.mubr.bf16.gmra.mxu0 %v2622
        %v8175 = vpop.f32.mrf.mxu0
        %v8176 = vadd.f32 %v7695, %v8175
        %v8177 = vpop.f32.mrf.mxu0
        %v8178 = vpop.f32.mrf.mxu0
        %v8179 = vadd.f32 %v7698, %v8178
        %v8180 = vpop.f32.mrf.mxu0
        %8181 = vmatprep.mubr.bf16.mxu0 %v2628
        %8182 = vmatmul.mubr.bf16.gmra.mxu0 %v2626
        %v8183 = vpop.f32.mrf.mxu0
        %v8184 = vadd.f32 %v7703, %v8183
        %v8185 = vpop.f32.mrf.mxu0
        %v8186 = vpop.f32.mrf.mxu0
        %v8187 = vadd.f32 %v7706, %v8186
        %v8188 = vpop.f32.mrf.mxu0
        %8189 = vmatprep.mubr.bf16.mxu0 %v2632
        %8190 = vmatmul.mubr.bf16.gmra.mxu0 %v2630
        %v8191 = vpop.f32.mrf.mxu0
        %v8192 = vadd.f32 %v7711, %v8191
        %v8193 = vpop.f32.mrf.mxu0
        %v8194 = vpop.f32.mrf.mxu0
        %v8195 = vadd.f32 %v7714, %v8194
        %v8196 = vpop.f32.mrf.mxu0
        %8197 = vmatprep.mubr.bf16.mxu0 %v2636
        %8198 = vmatmul.mubr.bf16.gmra.mxu0 %v2634
        %v8199 = vpop.f32.mrf.mxu0
        %v8200 = vadd.f32 %v7719, %v8199
        %v8201 = vpop.f32.mrf.mxu0
        %v8202 = vpop.f32.mrf.mxu0
        %v8203 = vadd.f32 %v7722, %v8202
        %v8204 = vpop.f32.mrf.mxu0
        %8205 = vmatprep.mubr.bf16.mxu0 %v2640
        %8206 = vmatmul.mubr.bf16.gmra.mxu0 %v2638
        %v8207 = vpop.f32.mrf.mxu0
        %v8208 = vadd.f32 %v7727, %v8207
        %v8209 = vpop.f32.mrf.mxu0
        %v8210 = vpop.f32.mrf.mxu0
        %v8211 = vadd.f32 %v7730, %v8210
        %v8212 = vpop.f32.mrf.mxu0
        %8213 = vmatprep.mubr.bf16.mxu0 %v2644
        %8214 = vmatmul.mubr.bf16.gmra.mxu0 %v2642
        %v8215 = vpop.f32.mrf.mxu0
        %v8216 = vadd.f32 %v7735, %v8215
        %v8217 = vpop.f32.mrf.mxu0
        %v8218 = vpop.f32.mrf.mxu0
        %v8219 = vadd.f32 %v7738, %v8218
        %v8220 = vpop.f32.mrf.mxu0
        %8221 = vmatprep.mubr.bf16.mxu0 %v2648
        %8222 = vmatmul.mubr.bf16.gmra.mxu0 %v2646
        %v8223 = vpop.f32.mrf.mxu0
        %v8224 = vadd.f32 %v7743, %v8223
        %v8225 = vpop.f32.mrf.mxu0
        %v8226 = vpop.f32.mrf.mxu0
        %v8227 = vadd.f32 %v7746, %v8226
        %v8228 = vpop.f32.mrf.mxu0
        %8229 = vmatprep.mubr.bf16.mxu0 %v2652
        %8230 = vmatmul.mubr.bf16.gmra.mxu0 %v2650
        %v8231 = vpop.f32.mrf.mxu0
        %v8232 = vadd.f32 %v7751, %v8231
        %v8233 = vpop.f32.mrf.mxu0
        %v8234 = vpop.f32.mrf.mxu0
        %v8235 = vadd.f32 %v7754, %v8234
        %v8236 = vpop.f32.mrf.mxu0
        %8237 = vmatprep.mubr.bf16.mxu0 %v2656
        %8238 = vmatmul.mubr.bf16.gmra.mxu0 %v2654
        %v8239 = vpop.f32.mrf.mxu0
        %v8240 = vadd.f32 %v7759, %v8239
        %v8241 = vpop.f32.mrf.mxu0
        %v8242 = vpop.f32.mrf.mxu0
        %v8243 = vadd.f32 %v7762, %v8242
        %v8244 = vpop.f32.mrf.mxu0
        %8245 = vmatprep.mubr.bf16.mxu0 %v2660
        %8246 = vmatmul.mubr.bf16.gmra.mxu0 %v2658
        %v8247 = vpop.f32.mrf.mxu0
        %v8248 = vadd.f32 %v7767, %v8247
        %v8249 = vpop.f32.mrf.mxu0
        %v8250 = vpop.f32.mrf.mxu0
        %v8251 = vadd.f32 %v7770, %v8250
        %v8252 = vpop.f32.mrf.mxu0
        %8253 = vmatprep.mubr.bf16.mxu0 %v2664
        %8254 = vmatmul.mubr.bf16.gmra.mxu0 %v2662
        %v8255 = vpop.f32.mrf.mxu0
        %v8256 = vadd.f32 %v7775, %v8255
        %v8257 = vpop.f32.mrf.mxu0
        %v8258 = vpop.f32.mrf.mxu0
        %v8259 = vadd.f32 %v7778, %v8258
        %v8260 = vpop.f32.mrf.mxu0
        %8261 = vmatprep.mubr.bf16.mxu0 %v2668
        %8262 = vmatmul.mubr.bf16.gmra.mxu0 %v2666
        %v8263 = vpop.f32.mrf.mxu0
        %v8264 = vadd.f32 %v7783, %v8263
        %v8265 = vpop.f32.mrf.mxu0
        %v8266 = vpop.f32.mrf.mxu0
        %v8267 = vadd.f32 %v7786, %v8266
        %v8268 = vpop.f32.mrf.mxu0
        %8269 = vmatprep.mubr.bf16.mxu0 %v2672
        %8270 = vmatmul.mubr.bf16.gmra.mxu0 %v2670
        %v8271 = vpop.f32.mrf.mxu0
        %v8272 = vadd.f32 %v7791, %v8271
        %v8273 = vpop.f32.mrf.mxu0
        %v8274 = vpop.f32.mrf.mxu0
        %v8275 = vadd.f32 %v7794, %v8274
        %v8276 = vpop.f32.mrf.mxu0
        %8277 = vmatprep.mubr.bf16.mxu0 %v2676
        %8278 = vmatmul.mubr.bf16.gmra.mxu0 %v2674
        %v8279 = vpop.f32.mrf.mxu0
        %v8280 = vadd.f32 %v7799, %v8279
        %v8281 = vpop.f32.mrf.mxu0
        %v8282 = vpop.f32.mrf.mxu0
        %v8283 = vadd.f32 %v7802, %v8282
        %v8284 = vpop.f32.mrf.mxu0
        %8285 = vmatprep.mubr.bf16.mxu0 %v2680
        %8286 = vmatmul.mubr.bf16.gmra.mxu0 %v2678
        %v8287 = vpop.f32.mrf.mxu0
        %v8288 = vadd.f32 %v7807, %v8287
        %v8289 = vpop.f32.mrf.mxu0
        %v8290 = vpop.f32.mrf.mxu0
        %v8291 = vadd.f32 %v7810, %v8290
        %v8292 = vpop.f32.mrf.mxu0
        %8293 = vmatprep.mubr.bf16.mxu0 %v2684
        %8294 = vmatmul.mubr.bf16.gmra.mxu0 %v2682
        %v8295 = vpop.f32.mrf.mxu0
        %v8296 = vadd.f32 %v7815, %v8295
        %v8297 = vpop.f32.mrf.mxu0
        %v8298 = vpop.f32.mrf.mxu0
        %v8299 = vadd.f32 %v7818, %v8298
        %v8300 = vpop.f32.mrf.mxu0
        %8301 = vmatprep.mubr.bf16.mxu0 %v2688
        %8302 = vmatmul.mubr.bf16.gmra.mxu0 %v2686
        %v8303 = vpop.f32.mrf.mxu0
        %v8304 = vadd.f32 %v7823, %v8303
        %v8305 = vpop.f32.mrf.mxu0
        %v8306 = vpop.f32.mrf.mxu0
        %v8307 = vadd.f32 %v7826, %v8306
        %v8308 = vpop.f32.mrf.mxu0
        %8309 = vmatprep.mubr.bf16.mxu0 %v2692
        %8310 = vmatmul.mubr.bf16.gmra.mxu0 %v2690
        %v8311 = vpop.f32.mrf.mxu0
        %v8312 = vadd.f32 %v7831, %v8311
        %v8313 = vpop.f32.mrf.mxu0
        %v8314 = vpop.f32.mrf.mxu0
        %v8315 = vadd.f32 %v7834, %v8314
        %v8316 = vpop.f32.mrf.mxu0
        %8317 = vmatprep.mubr.bf16.mxu0 %v2696
        %8318 = vmatmul.mubr.bf16.gmra.mxu0 %v2694
        %v8319 = vpop.f32.mrf.mxu0
        %v8320 = vadd.f32 %v7839, %v8319
        %v8321 = vpop.f32.mrf.mxu0
        %v8322 = vpop.f32.mrf.mxu0
        %v8323 = vadd.f32 %v7842, %v8322
        %v8324 = vpop.f32.mrf.mxu0
        %8325 = vmatprep.mubr.bf16.mxu0 %v2700
        %8326 = vmatmul.mubr.bf16.gmra.mxu0 %v2698
        %v8327 = vpop.f32.mrf.mxu0
        %v8328 = vadd.f32 %v7847, %v8327
        %v8329 = vpop.f32.mrf.mxu0
        %v8330 = vpop.f32.mrf.mxu0
        %v8331 = vadd.f32 %v7850, %v8330
        %v8332 = vpop.f32.mrf.mxu0
        %8333 = vmatprep.mubr.bf16.mxu0 %v2704
        %8334 = vmatmul.mubr.bf16.gmra.mxu0 %v2702
        %v8335 = vpop.f32.mrf.mxu0
        %v8336 = vadd.f32 %v7855, %v8335
        %v8337 = vpop.f32.mrf.mxu0
        %v8338 = vpop.f32.mrf.mxu0
        %v8339 = vadd.f32 %v7858, %v8338
        %v8340 = vpop.f32.mrf.mxu0
        %8341 = vmatprep.mubr.bf16.mxu0 %v2708
        %8342 = vmatmul.mubr.bf16.gmra.mxu0 %v2706
        %v8343 = vpop.f32.mrf.mxu0
        %v8344 = vadd.f32 %v7863, %v8343
        %v8345 = vpop.f32.mrf.mxu0
        %v8346 = vpop.f32.mrf.mxu0
        %v8347 = vadd.f32 %v7866, %v8346
        %v8348 = vpop.f32.mrf.mxu0
        %8349 = vmatprep.mubr.bf16.mxu0 %v2712
        %8350 = vmatmul.mubr.bf16.gmra.mxu0 %v2710
        %v8351 = vpop.f32.mrf.mxu0
        %v8352 = vadd.f32 %v7871, %v8351
        %v8353 = vpop.f32.mrf.mxu0
        %v8354 = vpop.f32.mrf.mxu0
        %v8355 = vadd.f32 %v7874, %v8354
        %v8356 = vpop.f32.mrf.mxu0
        %8357 = vmatprep.mubr.bf16.mxu0 %v2716
        %8358 = vmatmul.mubr.bf16.gmra.mxu0 %v2714
        %v8359 = vpop.f32.mrf.mxu0
        %v8360 = vadd.f32 %v7879, %v8359
        %v8361 = vpop.f32.mrf.mxu0
        %v8362 = vpop.f32.mrf.mxu0
        %v8363 = vadd.f32 %v7882, %v8362
        %v8364 = vpop.f32.mrf.mxu0
        %8365 = vmatprep.mubr.bf16.mxu0 %v2720
        %8366 = vmatmul.mubr.bf16.gmra.mxu0 %v2718
        %v8367 = vpop.f32.mrf.mxu0
        %v8368 = vadd.f32 %v7887, %v8367
        %v8369 = vpop.f32.mrf.mxu0
        %v8370 = vpop.f32.mrf.mxu0
        %v8371 = vadd.f32 %v7890, %v8370
        %v8372 = vpop.f32.mrf.mxu0
        %8373 = vmatprep.mubr.bf16.mxu0 %v2724
        %8374 = vmatmul.mubr.bf16.gmra.mxu0 %v2722
        %v8375 = vpop.f32.mrf.mxu0
        %v8376 = vadd.f32 %v7895, %v8375
        %v8377 = vpop.f32.mrf.mxu0
        %v8378 = vpop.f32.mrf.mxu0
        %v8379 = vadd.f32 %v7898, %v8378
        %v8380 = vpop.f32.mrf.mxu0
        %8381 = vmatprep.mubr.bf16.mxu0 %v2728
        %8382 = vmatmul.mubr.bf16.gmra.mxu0 %v2726
        %v8383 = vpop.f32.mrf.mxu0
        %v8384 = vadd.f32 %v7903, %v8383
        %v8385 = vpop.f32.mrf.mxu0
        %v8386 = vpop.f32.mrf.mxu0
        %v8387 = vadd.f32 %v7906, %v8386
        %v8388 = vpop.f32.mrf.mxu0
        %8389 = vmatprep.mubr.bf16.mxu0 %v2732
        %8390 = vmatmul.mubr.bf16.gmra.mxu0 %v2730
        %v8391 = vpop.f32.mrf.mxu0
        %v8392 = vadd.f32 %v7911, %v8391
        %v8393 = vpop.f32.mrf.mxu0
        %v8394 = vpop.f32.mrf.mxu0
        %v8395 = vadd.f32 %v7914, %v8394
        %v8396 = vpop.f32.mrf.mxu0
        %8397 = vmatprep.mubr.bf16.mxu0 %v2736
        %8398 = vmatmul.mubr.bf16.gmra.mxu0 %v2734
        %v8399 = vpop.f32.mrf.mxu0
        %v8400 = vadd.f32 %v7919, %v8399
        %v8401 = vpop.f32.mrf.mxu0
        %v8402 = vpop.f32.mrf.mxu0
        %v8403 = vadd.f32 %v7922, %v8402
        %v8404 = vpop.f32.mrf.mxu0
        %8405 = vmatprep.mubr.bf16.mxu0 %v2740
        %8406 = vmatmul.mubr.bf16.gmra.mxu0 %v2738
        %v8407 = vpop.f32.mrf.mxu0
        %v8408 = vadd.f32 %v7927, %v8407
        %v8409 = vpop.f32.mrf.mxu0
        %v8410 = vpop.f32.mrf.mxu0
        %v8411 = vadd.f32 %v7930, %v8410
        %v8412 = vpop.f32.mrf.mxu0
        %8413 = vmatprep.mubr.bf16.mxu0 %v2744
        %8414 = vmatmul.mubr.bf16.gmra.mxu0 %v2742
        %v8415 = vpop.f32.mrf.mxu0
        %v8416 = vadd.f32 %v7935, %v8415
        %v8417 = vpop.f32.mrf.mxu0
        %v8418 = vpop.f32.mrf.mxu0
        %v8419 = vadd.f32 %v7938, %v8418
        %v8420 = vpop.f32.mrf.mxu0
        %8421 = vmatprep.mubr.bf16.mxu0 %v2748
        %8422 = vmatmul.mubr.bf16.gmra.mxu0 %v2746
        %v8423 = vpop.f32.mrf.mxu0
        %v8424 = vadd.f32 %v7943, %v8423
        %v8425 = vpop.f32.mrf.mxu0
        %v8426 = vpop.f32.mrf.mxu0
        %v8427 = vadd.f32 %v7946, %v8426
        %v8428 = vpop.f32.mrf.mxu0
        %8429 = vmatprep.mubr.bf16.mxu0 %v2752
        %8430 = vmatmul.mubr.bf16.gmra.mxu0 %v2750
        %v8431 = vpop.f32.mrf.mxu0
        %v8432 = vadd.f32 %v7951, %v8431
        %v8433 = vpop.f32.mrf.mxu0
        %v8434 = vpop.f32.mrf.mxu0
        %v8435 = vadd.f32 %v7954, %v8434
        %v8436 = vpop.f32.mrf.mxu0
        %8437 = vmatprep.mubr.bf16.mxu0 %v2756
        %8438 = vmatmul.mubr.bf16.gmra.mxu0 %v2754
        %v8439 = vpop.f32.mrf.mxu0
        %v8440 = vadd.f32 %v7959, %v8439
        %v8441 = vpop.f32.mrf.mxu0
        %v8442 = vpop.f32.mrf.mxu0
        %v8443 = vadd.f32 %v7962, %v8442
        %v8444 = vpop.f32.mrf.mxu0
        %8445 = vmatprep.mubr.bf16.mxu0 %v2760
        %8446 = vmatmul.mubr.bf16.gmra.mxu0 %v2758
        %v8447 = vpop.f32.mrf.mxu0
        %v8448 = vadd.f32 %v7967, %v8447
        %v8449 = vpop.f32.mrf.mxu0
        %v8450 = vpop.f32.mrf.mxu0
        %v8451 = vadd.f32 %v7970, %v8450
        %v8452 = vpop.f32.mrf.mxu0
        %8453 = vmatprep.mubr.bf16.mxu0 %v2764
        %8454 = vmatmul.mubr.bf16.gmra.mxu0 %v2762
        %v8455 = vpop.f32.mrf.mxu0
        %v8456 = vadd.f32 %v7975, %v8455
        %v8457 = vpop.f32.mrf.mxu0
        %v8458 = vpop.f32.mrf.mxu0
        %v8459 = vadd.f32 %v7978, %v8458
        %v8460 = vpop.f32.mrf.mxu0
        %8461 = vmatprep.mubr.bf16.mxu0 %v2768
        %8462 = vmatmul.mubr.bf16.gmra.mxu0 %v2766
        %v8463 = vpop.f32.mrf.mxu0
        %v8464 = vadd.f32 %v7983, %v8463
        %v8465 = vpop.f32.mrf.mxu0
        %v8466 = vpop.f32.mrf.mxu0
        %v8467 = vadd.f32 %v7986, %v8466
        %v8468 = vpop.f32.mrf.mxu0
        %8469 = vmatprep.mubr.bf16.mxu0 %v2772
        %8470 = vmatmul.mubr.bf16.gmra.mxu0 %v2770
        %v8471 = vpop.f32.mrf.mxu0
        %v8472 = vadd.f32 %v7991, %v8471
        %v8473 = vpop.f32.mrf.mxu0
        %v8474 = vpop.f32.mrf.mxu0
        %v8475 = vadd.f32 %v7994, %v8474
        %v8476 = vpop.f32.mrf.mxu0
        %8477 = vmatprep.mubr.bf16.mxu0 %v2776
        %8478 = vmatmul.mubr.bf16.gmra.mxu0 %v2774
        %v8479 = vpop.f32.mrf.mxu0
        %v8480 = vadd.f32 %v7999, %v8479
        %v8481 = vpop.f32.mrf.mxu0
        %v8482 = vpop.f32.mrf.mxu0
        %v8483 = vadd.f32 %v8002, %v8482
        %v8484 = vpop.f32.mrf.mxu0
        %8485 = vmatprep.mubr.bf16.mxu0 %v2780
        %8486 = vmatmul.mubr.bf16.gmra.mxu0 %v2778
        %v8487 = vpop.f32.mrf.mxu0
        %v8488 = vadd.f32 %v8007, %v8487
        %v8489 = vpop.f32.mrf.mxu0
        %v8490 = vpop.f32.mrf.mxu0
        %v8491 = vadd.f32 %v8010, %v8490
        %v8492 = vpop.f32.mrf.mxu0
        %8493 = vmatprep.mubr.bf16.mxu0 %v2784
        %8494 = vmatmul.mubr.bf16.gmra.mxu0 %v2782
        %v8495 = vpop.f32.mrf.mxu0
        %v8496 = vadd.f32 %v8015, %v8495
        %v8497 = vpop.f32.mrf.mxu0
        %v8498 = vpop.f32.mrf.mxu0
        %v8499 = vadd.f32 %v8018, %v8498
        %v8500 = vpop.f32.mrf.mxu0
        %8501 = vmatprep.mubr.bf16.mxu0 %v2788
        %8502 = vmatmul.mubr.bf16.gmra.mxu0 %v2786
        %v8503 = vpop.f32.mrf.mxu0
        %v8504 = vadd.f32 %v8023, %v8503
        %v8505 = vpop.f32.mrf.mxu0
        %v8506 = vpop.f32.mrf.mxu0
        %v8507 = vadd.f32 %v8026, %v8506
        %v8508 = vpop.f32.mrf.mxu0
        %8509 = vmatprep.mubr.bf16.mxu0 %v2792
        %8510 = vmatmul.mubr.bf16.gmra.mxu0 %v2790
        %v8511 = vpop.f32.mrf.mxu0
        %v8512 = vadd.f32 %v8031, %v8511
        %v8513 = vpop.f32.mrf.mxu0
        %v8514 = vpop.f32.mrf.mxu0
        %v8515 = vadd.f32 %v8034, %v8514
        %v8516 = vpop.f32.mrf.mxu0
        %8517 = vmatprep.mubr.bf16.mxu0 %v2796
        %8518 = vmatmul.mubr.bf16.gmra.mxu0 %v2794
        %v8519 = vpop.f32.mrf.mxu0
        %v8520 = vadd.f32 %v8039, %v8519
        %v8521 = vpop.f32.mrf.mxu0
        %v8522 = vpop.f32.mrf.mxu0
        %v8523 = vadd.f32 %v8042, %v8522
        %v8524 = vpop.f32.mrf.mxu0
        %8525 = vmatprep.mubr.bf16.mxu0 %v2988
        %8526 = vmatmul.mubr.bf16.gmra.mxu0 %v2986
        %v8527 = vpop.f32.mrf.mxu0
        %v8528 = vadd.f32 %v8047, %v8527
        %v8529 = vpop.f32.mrf.mxu0
        %v8530 = vpop.f32.mrf.mxu0
        %v8531 = vadd.f32 %v8050, %v8530
        %v8532 = vpop.f32.mrf.mxu0
        %8533 = vmatprep.mubr.bf16.mxu0 %v2992
        %8534 = vmatmul.mubr.bf16.gmra.mxu0 %v2990
        %v8535 = vpop.f32.mrf.mxu0
        %v8536 = vadd.f32 %v8055, %v8535
        %v8537 = vpop.f32.mrf.mxu0
        %v8538 = vpop.f32.mrf.mxu0
        %v8539 = vadd.f32 %v8058, %v8538
        %v8540 = vpop.f32.mrf.mxu0
        %8541 = vmatprep.mubr.bf16.mxu0 %v2996
        %8542 = vmatmul.mubr.bf16.gmra.mxu0 %v2994
        %v8543 = vpop.f32.mrf.mxu0
        %v8544 = vadd.f32 %v8063, %v8543
        %v8545 = vpop.f32.mrf.mxu0
        %v8546 = vpop.f32.mrf.mxu0
        %v8547 = vadd.f32 %v8066, %v8546
        %v8548 = vpop.f32.mrf.mxu0
        %8549 = vmatprep.mubr.bf16.mxu0 %v3000
        %8550 = vmatmul.mubr.bf16.gmra.mxu0 %v2998
        %v8551 = vpop.f32.mrf.mxu0
        %v8552 = vadd.f32 %v8071, %v8551
        %v8553 = vpop.f32.mrf.mxu0
        %v8554 = vpop.f32.mrf.mxu0
        %v8555 = vadd.f32 %v8074, %v8554
        %v8556 = vpop.f32.mrf.mxu0
        %8557 = vmatprep.mubr.bf16.mxu0 %v3090
        %8558 = vmatmul.mubr.bf16.gmra.mxu0 %v3088
        %v8559 = vpop.f32.mrf.mxu0
        %v8560 = vadd.f32 %v8079, %v8559
        %v8561 = vpop.f32.mrf.mxu0
        %v8562 = vpop.f32.mrf.mxu0
        %v8563 = vadd.f32 %v8082, %v8562
        %v8564 = vpop.f32.mrf.mxu0
        %8565 = vmatprep.mubr.bf16.mxu0 %v3094
        %8566 = vmatmul.mubr.bf16.gmra.mxu0 %v3092
        %v8567 = vpop.f32.mrf.mxu0
        %v8568 = vadd.f32 %v8087, %v8567
        %v8569 = vpop.f32.mrf.mxu0
        %v8570 = vpop.f32.mrf.mxu0
        %v8571 = vadd.f32 %v8090, %v8570
        %v8572 = vpop.f32.mrf.mxu0
        %8573 = vmatprep.mubr.bf16.mxu0 %v3098
        %8574 = vmatmul.mubr.bf16.gmra.mxu0 %v3096
        %v8575 = vpop.f32.mrf.mxu0
        %v8576 = vadd.f32 %v8095, %v8575
        %v8577 = vpop.f32.mrf.mxu0
        %v8578 = vpop.f32.mrf.mxu0
        %v8579 = vadd.f32 %v8098, %v8578
        %v8580 = vpop.f32.mrf.mxu0
        %8581 = vmatprep.mubr.bf16.mxu0 %v3102
        %8582 = vmatmul.mubr.bf16.gmra.mxu0 %v3100
        %v8583 = vpop.f32.mrf.mxu0
        %v8584 = vadd.f32 %v8103, %v8583
        %v8585 = vpop.f32.mrf.mxu0
        %v8586 = vpop.f32.mrf.mxu0
        %v8587 = vadd.f32 %v8106, %v8586
        %v8588 = vpop.f32.mrf.mxu0
        %8589 = vmatprep.mubr.bf16.mxu0 %v3106
        %8590 = vmatmul.mubr.bf16.gmra.mxu0 %v3104
        %v8591 = vpop.f32.mrf.mxu0
        %v8592 = vadd.f32 %v8111, %v8591
        %v8593 = vpop.f32.mrf.mxu0
        %v8594 = vpop.f32.mrf.mxu0
        %v8595 = vadd.f32 %v8114, %v8594
        %v8596 = vpop.f32.mrf.mxu0
        %8597 = vdwg.mxu0
        %v8598 = vlaneseq
        %v8599 = vshrl.u32 %v8598, 7
        %v8600 = vadd.s32 %v8599, 8
        %v8601 = vadd.s32 %v8599, 16
        %v8602 = vadd.s32 %v8599, 24
        %v8603 = vadd.s32 %v8599, 32
        %v8604 = vadd.s32 %v8599, 40
        %v8605 = vadd.s32 %v8599, 48
        %v8606 = vadd.s32 %v8599, 56
        %v8607 = vadd.s32 %v8599, 64
        %v8608 = vadd.s32 %v8599, 72
        %v8609 = vadd.s32 %v8599, 80
        %v8610 = vadd.s32 %v8599, 88
        %v8611 = vadd.s32 %v8599, 96
        %v8612 = vadd.s32 %v8599, 104
        %v8613 = vadd.s32 %v8599, 112
        %v8614 = vadd.s32 %v8599, 120
        %v8615 = vadd.s32 %v8599, 128
        %v8616 = vadd.s32 %v8599, 136
        %v8617 = vadd.s32 %v8599, 144
        %v8618 = vadd.s32 %v8599, 152
        %v8619 = vadd.s32 %v8599, 160
        %v8620 = vadd.s32 %v8599, 168
        %v8621 = vadd.s32 %v8599, 176
        %v8622 = vadd.s32 %v8599, 184
        %v8623 = vadd.s32 %v8599, 192
        %v8624 = vadd.s32 %v8599, 200
        %v8625 = vadd.s32 %v8599, 208
        %v8626 = vadd.s32 %v8599, 216
        %v8627 = vadd.s32 %v8599, 224
        %v8628 = vadd.s32 %v8599, 232
        %v8629 = vadd.s32 %v8599, 240
        %v8630 = vadd.s32 %v8599, 248
        %v8631 = vadd.s32 %v8599, 256
        %v8632 = vadd.s32 %v8599, 264
        %v8633 = vadd.s32 %v8599, 272
        %v8634 = vadd.s32 %v8599, 280
        %v8635 = vadd.s32 %v8599, 288
        %v8636 = vadd.s32 %v8599, 296
        %v8637 = vadd.s32 %v8599, 304
        %v8638 = vadd.s32 %v8599, 312
        %v8639 = vadd.s32 %v8599, 320
        %v8640 = vadd.s32 %v8599, 328
        %v8641 = vadd.s32 %v8599, 336
        %v8642 = vadd.s32 %v8599, 344
        %v8643 = vadd.s32 %v8599, 352
        %v8644 = vadd.s32 %v8599, 360
        %v8645 = vadd.s32 %v8599, 368
        %v8646 = vadd.s32 %v8599, 376
        %v8647 = vadd.s32 %v8599, 384
        %v8648 = vadd.s32 %v8599, 392
        %v8649 = vadd.s32 %v8599, 400
        %v8650 = vadd.s32 %v8599, 408
        %v8651 = vadd.s32 %v8599, 416
        %v8652 = vadd.s32 %v8599, 424
        %v8653 = vadd.s32 %v8599, 432
        %v8654 = vadd.s32 %v8599, 440
        %v8655 = vadd.s32 %v8599, 448
        %v8656 = vadd.s32 %v8599, 456
        %v8657 = vadd.s32 %v8599, 464
        %v8658 = vadd.s32 %v8599, 472
        %v8659 = vadd.s32 %v8599, 480
        %v8660 = vadd.s32 %v8599, 488
        %v8661 = vadd.s32 %v8599, 496
        %v8662 = vadd.s32 %v8599, 504
        %v8663 = vadd.s32 %v8599, 512
        %v8664 = vadd.s32 %v8599, 520
        %v8665 = vadd.s32 %v8599, 528
        %v8666 = vadd.s32 %v8599, 536
        %v8667 = vadd.s32 %v8599, 544
        %v8668 = vadd.s32 %v8599, 552
        %v8669 = vadd.s32 %v8599, 560
        %v8670 = vadd.s32 %v8599, 568
        %v8671 = vadd.s32 %v8599, 576
        %v8672 = vadd.s32 %v8599, 584
        %v8673 = vadd.s32 %v8599, 592
        %v8674 = vadd.s32 %v8599, 600
        %v8675 = vadd.s32 %v8599, 608
        %v8676 = vadd.s32 %v8599, 616
        %v8677 = vadd.s32 %v8599, 624
        %v8678 = vadd.s32 %v8599, 632
        %v8679 = vadd.s32 %v8599, 640
        %v8680 = vadd.s32 %v8599, 648
        %v8681 = vadd.s32 %v8599, 656
        %v8682 = vadd.s32 %v8599, 664
        %v8683 = vadd.s32 %v8599, 672
        %v8684 = vadd.s32 %v8599, 680
        %v8685 = vadd.s32 %v8599, 688
        %v8686 = vadd.s32 %v8599, 696
        %v8687 = vadd.s32 %v8599, 704
        %v8688 = vadd.s32 %v8599, 712
        %v8689 = vadd.s32 %v8599, 720
        %v8690 = vadd.s32 %v8599, 728
        %v8691 = vadd.s32 %v8599, 736
        %v8692 = vadd.s32 %v8599, 744
        %v8693 = vadd.s32 %v8599, 752
        %v8694 = vadd.s32 %v8599, 760
        %v8695 = vadd.s32 %v8599, 768
        %v8696 = vadd.s32 %v8599, 776
        %v8697 = vadd.s32 %v8599, 784
        %v8698 = vadd.s32 %v8599, 792
        %v8699 = vadd.s32 %v8599, 800
        %v8700 = vadd.s32 %v8599, 808
        %v8701 = vadd.s32 %v8599, 816
        %v8702 = vadd.s32 %v8599, 824
        %v8703 = vadd.s32 %v8599, 832
        %v8704 = vadd.s32 %v8599, 840
        %v8705 = vadd.s32 %v8599, 848
        %v8706 = vadd.s32 %v8599, 856
        %v8707 = vadd.s32 %v8599, 864
        %v8708 = vadd.s32 %v8599, 872
        %v8709 = vadd.s32 %v8599, 880
        %v8710 = vadd.s32 %v8599, 888
        %v8711 = vand.u32 %v8599, 31
        %v8712 = vand.u32 %v8600, 31
        %v8713 = vand.u32 %v8601, 31
        %v8714 = vand.u32 %v8602, 31
        %v8715 = vand.u32 %v8603, 31
        %v8716 = vand.u32 %v8604, 31
        %v8717 = vand.u32 %v8605, 31
        %v8718 = vand.u32 %v8606, 31
        %v8719 = vand.u32 %v8607, 31
        %v8720 = vand.u32 %v8608, 31
        %v8721 = vand.u32 %v8609, 31
        %v8722 = vand.u32 %v8610, 31
        %v8723 = vand.u32 %v8611, 31
        %v8724 = vand.u32 %v8612, 31
        %v8725 = vand.u32 %v8613, 31
        %v8726 = vand.u32 %v8614, 31
        %v8727 = vand.u32 %v8615, 31
        %v8728 = vand.u32 %v8616, 31
        %v8729 = vand.u32 %v8617, 31
        %v8730 = vand.u32 %v8618, 31
        %v8731 = vand.u32 %v8619, 31
        %v8732 = vand.u32 %v8620, 31
        %v8733 = vand.u32 %v8621, 31
        %v8734 = vand.u32 %v8622, 31
        %v8735 = vand.u32 %v8623, 31
        %v8736 = vand.u32 %v8624, 31
        %v8737 = vand.u32 %v8625, 31
        %v8738 = vand.u32 %v8626, 31
        %v8739 = vand.u32 %v8627, 31
        %v8740 = vand.u32 %v8628, 31
        %v8741 = vand.u32 %v8629, 31
        %v8742 = vand.u32 %v8630, 31
        %v8743 = vand.u32 %v8631, 31
        %v8744 = vand.u32 %v8632, 31
        %v8745 = vand.u32 %v8633, 31
        %v8746 = vand.u32 %v8634, 31
        %v8747 = vand.u32 %v8635, 31
        %v8748 = vand.u32 %v8636, 31
        %v8749 = vand.u32 %v8637, 31
        %v8750 = vand.u32 %v8638, 31
        %v8751 = vand.u32 %v8639, 31
        %v8752 = vand.u32 %v8640, 31
        %v8753 = vand.u32 %v8641, 31
        %v8754 = vand.u32 %v8642, 31
        %v8755 = vand.u32 %v8643, 31
        %v8756 = vand.u32 %v8644, 31
        %v8757 = vand.u32 %v8645, 31
        %v8758 = vand.u32 %v8646, 31
        %v8759 = vand.u32 %v8647, 31
        %v8760 = vand.u32 %v8648, 31
        %v8761 = vand.u32 %v8649, 31
        %v8762 = vand.u32 %v8650, 31
        %v8763 = vand.u32 %v8651, 31
        %v8764 = vand.u32 %v8652, 31
        %v8765 = vand.u32 %v8653, 31
        %v8766 = vand.u32 %v8654, 31
        %v8767 = vand.u32 %v8655, 31
        %v8768 = vand.u32 %v8656, 31
        %v8769 = vand.u32 %v8657, 31
        %v8770 = vand.u32 %v8658, 31
        %v8771 = vand.u32 %v8659, 31
        %v8772 = vand.u32 %v8660, 31
        %v8773 = vand.u32 %v8661, 31
        %v8774 = vand.u32 %v8662, 31
        %v8775 = vand.u32 %v8663, 31
        %v8776 = vand.u32 %v8664, 31
        %v8777 = vand.u32 %v8665, 31
        %v8778 = vand.u32 %v8666, 31
        %v8779 = vand.u32 %v8667, 31
        %v8780 = vand.u32 %v8668, 31
        %v8781 = vand.u32 %v8669, 31
        %v8782 = vand.u32 %v8670, 31
        %v8783 = vand.u32 %v8671, 31
        %v8784 = vand.u32 %v8672, 31
        %v8785 = vand.u32 %v8673, 31
        %v8786 = vand.u32 %v8674, 31
        %v8787 = vand.u32 %v8675, 31
        %v8788 = vand.u32 %v8676, 31
        %v8789 = vand.u32 %v8677, 31
        %v8790 = vand.u32 %v8678, 31
        %v8791 = vand.u32 %v8679, 31
        %v8792 = vand.u32 %v8680, 31
        %v8793 = vand.u32 %v8681, 31
        %v8794 = vand.u32 %v8682, 31
        %v8795 = vand.u32 %v8683, 31
        %v8796 = vand.u32 %v8684, 31
        %v8797 = vand.u32 %v8685, 31
        %v8798 = vand.u32 %v8686, 31
        %v8799 = vand.u32 %v8687, 31
        %v8800 = vand.u32 %v8688, 31
        %v8801 = vand.u32 %v8689, 31
        %v8802 = vand.u32 %v8690, 31
        %v8803 = vand.u32 %v8691, 31
        %v8804 = vand.u32 %v8692, 31
        %v8805 = vand.u32 %v8693, 31
        %v8806 = vand.u32 %v8694, 31
        %v8807 = vand.u32 %v8695, 31
        %v8808 = vand.u32 %v8696, 31
        %v8809 = vand.u32 %v8697, 31
        %v8810 = vand.u32 %v8698, 31
        %v8811 = vand.u32 %v8699, 31
        %v8812 = vand.u32 %v8700, 31
        %v8813 = vand.u32 %v8701, 31
        %v8814 = vand.u32 %v8702, 31
        %v8815 = vand.u32 %v8703, 31
        %v8816 = vand.u32 %v8704, 31
        %v8817 = vand.u32 %v8705, 31
        %v8818 = vand.u32 %v8706, 31
        %v8819 = vand.u32 %v8707, 31
        %v8820 = vand.u32 %v8708, 31
        %v8821 = vand.u32 %v8709, 31
        %v8822 = vand.u32 %v8710, 31
        %vm8823 = vcmp.lt.s32.totalorder %v8711, 28
        %vm8824 = vcmp.lt.s32.totalorder %v8712, 28
        %vm8825 = vcmp.lt.s32.totalorder %v8713, 28
        %vm8826 = vcmp.lt.s32.totalorder %v8714, 28
        %vm8827 = vcmp.lt.s32.totalorder %v8715, 28
        %vm8828 = vcmp.lt.s32.totalorder %v8716, 28
        %vm8829 = vcmp.lt.s32.totalorder %v8717, 28
        %vm8830 = vcmp.lt.s32.totalorder %v8718, 28
        %vm8831 = vcmp.lt.s32.totalorder %v8719, 28
        %vm8832 = vcmp.lt.s32.totalorder %v8720, 28
        %vm8833 = vcmp.lt.s32.totalorder %v8721, 28
        %vm8834 = vcmp.lt.s32.totalorder %v8722, 28
        %vm8835 = vcmp.lt.s32.totalorder %v8723, 28
        %vm8836 = vcmp.lt.s32.totalorder %v8724, 28
        %vm8837 = vcmp.lt.s32.totalorder %v8725, 28
        %vm8838 = vcmp.lt.s32.totalorder %v8726, 28
        %vm8839 = vcmp.lt.s32.totalorder %v8727, 28
        %vm8840 = vcmp.lt.s32.totalorder %v8728, 28
        %vm8841 = vcmp.lt.s32.totalorder %v8729, 28
        %vm8842 = vcmp.lt.s32.totalorder %v8730, 28
        %vm8843 = vcmp.lt.s32.totalorder %v8731, 28
        %vm8844 = vcmp.lt.s32.totalorder %v8732, 28
        %vm8845 = vcmp.lt.s32.totalorder %v8733, 28
        %vm8846 = vcmp.lt.s32.totalorder %v8734, 28
        %vm8847 = vcmp.lt.s32.totalorder %v8735, 28
        %vm8848 = vcmp.lt.s32.totalorder %v8736, 28
        %vm8849 = vcmp.lt.s32.totalorder %v8737, 28
        %vm8850 = vcmp.lt.s32.totalorder %v8738, 28
        %vm8851 = vcmp.lt.s32.totalorder %v8739, 28
        %vm8852 = vcmp.lt.s32.totalorder %v8740, 28
        %vm8853 = vcmp.lt.s32.totalorder %v8741, 28
        %vm8854 = vcmp.lt.s32.totalorder %v8742, 28
        %vm8855 = vcmp.lt.s32.totalorder %v8743, 28
        %vm8856 = vcmp.lt.s32.totalorder %v8744, 28
        %vm8857 = vcmp.lt.s32.totalorder %v8745, 28
        %vm8858 = vcmp.lt.s32.totalorder %v8746, 28
        %vm8859 = vcmp.lt.s32.totalorder %v8747, 28
        %vm8860 = vcmp.lt.s32.totalorder %v8748, 28
        %vm8861 = vcmp.lt.s32.totalorder %v8749, 28
        %vm8862 = vcmp.lt.s32.totalorder %v8750, 28
        %vm8863 = vcmp.lt.s32.totalorder %v8751, 28
        %vm8864 = vcmp.lt.s32.totalorder %v8752, 28
        %vm8865 = vcmp.lt.s32.totalorder %v8753, 28
        %vm8866 = vcmp.lt.s32.totalorder %v8754, 28
        %vm8867 = vcmp.lt.s32.totalorder %v8755, 28
        %vm8868 = vcmp.lt.s32.totalorder %v8756, 28
        %vm8869 = vcmp.lt.s32.totalorder %v8757, 28
        %vm8870 = vcmp.lt.s32.totalorder %v8758, 28
        %vm8871 = vcmp.lt.s32.totalorder %v8759, 28
        %vm8872 = vcmp.lt.s32.totalorder %v8760, 28
        %vm8873 = vcmp.lt.s32.totalorder %v8761, 28
        %vm8874 = vcmp.lt.s32.totalorder %v8762, 28
        %vm8875 = vcmp.lt.s32.totalorder %v8763, 28
        %vm8876 = vcmp.lt.s32.totalorder %v8764, 28
        %vm8877 = vcmp.lt.s32.totalorder %v8765, 28
        %vm8878 = vcmp.lt.s32.totalorder %v8766, 28
        %vm8879 = vcmp.lt.s32.totalorder %v8767, 28
        %vm8880 = vcmp.lt.s32.totalorder %v8768, 28
        %vm8881 = vcmp.lt.s32.totalorder %v8769, 28
        %vm8882 = vcmp.lt.s32.totalorder %v8770, 28
        %vm8883 = vcmp.lt.s32.totalorder %v8771, 28
        %vm8884 = vcmp.lt.s32.totalorder %v8772, 28
        %vm8885 = vcmp.lt.s32.totalorder %v8773, 28
        %vm8886 = vcmp.lt.s32.totalorder %v8774, 28
        %vm8887 = vcmp.lt.s32.totalorder %v8775, 28
        %vm8888 = vcmp.lt.s32.totalorder %v8776, 28
        %vm8889 = vcmp.lt.s32.totalorder %v8777, 28
        %vm8890 = vcmp.lt.s32.totalorder %v8778, 28
        %vm8891 = vcmp.lt.s32.totalorder %v8779, 28
        %vm8892 = vcmp.lt.s32.totalorder %v8780, 28
        %vm8893 = vcmp.lt.s32.totalorder %v8781, 28
        %vm8894 = vcmp.lt.s32.totalorder %v8782, 28
        %vm8895 = vcmp.lt.s32.totalorder %v8783, 28
        %vm8896 = vcmp.lt.s32.totalorder %v8784, 28
        %vm8897 = vcmp.lt.s32.totalorder %v8785, 28
        %vm8898 = vcmp.lt.s32.totalorder %v8786, 28
        %vm8899 = vcmp.lt.s32.totalorder %v8787, 28
        %vm8900 = vcmp.lt.s32.totalorder %v8788, 28
        %vm8901 = vcmp.lt.s32.totalorder %v8789, 28
        %vm8902 = vcmp.lt.s32.totalorder %v8790, 28
        %vm8903 = vcmp.lt.s32.totalorder %v8791, 28
        %vm8904 = vcmp.lt.s32.totalorder %v8792, 28
        %vm8905 = vcmp.lt.s32.totalorder %v8793, 28
        %vm8906 = vcmp.lt.s32.totalorder %v8794, 28
        %vm8907 = vcmp.lt.s32.totalorder %v8795, 28
        %vm8908 = vcmp.lt.s32.totalorder %v8796, 28
        %vm8909 = vcmp.lt.s32.totalorder %v8797, 28
        %vm8910 = vcmp.lt.s32.totalorder %v8798, 28
        %vm8911 = vcmp.lt.s32.totalorder %v8799, 28
        %vm8912 = vcmp.lt.s32.totalorder %v8800, 28
        %vm8913 = vcmp.lt.s32.totalorder %v8801, 28
        %vm8914 = vcmp.lt.s32.totalorder %v8802, 28
        %vm8915 = vcmp.lt.s32.totalorder %v8803, 28
        %vm8916 = vcmp.lt.s32.totalorder %v8804, 28
        %vm8917 = vcmp.lt.s32.totalorder %v8805, 28
        %vm8918 = vcmp.lt.s32.totalorder %v8806, 28
        %vm8919 = vcmp.lt.s32.totalorder %v8807, 28
        %vm8920 = vcmp.lt.s32.totalorder %v8808, 28
        %vm8921 = vcmp.lt.s32.totalorder %v8809, 28
        %vm8922 = vcmp.lt.s32.totalorder %v8810, 28
        %vm8923 = vcmp.lt.s32.totalorder %v8811, 28
        %vm8924 = vcmp.lt.s32.totalorder %v8812, 28
        %vm8925 = vcmp.lt.s32.totalorder %v8813, 28
        %vm8926 = vcmp.lt.s32.totalorder %v8814, 28
        %vm8927 = vcmp.lt.s32.totalorder %v8815, 28
        %vm8928 = vcmp.lt.s32.totalorder %v8816, 28
        %vm8929 = vcmp.lt.s32.totalorder %v8817, 28
        %vm8930 = vcmp.lt.s32.totalorder %v8818, 28
        %vm8931 = vcmp.lt.s32.totalorder %v8819, 28
        %vm8932 = vcmp.lt.s32.totalorder %v8820, 28
        %vm8933 = vcmp.lt.s32.totalorder %v8821, 28
        %vm8934 = vcmp.lt.s32.totalorder %v8822, 28
        %v8935 = vsel %vm8823, 1, 0
        %v8936 = vsel %vm8824, 1, 0
        %v8937 = vsel %vm8825, 1, 0
        %v8938 = vsel %vm8826, 1, 0
        %v8939 = vsel %vm8827, 1, 0
        %v8940 = vsel %vm8828, 1, 0
        %v8941 = vsel %vm8829, 1, 0
        %v8942 = vsel %vm8830, 1, 0
        %v8943 = vsel %vm8831, 1, 0
        %v8944 = vsel %vm8832, 1, 0
        %v8945 = vsel %vm8833, 1, 0
        %v8946 = vsel %vm8834, 1, 0
        %v8947 = vsel %vm8835, 1, 0
        %v8948 = vsel %vm8836, 1, 0
        %v8949 = vsel %vm8837, 1, 0
        %v8950 = vsel %vm8838, 1, 0
        %v8951 = vsel %vm8839, 1, 0
        %v8952 = vsel %vm8840, 1, 0
        %v8953 = vsel %vm8841, 1, 0
        %v8954 = vsel %vm8842, 1, 0
        %v8955 = vsel %vm8843, 1, 0
        %v8956 = vsel %vm8844, 1, 0
        %v8957 = vsel %vm8845, 1, 0
        %v8958 = vsel %vm8846, 1, 0
        %v8959 = vsel %vm8847, 1, 0
        %v8960 = vsel %vm8848, 1, 0
        %v8961 = vsel %vm8849, 1, 0
        %v8962 = vsel %vm8850, 1, 0
        %v8963 = vsel %vm8851, 1, 0
        %v8964 = vsel %vm8852, 1, 0
        %v8965 = vsel %vm8853, 1, 0
        %v8966 = vsel %vm8854, 1, 0
        %v8967 = vsel %vm8855, 1, 0
        %v8968 = vsel %vm8856, 1, 0
        %v8969 = vsel %vm8857, 1, 0
        %v8970 = vsel %vm8858, 1, 0
        %v8971 = vsel %vm8859, 1, 0
        %v8972 = vsel %vm8860, 1, 0
        %v8973 = vsel %vm8861, 1, 0
        %v8974 = vsel %vm8862, 1, 0
        %v8975 = vsel %vm8863, 1, 0
        %v8976 = vsel %vm8864, 1, 0
        %v8977 = vsel %vm8865, 1, 0
        %v8978 = vsel %vm8866, 1, 0
        %v8979 = vsel %vm8867, 1, 0
        %v8980 = vsel %vm8868, 1, 0
        %v8981 = vsel %vm8869, 1, 0
        %v8982 = vsel %vm8870, 1, 0
        %v8983 = vsel %vm8871, 1, 0
        %v8984 = vsel %vm8872, 1, 0
        %v8985 = vsel %vm8873, 1, 0
        %v8986 = vsel %vm8874, 1, 0
        %v8987 = vsel %vm8875, 1, 0
        %v8988 = vsel %vm8876, 1, 0
        %v8989 = vsel %vm8877, 1, 0
        %v8990 = vsel %vm8878, 1, 0
        %v8991 = vsel %vm8879, 1, 0
        %v8992 = vsel %vm8880, 1, 0
        %v8993 = vsel %vm8881, 1, 0
        %v8994 = vsel %vm8882, 1, 0
        %v8995 = vsel %vm8883, 1, 0
        %v8996 = vsel %vm8884, 1, 0
        %v8997 = vsel %vm8885, 1, 0
        %v8998 = vsel %vm8886, 1, 0
        %v8999 = vsel %vm8887, 1, 0
        %v9000 = vsel %vm8888, 1, 0
        %v9001 = vsel %vm8889, 1, 0
        %v9002 = vsel %vm8890, 1, 0
        %v9003 = vsel %vm8891, 1, 0
        %v9004 = vsel %vm8892, 1, 0
        %v9005 = vsel %vm8893, 1, 0
        %v9006 = vsel %vm8894, 1, 0
        %v9007 = vsel %vm8895, 1, 0
        %v9008 = vsel %vm8896, 1, 0
        %v9009 = vsel %vm8897, 1, 0
        %v9010 = vsel %vm8898, 1, 0
        %v9011 = vsel %vm8899, 1, 0
        %v9012 = vsel %vm8900, 1, 0
        %v9013 = vsel %vm8901, 1, 0
        %v9014 = vsel %vm8902, 1, 0
        %v9015 = vsel %vm8903, 1, 0
        %v9016 = vsel %vm8904, 1, 0
        %v9017 = vsel %vm8905, 1, 0
        %v9018 = vsel %vm8906, 1, 0
        %v9019 = vsel %vm8907, 1, 0
        %v9020 = vsel %vm8908, 1, 0
        %v9021 = vsel %vm8909, 1, 0
        %v9022 = vsel %vm8910, 1, 0
        %v9023 = vsel %vm8911, 1, 0
        %v9024 = vsel %vm8912, 1, 0
        %v9025 = vsel %vm8913, 1, 0
        %v9026 = vsel %vm8914, 1, 0
        %v9027 = vsel %vm8915, 1, 0
        %v9028 = vsel %vm8916, 1, 0
        %v9029 = vsel %vm8917, 1, 0
        %v9030 = vsel %vm8918, 1, 0
        %v9031 = vsel %vm8919, 1, 0
        %v9032 = vsel %vm8920, 1, 0
        %v9033 = vsel %vm8921, 1, 0
        %v9034 = vsel %vm8922, 1, 0
        %v9035 = vsel %vm8923, 1, 0
        %v9036 = vsel %vm8924, 1, 0
        %v9037 = vsel %vm8925, 1, 0
        %v9038 = vsel %vm8926, 1, 0
        %v9039 = vsel %vm8927, 1, 0
        %v9040 = vsel %vm8928, 1, 0
        %v9041 = vsel %vm8929, 1, 0
        %v9042 = vsel %vm8930, 1, 0
        %v9043 = vsel %vm8931, 1, 0
        %v9044 = vsel %vm8932, 1, 0
        %v9045 = vsel %vm8933, 1, 0
        %v9046 = vsel %vm8934, 1, 0
        %v9047 = vcvt.s32.f32 %v8935
        %v9048 = vcvt.s32.f32 %v8936
        %v9049 = vcvt.s32.f32 %v8937
        %v9050 = vcvt.s32.f32 %v8938
        %v9051 = vcvt.s32.f32 %v8939
        %v9052 = vcvt.s32.f32 %v8940
        %v9053 = vcvt.s32.f32 %v8941
        %v9054 = vcvt.s32.f32 %v8942
        %v9055 = vcvt.s32.f32 %v8943
        %v9056 = vcvt.s32.f32 %v8944
        %v9057 = vcvt.s32.f32 %v8945
        %v9058 = vcvt.s32.f32 %v8946
        %v9059 = vcvt.s32.f32 %v8947
        %v9060 = vcvt.s32.f32 %v8948
        %v9061 = vcvt.s32.f32 %v8949
        %v9062 = vcvt.s32.f32 %v8950
        %v9063 = vcvt.s32.f32 %v8951
        %v9064 = vcvt.s32.f32 %v8952
        %v9065 = vcvt.s32.f32 %v8953
        %v9066 = vcvt.s32.f32 %v8954
        %v9067 = vcvt.s32.f32 %v8955
        %v9068 = vcvt.s32.f32 %v8956
        %v9069 = vcvt.s32.f32 %v8957
        %v9070 = vcvt.s32.f32 %v8958
        %v9071 = vcvt.s32.f32 %v8959
        %v9072 = vcvt.s32.f32 %v8960
        %v9073 = vcvt.s32.f32 %v8961
        %v9074 = vcvt.s32.f32 %v8962
        %v9075 = vcvt.s32.f32 %v8963
        %v9076 = vcvt.s32.f32 %v8964
        %v9077 = vcvt.s32.f32 %v8965
        %v9078 = vcvt.s32.f32 %v8966
        %v9079 = vcvt.s32.f32 %v8967
        %v9080 = vcvt.s32.f32 %v8968
        %v9081 = vcvt.s32.f32 %v8969
        %v9082 = vcvt.s32.f32 %v8970
        %v9083 = vcvt.s32.f32 %v8971
        %v9084 = vcvt.s32.f32 %v8972
        %v9085 = vcvt.s32.f32 %v8973
        %v9086 = vcvt.s32.f32 %v8974
        %v9087 = vcvt.s32.f32 %v8975
        %v9088 = vcvt.s32.f32 %v8976
        %v9089 = vcvt.s32.f32 %v8977
        %v9090 = vcvt.s32.f32 %v8978
        %v9091 = vcvt.s32.f32 %v8979
        %v9092 = vcvt.s32.f32 %v8980
        %v9093 = vcvt.s32.f32 %v8981
        %v9094 = vcvt.s32.f32 %v8982
        %v9095 = vcvt.s32.f32 %v8983
        %v9096 = vcvt.s32.f32 %v8984
        %v9097 = vcvt.s32.f32 %v8985
        %v9098 = vcvt.s32.f32 %v8986
        %v9099 = vcvt.s32.f32 %v8987
        %v9100 = vcvt.s32.f32 %v8988
        %v9101 = vcvt.s32.f32 %v8989
        %v9102 = vcvt.s32.f32 %v8990
        %v9103 = vcvt.s32.f32 %v8991
        %v9104 = vcvt.s32.f32 %v8992
        %v9105 = vcvt.s32.f32 %v8993
        %v9106 = vcvt.s32.f32 %v8994
        %v9107 = vcvt.s32.f32 %v8995
        %v9108 = vcvt.s32.f32 %v8996
        %v9109 = vcvt.s32.f32 %v8997
        %v9110 = vcvt.s32.f32 %v8998
        %v9111 = vcvt.s32.f32 %v8999
        %v9112 = vcvt.s32.f32 %v9000
        %v9113 = vcvt.s32.f32 %v9001
        %v9114 = vcvt.s32.f32 %v9002
        %v9115 = vcvt.s32.f32 %v9003
        %v9116 = vcvt.s32.f32 %v9004
        %v9117 = vcvt.s32.f32 %v9005
        %v9118 = vcvt.s32.f32 %v9006
        %v9119 = vcvt.s32.f32 %v9007
        %v9120 = vcvt.s32.f32 %v9008
        %v9121 = vcvt.s32.f32 %v9009
        %v9122 = vcvt.s32.f32 %v9010
        %v9123 = vcvt.s32.f32 %v9011
        %v9124 = vcvt.s32.f32 %v9012
        %v9125 = vcvt.s32.f32 %v9013
        %v9126 = vcvt.s32.f32 %v9014
        %v9127 = vcvt.s32.f32 %v9015
        %v9128 = vcvt.s32.f32 %v9016
        %v9129 = vcvt.s32.f32 %v9017
        %v9130 = vcvt.s32.f32 %v9018
        %v9131 = vcvt.s32.f32 %v9019
        %v9132 = vcvt.s32.f32 %v9020
        %v9133 = vcvt.s32.f32 %v9021
        %v9134 = vcvt.s32.f32 %v9022
        %v9135 = vcvt.s32.f32 %v9023
        %v9136 = vcvt.s32.f32 %v9024
        %v9137 = vcvt.s32.f32 %v9025
        %v9138 = vcvt.s32.f32 %v9026
        %v9139 = vcvt.s32.f32 %v9027
        %v9140 = vcvt.s32.f32 %v9028
        %v9141 = vcvt.s32.f32 %v9029
        %v9142 = vcvt.s32.f32 %v9030
        %v9143 = vcvt.s32.f32 %v9031
        %v9144 = vcvt.s32.f32 %v9032
        %v9145 = vcvt.s32.f32 %v9033
        %v9146 = vcvt.s32.f32 %v9034
        %v9147 = vcvt.s32.f32 %v9035
        %v9148 = vcvt.s32.f32 %v9036
        %v9149 = vcvt.s32.f32 %v9037
        %v9150 = vcvt.s32.f32 %v9038
        %v9151 = vcvt.s32.f32 %v9039
        %v9152 = vcvt.s32.f32 %v9040
        %v9153 = vcvt.s32.f32 %v9041
        %v9154 = vcvt.s32.f32 %v9042
        %v9155 = vcvt.s32.f32 %v9043
        %v9156 = vcvt.s32.f32 %v9044
        %v9157 = vcvt.s32.f32 %v9045
        %v9158 = vcvt.s32.f32 %v9046
        %v9159 = vmul.f32 %v8152, %v9047
        %v9160 = vmul.f32 %v8155, %v9048
        %v9161 = vmul.f32 %v8160, %v9049
        %v9162 = vmul.f32 %v8163, %v9050
        %v9163 = vmul.f32 %v8168, %v9051
        %v9164 = vmul.f32 %v8171, %v9052
        %v9165 = vmul.f32 %v8176, %v9053
        %v9166 = vmul.f32 %v8179, %v9054
        %v9167 = vmul.f32 %v8184, %v9055
        %v9168 = vmul.f32 %v8187, %v9056
        %v9169 = vmul.f32 %v8192, %v9057
        %v9170 = vmul.f32 %v8195, %v9058
        %v9171 = vmul.f32 %v8200, %v9059
        %v9172 = vmul.f32 %v8203, %v9060
        %v9173 = vmul.f32 %v8208, %v9061
        %v9174 = vmul.f32 %v8211, %v9062
        %v9175 = vmul.f32 %v8216, %v9063
        %v9176 = vmul.f32 %v8219, %v9064
        %v9177 = vmul.f32 %v8224, %v9065
        %v9178 = vmul.f32 %v8227, %v9066
        %v9179 = vmul.f32 %v8232, %v9067
        %v9180 = vmul.f32 %v8235, %v9068
        %v9181 = vmul.f32 %v8240, %v9069
        %v9182 = vmul.f32 %v8243, %v9070
        %v9183 = vmul.f32 %v8248, %v9071
        %v9184 = vmul.f32 %v8251, %v9072
        %v9185 = vmul.f32 %v8256, %v9073
        %v9186 = vmul.f32 %v8259, %v9074
        %v9187 = vmul.f32 %v8264, %v9075
        %v9188 = vmul.f32 %v8267, %v9076
        %v9189 = vmul.f32 %v8272, %v9077
        %v9190 = vmul.f32 %v8275, %v9078
        %v9191 = vmul.f32 %v8280, %v9079
        %v9192 = vmul.f32 %v8283, %v9080
        %v9193 = vmul.f32 %v8288, %v9081
        %v9194 = vmul.f32 %v8291, %v9082
        %v9195 = vmul.f32 %v8296, %v9083
        %v9196 = vmul.f32 %v8299, %v9084
        %v9197 = vmul.f32 %v8304, %v9085
        %v9198 = vmul.f32 %v8307, %v9086
        %v9199 = vmul.f32 %v8312, %v9087
        %v9200 = vmul.f32 %v8315, %v9088
        %v9201 = vmul.f32 %v8320, %v9089
        %v9202 = vmul.f32 %v8323, %v9090
        %v9203 = vmul.f32 %v8328, %v9091
        %v9204 = vmul.f32 %v8331, %v9092
        %v9205 = vmul.f32 %v8336, %v9093
        %v9206 = vmul.f32 %v8339, %v9094
        %v9207 = vmul.f32 %v8344, %v9095
        %v9208 = vmul.f32 %v8347, %v9096
        %v9209 = vmul.f32 %v8352, %v9097
        %v9210 = vmul.f32 %v8355, %v9098
        %v9211 = vmul.f32 %v8360, %v9099
        %v9212 = vmul.f32 %v8363, %v9100
        %v9213 = vmul.f32 %v8368, %v9101
        %v9214 = vmul.f32 %v8371, %v9102
        %v9215 = vmul.f32 %v8376, %v9103
        %v9216 = vmul.f32 %v8379, %v9104
        %v9217 = vmul.f32 %v8384, %v9105
        %v9218 = vmul.f32 %v8387, %v9106
        %v9219 = vmul.f32 %v8392, %v9107
        %v9220 = vmul.f32 %v8395, %v9108
        %v9221 = vmul.f32 %v8400, %v9109
        %v9222 = vmul.f32 %v8403, %v9110
        %v9223 = vmul.f32 %v8408, %v9111
        %v9224 = vmul.f32 %v8411, %v9112
        %v9225 = vmul.f32 %v8416, %v9113
        %v9226 = vmul.f32 %v8419, %v9114
        %v9227 = vmul.f32 %v8424, %v9115
        %v9228 = vmul.f32 %v8427, %v9116
        %v9229 = vmul.f32 %v8432, %v9117
        %v9230 = vmul.f32 %v8435, %v9118
        %v9231 = vmul.f32 %v8440, %v9119
        %v9232 = vmul.f32 %v8443, %v9120
        %v9233 = vmul.f32 %v8448, %v9121
        %v9234 = vmul.f32 %v8451, %v9122
        %v9235 = vmul.f32 %v8456, %v9123
        %v9236 = vmul.f32 %v8459, %v9124
        %v9237 = vmul.f32 %v8464, %v9125
        %v9238 = vmul.f32 %v8467, %v9126
        %v9239 = vmul.f32 %v8472, %v9127
        %v9240 = vmul.f32 %v8475, %v9128
        %v9241 = vmul.f32 %v8480, %v9129
        %v9242 = vmul.f32 %v8483, %v9130
        %v9243 = vmul.f32 %v8488, %v9131
        %v9244 = vmul.f32 %v8491, %v9132
        %v9245 = vmul.f32 %v8496, %v9133
        %v9246 = vmul.f32 %v8499, %v9134
        %v9247 = vmul.f32 %v8504, %v9135
        %v9248 = vmul.f32 %v8507, %v9136
        %v9249 = vmul.f32 %v8512, %v9137
        %v9250 = vmul.f32 %v8515, %v9138
        %v9251 = vmul.f32 %v8520, %v9139
        %v9252 = vmul.f32 %v8523, %v9140
        %v9253 = vmul.f32 %v8528, %v9141
        %v9254 = vmul.f32 %v8531, %v9142
        %v9255 = vmul.f32 %v8536, %v9143
        %v9256 = vmul.f32 %v8539, %v9144
        %v9257 = vmul.f32 %v8544, %v9145
        %v9258 = vmul.f32 %v8547, %v9146
        %v9259 = vmul.f32 %v8552, %v9147
        %v9260 = vmul.f32 %v8555, %v9148
        %v9261 = vmul.f32 %v8560, %v9149
        %v9262 = vmul.f32 %v8563, %v9150
        %v9263 = vmul.f32 %v8568, %v9151
        %v9264 = vmul.f32 %v8571, %v9152
        %v9265 = vmul.f32 %v8576, %v9153
        %v9266 = vmul.f32 %v8579, %v9154
        %v9267 = vmul.f32 %v8584, %v9155
        %v9268 = vmul.f32 %v8587, %v9156
        %v9269 = vmul.f32 %v8592, %v9157
        %v9270 = vmul.f32 %v8595, %v9158
        %v9271 = vadd.f32 %v9159, %v9160
        %v9272 = vadd.f32 %v9271, %v9161
        %v9273 = vadd.f32 %v9272, %v9162
        %v9274 = vadd.f32 %v9273, %v9163
        %v9275 = vadd.f32 %v9274, %v9164
        %v9276 = vadd.f32 %v9275, %v9165
        %v9277 = vadd.f32 %v9276, %v9166
        %v9278 = vadd.f32 %v9277, %v9167
        %v9279 = vadd.f32 %v9278, %v9168
        %v9280 = vadd.f32 %v9279, %v9169
        %v9281 = vadd.f32 %v9280, %v9170
        %v9282 = vadd.f32 %v9281, %v9171
        %v9283 = vadd.f32 %v9282, %v9172
        %v9284 = vadd.f32 %v9283, %v9173
        %v9285 = vadd.f32 %v9284, %v9174
        %v9286 = vadd.f32 %v9285, %v9175
        %v9287 = vadd.f32 %v9286, %v9176
        %v9288 = vadd.f32 %v9287, %v9177
        %v9289 = vadd.f32 %v9288, %v9178
        %v9290 = vadd.f32 %v9289, %v9179
        %v9291 = vadd.f32 %v9290, %v9180
        %v9292 = vadd.f32 %v9291, %v9181
        %v9293 = vadd.f32 %v9292, %v9182
        %v9294 = vadd.f32 %v9293, %v9183
        %v9295 = vadd.f32 %v9294, %v9184
        %v9296 = vadd.f32 %v9295, %v9185
        %v9297 = vadd.f32 %v9296, %v9186
        %v9298 = vadd.f32 %v9297, %v9187
        %v9299 = vadd.f32 %v9298, %v9188
        %v9300 = vadd.f32 %v9299, %v9189
        %v9301 = vadd.f32 %v9300, %v9190
        %v9302 = vadd.f32 %v9301, %v9191
        %v9303 = vadd.f32 %v9302, %v9192
        %v9304 = vadd.f32 %v9303, %v9193
        %v9305 = vadd.f32 %v9304, %v9194
        %v9306 = vadd.f32 %v9305, %v9195
        %v9307 = vadd.f32 %v9306, %v9196
        %v9308 = vadd.f32 %v9307, %v9197
        %v9309 = vadd.f32 %v9308, %v9198
        %v9310 = vadd.f32 %v9309, %v9199
        %v9311 = vadd.f32 %v9310, %v9200
        %v9312 = vadd.f32 %v9311, %v9201
        %v9313 = vadd.f32 %v9312, %v9202
        %v9314 = vadd.f32 %v9313, %v9203
        %v9315 = vadd.f32 %v9314, %v9204
        %v9316 = vadd.f32 %v9315, %v9205
        %v9317 = vadd.f32 %v9316, %v9206
        %v9318 = vadd.f32 %v9317, %v9207
        %v9319 = vadd.f32 %v9318, %v9208
        %v9320 = vadd.f32 %v9319, %v9209
        %v9321 = vadd.f32 %v9320, %v9210
        %v9322 = vadd.f32 %v9321, %v9211
        %v9323 = vadd.f32 %v9322, %v9212
        %v9324 = vadd.f32 %v9323, %v9213
        %v9325 = vadd.f32 %v9324, %v9214
        %v9326 = vadd.f32 %v9325, %v9215
        %v9327 = vadd.f32 %v9326, %v9216
        %v9328 = vadd.f32 %v9327, %v9217
        %v9329 = vadd.f32 %v9328, %v9218
        %v9330 = vadd.f32 %v9329, %v9219
        %v9331 = vadd.f32 %v9330, %v9220
        %v9332 = vadd.f32 %v9331, %v9221
        %v9333 = vadd.f32 %v9332, %v9222
        %v9334 = vadd.f32 %v9333, %v9223
        %v9335 = vadd.f32 %v9334, %v9224
        %v9336 = vadd.f32 %v9335, %v9225
        %v9337 = vadd.f32 %v9336, %v9226
        %v9338 = vadd.f32 %v9337, %v9227
        %v9339 = vadd.f32 %v9338, %v9228
        %v9340 = vadd.f32 %v9339, %v9229
        %v9341 = vadd.f32 %v9340, %v9230
        %v9342 = vadd.f32 %v9341, %v9231
        %v9343 = vadd.f32 %v9342, %v9232
        %v9344 = vadd.f32 %v9343, %v9233
        %v9345 = vadd.f32 %v9344, %v9234
        %v9346 = vadd.f32 %v9345, %v9235
        %v9347 = vadd.f32 %v9346, %v9236
        %v9348 = vadd.f32 %v9347, %v9237
        %v9349 = vadd.f32 %v9348, %v9238
        %v9350 = vadd.f32 %v9349, %v9239
        %v9351 = vadd.f32 %v9350, %v9240
        %v9352 = vadd.f32 %v9351, %v9241
        %v9353 = vadd.f32 %v9352, %v9242
        %v9354 = vadd.f32 %v9353, %v9243
        %v9355 = vadd.f32 %v9354, %v9244
        %v9356 = vadd.f32 %v9355, %v9245
        %v9357 = vadd.f32 %v9356, %v9246
        %v9358 = vadd.f32 %v9357, %v9247
        %v9359 = vadd.f32 %v9358, %v9248
        %v9360 = vadd.f32 %v9359, %v9249
        %v9361 = vadd.f32 %v9360, %v9250
        %v9362 = vadd.f32 %v9361, %v9251
        %v9363 = vadd.f32 %v9362, %v9252
        %v9364 = vadd.f32 %v9363, %v9253
        %v9365 = vadd.f32 %v9364, %v9254
        %v9366 = vadd.f32 %v9365, %v9255
        %v9367 = vadd.f32 %v9366, %v9256
        %v9368 = vadd.f32 %v9367, %v9257
        %v9369 = vadd.f32 %v9368, %v9258
        %v9370 = vadd.f32 %v9369, %v9259
        %v9371 = vadd.f32 %v9370, %v9260
        %v9372 = vadd.f32 %v9371, %v9261
        %v9373 = vadd.f32 %v9372, %v9262
        %v9374 = vadd.f32 %v9373, %v9263
        %v9375 = vadd.f32 %v9374, %v9264
        %v9376 = vadd.f32 %v9375, %v9265
        %v9377 = vadd.f32 %v9376, %v9266
        %v9378 = vadd.f32 %v9377, %v9267
        %v9379 = vadd.f32 %v9378, %v9268
        %v9380 = vadd.f32 %v9379, %v9269
        %v9381 = vadd.f32 %v9380, %v9270
        %v9382 = vrot.slane %v9381, 4
        %v9383 = vadd.f32 %v9381, %v9382
        %v9384 = vrot.slane %v9383, 2
        %v9385 = vadd.f32 %v9383, %v9384
        %v9386 = vrot.slane %v9385, 1
        %v9387 = vadd.f32 %v9385, %v9386
        %v9388 = vmul.f32 %v9387, 0.0012755102
        %v9389 = vmul.f32 %v9159, %v8152
        %v9390 = vmul.f32 %v9160, %v8155
        %v9391 = vmul.f32 %v9161, %v8160
        %v9392 = vmul.f32 %v9162, %v8163
        %v9393 = vmul.f32 %v9163, %v8168
        %v9394 = vmul.f32 %v9164, %v8171
        %v9395 = vmul.f32 %v9165, %v8176
        %v9396 = vmul.f32 %v9166, %v8179
        %v9397 = vmul.f32 %v9167, %v8184
        %v9398 = vmul.f32 %v9168, %v8187
        %v9399 = vmul.f32 %v9169, %v8192
        %v9400 = vmul.f32 %v9170, %v8195
        %v9401 = vmul.f32 %v9171, %v8200
        %v9402 = vmul.f32 %v9172, %v8203
        %v9403 = vmul.f32 %v9173, %v8208
        %v9404 = vmul.f32 %v9174, %v8211
        %v9405 = vmul.f32 %v9175, %v8216
        %v9406 = vmul.f32 %v9176, %v8219
        %v9407 = vmul.f32 %v9177, %v8224
        %v9408 = vmul.f32 %v9178, %v8227
        %v9409 = vmul.f32 %v9179, %v8232
        %v9410 = vmul.f32 %v9180, %v8235
        %v9411 = vmul.f32 %v9181, %v8240
        %v9412 = vmul.f32 %v9182, %v8243
        %v9413 = vmul.f32 %v9183, %v8248
        %v9414 = vmul.f32 %v9184, %v8251
        %v9415 = vmul.f32 %v9185, %v8256
        %v9416 = vmul.f32 %v9186, %v8259
        %v9417 = vmul.f32 %v9187, %v8264
        %v9418 = vmul.f32 %v9188, %v8267
        %v9419 = vmul.f32 %v9189, %v8272
        %v9420 = vmul.f32 %v9190, %v8275
        %v9421 = vmul.f32 %v9191, %v8280
        %v9422 = vmul.f32 %v9192, %v8283
        %v9423 = vmul.f32 %v9193, %v8288
        %v9424 = vmul.f32 %v9194, %v8291
        %v9425 = vmul.f32 %v9195, %v8296
        %v9426 = vmul.f32 %v9196, %v8299
        %v9427 = vmul.f32 %v9197, %v8304
        %v9428 = vmul.f32 %v9198, %v8307
        %v9429 = vmul.f32 %v9199, %v8312
        %v9430 = vmul.f32 %v9200, %v8315
        %v9431 = vmul.f32 %v9201, %v8320
        %v9432 = vmul.f32 %v9202, %v8323
        %v9433 = vmul.f32 %v9203, %v8328
        %v9434 = vmul.f32 %v9204, %v8331
        %v9435 = vmul.f32 %v9205, %v8336
        %v9436 = vmul.f32 %v9206, %v8339
        %v9437 = vmul.f32 %v9207, %v8344
        %v9438 = vmul.f32 %v9208, %v8347
        %v9439 = vmul.f32 %v9209, %v8352
        %v9440 = vmul.f32 %v9210, %v8355
        %v9441 = vmul.f32 %v9211, %v8360
        %v9442 = vmul.f32 %v9212, %v8363
        %v9443 = vmul.f32 %v9213, %v8368
        %v9444 = vmul.f32 %v9214, %v8371
        %v9445 = vmul.f32 %v9215, %v8376
        %v9446 = vmul.f32 %v9216, %v8379
        %v9447 = vmul.f32 %v9217, %v8384
        %v9448 = vmul.f32 %v9218, %v8387
        %v9449 = vmul.f32 %v9219, %v8392
        %v9450 = vmul.f32 %v9220, %v8395
        %v9451 = vmul.f32 %v9221, %v8400
        %v9452 = vmul.f32 %v9222, %v8403
        %v9453 = vmul.f32 %v9223, %v8408
        %v9454 = vmul.f32 %v9224, %v8411
        %v9455 = vmul.f32 %v9225, %v8416
        %v9456 = vmul.f32 %v9226, %v8419
        %v9457 = vmul.f32 %v9227, %v8424
        %v9458 = vmul.f32 %v9228, %v8427
        %v9459 = vmul.f32 %v9229, %v8432
        %v9460 = vmul.f32 %v9230, %v8435
        %v9461 = vmul.f32 %v9231, %v8440
        %v9462 = vmul.f32 %v9232, %v8443
        %v9463 = vmul.f32 %v9233, %v8448
        %v9464 = vmul.f32 %v9234, %v8451
        %v9465 = vmul.f32 %v9235, %v8456
        %v9466 = vmul.f32 %v9236, %v8459
        %v9467 = vmul.f32 %v9237, %v8464
        %v9468 = vmul.f32 %v9238, %v8467
        %v9469 = vmul.f32 %v9239, %v8472
        %v9470 = vmul.f32 %v9240, %v8475
        %v9471 = vmul.f32 %v9241, %v8480
        %v9472 = vmul.f32 %v9242, %v8483
        %v9473 = vmul.f32 %v9243, %v8488
        %v9474 = vmul.f32 %v9244, %v8491
        %v9475 = vmul.f32 %v9245, %v8496
        %v9476 = vmul.f32 %v9246, %v8499
        %v9477 = vmul.f32 %v9247, %v8504
        %v9478 = vmul.f32 %v9248, %v8507
        %v9479 = vmul.f32 %v9249, %v8512
        %v9480 = vmul.f32 %v9250, %v8515
        %v9481 = vmul.f32 %v9251, %v8520
        %v9482 = vmul.f32 %v9252, %v8523
        %v9483 = vmul.f32 %v9253, %v8528
        %v9484 = vmul.f32 %v9254, %v8531
        %v9485 = vmul.f32 %v9255, %v8536
        %v9486 = vmul.f32 %v9256, %v8539
        %v9487 = vmul.f32 %v9257, %v8544
        %v9488 = vmul.f32 %v9258, %v8547
        %v9489 = vmul.f32 %v9259, %v8552
        %v9490 = vmul.f32 %v9260, %v8555
        %v9491 = vmul.f32 %v9261, %v8560
        %v9492 = vmul.f32 %v9262, %v8563
        %v9493 = vmul.f32 %v9263, %v8568
        %v9494 = vmul.f32 %v9264, %v8571
        %v9495 = vmul.f32 %v9265, %v8576
        %v9496 = vmul.f32 %v9266, %v8579
        %v9497 = vmul.f32 %v9267, %v8584
        %v9498 = vmul.f32 %v9268, %v8587
        %v9499 = vmul.f32 %v9269, %v8592
        %v9500 = vmul.f32 %v9270, %v8595
        %v9501 = vadd.f32 %v9389, %v9390
        %v9502 = vadd.f32 %v9501, %v9391
        %v9503 = vadd.f32 %v9502, %v9392
        %v9504 = vadd.f32 %v9503, %v9393
        %v9505 = vadd.f32 %v9504, %v9394
        %v9506 = vadd.f32 %v9505, %v9395
        %v9507 = vadd.f32 %v9506, %v9396
        %v9508 = vadd.f32 %v9507, %v9397
        %v9509 = vadd.f32 %v9508, %v9398
        %v9510 = vadd.f32 %v9509, %v9399
        %v9511 = vadd.f32 %v9510, %v9400
        %v9512 = vadd.f32 %v9511, %v9401
        %v9513 = vadd.f32 %v9512, %v9402
        %v9514 = vadd.f32 %v9513, %v9403
        %v9515 = vadd.f32 %v9514, %v9404
        %v9516 = vadd.f32 %v9515, %v9405
        %v9517 = vadd.f32 %v9516, %v9406
        %v9518 = vadd.f32 %v9517, %v9407
        %v9519 = vadd.f32 %v9518, %v9408
        %v9520 = vadd.f32 %v9519, %v9409
        %v9521 = vadd.f32 %v9520, %v9410
        %v9522 = vadd.f32 %v9521, %v9411
        %v9523 = vadd.f32 %v9522, %v9412
        %v9524 = vadd.f32 %v9523, %v9413
        %v9525 = vadd.f32 %v9524, %v9414
        %v9526 = vadd.f32 %v9525, %v9415
        %v9527 = vadd.f32 %v9526, %v9416
        %v9528 = vadd.f32 %v9527, %v9417
        %v9529 = vadd.f32 %v9528, %v9418
        %v9530 = vadd.f32 %v9529, %v9419
        %v9531 = vadd.f32 %v9530, %v9420
        %v9532 = vadd.f32 %v9531, %v9421
        %v9533 = vadd.f32 %v9532, %v9422
        %v9534 = vadd.f32 %v9533, %v9423
        %v9535 = vadd.f32 %v9534, %v9424
        %v9536 = vadd.f32 %v9535, %v9425
        %v9537 = vadd.f32 %v9536, %v9426
        %v9538 = vadd.f32 %v9537, %v9427
        %v9539 = vadd.f32 %v9538, %v9428
        %v9540 = vadd.f32 %v9539, %v9429
        %v9541 = vadd.f32 %v9540, %v9430
        %v9542 = vadd.f32 %v9541, %v9431
        %v9543 = vadd.f32 %v9542, %v9432
        %v9544 = vadd.f32 %v9543, %v9433
        %v9545 = vadd.f32 %v9544, %v9434
        %v9546 = vadd.f32 %v9545, %v9435
        %v9547 = vadd.f32 %v9546, %v9436
        %v9548 = vadd.f32 %v9547, %v9437
        %v9549 = vadd.f32 %v9548, %v9438
        %v9550 = vadd.f32 %v9549, %v9439
        %v9551 = vadd.f32 %v9550, %v9440
        %v9552 = vadd.f32 %v9551, %v9441
        %v9553 = vadd.f32 %v9552, %v9442
        %v9554 = vadd.f32 %v9553, %v9443
        %v9555 = vadd.f32 %v9554, %v9444
        %v9556 = vadd.f32 %v9555, %v9445
        %v9557 = vadd.f32 %v9556, %v9446
        %v9558 = vadd.f32 %v9557, %v9447
        %v9559 = vadd.f32 %v9558, %v9448
        %v9560 = vadd.f32 %v9559, %v9449
        %v9561 = vadd.f32 %v9560, %v9450
        %v9562 = vadd.f32 %v9561, %v9451
        %v9563 = vadd.f32 %v9562, %v9452
        %v9564 = vadd.f32 %v9563, %v9453
        %v9565 = vadd.f32 %v9564, %v9454
        %v9566 = vadd.f32 %v9565, %v9455
        %v9567 = vadd.f32 %v9566, %v9456
        %v9568 = vadd.f32 %v9567, %v9457
        %v9569 = vadd.f32 %v9568, %v9458
        %v9570 = vadd.f32 %v9569, %v9459
        %v9571 = vadd.f32 %v9570, %v9460
        %v9572 = vadd.f32 %v9571, %v9461
        %v9573 = vadd.f32 %v9572, %v9462
        %v9574 = vadd.f32 %v9573, %v9463
        %v9575 = vadd.f32 %v9574, %v9464
        %v9576 = vadd.f32 %v9575, %v9465
        %v9577 = vadd.f32 %v9576, %v9466
        %v9578 = vadd.f32 %v9577, %v9467
        %v9579 = vadd.f32 %v9578, %v9468
        %v9580 = vadd.f32 %v9579, %v9469
        %v9581 = vadd.f32 %v9580, %v9470
        %v9582 = vadd.f32 %v9581, %v9471
        %v9583 = vadd.f32 %v9582, %v9472
        %v9584 = vadd.f32 %v9583, %v9473
        %v9585 = vadd.f32 %v9584, %v9474
        %v9586 = vadd.f32 %v9585, %v9475
        %v9587 = vadd.f32 %v9586, %v9476
        %v9588 = vadd.f32 %v9587, %v9477
        %v9589 = vadd.f32 %v9588, %v9478
        %v9590 = vadd.f32 %v9589, %v9479
        %v9591 = vadd.f32 %v9590, %v9480
        %v9592 = vadd.f32 %v9591, %v9481
        %v9593 = vadd.f32 %v9592, %v9482
        %v9594 = vadd.f32 %v9593, %v9483
        %v9595 = vadd.f32 %v9594, %v9484
        %v9596 = vadd.f32 %v9595, %v9485
        %v9597 = vadd.f32 %v9596, %v9486
        %v9598 = vadd.f32 %v9597, %v9487
        %v9599 = vadd.f32 %v9598, %v9488
        %v9600 = vadd.f32 %v9599, %v9489
        %v9601 = vadd.f32 %v9600, %v9490
        %v9602 = vadd.f32 %v9601, %v9491
        %v9603 = vadd.f32 %v9602, %v9492
        %v9604 = vadd.f32 %v9603, %v9493
        %v9605 = vadd.f32 %v9604, %v9494
        %v9606 = vadd.f32 %v9605, %v9495
        %v9607 = vadd.f32 %v9606, %v9496
        %v9608 = vadd.f32 %v9607, %v9497
        %v9609 = vadd.f32 %v9608, %v9498
        %v9610 = vadd.f32 %v9609, %v9499
        %v9611 = vadd.f32 %v9610, %v9500
        %v9612 = vrot.slane %v9611, 4
        %v9613 = vadd.f32 %v9611, %v9612
        %v9614 = vrot.slane %v9613, 2
        %v9615 = vadd.f32 %v9613, %v9614
        %v9616 = vrot.slane %v9615, 1
        %v9617 = vadd.f32 %v9615, %v9616
        %v9618 = vmul.f32 %v9617, 0.0012755102
        %v9619 = vmul.f32 %v9388, %v9388
        %v9620 = vsub.f32 %v9618, %v9619
        %v9621 = vld [vmem:[%s1407] sm:$0x1]
        %v9622 = vadd.f32 %v9620, 1e-05
        %v9623 = vrsqrt.pop %v9622
        %v9624 = vmul.f32 %v9621, %v9623
        %v9625 = vld [vmem:[%s1410] sm:$0x1]
        %v9626 = vmul.f32 %v9388, %v9624
        %v9627 = vsub.f32 %v9625, %v9626
        %v9629 = vlaneseq
        %v9630 = vshrl.u32 %v9629, 7
        %v9631 = vsub.s32 0, %v9630
        %v9632 = vrot.slane %v9624, %v9631
        %v9634 = vmul.f32 %v8152, %v9632
        %v9635 = vmul.f32 %v8155, %v9632
        %v9636 = vmul.f32 %v8160, %v9632
        %v9637 = vmul.f32 %v8163, %v9632
        %v9638 = vmul.f32 %v8168, %v9632
        %v9639 = vmul.f32 %v8171, %v9632
        %v9640 = vmul.f32 %v8176, %v9632
        %v9641 = vmul.f32 %v8179, %v9632
        %v9642 = vmul.f32 %v8184, %v9632
        %v9643 = vmul.f32 %v8187, %v9632
        %v9644 = vmul.f32 %v8192, %v9632
        %v9645 = vmul.f32 %v8195, %v9632
        %v9646 = vmul.f32 %v8200, %v9632
        %v9647 = vmul.f32 %v8203, %v9632
        %v9648 = vmul.f32 %v8208, %v9632
        %v9649 = vmul.f32 %v8211, %v9632
        %v9650 = vmul.f32 %v8216, %v9632
        %v9651 = vmul.f32 %v8219, %v9632
        %v9652 = vmul.f32 %v8224, %v9632
        %v9653 = vmul.f32 %v8227, %v9632
        %v9654 = vmul.f32 %v8232, %v9632
        %v9655 = vmul.f32 %v8235, %v9632
        %v9656 = vmul.f32 %v8240, %v9632
        %v9657 = vmul.f32 %v8243, %v9632
        %v9658 = vmul.f32 %v8248, %v9632
        %v9659 = vmul.f32 %v8251, %v9632
        %v9660 = vmul.f32 %v8256, %v9632
        %v9661 = vmul.f32 %v8259, %v9632
        %v9662 = vmul.f32 %v8264, %v9632
        %v9663 = vmul.f32 %v8267, %v9632
        %v9664 = vmul.f32 %v8272, %v9632
        %v9665 = vmul.f32 %v8275, %v9632
        %v9666 = vmul.f32 %v8280, %v9632
        %v9667 = vmul.f32 %v8283, %v9632
        %v9668 = vmul.f32 %v8288, %v9632
        %v9669 = vmul.f32 %v8291, %v9632
        %v9670 = vmul.f32 %v8296, %v9632
        %v9671 = vmul.f32 %v8299, %v9632
        %v9672 = vmul.f32 %v8304, %v9632
        %v9673 = vmul.f32 %v8307, %v9632
        %v9674 = vmul.f32 %v8312, %v9632
        %v9675 = vmul.f32 %v8315, %v9632
        %v9676 = vmul.f32 %v8320, %v9632
        %v9677 = vmul.f32 %v8323, %v9632
        %v9678 = vmul.f32 %v8328, %v9632
        %v9679 = vmul.f32 %v8331, %v9632
        %v9680 = vmul.f32 %v8336, %v9632
        %v9681 = vmul.f32 %v8339, %v9632
        %v9682 = vmul.f32 %v8344, %v9632
        %v9683 = vmul.f32 %v8347, %v9632
        %v9684 = vmul.f32 %v8352, %v9632
        %v9685 = vmul.f32 %v8355, %v9632
        %v9686 = vmul.f32 %v8360, %v9632
        %v9687 = vmul.f32 %v8363, %v9632
        %v9688 = vmul.f32 %v8368, %v9632
        %v9689 = vmul.f32 %v8371, %v9632
        %v9690 = vmul.f32 %v8376, %v9632
        %v9691 = vmul.f32 %v8379, %v9632
        %v9692 = vmul.f32 %v8384, %v9632
        %v9693 = vmul.f32 %v8387, %v9632
        %v9694 = vmul.f32 %v8392, %v9632
        %v9695 = vmul.f32 %v8395, %v9632
        %v9696 = vmul.f32 %v8400, %v9632
        %v9697 = vmul.f32 %v8403, %v9632
        %v9698 = vmul.f32 %v8408, %v9632
        %v9699 = vmul.f32 %v8411, %v9632
        %v9700 = vmul.f32 %v8416, %v9632
        %v9701 = vmul.f32 %v8419, %v9632
        %v9702 = vmul.f32 %v8424, %v9632
        %v9703 = vmul.f32 %v8427, %v9632
        %v9704 = vmul.f32 %v8432, %v9632
        %v9705 = vmul.f32 %v8435, %v9632
        %v9706 = vmul.f32 %v8440, %v9632
        %v9707 = vmul.f32 %v8443, %v9632
        %v9708 = vmul.f32 %v8448, %v9632
        %v9709 = vmul.f32 %v8451, %v9632
        %v9710 = vmul.f32 %v8456, %v9632
        %v9711 = vmul.f32 %v8459, %v9632
        %v9712 = vmul.f32 %v8464, %v9632
        %v9713 = vmul.f32 %v8467, %v9632
        %v9714 = vmul.f32 %v8472, %v9632
        %v9715 = vmul.f32 %v8475, %v9632
        %v9716 = vmul.f32 %v8480, %v9632
        %v9717 = vmul.f32 %v8483, %v9632
        %v9718 = vmul.f32 %v8488, %v9632
        %v9719 = vmul.f32 %v8491, %v9632
        %v9720 = vmul.f32 %v8496, %v9632
        %v9721 = vmul.f32 %v8499, %v9632
        %v9722 = vmul.f32 %v8504, %v9632
        %v9723 = vmul.f32 %v8507, %v9632
        %v9724 = vmul.f32 %v8512, %v9632
        %v9725 = vmul.f32 %v8515, %v9632
        %v9726 = vmul.f32 %v8520, %v9632
        %v9727 = vmul.f32 %v8523, %v9632
        %v9728 = vmul.f32 %v8528, %v9632
        %v9729 = vmul.f32 %v8531, %v9632
        %v9730 = vmul.f32 %v8536, %v9632
        %v9731 = vmul.f32 %v8539, %v9632
        %v9732 = vmul.f32 %v8544, %v9632
        %v9733 = vmul.f32 %v8547, %v9632
        %v9734 = vmul.f32 %v8552, %v9632
        %v9735 = vmul.f32 %v8555, %v9632
        %v9736 = vmul.f32 %v8560, %v9632
        %v9737 = vmul.f32 %v8563, %v9632
        %v9738 = vmul.f32 %v8568, %v9632
        %v9739 = vmul.f32 %v8571, %v9632
        %v9740 = vmul.f32 %v8576, %v9632
        %v9741 = vmul.f32 %v8579, %v9632
        %v9742 = vmul.f32 %v8584, %v9632
        %v9743 = vmul.f32 %v8587, %v9632
        %v9744 = vmul.f32 %v8592, %v9632
        %v9745 = vmul.f32 %v8595, %v9632
        %v9747 = vlaneseq
        %v9748 = vshrl.u32 %v9747, 7
        %v9749 = vsub.s32 0, %v9748
        %v9750 = vrot.slane %v9627, %v9749
        %v9752 = vadd.f32 %v9634, %v9750
        %v9753 = vadd.f32 %v9635, %v9750
        %v9754 = vadd.f32 %v9636, %v9750
        %v9755 = vadd.f32 %v9637, %v9750
        %v9756 = vadd.f32 %v9638, %v9750
        %v9757 = vadd.f32 %v9639, %v9750
        %v9758 = vadd.f32 %v9640, %v9750
        %v9759 = vadd.f32 %v9641, %v9750
        %v9760 = vadd.f32 %v9642, %v9750
        %v9761 = vadd.f32 %v9643, %v9750
        %v9762 = vadd.f32 %v9644, %v9750
        %v9763 = vadd.f32 %v9645, %v9750
        %v9764 = vadd.f32 %v9646, %v9750
        %v9765 = vadd.f32 %v9647, %v9750
        %v9766 = vadd.f32 %v9648, %v9750
        %v9767 = vadd.f32 %v9649, %v9750
        %v9768 = vadd.f32 %v9650, %v9750
        %v9769 = vadd.f32 %v9651, %v9750
        %v9770 = vadd.f32 %v9652, %v9750
        %v9771 = vadd.f32 %v9653, %v9750
        %v9772 = vadd.f32 %v9654, %v9750
        %v9773 = vadd.f32 %v9655, %v9750
        %v9774 = vadd.f32 %v9656, %v9750
        %v9775 = vadd.f32 %v9657, %v9750
        %v9776 = vadd.f32 %v9658, %v9750
        %v9777 = vadd.f32 %v9659, %v9750
        %v9778 = vadd.f32 %v9660, %v9750
        %v9779 = vadd.f32 %v9661, %v9750
        %v9780 = vadd.f32 %v9662, %v9750
        %v9781 = vadd.f32 %v9663, %v9750
        %v9782 = vadd.f32 %v9664, %v9750
        %v9783 = vadd.f32 %v9665, %v9750
        %v9784 = vadd.f32 %v9666, %v9750
        %v9785 = vadd.f32 %v9667, %v9750
        %v9786 = vadd.f32 %v9668, %v9750
        %v9787 = vadd.f32 %v9669, %v9750
        %v9788 = vadd.f32 %v9670, %v9750
        %v9789 = vadd.f32 %v9671, %v9750
        %v9790 = vadd.f32 %v9672, %v9750
        %v9791 = vadd.f32 %v9673, %v9750
        %v9792 = vadd.f32 %v9674, %v9750
        %v9793 = vadd.f32 %v9675, %v9750
        %v9794 = vadd.f32 %v9676, %v9750
        %v9795 = vadd.f32 %v9677, %v9750
        %v9796 = vadd.f32 %v9678, %v9750
        %v9797 = vadd.f32 %v9679, %v9750
        %v9798 = vadd.f32 %v9680, %v9750
        %v9799 = vadd.f32 %v9681, %v9750
        %v9800 = vadd.f32 %v9682, %v9750
        %v9801 = vadd.f32 %v9683, %v9750
        %v9802 = vadd.f32 %v9684, %v9750
        %v9803 = vadd.f32 %v9685, %v9750
        %v9804 = vadd.f32 %v9686, %v9750
        %v9805 = vadd.f32 %v9687, %v9750
        %v9806 = vadd.f32 %v9688, %v9750
        %v9807 = vadd.f32 %v9689, %v9750
        %v9808 = vadd.f32 %v9690, %v9750
        %v9809 = vadd.f32 %v9691, %v9750
        %v9810 = vadd.f32 %v9692, %v9750
        %v9811 = vadd.f32 %v9693, %v9750
        %v9812 = vadd.f32 %v9694, %v9750
        %v9813 = vadd.f32 %v9695, %v9750
        %v9814 = vadd.f32 %v9696, %v9750
        %v9815 = vadd.f32 %v9697, %v9750
        %v9816 = vadd.f32 %v9698, %v9750
        %v9817 = vadd.f32 %v9699, %v9750
        %v9818 = vadd.f32 %v9700, %v9750
        %v9819 = vadd.f32 %v9701, %v9750
        %v9820 = vadd.f32 %v9702, %v9750
        %v9821 = vadd.f32 %v9703, %v9750
        %v9822 = vadd.f32 %v9704, %v9750
        %v9823 = vadd.f32 %v9705, %v9750
        %v9824 = vadd.f32 %v9706, %v9750
        %v9825 = vadd.f32 %v9707, %v9750
        %v9826 = vadd.f32 %v9708, %v9750
        %v9827 = vadd.f32 %v9709, %v9750
        %v9828 = vadd.f32 %v9710, %v9750
        %v9829 = vadd.f32 %v9711, %v9750
        %v9830 = vadd.f32 %v9712, %v9750
        %v9831 = vadd.f32 %v9713, %v9750
        %v9832 = vadd.f32 %v9714, %v9750
        %v9833 = vadd.f32 %v9715, %v9750
        %v9834 = vadd.f32 %v9716, %v9750
        %v9835 = vadd.f32 %v9717, %v9750
        %v9836 = vadd.f32 %v9718, %v9750
        %v9837 = vadd.f32 %v9719, %v9750
        %v9838 = vadd.f32 %v9720, %v9750
        %v9839 = vadd.f32 %v9721, %v9750
        %v9840 = vadd.f32 %v9722, %v9750
        %v9841 = vadd.f32 %v9723, %v9750
        %v9842 = vadd.f32 %v9724, %v9750
        %v9843 = vadd.f32 %v9725, %v9750
        %v9844 = vadd.f32 %v9726, %v9750
        %v9845 = vadd.f32 %v9727, %v9750
        %v9846 = vadd.f32 %v9728, %v9750
        %v9847 = vadd.f32 %v9729, %v9750
        %v9848 = vadd.f32 %v9730, %v9750
        %v9849 = vadd.f32 %v9731, %v9750
        %v9850 = vadd.f32 %v9732, %v9750
        %v9851 = vadd.f32 %v9733, %v9750
        %v9852 = vadd.f32 %v9734, %v9750
        %v9853 = vadd.f32 %v9735, %v9750
        %v9854 = vadd.f32 %v9736, %v9750
        %v9855 = vadd.f32 %v9737, %v9750
        %v9856 = vadd.f32 %v9738, %v9750
        %v9857 = vadd.f32 %v9739, %v9750
        %v9858 = vadd.f32 %v9740, %v9750
        %v9859 = vadd.f32 %v9741, %v9750
        %v9860 = vadd.f32 %v9742, %v9750
        %v9861 = vadd.f32 %v9743, %v9750
        %v9862 = vadd.f32 %v9744, %v9750
        %v9863 = vadd.f32 %v9745, %v9750
        %v9864 = vmax.f32 %v9752, 0.0
        %v9865 = vmax.f32 %v9753, 0.0
        %v9866 = vmax.f32 %v9754, 0.0
        %v9867 = vmax.f32 %v9755, 0.0
        %v9868 = vmax.f32 %v9756, 0.0
        %v9869 = vmax.f32 %v9757, 0.0
        %v9870 = vmax.f32 %v9758, 0.0
        %v9871 = vmax.f32 %v9759, 0.0
        %v9872 = vmax.f32 %v9760, 0.0
        %v9873 = vmax.f32 %v9761, 0.0
        %v9874 = vmax.f32 %v9762, 0.0
        %v9875 = vmax.f32 %v9763, 0.0
        %v9876 = vmax.f32 %v9764, 0.0
        %v9877 = vmax.f32 %v9765, 0.0
        %v9878 = vmax.f32 %v9766, 0.0
        %v9879 = vmax.f32 %v9767, 0.0
        %v9880 = vmax.f32 %v9768, 0.0
        %v9881 = vmax.f32 %v9769, 0.0
        %v9882 = vmax.f32 %v9770, 0.0
        %v9883 = vmax.f32 %v9771, 0.0
        %v9884 = vmax.f32 %v9772, 0.0
        %v9885 = vmax.f32 %v9773, 0.0
        %v9886 = vmax.f32 %v9774, 0.0
        %v9887 = vmax.f32 %v9775, 0.0
        %v9888 = vmax.f32 %v9776, 0.0
        %v9889 = vmax.f32 %v9777, 0.0
        %v9890 = vmax.f32 %v9778, 0.0
        %v9891 = vmax.f32 %v9779, 0.0
        %v9892 = vmax.f32 %v9780, 0.0
        %v9893 = vmax.f32 %v9781, 0.0
        %v9894 = vmax.f32 %v9782, 0.0
        %v9895 = vmax.f32 %v9783, 0.0
        %v9896 = vmax.f32 %v9784, 0.0
        %v9897 = vmax.f32 %v9785, 0.0
        %v9898 = vmax.f32 %v9786, 0.0
        %v9899 = vmax.f32 %v9787, 0.0
        %v9900 = vmax.f32 %v9788, 0.0
        %v9901 = vmax.f32 %v9789, 0.0
        %v9902 = vmax.f32 %v9790, 0.0
        %v9903 = vmax.f32 %v9791, 0.0
        %v9904 = vmax.f32 %v9792, 0.0
        %v9905 = vmax.f32 %v9793, 0.0
        %v9906 = vmax.f32 %v9794, 0.0
        %v9907 = vmax.f32 %v9795, 0.0
        %v9908 = vmax.f32 %v9796, 0.0
        %v9909 = vmax.f32 %v9797, 0.0
        %v9910 = vmax.f32 %v9798, 0.0
        %v9911 = vmax.f32 %v9799, 0.0
        %v9912 = vmax.f32 %v9800, 0.0
        %v9913 = vmax.f32 %v9801, 0.0
        %v9914 = vmax.f32 %v9802, 0.0
        %v9915 = vmax.f32 %v9803, 0.0
        %v9916 = vmax.f32 %v9804, 0.0
        %v9917 = vmax.f32 %v9805, 0.0
        %v9918 = vmax.f32 %v9806, 0.0
        %v9919 = vmax.f32 %v9807, 0.0
        %v9920 = vmax.f32 %v9808, 0.0
        %v9921 = vmax.f32 %v9809, 0.0
        %v9922 = vmax.f32 %v9810, 0.0
        %v9923 = vmax.f32 %v9811, 0.0
        %v9924 = vmax.f32 %v9812, 0.0
        %v9925 = vmax.f32 %v9813, 0.0
        %v9926 = vmax.f32 %v9814, 0.0
        %v9927 = vmax.f32 %v9815, 0.0
        %v9928 = vmax.f32 %v9816, 0.0
        %v9929 = vmax.f32 %v9817, 0.0
        %v9930 = vmax.f32 %v9818, 0.0
        %v9931 = vmax.f32 %v9819, 0.0
        %v9932 = vmax.f32 %v9820, 0.0
        %v9933 = vmax.f32 %v9821, 0.0
        %v9934 = vmax.f32 %v9822, 0.0
        %v9935 = vmax.f32 %v9823, 0.0
        %v9936 = vmax.f32 %v9824, 0.0
        %v9937 = vmax.f32 %v9825, 0.0
        %v9938 = vmax.f32 %v9826, 0.0
        %v9939 = vmax.f32 %v9827, 0.0
        %v9940 = vmax.f32 %v9828, 0.0
        %v9941 = vmax.f32 %v9829, 0.0
        %v9942 = vmax.f32 %v9830, 0.0
        %v9943 = vmax.f32 %v9831, 0.0
        %v9944 = vmax.f32 %v9832, 0.0
        %v9945 = vmax.f32 %v9833, 0.0
        %v9946 = vmax.f32 %v9834, 0.0
        %v9947 = vmax.f32 %v9835, 0.0
        %v9948 = vmax.f32 %v9836, 0.0
        %v9949 = vmax.f32 %v9837, 0.0
        %v9950 = vmax.f32 %v9838, 0.0
        %v9951 = vmax.f32 %v9839, 0.0
        %v9952 = vmax.f32 %v9840, 0.0
        %v9953 = vmax.f32 %v9841, 0.0
        %v9954 = vmax.f32 %v9842, 0.0
        %v9955 = vmax.f32 %v9843, 0.0
        %v9956 = vmax.f32 %v9844, 0.0
        %v9957 = vmax.f32 %v9845, 0.0
        %v9958 = vmax.f32 %v9846, 0.0
        %v9959 = vmax.f32 %v9847, 0.0
        %v9960 = vmax.f32 %v9848, 0.0
        %v9961 = vmax.f32 %v9849, 0.0
        %v9962 = vmax.f32 %v9850, 0.0
        %v9963 = vmax.f32 %v9851, 0.0
        %v9964 = vmax.f32 %v9852, 0.0
        %v9965 = vmax.f32 %v9853, 0.0
        %v9966 = vmax.f32 %v9854, 0.0
        %v9967 = vmax.f32 %v9855, 0.0
        %v9968 = vmax.f32 %v9856, 0.0
        %v9969 = vmax.f32 %v9857, 0.0
        %v9970 = vmax.f32 %v9858, 0.0
        %v9971 = vmax.f32 %v9859, 0.0
        %v9972 = vmax.f32 %v9860, 0.0
        %v9973 = vmax.f32 %v9861, 0.0
        %v9974 = vmax.f32 %v9862, 0.0
        %v9975 = vmax.f32 %v9863, 0.0
        %9976 = vst [vmem:[%s1404] sm:$0xff] %v9864
        %9977 = vst [vmem:[%s1404 + $0x8] sm:$0xff] %v9865
        %9978 = vst [vmem:[%s1404 + $0x10] sm:$0xff] %v9866
        %9979 = vst [vmem:[%s1404 + $0x18] sm:$0xff] %v9867
        %9980 = vst [vmem:[%s1404 + $0x20] sm:$0xff] %v9868
        %9981 = vst [vmem:[%s1404 + $0x28] sm:$0xff] %v9869
        %9982 = vst [vmem:[%s1404 + $0x30] sm:$0xff] %v9870
        %9983 = vst [vmem:[%s1404 + $0x38] sm:$0xff] %v9871
        %9984 = vst [vmem:[%s1404 + $0x40] sm:$0xff] %v9872
        %9985 = vst [vmem:[%s1404 + $0x48] sm:$0xff] %v9873
        %9986 = vst [vmem:[%s1404 + $0x50] sm:$0xff] %v9874
        %9987 = vst [vmem:[%s1404 + $0x58] sm:$0xff] %v9875
        %9988 = vst [vmem:[%s1404 + $0x60] sm:$0xff] %v9876
        %9989 = vst [vmem:[%s1404 + $0x68] sm:$0xff] %v9877
        %9990 = vst [vmem:[%s1404 + $0x70] sm:$0xff] %v9878
        %9991 = vst [vmem:[%s1404 + $0x78] sm:$0xff] %v9879
        %9992 = vst [vmem:[%s1404 + $0x80] sm:$0xff] %v9880
        %9993 = vst [vmem:[%s1404 + $0x88] sm:$0xff] %v9881
        %9994 = vst [vmem:[%s1404 + $0x90] sm:$0xff] %v9882
        %9995 = vst [vmem:[%s1404 + $0x98] sm:$0xff] %v9883
        %9996 = vst [vmem:[%s1404 + $0xa0] sm:$0xff] %v9884
        %9997 = vst [vmem:[%s1404 + $0xa8] sm:$0xff] %v9885
        %9998 = vst [vmem:[%s1404 + $0xb0] sm:$0xff] %v9886
        %9999 = vst [vmem:[%s1404 + $0xb8] sm:$0xff] %v9887
        %10000 = vst [vmem:[%s1404 + $0xc0] sm:$0xff] %v9888
        %10001 = vst [vmem:[%s1404 + $0xc8] sm:$0xff] %v9889
        %10002 = vst [vmem:[%s1404 + $0xd0] sm:$0xff] %v9890
        %10003 = vst [vmem:[%s1404 + $0xd8] sm:$0xff] %v9891
        %10004 = vst [vmem:[%s1404 + $0xe0] sm:$0xff] %v9892
        %10005 = vst [vmem:[%s1404 + $0xe8] sm:$0xff] %v9893
        %10006 = vst [vmem:[%s1404 + $0xf0] sm:$0xff] %v9894
        %10007 = vst [vmem:[%s1404 + $0xf8] sm:$0xff] %v9895
        %10008 = vst [vmem:[%s1404 + $0x100] sm:$0xff] %v9896
        %10009 = vst [vmem:[%s1404 + $0x108] sm:$0xff] %v9897
        %10010 = vst [vmem:[%s1404 + $0x110] sm:$0xff] %v9898
        %10011 = vst [vmem:[%s1404 + $0x118] sm:$0xff] %v9899
        %10012 = vst [vmem:[%s1404 + $0x120] sm:$0xff] %v9900
        %10013 = vst [vmem:[%s1404 + $0x128] sm:$0xff] %v9901
        %10014 = vst [vmem:[%s1404 + $0x130] sm:$0xff] %v9902
        %10015 = vst [vmem:[%s1404 + $0x138] sm:$0xff] %v9903
        %10016 = vst [vmem:[%s1404 + $0x140] sm:$0xff] %v9904
        %10017 = vst [vmem:[%s1404 + $0x148] sm:$0xff] %v9905
        %10018 = vst [vmem:[%s1404 + $0x150] sm:$0xff] %v9906
        %10019 = vst [vmem:[%s1404 + $0x158] sm:$0xff] %v9907
        %10020 = vst [vmem:[%s1404 + $0x160] sm:$0xff] %v9908
        %10021 = vst [vmem:[%s1404 + $0x168] sm:$0xff] %v9909
        %10022 = vst [vmem:[%s1404 + $0x170] sm:$0xff] %v9910
        %10023 = vst [vmem:[%s1404 + $0x178] sm:$0xff] %v9911
        %10024 = vst [vmem:[%s1404 + $0x180] sm:$0xff] %v9912
        %10025 = vst [vmem:[%s1404 + $0x188] sm:$0xff] %v9913
        %10026 = vst [vmem:[%s1404 + $0x190] sm:$0xff] %v9914
        %10027 = vst [vmem:[%s1404 + $0x198] sm:$0xff] %v9915
        %10028 = vst [vmem:[%s1404 + $0x1a0] sm:$0xff] %v9916
        %10029 = vst [vmem:[%s1404 + $0x1a8] sm:$0xff] %v9917
        %10030 = vst [vmem:[%s1404 + $0x1b0] sm:$0xff] %v9918
        %10031 = vst [vmem:[%s1404 + $0x1b8] sm:$0xff] %v9919
        %10032 = vst [vmem:[%s1404 + $0x1c0] sm:$0xff] %v9920
        %10033 = vst [vmem:[%s1404 + $0x1c8] sm:$0xff] %v9921
        %10034 = vst [vmem:[%s1404 + $0x1d0] sm:$0xff] %v9922
        %10035 = vst [vmem:[%s1404 + $0x1d8] sm:$0xff] %v9923
        %10036 = vst [vmem:[%s1404 + $0x1e0] sm:$0xff] %v9924
        %10037 = vst [vmem:[%s1404 + $0x1e8] sm:$0xff] %v9925
        %10038 = vst [vmem:[%s1404 + $0x1f0] sm:$0xff] %v9926
        %10039 = vst [vmem:[%s1404 + $0x1f8] sm:$0xff] %v9927
        %10040 = vst [vmem:[%s1404 + $0x200] sm:$0xff] %v9928
        %10041 = vst [vmem:[%s1404 + $0x208] sm:$0xff] %v9929
        %10042 = vst [vmem:[%s1404 + $0x210] sm:$0xff] %v9930
        %10043 = vst [vmem:[%s1404 + $0x218] sm:$0xff] %v9931
        %10044 = vst [vmem:[%s1404 + $0x220] sm:$0xff] %v9932
        %10045 = vst [vmem:[%s1404 + $0x228] sm:$0xff] %v9933
        %10046 = vst [vmem:[%s1404 + $0x230] sm:$0xff] %v9934
        %10047 = vst [vmem:[%s1404 + $0x238] sm:$0xff] %v9935
        %10048 = vst [vmem:[%s1404 + $0x240] sm:$0xff] %v9936
        %10049 = vst [vmem:[%s1404 + $0x248] sm:$0xff] %v9937
        %10050 = vst [vmem:[%s1404 + $0x250] sm:$0xff] %v9938
        %10051 = vst [vmem:[%s1404 + $0x258] sm:$0xff] %v9939
        %10052 = vst [vmem:[%s1404 + $0x260] sm:$0xff] %v9940
        %10053 = vst [vmem:[%s1404 + $0x268] sm:$0xff] %v9941
        %10054 = vst [vmem:[%s1404 + $0x270] sm:$0xff] %v9942
        %10055 = vst [vmem:[%s1404 + $0x278] sm:$0xff] %v9943
        %10056 = vst [vmem:[%s1404 + $0x280] sm:$0xff] %v9944
        %10057 = vst [vmem:[%s1404 + $0x288] sm:$0xff] %v9945
        %10058 = vst [vmem:[%s1404 + $0x290] sm:$0xff] %v9946
        %10059 = vst [vmem:[%s1404 + $0x298] sm:$0xff] %v9947
        %10060 = vst [vmem:[%s1404 + $0x2a0] sm:$0xff] %v9948
        %10061 = vst [vmem:[%s1404 + $0x2a8] sm:$0xff] %v9949
        %10062 = vst [vmem:[%s1404 + $0x2b0] sm:$0xff] %v9950
        %10063 = vst [vmem:[%s1404 + $0x2b8] sm:$0xff] %v9951
        %10064 = vst [vmem:[%s1404 + $0x2c0] sm:$0xff] %v9952
        %10065 = vst [vmem:[%s1404 + $0x2c8] sm:$0xff] %v9953
        %10066 = vst [vmem:[%s1404 + $0x2d0] sm:$0xff] %v9954
        %10067 = vst [vmem:[%s1404 + $0x2d8] sm:$0xff] %v9955
        %10068 = vst [vmem:[%s1404 + $0x2e0] sm:$0xff] %v9956
        %10069 = vst [vmem:[%s1404 + $0x2e8] sm:$0xff] %v9957
        %10070 = vst [vmem:[%s1404 + $0x2f0] sm:$0xff] %v9958
        %10071 = vst [vmem:[%s1404 + $0x2f8] sm:$0xff] %v9959
        %10072 = vst [vmem:[%s1404 + $0x300] sm:$0xff] %v9960
        %10073 = vst [vmem:[%s1404 + $0x308] sm:$0xff] %v9961
        %10074 = vst [vmem:[%s1404 + $0x310] sm:$0xff] %v9962
        %10075 = vst [vmem:[%s1404 + $0x318] sm:$0xff] %v9963
        %10076 = vst [vmem:[%s1404 + $0x320] sm:$0xff] %v9964
        %10077 = vst [vmem:[%s1404 + $0x328] sm:$0xff] %v9965
        %10078 = vst [vmem:[%s1404 + $0x330] sm:$0xff] %v9966
        %10079 = vst [vmem:[%s1404 + $0x338] sm:$0xff] %v9967
        %10080 = vst [vmem:[%s1404 + $0x340] sm:$0xff] %v9968
        %10081 = vst [vmem:[%s1404 + $0x348] sm:$0xff] %v9969
        %10082 = vst [vmem:[%s1404 + $0x350] sm:$0xff] %v9970
        %10083 = vst [vmem:[%s1404 + $0x358] sm:$0xff] %v9971
        %10084 = vst [vmem:[%s1404 + $0x360] sm:$0xff] %v9972
        %10085 = vst [vmem:[%s1404 + $0x368] sm:$0xff] %v9973
        %10086 = vst [vmem:[%s1404 + $0x370] sm:$0xff] %v9974
        %10087 = vst [vmem:[%s1404 + $0x378] sm:$0xff] %v9975
        %s10088 = sand.u32 %s122, 1
        %s10089 = sand.u32 %s122, 1
        %s10090 = smul.addr %s10089, 896
        %s10091 = scalar_lea.vmem [#allocation3], %s10090
        // Predicated region
        $region78: #{relu_conv_bn_relu.1} parent=72 // pred_check
          %p10092 = pneg %p132
        $region79: #{relu_conv_bn_relu.1} parent=72 // pred_check_branch
          %10094 = sbr.rel (%p10092) target = $region81
        $region80: #{relu_conv_bn_relu.1} parent=72 // pred_region
          %s10095 = smul.addr %s15, 8
          %s10096 = scalar_lea.vmem %s4, %s10095
          // Predicated region
          $region82: #{relu_conv_bn_relu.1} parent=80 // pred_check
            _
          $region83: #{relu_conv_bn_relu.1} parent=80 // pred_check_branch
            %10098 = sbr.rel (0) target = $region85
          $region84: #{relu_conv_bn_relu.1} parent=80 // pred_region
            // Predicated region
            $region86: #{relu_conv_bn_relu.1} parent=84 // pred_check
              _
            $region87: #{relu_conv_bn_relu.1} parent=84 // pred_check_branch
              %10100 = sbr.rel (0) target = $region89
            $region88: #{relu_conv_bn_relu.1} parent=84 // pred_region
              // Predicated region
              $region101: #{relu_conv_bn_relu.1} parent=88 // pred_check
                _
              $region102: #{relu_conv_bn_relu.1} parent=88 // pred_check_branch
                %10338 = sbr.rel (0) target = $region104
              $region103: #{relu_conv_bn_relu.1} parent=88 // pred_region
                loop: start=0, step=1, limit=1
                $region105: #{relu_conv_bn_relu.1} parent=103 // loop_pre_header
                  _
                $region106: #{relu_conv_bn_relu.1} parent=103 // loop_header
                  %s10340 = sphi 0, %s10344
                  %p10341 = scmp.ge.s32.totalorder %s10340, 1
                  %s10345 = sphi %s10091, %s10091
                  %s10346 = sphi %s10096, %s10096
                $region107: #{relu_conv_bn_relu.1} parent=103 // loop_header_branch
                  %10343 = sbr.rel (%p10341) target = $region111
                $region108: #{relu_conv_bn_relu.1} parent=103 // loop_body
                  %v10347 = vld [vmem:[%s10345] sm:$0xff]
                  %10348 = vst [vmem:[%s10346] sm:$0xff] %v10347
                  %v10349 = vld [vmem:[%s10345 + $0x8] sm:$0xff]
                  %10350 = vst [vmem:[%s10346 + $0x10] sm:$0xff] %v10349
                  %v10351 = vld [vmem:[%s10345 + $0x10] sm:$0xff]
                  %10352 = vst [vmem:[%s10346 + $0x20] sm:$0xff] %v10351
                  %v10353 = vld [vmem:[%s10345 + $0x18] sm:$0xff]
                  %10354 = vst [vmem:[%s10346 + $0x30] sm:$0xff] %v10353
                  %v10355 = vld [vmem:[%s10345 + $0x20] sm:$0xff]
                  %10356 = vst [vmem:[%s10346 + $0x40] sm:$0xff] %v10355
                  %v10357 = vld [vmem:[%s10345 + $0x28] sm:$0xff]
                  %10358 = vst [vmem:[%s10346 + $0x50] sm:$0xff] %v10357
                  %v10359 = vld [vmem:[%s10345 + $0x30] sm:$0xff]
                  %10360 = vst [vmem:[%s10346 + $0x60] sm:$0xff] %v10359
                  %v10361 = vld [vmem:[%s10345 + $0x38] sm:$0xff]
                  %10362 = vst [vmem:[%s10346 + $0x70] sm:$0xff] %v10361
                  %v10363 = vld [vmem:[%s10345 + $0x40] sm:$0xff]
                  %10364 = vst [vmem:[%s10346 + $0x80] sm:$0xff] %v10363
                  %v10365 = vld [vmem:[%s10345 + $0x48] sm:$0xff]
                  %10366 = vst [vmem:[%s10346 + $0x90] sm:$0xff] %v10365
                  %v10367 = vld [vmem:[%s10345 + $0x50] sm:$0xff]
                  %10368 = vst [vmem:[%s10346 + $0xa0] sm:$0xff] %v10367
                  %v10369 = vld [vmem:[%s10345 + $0x58] sm:$0xff]
                  %10370 = vst [vmem:[%s10346 + $0xb0] sm:$0xff] %v10369
                  %v10371 = vld [vmem:[%s10345 + $0x60] sm:$0xff]
                  %10372 = vst [vmem:[%s10346 + $0xc0] sm:$0xff] %v10371
                  %v10373 = vld [vmem:[%s10345 + $0x68] sm:$0xff]
                  %10374 = vst [vmem:[%s10346 + $0xd0] sm:$0xff] %v10373
                  %v10375 = vld [vmem:[%s10345 + $0x70] sm:$0xff]
                  %10376 = vst [vmem:[%s10346 + $0xe0] sm:$0xff] %v10375
                  %v10377 = vld [vmem:[%s10345 + $0x78] sm:$0xff]
                  %10378 = vst [vmem:[%s10346 + $0xf0] sm:$0xff] %v10377
                  %v10379 = vld [vmem:[%s10345 + $0x80] sm:$0xff]
                  %10380 = vst [vmem:[%s10346 + $0x100] sm:$0xff] %v10379
                  %v10381 = vld [vmem:[%s10345 + $0x88] sm:$0xff]
                  %10382 = vst [vmem:[%s10346 + $0x110] sm:$0xff] %v10381
                  %v10383 = vld [vmem:[%s10345 + $0x90] sm:$0xff]
                  %10384 = vst [vmem:[%s10346 + $0x120] sm:$0xff] %v10383
                  %v10385 = vld [vmem:[%s10345 + $0x98] sm:$0xff]
                  %10386 = vst [vmem:[%s10346 + $0x130] sm:$0xff] %v10385
                  %v10387 = vld [vmem:[%s10345 + $0xa0] sm:$0xff]
                  %10388 = vst [vmem:[%s10346 + $0x140] sm:$0xff] %v10387
                  %v10389 = vld [vmem:[%s10345 + $0xa8] sm:$0xff]
                  %10390 = vst [vmem:[%s10346 + $0x150] sm:$0xff] %v10389
                  %v10391 = vld [vmem:[%s10345 + $0xb0] sm:$0xff]
                  %10392 = vst [vmem:[%s10346 + $0x160] sm:$0xff] %v10391
                  %v10393 = vld [vmem:[%s10345 + $0xb8] sm:$0xff]
                  %10394 = vst [vmem:[%s10346 + $0x170] sm:$0xff] %v10393
                  %v10395 = vld [vmem:[%s10345 + $0xc0] sm:$0xff]
                  %10396 = vst [vmem:[%s10346 + $0x180] sm:$0xff] %v10395
                  %v10397 = vld [vmem:[%s10345 + $0xc8] sm:$0xff]
                  %10398 = vst [vmem:[%s10346 + $0x190] sm:$0xff] %v10397
                  %v10399 = vld [vmem:[%s10345 + $0xd0] sm:$0xff]
                  %10400 = vst [vmem:[%s10346 + $0x1a0] sm:$0xff] %v10399
                  %v10401 = vld [vmem:[%s10345 + $0xd8] sm:$0xff]
                  %10402 = vst [vmem:[%s10346 + $0x1b0] sm:$0xff] %v10401
                  %v10403 = vld [vmem:[%s10345 + $0xe0] sm:$0xff]
                  %10404 = vst [vmem:[%s10346 + $0x1c0] sm:$0xff] %v10403
                  %v10405 = vld [vmem:[%s10345 + $0xe8] sm:$0xff]
                  %10406 = vst [vmem:[%s10346 + $0x1d0] sm:$0xff] %v10405
                  %v10407 = vld [vmem:[%s10345 + $0xf0] sm:$0xff]
                  %10408 = vst [vmem:[%s10346 + $0x1e0] sm:$0xff] %v10407
                  %v10409 = vld [vmem:[%s10345 + $0xf8] sm:$0xff]
                  %10410 = vst [vmem:[%s10346 + $0x1f0] sm:$0xff] %v10409
                  %v10411 = vld [vmem:[%s10345 + $0x100] sm:$0xff]
                  %10412 = vst [vmem:[%s10346 + $0x200] sm:$0xff] %v10411
                  %v10413 = vld [vmem:[%s10345 + $0x108] sm:$0xff]
                  %10414 = vst [vmem:[%s10346 + $0x210] sm:$0xff] %v10413
                  %v10415 = vld [vmem:[%s10345 + $0x110] sm:$0xff]
                  %10416 = vst [vmem:[%s10346 + $0x220] sm:$0xff] %v10415
                  %v10417 = vld [vmem:[%s10345 + $0x118] sm:$0xff]
                  %10418 = vst [vmem:[%s10346 + $0x230] sm:$0xff] %v10417
                  %v10419 = vld [vmem:[%s10345 + $0x120] sm:$0xff]
                  %10420 = vst [vmem:[%s10346 + $0x240] sm:$0xff] %v10419
                  %v10421 = vld [vmem:[%s10345 + $0x128] sm:$0xff]
                  %10422 = vst [vmem:[%s10346 + $0x250] sm:$0xff] %v10421
                  %v10423 = vld [vmem:[%s10345 + $0x130] sm:$0xff]
                  %10424 = vst [vmem:[%s10346 + $0x260] sm:$0xff] %v10423
                  %v10425 = vld [vmem:[%s10345 + $0x138] sm:$0xff]
                  %10426 = vst [vmem:[%s10346 + $0x270] sm:$0xff] %v10425
                  %v10427 = vld [vmem:[%s10345 + $0x140] sm:$0xff]
                  %10428 = vst [vmem:[%s10346 + $0x280] sm:$0xff] %v10427
                  %v10429 = vld [vmem:[%s10345 + $0x148] sm:$0xff]
                  %10430 = vst [vmem:[%s10346 + $0x290] sm:$0xff] %v10429
                  %v10431 = vld [vmem:[%s10345 + $0x150] sm:$0xff]
                  %10432 = vst [vmem:[%s10346 + $0x2a0] sm:$0xff] %v10431
                  %v10433 = vld [vmem:[%s10345 + $0x158] sm:$0xff]
                  %10434 = vst [vmem:[%s10346 + $0x2b0] sm:$0xff] %v10433
                  %v10435 = vld [vmem:[%s10345 + $0x160] sm:$0xff]
                  %10436 = vst [vmem:[%s10346 + $0x2c0] sm:$0xff] %v10435
                  %v10437 = vld [vmem:[%s10345 + $0x168] sm:$0xff]
                  %10438 = vst [vmem:[%s10346 + $0x2d0] sm:$0xff] %v10437
                  %v10439 = vld [vmem:[%s10345 + $0x170] sm:$0xff]
                  %10440 = vst [vmem:[%s10346 + $0x2e0] sm:$0xff] %v10439
                  %v10441 = vld [vmem:[%s10345 + $0x178] sm:$0xff]
                  %10442 = vst [vmem:[%s10346 + $0x2f0] sm:$0xff] %v10441
                  %v10443 = vld [vmem:[%s10345 + $0x180] sm:$0xff]
                  %10444 = vst [vmem:[%s10346 + $0x300] sm:$0xff] %v10443
                  %v10445 = vld [vmem:[%s10345 + $0x188] sm:$0xff]
                  %10446 = vst [vmem:[%s10346 + $0x310] sm:$0xff] %v10445
                  %v10447 = vld [vmem:[%s10345 + $0x190] sm:$0xff]
                  %10448 = vst [vmem:[%s10346 + $0x320] sm:$0xff] %v10447
                  %v10449 = vld [vmem:[%s10345 + $0x198] sm:$0xff]
                  %10450 = vst [vmem:[%s10346 + $0x330] sm:$0xff] %v10449
                  %v10451 = vld [vmem:[%s10345 + $0x1a0] sm:$0xff]
                  %10452 = vst [vmem:[%s10346 + $0x340] sm:$0xff] %v10451
                  %v10453 = vld [vmem:[%s10345 + $0x1a8] sm:$0xff]
                  %10454 = vst [vmem:[%s10346 + $0x350] sm:$0xff] %v10453
                  %v10455 = vld [vmem:[%s10345 + $0x1b0] sm:$0xff]
                  %10456 = vst [vmem:[%s10346 + $0x360] sm:$0xff] %v10455
                  %v10457 = vld [vmem:[%s10345 + $0x1b8] sm:$0xff]
                  %10458 = vst [vmem:[%s10346 + $0x370] sm:$0xff] %v10457
                  %v10459 = vld [vmem:[%s10345 + $0x1c0] sm:$0xff]
                  %10460 = vst [vmem:[%s10346 + $0x380] sm:$0xff] %v10459
                  %v10461 = vld [vmem:[%s10345 + $0x1c8] sm:$0xff]
                  %10462 = vst [vmem:[%s10346 + $0x390] sm:$0xff] %v10461
                  %v10463 = vld [vmem:[%s10345 + $0x1d0] sm:$0xff]
                  %10464 = vst [vmem:[%s10346 + $0x3a0] sm:$0xff] %v10463
                  %v10465 = vld [vmem:[%s10345 + $0x1d8] sm:$0xff]
                  %10466 = vst [vmem:[%s10346 + $0x3b0] sm:$0xff] %v10465
                  %v10467 = vld [vmem:[%s10345 + $0x1e0] sm:$0xff]
                  %10468 = vst [vmem:[%s10346 + $0x3c0] sm:$0xff] %v10467
                  %v10469 = vld [vmem:[%s10345 + $0x1e8] sm:$0xff]
                  %10470 = vst [vmem:[%s10346 + $0x3d0] sm:$0xff] %v10469
                  %v10471 = vld [vmem:[%s10345 + $0x1f0] sm:$0xff]
                  %10472 = vst [vmem:[%s10346 + $0x3e0] sm:$0xff] %v10471
                  %v10473 = vld [vmem:[%s10345 + $0x1f8] sm:$0xff]
                  %10474 = vst [vmem:[%s10346 + $0x3f0] sm:$0xff] %v10473
                  %v10475 = vld [vmem:[%s10345 + $0x200] sm:$0xff]
                  %10476 = vst [vmem:[%s10346 + $0x400] sm:$0xff] %v10475
                  %v10477 = vld [vmem:[%s10345 + $0x208] sm:$0xff]
                  %10478 = vst [vmem:[%s10346 + $0x410] sm:$0xff] %v10477
                  %v10479 = vld [vmem:[%s10345 + $0x210] sm:$0xff]
                  %10480 = vst [vmem:[%s10346 + $0x420] sm:$0xff] %v10479
                  %v10481 = vld [vmem:[%s10345 + $0x218] sm:$0xff]
                  %10482 = vst [vmem:[%s10346 + $0x430] sm:$0xff] %v10481
                  %v10483 = vld [vmem:[%s10345 + $0x220] sm:$0xff]
                  %10484 = vst [vmem:[%s10346 + $0x440] sm:$0xff] %v10483
                  %v10485 = vld [vmem:[%s10345 + $0x228] sm:$0xff]
                  %10486 = vst [vmem:[%s10346 + $0x450] sm:$0xff] %v10485
                  %v10487 = vld [vmem:[%s10345 + $0x230] sm:$0xff]
                  %10488 = vst [vmem:[%s10346 + $0x460] sm:$0xff] %v10487
                  %v10489 = vld [vmem:[%s10345 + $0x238] sm:$0xff]
                  %10490 = vst [vmem:[%s10346 + $0x470] sm:$0xff] %v10489
                  %v10491 = vld [vmem:[%s10345 + $0x240] sm:$0xff]
                  %10492 = vst [vmem:[%s10346 + $0x480] sm:$0xff] %v10491
                  %v10493 = vld [vmem:[%s10345 + $0x248] sm:$0xff]
                  %10494 = vst [vmem:[%s10346 + $0x490] sm:$0xff] %v10493
                  %v10495 = vld [vmem:[%s10345 + $0x250] sm:$0xff]
                  %10496 = vst [vmem:[%s10346 + $0x4a0] sm:$0xff] %v10495
                  %v10497 = vld [vmem:[%s10345 + $0x258] sm:$0xff]
                  %10498 = vst [vmem:[%s10346 + $0x4b0] sm:$0xff] %v10497
                  %v10499 = vld [vmem:[%s10345 + $0x260] sm:$0xff]
                  %10500 = vst [vmem:[%s10346 + $0x4c0] sm:$0xff] %v10499
                  %v10501 = vld [vmem:[%s10345 + $0x268] sm:$0xff]
                  %10502 = vst [vmem:[%s10346 + $0x4d0] sm:$0xff] %v10501
                  %v10503 = vld [vmem:[%s10345 + $0x270] sm:$0xff]
                  %10504 = vst [vmem:[%s10346 + $0x4e0] sm:$0xff] %v10503
                  %v10505 = vld [vmem:[%s10345 + $0x278] sm:$0xff]
                  %10506 = vst [vmem:[%s10346 + $0x4f0] sm:$0xff] %v10505
                  %v10507 = vld [vmem:[%s10345 + $0x280] sm:$0xff]
                  %10508 = vst [vmem:[%s10346 + $0x500] sm:$0xff] %v10507
                  %v10509 = vld [vmem:[%s10345 + $0x288] sm:$0xff]
                  %10510 = vst [vmem:[%s10346 + $0x510] sm:$0xff] %v10509
                  %v10511 = vld [vmem:[%s10345 + $0x290] sm:$0xff]
                  %10512 = vst [vmem:[%s10346 + $0x520] sm:$0xff] %v10511
                  %v10513 = vld [vmem:[%s10345 + $0x298] sm:$0xff]
                  %10514 = vst [vmem:[%s10346 + $0x530] sm:$0xff] %v10513
                  %v10515 = vld [vmem:[%s10345 + $0x2a0] sm:$0xff]
                  %10516 = vst [vmem:[%s10346 + $0x540] sm:$0xff] %v10515
                  %v10517 = vld [vmem:[%s10345 + $0x2a8] sm:$0xff]
                  %10518 = vst [vmem:[%s10346 + $0x550] sm:$0xff] %v10517
                  %v10519 = vld [vmem:[%s10345 + $0x2b0] sm:$0xff]
                  %10520 = vst [vmem:[%s10346 + $0x560] sm:$0xff] %v10519
                  %v10521 = vld [vmem:[%s10345 + $0x2b8] sm:$0xff]
                  %10522 = vst [vmem:[%s10346 + $0x570] sm:$0xff] %v10521
                  %v10523 = vld [vmem:[%s10345 + $0x2c0] sm:$0xff]
                  %10524 = vst [vmem:[%s10346 + $0x580] sm:$0xff] %v10523
                  %v10525 = vld [vmem:[%s10345 + $0x2c8] sm:$0xff]
                  %10526 = vst [vmem:[%s10346 + $0x590] sm:$0xff] %v10525
                  %v10527 = vld [vmem:[%s10345 + $0x2d0] sm:$0xff]
                  %10528 = vst [vmem:[%s10346 + $0x5a0] sm:$0xff] %v10527
                  %v10529 = vld [vmem:[%s10345 + $0x2d8] sm:$0xff]
                  %10530 = vst [vmem:[%s10346 + $0x5b0] sm:$0xff] %v10529
                  %v10531 = vld [vmem:[%s10345 + $0x2e0] sm:$0xff]
                  %10532 = vst [vmem:[%s10346 + $0x5c0] sm:$0xff] %v10531
                  %v10533 = vld [vmem:[%s10345 + $0x2e8] sm:$0xff]
                  %10534 = vst [vmem:[%s10346 + $0x5d0] sm:$0xff] %v10533
                  %v10535 = vld [vmem:[%s10345 + $0x2f0] sm:$0xff]
                  %10536 = vst [vmem:[%s10346 + $0x5e0] sm:$0xff] %v10535
                  %v10537 = vld [vmem:[%s10345 + $0x2f8] sm:$0xff]
                  %10538 = vst [vmem:[%s10346 + $0x5f0] sm:$0xff] %v10537
                  %v10539 = vld [vmem:[%s10345 + $0x300] sm:$0xff]
                  %10540 = vst [vmem:[%s10346 + $0x600] sm:$0xff] %v10539
                  %v10541 = vld [vmem:[%s10345 + $0x308] sm:$0xff]
                  %10542 = vst [vmem:[%s10346 + $0x610] sm:$0xff] %v10541
                  %v10543 = vld [vmem:[%s10345 + $0x310] sm:$0xff]
                  %10544 = vst [vmem:[%s10346 + $0x620] sm:$0xff] %v10543
                  %v10545 = vld [vmem:[%s10345 + $0x318] sm:$0xff]
                  %10546 = vst [vmem:[%s10346 + $0x630] sm:$0xff] %v10545
                  %v10547 = vld [vmem:[%s10345 + $0x320] sm:$0xff]
                  %10548 = vst [vmem:[%s10346 + $0x640] sm:$0xff] %v10547
                  %v10549 = vld [vmem:[%s10345 + $0x328] sm:$0xff]
                  %10550 = vst [vmem:[%s10346 + $0x650] sm:$0xff] %v10549
                  %v10551 = vld [vmem:[%s10345 + $0x330] sm:$0xff]
                  %10552 = vst [vmem:[%s10346 + $0x660] sm:$0xff] %v10551
                  %v10553 = vld [vmem:[%s10345 + $0x338] sm:$0xff]
                  %10554 = vst [vmem:[%s10346 + $0x670] sm:$0xff] %v10553
                  %v10555 = vld [vmem:[%s10345 + $0x340] sm:$0xff]
                  %10556 = vst [vmem:[%s10346 + $0x680] sm:$0xff] %v10555
                  %v10557 = vld [vmem:[%s10345 + $0x348] sm:$0xff]
                  %10558 = vst [vmem:[%s10346 + $0x690] sm:$0xff] %v10557
                  %v10559 = vld [vmem:[%s10345 + $0x350] sm:$0xff]
                  %10560 = vst [vmem:[%s10346 + $0x6a0] sm:$0xff] %v10559
                  %v10561 = vld [vmem:[%s10345 + $0x358] sm:$0xff]
                  %10562 = vst [vmem:[%s10346 + $0x6b0] sm:$0xff] %v10561
                  %v10563 = vld [vmem:[%s10345 + $0x360] sm:$0xff]
                  %10564 = vst [vmem:[%s10346 + $0x6c0] sm:$0xff] %v10563
                  %v10565 = vld [vmem:[%s10345 + $0x368] sm:$0xff]
                  %10566 = vst [vmem:[%s10346 + $0x6d0] sm:$0xff] %v10565
                  %v10567 = vld [vmem:[%s10345 + $0x370] sm:$0xff]
                  %10568 = vst [vmem:[%s10346 + $0x6e0] sm:$0xff] %v10567
                  %v10569 = vld [vmem:[%s10345 + $0x378] sm:$0xff]
                  %10570 = vst [vmem:[%s10346 + $0x6f0] sm:$0xff] %v10569
                $region109: #{relu_conv_bn_relu.1} parent=103 // loop_footer
                  %s10344 = sadd.s32 1, %s10340
                $region110: #{relu_conv_bn_relu.1} parent=103 // loop_footer_branch
                  %10339 = sbr.rel target = $region106
                $region111: #{relu_conv_bn_relu.1} parent=103 // loop_exit
                  _
              $region104: #{relu_conv_bn_relu.1} parent=88 // pred_fallthru
                _
              // Predicated region
              $region112: #{relu_conv_bn_relu.1} parent=88 // pred_check
                _
              $region113: #{relu_conv_bn_relu.1} parent=88 // pred_check_branch
                %10572 = sbr.rel target = $region115
              $region114: #{relu_conv_bn_relu.1} parent=88 // pred_region
                _
              $region115: #{relu_conv_bn_relu.1} parent=88 // pred_fallthru
                _
            $region89: #{relu_conv_bn_relu.1} parent=84 // pred_fallthru
              _
            // Predicated region
            $region90: #{relu_conv_bn_relu.1} parent=84 // pred_check
              _
            $region91: #{relu_conv_bn_relu.1} parent=84 // pred_check_branch
              %10102 = sbr.rel target = $region93
            $region92: #{relu_conv_bn_relu.1} parent=84 // pred_region
              %s10104 = ssub.s32 256, 1
              loop: start=0, step=1, limit=1
              $region94: #{relu_conv_bn_relu.1} parent=92 // loop_pre_header
                _
              $region95: #{relu_conv_bn_relu.1} parent=92 // loop_header
                %s10106 = sphi 0, %s10110
                %p10107 = scmp.ge.s32.totalorder %s10106, 1
                %s10111 = sphi %s10091, %s10091
                %s10112 = sphi %s10096, %s10096
              $region96: #{relu_conv_bn_relu.1} parent=92 // loop_header_branch
                %10109 = sbr.rel (%p10107) target = $region100
              $region97: #{relu_conv_bn_relu.1} parent=92 // loop_body
                %v10113 = vld [vmem:[%s10111] sm:%s10104]
                %10114 = vst [vmem:[%s10112] sm:%s10104] %v10113
                %v10115 = vld [vmem:[%s10111 + $0x8] sm:%s10104]
                %10116 = vst [vmem:[%s10112 + $0x10] sm:%s10104] %v10115
                %v10117 = vld [vmem:[%s10111 + $0x10] sm:%s10104]
                %10118 = vst [vmem:[%s10112 + $0x20] sm:%s10104] %v10117
                %v10119 = vld [vmem:[%s10111 + $0x18] sm:%s10104]
                %10120 = vst [vmem:[%s10112 + $0x30] sm:%s10104] %v10119
                %v10121 = vld [vmem:[%s10111 + $0x20] sm:%s10104]
                %10122 = vst [vmem:[%s10112 + $0x40] sm:%s10104] %v10121
                %v10123 = vld [vmem:[%s10111 + $0x28] sm:%s10104]
                %10124 = vst [vmem:[%s10112 + $0x50] sm:%s10104] %v10123
                %v10125 = vld [vmem:[%s10111 + $0x30] sm:%s10104]
                %10126 = vst [vmem:[%s10112 + $0x60] sm:%s10104] %v10125
                %v10127 = vld [vmem:[%s10111 + $0x38] sm:%s10104]
                %10128 = vst [vmem:[%s10112 + $0x70] sm:%s10104] %v10127
                %v10129 = vld [vmem:[%s10111 + $0x40] sm:%s10104]
                %10130 = vst [vmem:[%s10112 + $0x80] sm:%s10104] %v10129
                %v10131 = vld [vmem:[%s10111 + $0x48] sm:%s10104]
                %10132 = vst [vmem:[%s10112 + $0x90] sm:%s10104] %v10131
                %v10133 = vld [vmem:[%s10111 + $0x50] sm:%s10104]
                %10134 = vst [vmem:[%s10112 + $0xa0] sm:%s10104] %v10133
                %v10135 = vld [vmem:[%s10111 + $0x58] sm:%s10104]
                %10136 = vst [vmem:[%s10112 + $0xb0] sm:%s10104] %v10135
                %v10137 = vld [vmem:[%s10111 + $0x60] sm:%s10104]
                %10138 = vst [vmem:[%s10112 + $0xc0] sm:%s10104] %v10137
                %v10139 = vld [vmem:[%s10111 + $0x68] sm:%s10104]
                %10140 = vst [vmem:[%s10112 + $0xd0] sm:%s10104] %v10139
                %v10141 = vld [vmem:[%s10111 + $0x70] sm:%s10104]
                %10142 = vst [vmem:[%s10112 + $0xe0] sm:%s10104] %v10141
                %v10143 = vld [vmem:[%s10111 + $0x78] sm:%s10104]
                %10144 = vst [vmem:[%s10112 + $0xf0] sm:%s10104] %v10143
                %v10145 = vld [vmem:[%s10111 + $0x80] sm:%s10104]
                %10146 = vst [vmem:[%s10112 + $0x100] sm:%s10104] %v10145
                %v10147 = vld [vmem:[%s10111 + $0x88] sm:%s10104]
                %10148 = vst [vmem:[%s10112 + $0x110] sm:%s10104] %v10147
                %v10149 = vld [vmem:[%s10111 + $0x90] sm:%s10104]
                %10150 = vst [vmem:[%s10112 + $0x120] sm:%s10104] %v10149
                %v10151 = vld [vmem:[%s10111 + $0x98] sm:%s10104]
                %10152 = vst [vmem:[%s10112 + $0x130] sm:%s10104] %v10151
                %v10153 = vld [vmem:[%s10111 + $0xa0] sm:%s10104]
                %10154 = vst [vmem:[%s10112 + $0x140] sm:%s10104] %v10153
                %v10155 = vld [vmem:[%s10111 + $0xa8] sm:%s10104]
                %10156 = vst [vmem:[%s10112 + $0x150] sm:%s10104] %v10155
                %v10157 = vld [vmem:[%s10111 + $0xb0] sm:%s10104]
                %10158 = vst [vmem:[%s10112 + $0x160] sm:%s10104] %v10157
                %v10159 = vld [vmem:[%s10111 + $0xb8] sm:%s10104]
                %10160 = vst [vmem:[%s10112 + $0x170] sm:%s10104] %v10159
                %v10161 = vld [vmem:[%s10111 + $0xc0] sm:%s10104]
                %10162 = vst [vmem:[%s10112 + $0x180] sm:%s10104] %v10161
                %v10163 = vld [vmem:[%s10111 + $0xc8] sm:%s10104]
                %10164 = vst [vmem:[%s10112 + $0x190] sm:%s10104] %v10163
                %v10165 = vld [vmem:[%s10111 + $0xd0] sm:%s10104]
                %10166 = vst [vmem:[%s10112 + $0x1a0] sm:%s10104] %v10165
                %v10167 = vld [vmem:[%s10111 + $0xd8] sm:%s10104]
                %10168 = vst [vmem:[%s10112 + $0x1b0] sm:%s10104] %v10167
                %v10169 = vld [vmem:[%s10111 + $0xe0] sm:%s10104]
                %10170 = vst [vmem:[%s10112 + $0x1c0] sm:%s10104] %v10169
                %v10171 = vld [vmem:[%s10111 + $0xe8] sm:%s10104]
                %10172 = vst [vmem:[%s10112 + $0x1d0] sm:%s10104] %v10171
                %v10173 = vld [vmem:[%s10111 + $0xf0] sm:%s10104]
                %10174 = vst [vmem:[%s10112 + $0x1e0] sm:%s10104] %v10173
                %v10175 = vld [vmem:[%s10111 + $0xf8] sm:%s10104]
                %10176 = vst [vmem:[%s10112 + $0x1f0] sm:%s10104] %v10175
                %v10177 = vld [vmem:[%s10111 + $0x100] sm:%s10104]
                %10178 = vst [vmem:[%s10112 + $0x200] sm:%s10104] %v10177
                %v10179 = vld [vmem:[%s10111 + $0x108] sm:%s10104]
                %10180 = vst [vmem:[%s10112 + $0x210] sm:%s10104] %v10179
                %v10181 = vld [vmem:[%s10111 + $0x110] sm:%s10104]
                %10182 = vst [vmem:[%s10112 + $0x220] sm:%s10104] %v10181
                %v10183 = vld [vmem:[%s10111 + $0x118] sm:%s10104]
                %10184 = vst [vmem:[%s10112 + $0x230] sm:%s10104] %v10183
                %v10185 = vld [vmem:[%s10111 + $0x120] sm:%s10104]
                %10186 = vst [vmem:[%s10112 + $0x240] sm:%s10104] %v10185
                %v10187 = vld [vmem:[%s10111 + $0x128] sm:%s10104]
                %10188 = vst [vmem:[%s10112 + $0x250] sm:%s10104] %v10187
                %v10189 = vld [vmem:[%s10111 + $0x130] sm:%s10104]
                %10190 = vst [vmem:[%s10112 + $0x260] sm:%s10104] %v10189
                %v10191 = vld [vmem:[%s10111 + $0x138] sm:%s10104]
                %10192 = vst [vmem:[%s10112 + $0x270] sm:%s10104] %v10191
                %v10193 = vld [vmem:[%s10111 + $0x140] sm:%s10104]
                %10194 = vst [vmem:[%s10112 + $0x280] sm:%s10104] %v10193
                %v10195 = vld [vmem:[%s10111 + $0x148] sm:%s10104]
                %10196 = vst [vmem:[%s10112 + $0x290] sm:%s10104] %v10195
                %v10197 = vld [vmem:[%s10111 + $0x150] sm:%s10104]
                %10198 = vst [vmem:[%s10112 + $0x2a0] sm:%s10104] %v10197
                %v10199 = vld [vmem:[%s10111 + $0x158] sm:%s10104]
                %10200 = vst [vmem:[%s10112 + $0x2b0] sm:%s10104] %v10199
                %v10201 = vld [vmem:[%s10111 + $0x160] sm:%s10104]
                %10202 = vst [vmem:[%s10112 + $0x2c0] sm:%s10104] %v10201
                %v10203 = vld [vmem:[%s10111 + $0x168] sm:%s10104]
                %10204 = vst [vmem:[%s10112 + $0x2d0] sm:%s10104] %v10203
                %v10205 = vld [vmem:[%s10111 + $0x170] sm:%s10104]
                %10206 = vst [vmem:[%s10112 + $0x2e0] sm:%s10104] %v10205
                %v10207 = vld [vmem:[%s10111 + $0x178] sm:%s10104]
                %10208 = vst [vmem:[%s10112 + $0x2f0] sm:%s10104] %v10207
                %v10209 = vld [vmem:[%s10111 + $0x180] sm:%s10104]
                %10210 = vst [vmem:[%s10112 + $0x300] sm:%s10104] %v10209
                %v10211 = vld [vmem:[%s10111 + $0x188] sm:%s10104]
                %10212 = vst [vmem:[%s10112 + $0x310] sm:%s10104] %v10211
                %v10213 = vld [vmem:[%s10111 + $0x190] sm:%s10104]
                %10214 = vst [vmem:[%s10112 + $0x320] sm:%s10104] %v10213
                %v10215 = vld [vmem:[%s10111 + $0x198] sm:%s10104]
                %10216 = vst [vmem:[%s10112 + $0x330] sm:%s10104] %v10215
                %v10217 = vld [vmem:[%s10111 + $0x1a0] sm:%s10104]
                %10218 = vst [vmem:[%s10112 + $0x340] sm:%s10104] %v10217
                %v10219 = vld [vmem:[%s10111 + $0x1a8] sm:%s10104]
                %10220 = vst [vmem:[%s10112 + $0x350] sm:%s10104] %v10219
                %v10221 = vld [vmem:[%s10111 + $0x1b0] sm:%s10104]
                %10222 = vst [vmem:[%s10112 + $0x360] sm:%s10104] %v10221
                %v10223 = vld [vmem:[%s10111 + $0x1b8] sm:%s10104]
                %10224 = vst [vmem:[%s10112 + $0x370] sm:%s10104] %v10223
                %v10225 = vld [vmem:[%s10111 + $0x1c0] sm:%s10104]
                %10226 = vst [vmem:[%s10112 + $0x380] sm:%s10104] %v10225
                %v10227 = vld [vmem:[%s10111 + $0x1c8] sm:%s10104]
                %10228 = vst [vmem:[%s10112 + $0x390] sm:%s10104] %v10227
                %v10229 = vld [vmem:[%s10111 + $0x1d0] sm:%s10104]
                %10230 = vst [vmem:[%s10112 + $0x3a0] sm:%s10104] %v10229
                %v10231 = vld [vmem:[%s10111 + $0x1d8] sm:%s10104]
                %10232 = vst [vmem:[%s10112 + $0x3b0] sm:%s10104] %v10231
                %v10233 = vld [vmem:[%s10111 + $0x1e0] sm:%s10104]
                %10234 = vst [vmem:[%s10112 + $0x3c0] sm:%s10104] %v10233
                %v10235 = vld [vmem:[%s10111 + $0x1e8] sm:%s10104]
                %10236 = vst [vmem:[%s10112 + $0x3d0] sm:%s10104] %v10235
                %v10237 = vld [vmem:[%s10111 + $0x1f0] sm:%s10104]
                %10238 = vst [vmem:[%s10112 + $0x3e0] sm:%s10104] %v10237
                %v10239 = vld [vmem:[%s10111 + $0x1f8] sm:%s10104]
                %10240 = vst [vmem:[%s10112 + $0x3f0] sm:%s10104] %v10239
                %v10241 = vld [vmem:[%s10111 + $0x200] sm:%s10104]
                %10242 = vst [vmem:[%s10112 + $0x400] sm:%s10104] %v10241
                %v10243 = vld [vmem:[%s10111 + $0x208] sm:%s10104]
                %10244 = vst [vmem:[%s10112 + $0x410] sm:%s10104] %v10243
                %v10245 = vld [vmem:[%s10111 + $0x210] sm:%s10104]
                %10246 = vst [vmem:[%s10112 + $0x420] sm:%s10104] %v10245
                %v10247 = vld [vmem:[%s10111 + $0x218] sm:%s10104]
                %10248 = vst [vmem:[%s10112 + $0x430] sm:%s10104] %v10247
                %v10249 = vld [vmem:[%s10111 + $0x220] sm:%s10104]
                %10250 = vst [vmem:[%s10112 + $0x440] sm:%s10104] %v10249
                %v10251 = vld [vmem:[%s10111 + $0x228] sm:%s10104]
                %10252 = vst [vmem:[%s10112 + $0x450] sm:%s10104] %v10251
                %v10253 = vld [vmem:[%s10111 + $0x230] sm:%s10104]
                %10254 = vst [vmem:[%s10112 + $0x460] sm:%s10104] %v10253
                %v10255 = vld [vmem:[%s10111 + $0x238] sm:%s10104]
                %10256 = vst [vmem:[%s10112 + $0x470] sm:%s10104] %v10255
                %v10257 = vld [vmem:[%s10111 + $0x240] sm:%s10104]
                %10258 = vst [vmem:[%s10112 + $0x480] sm:%s10104] %v10257
                %v10259 = vld [vmem:[%s10111 + $0x248] sm:%s10104]
                %10260 = vst [vmem:[%s10112 + $0x490] sm:%s10104] %v10259
                %v10261 = vld [vmem:[%s10111 + $0x250] sm:%s10104]
                %10262 = vst [vmem:[%s10112 + $0x4a0] sm:%s10104] %v10261
                %v10263 = vld [vmem:[%s10111 + $0x258] sm:%s10104]
                %10264 = vst [vmem:[%s10112 + $0x4b0] sm:%s10104] %v10263
                %v10265 = vld [vmem:[%s10111 + $0x260] sm:%s10104]
                %10266 = vst [vmem:[%s10112 + $0x4c0] sm:%s10104] %v10265
                %v10267 = vld [vmem:[%s10111 + $0x268] sm:%s10104]
                %10268 = vst [vmem:[%s10112 + $0x4d0] sm:%s10104] %v10267
                %v10269 = vld [vmem:[%s10111 + $0x270] sm:%s10104]
                %10270 = vst [vmem:[%s10112 + $0x4e0] sm:%s10104] %v10269
                %v10271 = vld [vmem:[%s10111 + $0x278] sm:%s10104]
                %10272 = vst [vmem:[%s10112 + $0x4f0] sm:%s10104] %v10271
                %v10273 = vld [vmem:[%s10111 + $0x280] sm:%s10104]
                %10274 = vst [vmem:[%s10112 + $0x500] sm:%s10104] %v10273
                %v10275 = vld [vmem:[%s10111 + $0x288] sm:%s10104]
                %10276 = vst [vmem:[%s10112 + $0x510] sm:%s10104] %v10275
                %v10277 = vld [vmem:[%s10111 + $0x290] sm:%s10104]
                %10278 = vst [vmem:[%s10112 + $0x520] sm:%s10104] %v10277
                %v10279 = vld [vmem:[%s10111 + $0x298] sm:%s10104]
                %10280 = vst [vmem:[%s10112 + $0x530] sm:%s10104] %v10279
                %v10281 = vld [vmem:[%s10111 + $0x2a0] sm:%s10104]
                %10282 = vst [vmem:[%s10112 + $0x540] sm:%s10104] %v10281
                %v10283 = vld [vmem:[%s10111 + $0x2a8] sm:%s10104]
                %10284 = vst [vmem:[%s10112 + $0x550] sm:%s10104] %v10283
                %v10285 = vld [vmem:[%s10111 + $0x2b0] sm:%s10104]
                %10286 = vst [vmem:[%s10112 + $0x560] sm:%s10104] %v10285
                %v10287 = vld [vmem:[%s10111 + $0x2b8] sm:%s10104]
                %10288 = vst [vmem:[%s10112 + $0x570] sm:%s10104] %v10287
                %v10289 = vld [vmem:[%s10111 + $0x2c0] sm:%s10104]
                %10290 = vst [vmem:[%s10112 + $0x580] sm:%s10104] %v10289
                %v10291 = vld [vmem:[%s10111 + $0x2c8] sm:%s10104]
                %10292 = vst [vmem:[%s10112 + $0x590] sm:%s10104] %v10291
                %v10293 = vld [vmem:[%s10111 + $0x2d0] sm:%s10104]
                %10294 = vst [vmem:[%s10112 + $0x5a0] sm:%s10104] %v10293
                %v10295 = vld [vmem:[%s10111 + $0x2d8] sm:%s10104]
                %10296 = vst [vmem:[%s10112 + $0x5b0] sm:%s10104] %v10295
                %v10297 = vld [vmem:[%s10111 + $0x2e0] sm:%s10104]
                %10298 = vst [vmem:[%s10112 + $0x5c0] sm:%s10104] %v10297
                %v10299 = vld [vmem:[%s10111 + $0x2e8] sm:%s10104]
                %10300 = vst [vmem:[%s10112 + $0x5d0] sm:%s10104] %v10299
                %v10301 = vld [vmem:[%s10111 + $0x2f0] sm:%s10104]
                %10302 = vst [vmem:[%s10112 + $0x5e0] sm:%s10104] %v10301
                %v10303 = vld [vmem:[%s10111 + $0x2f8] sm:%s10104]
                %10304 = vst [vmem:[%s10112 + $0x5f0] sm:%s10104] %v10303
                %v10305 = vld [vmem:[%s10111 + $0x300] sm:%s10104]
                %10306 = vst [vmem:[%s10112 + $0x600] sm:%s10104] %v10305
                %v10307 = vld [vmem:[%s10111 + $0x308] sm:%s10104]
                %10308 = vst [vmem:[%s10112 + $0x610] sm:%s10104] %v10307
                %v10309 = vld [vmem:[%s10111 + $0x310] sm:%s10104]
                %10310 = vst [vmem:[%s10112 + $0x620] sm:%s10104] %v10309
                %v10311 = vld [vmem:[%s10111 + $0x318] sm:%s10104]
                %10312 = vst [vmem:[%s10112 + $0x630] sm:%s10104] %v10311
                %v10313 = vld [vmem:[%s10111 + $0x320] sm:%s10104]
                %10314 = vst [vmem:[%s10112 + $0x640] sm:%s10104] %v10313
                %v10315 = vld [vmem:[%s10111 + $0x328] sm:%s10104]
                %10316 = vst [vmem:[%s10112 + $0x650] sm:%s10104] %v10315
                %v10317 = vld [vmem:[%s10111 + $0x330] sm:%s10104]
                %10318 = vst [vmem:[%s10112 + $0x660] sm:%s10104] %v10317
                %v10319 = vld [vmem:[%s10111 + $0x338] sm:%s10104]
                %10320 = vst [vmem:[%s10112 + $0x670] sm:%s10104] %v10319
                %v10321 = vld [vmem:[%s10111 + $0x340] sm:%s10104]
                %10322 = vst [vmem:[%s10112 + $0x680] sm:%s10104] %v10321
                %v10323 = vld [vmem:[%s10111 + $0x348] sm:%s10104]
                %10324 = vst [vmem:[%s10112 + $0x690] sm:%s10104] %v10323
                %v10325 = vld [vmem:[%s10111 + $0x350] sm:%s10104]
                %10326 = vst [vmem:[%s10112 + $0x6a0] sm:%s10104] %v10325
                %v10327 = vld [vmem:[%s10111 + $0x358] sm:%s10104]
                %10328 = vst [vmem:[%s10112 + $0x6b0] sm:%s10104] %v10327
                %v10329 = vld [vmem:[%s10111 + $0x360] sm:%s10104]
                %10330 = vst [vmem:[%s10112 + $0x6c0] sm:%s10104] %v10329
                %v10331 = vld [vmem:[%s10111 + $0x368] sm:%s10104]
                %10332 = vst [vmem:[%s10112 + $0x6d0] sm:%s10104] %v10331
                %v10333 = vld [vmem:[%s10111 + $0x370] sm:%s10104]
                %10334 = vst [vmem:[%s10112 + $0x6e0] sm:%s10104] %v10333
                %v10335 = vld [vmem:[%s10111 + $0x378] sm:%s10104]
                %10336 = vst [vmem:[%s10112 + $0x6f0] sm:%s10104] %v10335
              $region98: #{relu_conv_bn_relu.1} parent=92 // loop_footer
                %s10110 = sadd.s32 1, %s10106
              $region99: #{relu_conv_bn_relu.1} parent=92 // loop_footer_branch
                %10105 = sbr.rel target = $region95
              $region100: #{relu_conv_bn_relu.1} parent=92 // loop_exit
                _
            $region93: #{relu_conv_bn_relu.1} parent=84 // pred_fallthru
              _
          $region85: #{relu_conv_bn_relu.1} parent=80 // pred_fallthru
            _
          %10573 = vnop
        $region81: #{relu_conv_bn_relu.1} parent=72 // pred_fallthru
          _
      $region73: #{relu_conv_bn_relu.1} parent=5 // pred_fallthru
        _
      %p10574 = scmp.le.s32.totalorder 2, %s10
      // Predicated region
      $region116: #{relu_conv_bn_relu.1} parent=5 // pred_check
        %p10575 = pneg %p10574
      $region117: #{relu_conv_bn_relu.1} parent=5 // pred_check_branch
        %10577 = sbr.rel (%p10575) target = $region119
      $region118: #{relu_conv_bn_relu.1} parent=5 // pred_region
        %s10578 = ssub.s32 %s10, 2
        // Predicated region
        $region120: #{relu_conv_bn_relu.1} parent=118 // pred_check
          %p10579 = pneg %p138
        $region121: #{relu_conv_bn_relu.1} parent=118 // pred_check_branch
          %10581 = sbr.rel (%p10579) target = $region123
        $region122: #{relu_conv_bn_relu.1} parent=118 // pred_region
          %s10582 = sand.u32 %s123, 1
          %s10583 = sand.u32 %s123, 1
          %s10584 = smul.addr %s10583, 896
          %s10585 = scalar_lea.vmem [#allocation3], %s10584
        $region123: #{relu_conv_bn_relu.1} parent=118 // pred_fallthru
          _
      $region119: #{relu_conv_bn_relu.1} parent=5 // pred_fallthru
        _
    $region6: #{relu_conv_bn_relu.1} parent=1 // loop_footer
      %s14 = sadd.s32 1, %s10
    $region7: #{relu_conv_bn_relu.1} parent=1 // loop_footer_branch
      %9 = sbr.rel target = $region3
    $region8: #{relu_conv_bn_relu.1} parent=1 // loop_exit
      _

</llo_original>
